<compile_context>
chip_gen: v6e
topology: v6e:2x2x1
jax: 0.10.0
libtpu: 0.0.40
codegen_flags: <defaults>
</compile_context>

<pallas_src>
import functools

import numpy as np
import jax
import jax.numpy as jnp
from jax.experimental import pallas as pl
from jax.experimental.pallas import tpu as pltpu

NEG_SLOPE = 0.2
EPS = 1e-5


# ----------------------------- fused Pallas kernel -----------------------------

def _fused_disc_kernel(*refs):
    """refs = [x,
               (A, B, bias)                                    # layer 1
               (A, B, gamma, beta, msum, mbc, rsum, rbc) x 3   # layers 2-4
               (A, B, bias)                                    # layer 5
               out_ref]"""
    ins, o_ref = refs[:-1], refs[-1]

    def conv(y_bf, a_ref, b_ref):
        # k cheap 0/1 column gathers (exact in bf16), stacked along the
        # contraction axis, then ONE deep-K bf16 weight matmul on the MXU.
        k = b_ref.shape[0]
        gathered = [
            jnp.dot(y_bf, b_ref[dj],
                    preferred_element_type=jnp.float32).astype(jnp.bfloat16)
            for dj in range(k)
        ]
        t = jnp.concatenate(gathered, axis=0)            # (k*Rin, N*Wo) bf16
        return jnp.dot(a_ref[...], t, preferred_element_type=jnp.float32)

    def lrelu(v):
        return jnp.where(v >= 0, v, NEG_SLOPE * v)

    i = 0
    y_bf = ins[i][...]; i += 1                            # bf16 (Cin*Hin, 128)

    # ---- layer 1: Conv + bias + LeakyReLU ----
    a, b, bias = ins[i:i + 3]; i += 3
    y = lrelu(conv(y_bf, a, b) + bias[...])               # f32 (Cout*Ho, N*Wo)

    # ---- layers 2-4: Conv + InstanceNorm(affine) + LeakyReLU ----
    for _ in range(3):
        a, b, g, be, msum_r, mbc_r, rsum_r, rbc_r = ins[i:i + 8]; i += 8
        y = conv(y.astype(jnp.bfloat16), a, b)            # f32 (Cout*Ho, N*Wo)
        rows, lanes = y.shape
        co, n = rsum_r.shape[0], msum_r.shape[1]
        inv_cnt = 1.0 / float((rows // co) * (lanes // n))
        msum, rsum = msum_r[...], rsum_r[...]
        # per-(channel, batch) first / second moments via thin 0/1 matmuls
        s1 = jnp.dot(rsum, jnp.dot(y, msum, preferred_element_type=jnp.float32),
                     preferred_element_type=jnp.float32)           # (Cout, N)
        s2 = jnp.dot(rsum, jnp.dot(y * y, msum, preferred_element_type=jnp.float32),
                     preferred_element_type=jnp.float32)           # (Cout, N)
        mean = s1 * inv_cnt
        var = s2 * inv_cnt - mean * mean
        inv = jax.lax.rsqrt(var + EPS)
        scale = g[...] * inv                                        # (Cout, N)
        shift = be[...] - scale * mean                              # (Cout, N)
        scale_f = jnp.dot(jnp.dot(rbc_r[...], scale, preferred_element_type=jnp.float32),
                          mbc_r[...], preferred_element_type=jnp.float32)
        shift_f = jnp.dot(jnp.dot(rbc_r[...], shift, preferred_element_type=jnp.float32),
                          mbc_r[...], preferred_element_type=jnp.float32)
        y = lrelu(scale_f * y + shift_f)

    # ---- layer 5: Conv + bias (no norm / activation) ----
    a, b, bias = ins[i:i + 3]; i += 3
    o_ref[...] = conv(y.astype(jnp.bfloat16), a, b) + bias[...]     # (1, N)


# ----------------------------- operand construction (one-time) ------------------

def build_discriminator_operands(params, *, in_channels, hidden_channels, k,
                                 stride, pad, disc_stride, batch, height, width,
                                 lane_pad):
    """Pre-transform conv weights into the fused kernel's bf16 A/B/mask operands."""
    h = hidden_channels
    chans = [(in_channels, h), (h, 2 * h), (2 * h, 4 * h), (4 * h, 8 * h), (8 * h, 1)]
    strides = [stride, stride, stride, stride, disc_stride]
    N = batch
    ops = []
    Hin, Win = height, width
    for li, ((ci, co), s) in enumerate(zip(chans, strides), start=1):
        Ho = (Hin + 2 * pad - k) // s + 1
        Wo = (Win + 2 * pad - k) // s + 1
        w = np.asarray(params[f"w{li}"], np.float32)          # (co, ci, k, k)

        # Row-gather one-hots with the conv zero padding folded in:
        #   RH[di, ho, h] = 1  iff  h == s*ho + di - pad  and  0 <= h < Hin
        RH = np.zeros((k, Ho, Hin), np.float32)
        for di in range(k):
            hh = s * np.arange(Ho) + di - pad
            ok = (hh >= 0) & (hh < Hin)
            RH[di, np.arange(Ho)[ok], hh[ok]] = 1.0
        # A_dj[(co,ho),(ci,h)] = sum_di W[co,ci,di,dj] * RH[di,ho,h];
        # dj blocks concatenated along the contraction axis -> one weight matmul.
        acat = np.concatenate(
            [np.einsum("ocd,dph->opch", w[:, :, :, dj], RH).reshape(co * Ho, ci * Hin)
             for dj in range(k)], axis=1)                     # (co*Ho, k*ci*Hin)

        # Column-gather one-hots (stride + zero padding folded), per batch.
        lanes_in = lane_pad if li == 1 else N * Win
        B = np.zeros((k, lanes_in, N * Wo), np.float32)
        for dj in range(k):
            ww = s * np.arange(Wo) + dj - pad
            ok = (ww >= 0) & (ww < Win)
            Bw = np.zeros((Win, Wo), np.float32)
            Bw[ww[ok], np.arange(Wo)[ok]] = 1.0
            B[dj, :N * Win, :] = np.kron(np.eye(N, dtype=np.float32), Bw)

        ops += [jnp.asarray(acat, jnp.bfloat16), jnp.asarray(B, jnp.bfloat16)]

        if li == 1:
            b1 = np.repeat(np.asarray(params["b1"], np.float32), Ho)[:, None]
            ops.append(jnp.asarray(b1, jnp.float32))                    # (co*Ho, 1)
        elif li == len(chans):
            ops.append(jnp.asarray(params[f"b{li}"], jnp.float32).reshape(1, 1))
        else:
            ops.append(jnp.asarray(params[f"g{li}"], jnp.float32).reshape(co, 1))
            ops.append(jnp.asarray(params[f"be{li}"], jnp.float32).reshape(co, 1))
            # thin InstanceNorm reduce masks (lane / row) and their transposes
            msum = np.kron(np.eye(N, dtype=np.float32), np.ones((Wo, 1), np.float32))
            rsum = np.kron(np.eye(co, dtype=np.float32), np.ones((1, Ho), np.float32))
            ops += [jnp.asarray(msum, jnp.bfloat16), jnp.asarray(msum.T, jnp.bfloat16),
                    jnp.asarray(rsum, jnp.bfloat16), jnp.asarray(rsum.T, jnp.bfloat16)]
        Hin, Win = Ho, Wo
    return ops


# ----------------------------- forward wrappers -----------------------------

def _full_spec(a):
    return pl.BlockSpec(a.shape, lambda i, _nd=a.ndim: (0,) * _nd)


def discriminator_forward_pallas(ops, x, *, lane_pad):
    N, C, H, W = x.shape
    # rows = (channel, row); lanes = (batch, col), zero-padded to a full lane tile
    xm = jnp.transpose(x, (1, 2, 0, 3)).reshape(C * H, N * W).astype(jnp.bfloat16)
    xm = jnp.pad(xm, ((0, 0), (0, lane_pad - N * W)))
    inputs = [xm] + list(ops)
    out = pl.pallas_call(
        _fused_disc_kernel,
        out_shape=jax.ShapeDtypeStruct((1, N), jnp.float32),
        grid=(1,),
        in_specs=[_full_spec(a) for a in inputs],
        out_specs=pl.BlockSpec((1, N), lambda i: (0, 0)),
        compiler_params=pltpu.CompilerParams(dimension_semantics=("arbitrary",)),
    )(*inputs)
    return out.reshape(N, 1, 1, 1)


# ----------------------------- pure-JAX reference -----------------------------

def discriminator_forward_ref(params, x, *, stride, pad, disc_stride):
    def conv(h, w, b, s):
        y = jax.lax.conv_general_dilated(
            h, w, window_strides=(s, s), padding=[(pad, pad), (pad, pad)],
            dimension_numbers=("NCHW", "OIHW", "NCHW"))
        return y if b is None else y + b.reshape(1, -1, 1, 1)

    def lrelu(y):
        return jnp.where(y >= 0, y, NEG_SLOPE * y)

    h = lrelu(conv(x, params["w1"], params["b1"], stride))
    for i in (2, 3, 4):
        h = conv(h, params[f"w{i}"], None, stride)
        mean = jnp.mean(h, axis=(2, 3), keepdims=True)
        var = jnp.mean((h - mean) ** 2, axis=(2, 3), keepdims=True)
        h = (h - mean) * jax.lax.rsqrt(var + EPS)
        h = lrelu(h * params[f"g{i}"].reshape(1, -1, 1, 1)
                  + params[f"be{i}"].reshape(1, -1, 1, 1))
    return conv(h, params["w5"], params["b5"], disc_stride)


# ----------------------------- params -----------------------------

def init_params(key, in_channels, hidden_channels, k):
    h = hidden_channels
    chans = [(in_channels, h), (h, 2 * h), (2 * h, 4 * h), (4 * h, 8 * h), (8 * h, 1)]
    params = {}
    for i, (ci, co) in enumerate(chans, start=1):
        key, kw, kb, kg, kbeta = jax.random.split(key, 5)
        params[f"w{i}"] = jax.random.normal(kw, (co, ci, k, k), jnp.float32) * 0.05
        if i in (1, 5):          # only the un-normalised convs carry a bias
            params[f"b{i}"] = jax.random.normal(kb, (co,), jnp.float32) * 0.05
        if i in (2, 3, 4):       # affine InstanceNorm params
            params[f"g{i}"] = 1.0 + 0.1 * jax.random.normal(kg, (co,), jnp.float32)
            params[f"be{i}"] = 0.1 * jax.random.normal(kbeta, (co,), jnp.float32)
    return params


# ----------------------------- main -----------------------------

if __name__ == "__main__":
    config = dict(hidden_channels=8, in_channels=3, kernel_size=4,
                  disc_stride=1, stride=2, padding=1)
    N, H, W = 2, 32, 32   # 32x32 so the 4 stride-2 convs + final 4x4 conv reach 1x1

    key = jax.random.PRNGKey(0)
    k_params, k_x = jax.random.split(key)
    params = init_params(k_params, config["in_channels"],
                         config["hidden_channels"], config["kernel_size"])
    x = jax.random.normal(k_x, (N, config["in_channels"], H, W), jnp.float32)

    lane_pad = ((N * W + 127) // 128) * 128
    # one-time weight -> fused-operand transformation (outside the hot path)
    ops = build_discriminator_operands(
        params, in_channels=config["in_channels"],
        hidden_channels=config["hidden_channels"], k=config["kernel_size"],
        stride=config["stride"], pad=config["padding"],
        disc_stride=config["disc_stride"], batch=N, height=H, width=W,
        lane_pad=lane_pad)

    fwd = jax.jit(functools.partial(discriminator_forward_pallas, lane_pad=lane_pad))
    out = jax.block_until_ready(fwd(ops, x))

    ref = jax.block_until_ready(discriminator_forward_ref(
        params, x, stride=config["stride"], pad=config["padding"],
        disc_stride=config["disc_stride"]))

    assert out.shape == (N, 1, 1, 1), out.shape
    assert bool(jnp.all(jnp.isfinite(out)))
    # bf16 operand storage (perf review) costs ~1e-3 relative error per layer;
    # structural bugs would show as O(0.1-1) errors, so this still validates.
    assert bool(jnp.allclose(out, ref, atol=2e-2, rtol=2e-2)), (out, ref)
    print("KERNEL_OK")
</pallas_src>

<mosaic_0001>
module attributes {stable_mosaic.version = 11 : i64} {
  func.func @_fused_disc_kernel(%arg0: i32, %arg1: memref<96x128xbf16, #tpu.memory_space<vmem>>, %arg2: memref<128x384xbf16, #tpu.memory_space<vmem>>, %arg3: memref<4x128x32xbf16, #tpu.memory_space<vmem>>, %arg4: memref<128x1xf32, #tpu.memory_space<vmem>>, %arg5: memref<128x512xbf16, #tpu.memory_space<vmem>>, %arg6: memref<4x32x16xbf16, #tpu.memory_space<vmem>>, %arg7: memref<16x1xf32, #tpu.memory_space<vmem>>, %arg8: memref<16x1xf32, #tpu.memory_space<vmem>>, %arg9: memref<16x2xbf16, #tpu.memory_space<vmem>>, %arg10: memref<2x16xbf16, #tpu.memory_space<vmem>>, %arg11: memref<16x128xbf16, #tpu.memory_space<vmem>>, %arg12: memref<128x16xbf16, #tpu.memory_space<vmem>>, %arg13: memref<128x512xbf16, #tpu.memory_space<vmem>>, %arg14: memref<4x16x8xbf16, #tpu.memory_space<vmem>>, %arg15: memref<32x1xf32, #tpu.memory_space<vmem>>, %arg16: memref<32x1xf32, #tpu.memory_space<vmem>>, %arg17: memref<8x2xbf16, #tpu.memory_space<vmem>>, %arg18: memref<2x8xbf16, #tpu.memory_space<vmem>>, %arg19: memref<32x128xbf16, #tpu.memory_space<vmem>>, %arg20: memref<128x32xbf16, #tpu.memory_space<vmem>>, %arg21: memref<128x512xbf16, #tpu.memory_space<vmem>>, %arg22: memref<4x8x4xbf16, #tpu.memory_space<vmem>>, %arg23: memref<64x1xf32, #tpu.memory_space<vmem>>, %arg24: memref<64x1xf32, #tpu.memory_space<vmem>>, %arg25: memref<4x2xbf16, #tpu.memory_space<vmem>>, %arg26: memref<2x4xbf16, #tpu.memory_space<vmem>>, %arg27: memref<64x128xbf16, #tpu.memory_space<vmem>>, %arg28: memref<128x64xbf16, #tpu.memory_space<vmem>>, %arg29: memref<1x512xbf16, #tpu.memory_space<vmem>>, %arg30: memref<4x4x2xbf16, #tpu.memory_space<vmem>>, %arg31: memref<1x1xf32, #tpu.memory_space<vmem>>, %arg32: memref<1x2xf32, #tpu.memory_space<vmem>>) attributes {dimension_semantics = [#tpu.dimension_semantics<arbitrary>], iteration_bounds = array<i64: 1>, scalar_prefetch = 0 : i64, scratch_operands = 0 : i64, tpu.core_type = #tpu.core_type<tc>, window_params = [{pipeline_mode = #tpu.pipeline_mode<synchronous>, transform_indices = @transform_0, window_bounds = array<i64: 96, 128>}, {pipeline_mode = #tpu.pipeline_mode<synchronous>, transform_indices = @transform_1, window_bounds = array<i64: 128, 384>}, {pipeline_mode = #tpu.pipeline_mode<synchronous>, transform_indices = @transform_2, window_bounds = array<i64: 4, 128, 32>}, {pipeline_mode = #tpu.pipeline_mode<synchronous>, transform_indices = @transform_3, window_bounds = array<i64: 128, 1>}, {pipeline_mode = #tpu.pipeline_mode<synchronous>, transform_indices = @transform_4, window_bounds = array<i64: 128, 512>}, {pipeline_mode = #tpu.pipeline_mode<synchronous>, transform_indices = @transform_5, window_bounds = array<i64: 4, 32, 16>}, {pipeline_mode = #tpu.pipeline_mode<synchronous>, transform_indices = @transform_6, window_bounds = array<i64: 16, 1>}, {pipeline_mode = #tpu.pipeline_mode<synchronous>, transform_indices = @transform_7, window_bounds = array<i64: 16, 1>}, {pipeline_mode = #tpu.pipeline_mode<synchronous>, transform_indices = @transform_8, window_bounds = array<i64: 16, 2>}, {pipeline_mode = #tpu.pipeline_mode<synchronous>, transform_indices = @transform_9, window_bounds = array<i64: 2, 16>}, {pipeline_mode = #tpu.pipeline_mode<synchronous>, transform_indices = @transform_10, window_bounds = array<i64: 16, 128>}, {pipeline_mode = #tpu.pipeline_mode<synchronous>, transform_indices = @transform_11, window_bounds = array<i64: 128, 16>}, {pipeline_mode = #tpu.pipeline_mode<synchronous>, transform_indices = @transform_12, window_bounds = array<i64: 128, 512>}, {pipeline_mode = #tpu.pipeline_mode<synchronous>, transform_indices = @transform_13, window_bounds = array<i64: 4, 16, 8>}, {pipeline_mode = #tpu.pipeline_mode<synchronous>, transform_indices = @transform_14, window_bounds = array<i64: 32, 1>}, {pipeline_mode = #tpu.pipeline_mode<synchronous>, transform_indices = @transform_15, window_bounds = array<i64: 32, 1>}, {pipeline_mode = #tpu.pipeline_mode<synchronous>, transform_indices = @transform_16, window_bounds = array<i64: 8, 2>}, {pipeline_mode = #tpu.pipeline_mode<synchronous>, transform_indices = @transform_17, window_bounds = array<i64: 2, 8>}, {pipeline_mode = #tpu.pipeline_mode<synchronous>, transform_indices = @transform_18, window_bounds = array<i64: 32, 128>}, {pipeline_mode = #tpu.pipeline_mode<synchronous>, transform_indices = @transform_19, window_bounds = array<i64: 128, 32>}, {pipeline_mode = #tpu.pipeline_mode<synchronous>, transform_indices = @transform_20, window_bounds = array<i64: 128, 512>}, {pipeline_mode = #tpu.pipeline_mode<synchronous>, transform_indices = @transform_21, window_bounds = array<i64: 4, 8, 4>}, {pipeline_mode = #tpu.pipeline_mode<synchronous>, transform_indices = @transform_22, window_bounds = array<i64: 64, 1>}, {pipeline_mode = #tpu.pipeline_mode<synchronous>, transform_indices = @transform_23, window_bounds = array<i64: 64, 1>}, {pipeline_mode = #tpu.pipeline_mode<synchronous>, transform_indices = @transform_24, window_bounds = array<i64: 4, 2>}, {pipeline_mode = #tpu.pipeline_mode<synchronous>, transform_indices = @transform_25, window_bounds = array<i64: 2, 4>}, {pipeline_mode = #tpu.pipeline_mode<synchronous>, transform_indices = @transform_26, window_bounds = array<i64: 64, 128>}, {pipeline_mode = #tpu.pipeline_mode<synchronous>, transform_indices = @transform_27, window_bounds = array<i64: 128, 64>}, {pipeline_mode = #tpu.pipeline_mode<synchronous>, transform_indices = @transform_28, window_bounds = array<i64: 1, 512>}, {pipeline_mode = #tpu.pipeline_mode<synchronous>, transform_indices = @transform_29, window_bounds = array<i64: 4, 4, 2>}, {pipeline_mode = #tpu.pipeline_mode<synchronous>, transform_indices = @transform_30, window_bounds = array<i64: 1, 1>}, {pipeline_mode = #tpu.pipeline_mode<synchronous>, transform_indices = @transform_31, window_bounds = array<i64: 1, 2>}]} {
    %c0 = arith.constant 0 : index
    %c0_0 = arith.constant 0 : index
    %0 = vector.load %arg1[%c0, %c0_0] : memref<96x128xbf16, #tpu.memory_space<vmem>>, vector<96x128xbf16>
    %c0_1 = arith.constant 0 : index
    %c0_2 = arith.constant 0 : index
    %c0_3 = arith.constant 0 : index
    %1 = vector.load %arg3[%c0_1, %c0_2, %c0_3] : memref<4x128x32xbf16, #tpu.memory_space<vmem>>, vector<1x128x32xbf16>
    %2 = vector.shape_cast %1 : vector<1x128x32xbf16> to vector<128x32xbf16>
    %cst = arith.constant dense<0.000000e+00> : vector<96x32xf32>
    %3 = tpu.matmul %0, %2, %cst {dimension_numbers = #tpu.dot_dimension_numbers<[1], [0], [0], [1], [0, 0, 1, 1], [], []>} : vector<96x128xbf16>, vector<128x32xbf16>, vector<96x32xf32> -> vector<96x32xf32>
    %4 = arith.truncf %3 : vector<96x32xf32> to vector<96x32xbf16>
    %c1 = arith.constant 1 : index
    %c0_4 = arith.constant 0 : index
    %c0_5 = arith.constant 0 : index
    %5 = vector.load %arg3[%c1, %c0_4, %c0_5] : memref<4x128x32xbf16, #tpu.memory_space<vmem>>, vector<1x128x32xbf16>
    %6 = vector.shape_cast %5 : vector<1x128x32xbf16> to vector<128x32xbf16>
    %cst_6 = arith.constant dense<0.000000e+00> : vector<96x32xf32>
    %7 = tpu.matmul %0, %6, %cst_6 {dimension_numbers = #tpu.dot_dimension_numbers<[1], [0], [0], [1], [0, 0, 1, 1], [], []>} : vector<96x128xbf16>, vector<128x32xbf16>, vector<96x32xf32> -> vector<96x32xf32>
    %8 = arith.truncf %7 : vector<96x32xf32> to vector<96x32xbf16>
    %c2 = arith.constant 2 : index
    %c0_7 = arith.constant 0 : index
    %c0_8 = arith.constant 0 : index
    %9 = vector.load %arg3[%c2, %c0_7, %c0_8] : memref<4x128x32xbf16, #tpu.memory_space<vmem>>, vector<1x128x32xbf16>
    %10 = vector.shape_cast %9 : vector<1x128x32xbf16> to vector<128x32xbf16>
    %cst_9 = arith.constant dense<0.000000e+00> : vector<96x32xf32>
    %11 = tpu.matmul %0, %10, %cst_9 {dimension_numbers = #tpu.dot_dimension_numbers<[1], [0], [0], [1], [0, 0, 1, 1], [], []>} : vector<96x128xbf16>, vector<128x32xbf16>, vector<96x32xf32> -> vector<96x32xf32>
    %12 = arith.truncf %11 : vector<96x32xf32> to vector<96x32xbf16>
    %c3 = arith.constant 3 : index
    %c0_10 = arith.constant 0 : index
    %c0_11 = arith.constant 0 : index
    %13 = vector.load %arg3[%c3, %c0_10, %c0_11] : memref<4x128x32xbf16, #tpu.memory_space<vmem>>, vector<1x128x32xbf16>
    %14 = vector.shape_cast %13 : vector<1x128x32xbf16> to vector<128x32xbf16>
    %cst_12 = arith.constant dense<0.000000e+00> : vector<96x32xf32>
    %15 = tpu.matmul %0, %14, %cst_12 {dimension_numbers = #tpu.dot_dimension_numbers<[1], [0], [0], [1], [0, 0, 1, 1], [], []>} : vector<96x128xbf16>, vector<128x32xbf16>, vector<96x32xf32> -> vector<96x32xf32>
    %16 = arith.truncf %15 : vector<96x32xf32> to vector<96x32xbf16>
    %17 = tpu.concatenate %4, %8, %12, %16 in 0 : vector<96x32xbf16>, vector<96x32xbf16>, vector<96x32xbf16>, vector<96x32xbf16> -> vector<384x32xbf16>
    %c0_13 = arith.constant 0 : index
    %c0_14 = arith.constant 0 : index
    %18 = vector.load %arg2[%c0_13, %c0_14] : memref<128x384xbf16, #tpu.memory_space<vmem>>, vector<128x384xbf16>
    %cst_15 = arith.constant dense<0.000000e+00> : vector<128x32xf32>
    %19 = tpu.matmul %18, %17, %cst_15 {dimension_numbers = #tpu.dot_dimension_numbers<[1], [0], [0], [1], [0, 0, 1, 1], [], []>} : vector<128x384xbf16>, vector<384x32xbf16>, vector<128x32xf32> -> vector<128x32xf32>
    %c0_16 = arith.constant 0 : index
    %c0_17 = arith.constant 0 : index
    %20 = vector.load %arg4[%c0_16, %c0_17] : memref<128x1xf32, #tpu.memory_space<vmem>>, vector<128x1xf32>
    %21 = vector.broadcast %20 : vector<128x1xf32> to vector<128x32xf32>
    %22 = arith.addf %19, %21 : vector<128x32xf32>
    %cst_18 = arith.constant 0.000000e+00 : f32
    %23 = vector.broadcast %cst_18 : f32 to vector<128x32xf32>
    %24 = arith.cmpf oge, %22, %23 : vector<128x32xf32>
    %cst_19 = arith.constant 2.000000e-01 : f32
    %25 = vector.broadcast %cst_19 : f32 to vector<128x32xf32>
    %26 = arith.mulf %25, %22 : vector<128x32xf32>
    %27 = arith.select %24, %22, %26 : vector<128x32xi1>, vector<128x32xf32>
    %28 = arith.truncf %27 : vector<128x32xf32> to vector<128x32xbf16>
    %c0_20 = arith.constant 0 : index
    %c0_21 = arith.constant 0 : index
    %c0_22 = arith.constant 0 : index
    %29 = vector.load %arg6[%c0_20, %c0_21, %c0_22] : memref<4x32x16xbf16, #tpu.memory_space<vmem>>, vector<1x32x16xbf16>
    %30 = vector.shape_cast %29 : vector<1x32x16xbf16> to vector<32x16xbf16>
    %cst_23 = arith.constant dense<0.000000e+00> : vector<128x16xf32>
    %31 = tpu.matmul %28, %30, %cst_23 {dimension_numbers = #tpu.dot_dimension_numbers<[1], [0], [0], [1], [0, 0, 1, 1], [], []>} : vector<128x32xbf16>, vector<32x16xbf16>, vector<128x16xf32> -> vector<128x16xf32>
    %32 = arith.truncf %31 : vector<128x16xf32> to vector<128x16xbf16>
    %c1_24 = arith.constant 1 : index
    %c0_25 = arith.constant 0 : index
    %c0_26 = arith.constant 0 : index
    %33 = vector.load %arg6[%c1_24, %c0_25, %c0_26] : memref<4x32x16xbf16, #tpu.memory_space<vmem>>, vector<1x32x16xbf16>
    %34 = vector.shape_cast %33 : vector<1x32x16xbf16> to vector<32x16xbf16>
    %cst_27 = arith.constant dense<0.000000e+00> : vector<128x16xf32>
    %35 = tpu.matmul %28, %34, %cst_27 {dimension_numbers = #tpu.dot_dimension_numbers<[1], [0], [0], [1], [0, 0, 1, 1], [], []>} : vector<128x32xbf16>, vector<32x16xbf16>, vector<128x16xf32> -> vector<128x16xf32>
    %36 = arith.truncf %35 : vector<128x16xf32> to vector<128x16xbf16>
    %c2_28 = arith.constant 2 : index
    %c0_29 = arith.constant 0 : index
    %c0_30 = arith.constant 0 : index
    %37 = vector.load %arg6[%c2_28, %c0_29, %c0_30] : memref<4x32x16xbf16, #tpu.memory_space<vmem>>, vector<1x32x16xbf16>
    %38 = vector.shape_cast %37 : vector<1x32x16xbf16> to vector<32x16xbf16>
    %cst_31 = arith.constant dense<0.000000e+00> : vector<128x16xf32>
    %39 = tpu.matmul %28, %38, %cst_31 {dimension_numbers = #tpu.dot_dimension_numbers<[1], [0], [0], [1], [0, 0, 1, 1], [], []>} : vector<128x32xbf16>, vector<32x16xbf16>, vector<128x16xf32> -> vector<128x16xf32>
    %40 = arith.truncf %39 : vector<128x16xf32> to vector<128x16xbf16>
    %c3_32 = arith.constant 3 : index
    %c0_33 = arith.constant 0 : index
    %c0_34 = arith.constant 0 : index
    %41 = vector.load %arg6[%c3_32, %c0_33, %c0_34] : memref<4x32x16xbf16, #tpu.memory_space<vmem>>, vector<1x32x16xbf16>
    %42 = vector.shape_cast %41 : vector<1x32x16xbf16> to vector<32x16xbf16>
    %cst_35 = arith.constant dense<0.000000e+00> : vector<128x16xf32>
    %43 = tpu.matmul %28, %42, %cst_35 {dimension_numbers = #tpu.dot_dimension_numbers<[1], [0], [0], [1], [0, 0, 1, 1], [], []>} : vector<128x32xbf16>, vector<32x16xbf16>, vector<128x16xf32> -> vector<128x16xf32>
    %44 = arith.truncf %43 : vector<128x16xf32> to vector<128x16xbf16>
    %45 = tpu.concatenate %32, %36, %40, %44 in 0 : vector<128x16xbf16>, vector<128x16xbf16>, vector<128x16xbf16>, vector<128x16xbf16> -> vector<512x16xbf16>
    %c0_36 = arith.constant 0 : index
    %c0_37 = arith.constant 0 : index
    %46 = vector.load %arg5[%c0_36, %c0_37] : memref<128x512xbf16, #tpu.memory_space<vmem>>, vector<128x512xbf16>
    %cst_38 = arith.constant dense<0.000000e+00> : vector<128x16xf32>
    %47 = tpu.matmul %46, %45, %cst_38 {dimension_numbers = #tpu.dot_dimension_numbers<[1], [0], [0], [1], [0, 0, 1, 1], [], []>} : vector<128x512xbf16>, vector<512x16xbf16>, vector<128x16xf32> -> vector<128x16xf32>
    %c0_39 = arith.constant 0 : index
    %c0_40 = arith.constant 0 : index
    %48 = vector.load %arg9[%c0_39, %c0_40] : memref<16x2xbf16, #tpu.memory_space<vmem>>, vector<16x2xbf16>
    %c0_41 = arith.constant 0 : index
    %c0_42 = arith.constant 0 : index
    %49 = vector.load %arg11[%c0_41, %c0_42] : memref<16x128xbf16, #tpu.memory_space<vmem>>, vector<16x128xbf16>
    %cst_43 = arith.constant dense<0.000000e+00> : vector<128x2xf32>
    %50 = tpu.matmul %47, %48, %cst_43 {dimension_numbers = #tpu.dot_dimension_numbers<[1], [0], [0], [1], [0, 0, 1, 1], [], []>} : vector<128x16xf32>, vector<16x2xbf16>, vector<128x2xf32> -> vector<128x2xf32>
    %cst_44 = arith.constant dense<0.000000e+00> : vector<16x2xf32>
    %51 = tpu.matmul %49, %50, %cst_44 {dimension_numbers = #tpu.dot_dimension_numbers<[1], [0], [0], [1], [0, 0, 1, 1], [], []>} : vector<16x128xbf16>, vector<128x2xf32>, vector<16x2xf32> -> vector<16x2xf32>
    %52 = arith.mulf %47, %47 : vector<128x16xf32>
    %cst_45 = arith.constant dense<0.000000e+00> : vector<128x2xf32>
    %53 = tpu.matmul %52, %48, %cst_45 {dimension_numbers = #tpu.dot_dimension_numbers<[1], [0], [0], [1], [0, 0, 1, 1], [], []>} : vector<128x16xf32>, vector<16x2xbf16>, vector<128x2xf32> -> vector<128x2xf32>
    %cst_46 = arith.constant dense<0.000000e+00> : vector<16x2xf32>
    %54 = tpu.matmul %49, %53, %cst_46 {dimension_numbers = #tpu.dot_dimension_numbers<[1], [0], [0], [1], [0, 0, 1, 1], [], []>} : vector<16x128xbf16>, vector<128x2xf32>, vector<16x2xf32> -> vector<16x2xf32>
    %cst_47 = arith.constant 1.562500e-02 : f32
    %55 = vector.broadcast %cst_47 : f32 to vector<16x2xf32>
    %56 = arith.mulf %51, %55 : vector<16x2xf32>
    %cst_48 = arith.constant 1.562500e-02 : f32
    %57 = vector.broadcast %cst_48 : f32 to vector<16x2xf32>
    %58 = arith.mulf %54, %57 : vector<16x2xf32>
    %59 = arith.mulf %56, %56 : vector<16x2xf32>
    %60 = arith.subf %58, %59 : vector<16x2xf32>
    %cst_49 = arith.constant 9.99999974E-6 : f32
    %61 = vector.broadcast %cst_49 : f32 to vector<16x2xf32>
    %62 = arith.addf %60, %61 : vector<16x2xf32>
    %63 = math.rsqrt %62 : vector<16x2xf32>
    %c0_50 = arith.constant 0 : index
    %c0_51 = arith.constant 0 : index
    %64 = vector.load %arg7[%c0_50, %c0_51] : memref<16x1xf32, #tpu.memory_space<vmem>>, vector<16x1xf32>
    %65 = vector.broadcast %64 : vector<16x1xf32> to vector<16x2xf32>
    %66 = arith.mulf %65, %63 : vector<16x2xf32>
    %c0_52 = arith.constant 0 : index
    %c0_53 = arith.constant 0 : index
    %67 = vector.load %arg8[%c0_52, %c0_53] : memref<16x1xf32, #tpu.memory_space<vmem>>, vector<16x1xf32>
    %68 = arith.mulf %66, %56 : vector<16x2xf32>
    %69 = vector.broadcast %67 : vector<16x1xf32> to vector<16x2xf32>
    %70 = arith.subf %69, %68 : vector<16x2xf32>
    %c0_54 = arith.constant 0 : index
    %c0_55 = arith.constant 0 : index
    %71 = vector.load %arg12[%c0_54, %c0_55] : memref<128x16xbf16, #tpu.memory_space<vmem>>, vector<128x16xbf16>
    %cst_56 = arith.constant dense<0.000000e+00> : vector<128x2xf32>
    %72 = tpu.matmul %71, %66, %cst_56 {dimension_numbers = #tpu.dot_dimension_numbers<[1], [0], [0], [1], [0, 0, 1, 1], [], []>} : vector<128x16xbf16>, vector<16x2xf32>, vector<128x2xf32> -> vector<128x2xf32>
    %c0_57 = arith.constant 0 : index
    %c0_58 = arith.constant 0 : index
    %73 = vector.load %arg10[%c0_57, %c0_58] : memref<2x16xbf16, #tpu.memory_space<vmem>>, vector<2x16xbf16>
    %cst_59 = arith.constant dense<0.000000e+00> : vector<128x16xf32>
    %74 = tpu.matmul %72, %73, %cst_59 {dimension_numbers = #tpu.dot_dimension_numbers<[1], [0], [0], [1], [0, 0, 1, 1], [], []>} : vector<128x2xf32>, vector<2x16xbf16>, vector<128x16xf32> -> vector<128x16xf32>
    %c0_60 = arith.constant 0 : index
    %c0_61 = arith.constant 0 : index
    %75 = vector.load %arg12[%c0_60, %c0_61] : memref<128x16xbf16, #tpu.memory_space<vmem>>, vector<128x16xbf16>
    %cst_62 = arith.constant dense<0.000000e+00> : vector<128x2xf32>
    %76 = tpu.matmul %75, %70, %cst_62 {dimension_numbers = #tpu.dot_dimension_numbers<[1], [0], [0], [1], [0, 0, 1, 1], [], []>} : vector<128x16xbf16>, vector<16x2xf32>, vector<128x2xf32> -> vector<128x2xf32>
    %c0_63 = arith.constant 0 : index
    %c0_64 = arith.constant 0 : index
    %77 = vector.load %arg10[%c0_63, %c0_64] : memref<2x16xbf16, #tpu.memory_space<vmem>>, vector<2x16xbf16>
    %cst_65 = arith.constant dense<0.000000e+00> : vector<128x16xf32>
    %78 = tpu.matmul %76, %77, %cst_65 {dimension_numbers = #tpu.dot_dimension_numbers<[1], [0], [0], [1], [0, 0, 1, 1], [], []>} : vector<128x2xf32>, vector<2x16xbf16>, vector<128x16xf32> -> vector<128x16xf32>
    %79 = arith.mulf %74, %47 : vector<128x16xf32>
    %80 = arith.addf %79, %78 : vector<128x16xf32>
    %cst_66 = arith.constant 0.000000e+00 : f32
    %81 = vector.broadcast %cst_66 : f32 to vector<128x16xf32>
    %82 = arith.cmpf oge, %80, %81 : vector<128x16xf32>
    %cst_67 = arith.constant 2.000000e-01 : f32
    %83 = vector.broadcast %cst_67 : f32 to vector<128x16xf32>
    %84 = arith.mulf %83, %80 : vector<128x16xf32>
    %85 = arith.select %82, %80, %84 : vector<128x16xi1>, vector<128x16xf32>
    %86 = arith.truncf %85 : vector<128x16xf32> to vector<128x16xbf16>
    %c0_68 = arith.constant 0 : index
    %c0_69 = arith.constant 0 : index
    %c0_70 = arith.constant 0 : index
    %87 = vector.load %arg14[%c0_68, %c0_69, %c0_70] : memref<4x16x8xbf16, #tpu.memory_space<vmem>>, vector<1x16x8xbf16>
    %88 = vector.shape_cast %87 : vector<1x16x8xbf16> to vector<16x8xbf16>
    %cst_71 = arith.constant dense<0.000000e+00> : vector<128x8xf32>
    %89 = tpu.matmul %86, %88, %cst_71 {dimension_numbers = #tpu.dot_dimension_numbers<[1], [0], [0], [1], [0, 0, 1, 1], [], []>} : vector<128x16xbf16>, vector<16x8xbf16>, vector<128x8xf32> -> vector<128x8xf32>
    %90 = arith.truncf %89 : vector<128x8xf32> to vector<128x8xbf16>
    %c1_72 = arith.constant 1 : index
    %c0_73 = arith.constant 0 : index
    %c0_74 = arith.constant 0 : index
    %91 = vector.load %arg14[%c1_72, %c0_73, %c0_74] : memref<4x16x8xbf16, #tpu.memory_space<vmem>>, vector<1x16x8xbf16>
    %92 = vector.shape_cast %91 : vector<1x16x8xbf16> to vector<16x8xbf16>
    %cst_75 = arith.constant dense<0.000000e+00> : vector<128x8xf32>
    %93 = tpu.matmul %86, %92, %cst_75 {dimension_numbers = #tpu.dot_dimension_numbers<[1], [0], [0], [1], [0, 0, 1, 1], [], []>} : vector<128x16xbf16>, vector<16x8xbf16>, vector<128x8xf32> -> vector<128x8xf32>
    %94 = arith.truncf %93 : vector<128x8xf32> to vector<128x8xbf16>
    %c2_76 = arith.constant 2 : index
    %c0_77 = arith.constant 0 : index
    %c0_78 = arith.constant 0 : index
    %95 = vector.load %arg14[%c2_76, %c0_77, %c0_78] : memref<4x16x8xbf16, #tpu.memory_space<vmem>>, vector<1x16x8xbf16>
    %96 = vector.shape_cast %95 : vector<1x16x8xbf16> to vector<16x8xbf16>
    %cst_79 = arith.constant dense<0.000000e+00> : vector<128x8xf32>
    %97 = tpu.matmul %86, %96, %cst_79 {dimension_numbers = #tpu.dot_dimension_numbers<[1], [0], [0], [1], [0, 0, 1, 1], [], []>} : vector<128x16xbf16>, vector<16x8xbf16>, vector<128x8xf32> -> vector<128x8xf32>
    %98 = arith.truncf %97 : vector<128x8xf32> to vector<128x8xbf16>
    %c3_80 = arith.constant 3 : index
    %c0_81 = arith.constant 0 : index
    %c0_82 = arith.constant 0 : index
    %99 = vector.load %arg14[%c3_80, %c0_81, %c0_82] : memref<4x16x8xbf16, #tpu.memory_space<vmem>>, vector<1x16x8xbf16>
    %100 = vector.shape_cast %99 : vector<1x16x8xbf16> to vector<16x8xbf16>
    %cst_83 = arith.constant dense<0.000000e+00> : vector<128x8xf32>
    %101 = tpu.matmul %86, %100, %cst_83 {dimension_numbers = #tpu.dot_dimension_numbers<[1], [0], [0], [1], [0, 0, 1, 1], [], []>} : vector<128x16xbf16>, vector<16x8xbf16>, vector<128x8xf32> -> vector<128x8xf32>
    %102 = arith.truncf %101 : vector<128x8xf32> to vector<128x8xbf16>
    %103 = tpu.concatenate %90, %94, %98, %102 in 0 : vector<128x8xbf16>, vector<128x8xbf16>, vector<128x8xbf16>, vector<128x8xbf16> -> vector<512x8xbf16>
    %c0_84 = arith.constant 0 : index
    %c0_85 = arith.constant 0 : index
    %104 = vector.load %arg13[%c0_84, %c0_85] : memref<128x512xbf16, #tpu.memory_space<vmem>>, vector<128x512xbf16>
    %cst_86 = arith.constant dense<0.000000e+00> : vector<128x8xf32>
    %105 = tpu.matmul %104, %103, %cst_86 {dimension_numbers = #tpu.dot_dimension_numbers<[1], [0], [0], [1], [0, 0, 1, 1], [], []>} : vector<128x512xbf16>, vector<512x8xbf16>, vector<128x8xf32> -> vector<128x8xf32>
    %c0_87 = arith.constant 0 : index
    %c0_88 = arith.constant 0 : index
    %106 = vector.load %arg17[%c0_87, %c0_88] : memref<8x2xbf16, #tpu.memory_space<vmem>>, vector<8x2xbf16>
    %c0_89 = arith.constant 0 : index
    %c0_90 = arith.constant 0 : index
    %107 = vector.load %arg19[%c0_89, %c0_90] : memref<32x128xbf16, #tpu.memory_space<vmem>>, vector<32x128xbf16>
    %cst_91 = arith.constant dense<0.000000e+00> : vector<128x2xf32>
    %108 = tpu.matmul %105, %106, %cst_91 {dimension_numbers = #tpu.dot_dimension_numbers<[1], [0], [0], [1], [0, 0, 1, 1], [], []>} : vector<128x8xf32>, vector<8x2xbf16>, vector<128x2xf32> -> vector<128x2xf32>
    %cst_92 = arith.constant dense<0.000000e+00> : vector<32x2xf32>
    %109 = tpu.matmul %107, %108, %cst_92 {dimension_numbers = #tpu.dot_dimension_numbers<[1], [0], [0], [1], [0, 0, 1, 1], [], []>} : vector<32x128xbf16>, vector<128x2xf32>, vector<32x2xf32> -> vector<32x2xf32>
    %110 = arith.mulf %105, %105 : vector<128x8xf32>
    %cst_93 = arith.constant dense<0.000000e+00> : vector<128x2xf32>
    %111 = tpu.matmul %110, %106, %cst_93 {dimension_numbers = #tpu.dot_dimension_numbers<[1], [0], [0], [1], [0, 0, 1, 1], [], []>} : vector<128x8xf32>, vector<8x2xbf16>, vector<128x2xf32> -> vector<128x2xf32>
    %cst_94 = arith.constant dense<0.000000e+00> : vector<32x2xf32>
    %112 = tpu.matmul %107, %111, %cst_94 {dimension_numbers = #tpu.dot_dimension_numbers<[1], [0], [0], [1], [0, 0, 1, 1], [], []>} : vector<32x128xbf16>, vector<128x2xf32>, vector<32x2xf32> -> vector<32x2xf32>
    %cst_95 = arith.constant 6.250000e-02 : f32
    %113 = vector.broadcast %cst_95 : f32 to vector<32x2xf32>
    %114 = arith.mulf %109, %113 : vector<32x2xf32>
    %cst_96 = arith.constant 6.250000e-02 : f32
    %115 = vector.broadcast %cst_96 : f32 to vector<32x2xf32>
    %116 = arith.mulf %112, %115 : vector<32x2xf32>
    %117 = arith.mulf %114, %114 : vector<32x2xf32>
    %118 = arith.subf %116, %117 : vector<32x2xf32>
    %cst_97 = arith.constant 9.99999974E-6 : f32
    %119 = vector.broadcast %cst_97 : f32 to vector<32x2xf32>
    %120 = arith.addf %118, %119 : vector<32x2xf32>
    %121 = math.rsqrt %120 : vector<32x2xf32>
    %c0_98 = arith.constant 0 : index
    %c0_99 = arith.constant 0 : index
    %122 = vector.load %arg15[%c0_98, %c0_99] : memref<32x1xf32, #tpu.memory_space<vmem>>, vector<32x1xf32>
    %123 = vector.broadcast %122 : vector<32x1xf32> to vector<32x2xf32>
    %124 = arith.mulf %123, %121 : vector<32x2xf32>
    %c0_100 = arith.constant 0 : index
    %c0_101 = arith.constant 0 : index
    %125 = vector.load %arg16[%c0_100, %c0_101] : memref<32x1xf32, #tpu.memory_space<vmem>>, vector<32x1xf32>
    %126 = arith.mulf %124, %114 : vector<32x2xf32>
    %127 = vector.broadcast %125 : vector<32x1xf32> to vector<32x2xf32>
    %128 = arith.subf %127, %126 : vector<32x2xf32>
    %c0_102 = arith.constant 0 : index
    %c0_103 = arith.constant 0 : index
    %129 = vector.load %arg20[%c0_102, %c0_103] : memref<128x32xbf16, #tpu.memory_space<vmem>>, vector<128x32xbf16>
    %cst_104 = arith.constant dense<0.000000e+00> : vector<128x2xf32>
    %130 = tpu.matmul %129, %124, %cst_104 {dimension_numbers = #tpu.dot_dimension_numbers<[1], [0], [0], [1], [0, 0, 1, 1], [], []>} : vector<128x32xbf16>, vector<32x2xf32>, vector<128x2xf32> -> vector<128x2xf32>
    %c0_105 = arith.constant 0 : index
    %c0_106 = arith.constant 0 : index
    %131 = vector.load %arg18[%c0_105, %c0_106] : memref<2x8xbf16, #tpu.memory_space<vmem>>, vector<2x8xbf16>
    %cst_107 = arith.constant dense<0.000000e+00> : vector<128x8xf32>
    %132 = tpu.matmul %130, %131, %cst_107 {dimension_numbers = #tpu.dot_dimension_numbers<[1], [0], [0], [1], [0, 0, 1, 1], [], []>} : vector<128x2xf32>, vector<2x8xbf16>, vector<128x8xf32> -> vector<128x8xf32>
    %c0_108 = arith.constant 0 : index
    %c0_109 = arith.constant 0 : index
    %133 = vector.load %arg20[%c0_108, %c0_109] : memref<128x32xbf16, #tpu.memory_space<vmem>>, vector<128x32xbf16>
    %cst_110 = arith.constant dense<0.000000e+00> : vector<128x2xf32>
    %134 = tpu.matmul %133, %128, %cst_110 {dimension_numbers = #tpu.dot_dimension_numbers<[1], [0], [0], [1], [0, 0, 1, 1], [], []>} : vector<128x32xbf16>, vector<32x2xf32>, vector<128x2xf32> -> vector<128x2xf32>
    %c0_111 = arith.constant 0 : index
    %c0_112 = arith.constant 0 : index
    %135 = vector.load %arg18[%c0_111, %c0_112] : memref<2x8xbf16, #tpu.memory_space<vmem>>, vector<2x8xbf16>
    %cst_113 = arith.constant dense<0.000000e+00> : vector<128x8xf32>
    %136 = tpu.matmul %134, %135, %cst_113 {dimension_numbers = #tpu.dot_dimension_numbers<[1], [0], [0], [1], [0, 0, 1, 1], [], []>} : vector<128x2xf32>, vector<2x8xbf16>, vector<128x8xf32> -> vector<128x8xf32>
    %137 = arith.mulf %132, %105 : vector<128x8xf32>
    %138 = arith.addf %137, %136 : vector<128x8xf32>
    %cst_114 = arith.constant 0.000000e+00 : f32
    %139 = vector.broadcast %cst_114 : f32 to vector<128x8xf32>
    %140 = arith.cmpf oge, %138, %139 : vector<128x8xf32>
    %cst_115 = arith.constant 2.000000e-01 : f32
    %141 = vector.broadcast %cst_115 : f32 to vector<128x8xf32>
    %142 = arith.mulf %141, %138 : vector<128x8xf32>
    %143 = arith.select %140, %138, %142 : vector<128x8xi1>, vector<128x8xf32>
    %144 = arith.truncf %143 : vector<128x8xf32> to vector<128x8xbf16>
    %c0_116 = arith.constant 0 : index
    %c0_117 = arith.constant 0 : index
    %c0_118 = arith.constant 0 : index
    %145 = vector.load %arg22[%c0_116, %c0_117, %c0_118] : memref<4x8x4xbf16, #tpu.memory_space<vmem>>, vector<1x8x4xbf16>
    %146 = vector.shape_cast %145 : vector<1x8x4xbf16> to vector<8x4xbf16>
    %cst_119 = arith.constant dense<0.000000e+00> : vector<128x4xf32>
    %147 = tpu.matmul %144, %146, %cst_119 {dimension_numbers = #tpu.dot_dimension_numbers<[1], [0], [0], [1], [0, 0, 1, 1], [], []>} : vector<128x8xbf16>, vector<8x4xbf16>, vector<128x4xf32> -> vector<128x4xf32>
    %148 = arith.truncf %147 : vector<128x4xf32> to vector<128x4xbf16>
    %c1_120 = arith.constant 1 : index
    %c0_121 = arith.constant 0 : index
    %c0_122 = arith.constant 0 : index
    %149 = vector.load %arg22[%c1_120, %c0_121, %c0_122] : memref<4x8x4xbf16, #tpu.memory_space<vmem>>, vector<1x8x4xbf16>
    %150 = vector.shape_cast %149 : vector<1x8x4xbf16> to vector<8x4xbf16>
    %cst_123 = arith.constant dense<0.000000e+00> : vector<128x4xf32>
    %151 = tpu.matmul %144, %150, %cst_123 {dimension_numbers = #tpu.dot_dimension_numbers<[1], [0], [0], [1], [0, 0, 1, 1], [], []>} : vector<128x8xbf16>, vector<8x4xbf16>, vector<128x4xf32> -> vector<128x4xf32>
    %152 = arith.truncf %151 : vector<128x4xf32> to vector<128x4xbf16>
    %c2_124 = arith.constant 2 : index
    %c0_125 = arith.constant 0 : index
    %c0_126 = arith.constant 0 : index
    %153 = vector.load %arg22[%c2_124, %c0_125, %c0_126] : memref<4x8x4xbf16, #tpu.memory_space<vmem>>, vector<1x8x4xbf16>
    %154 = vector.shape_cast %153 : vector<1x8x4xbf16> to vector<8x4xbf16>
    %cst_127 = arith.constant dense<0.000000e+00> : vector<128x4xf32>
    %155 = tpu.matmul %144, %154, %cst_127 {dimension_numbers = #tpu.dot_dimension_numbers<[1], [0], [0], [1], [0, 0, 1, 1], [], []>} : vector<128x8xbf16>, vector<8x4xbf16>, vector<128x4xf32> -> vector<128x4xf32>
    %156 = arith.truncf %155 : vector<128x4xf32> to vector<128x4xbf16>
    %c3_128 = arith.constant 3 : index
    %c0_129 = arith.constant 0 : index
    %c0_130 = arith.constant 0 : index
    %157 = vector.load %arg22[%c3_128, %c0_129, %c0_130] : memref<4x8x4xbf16, #tpu.memory_space<vmem>>, vector<1x8x4xbf16>
    %158 = vector.shape_cast %157 : vector<1x8x4xbf16> to vector<8x4xbf16>
    %cst_131 = arith.constant dense<0.000000e+00> : vector<128x4xf32>
    %159 = tpu.matmul %144, %158, %cst_131 {dimension_numbers = #tpu.dot_dimension_numbers<[1], [0], [0], [1], [0, 0, 1, 1], [], []>} : vector<128x8xbf16>, vector<8x4xbf16>, vector<128x4xf32> -> vector<128x4xf32>
    %160 = arith.truncf %159 : vector<128x4xf32> to vector<128x4xbf16>
    %161 = tpu.concatenate %148, %152, %156, %160 in 0 : vector<128x4xbf16>, vector<128x4xbf16>, vector<128x4xbf16>, vector<128x4xbf16> -> vector<512x4xbf16>
    %c0_132 = arith.constant 0 : index
    %c0_133 = arith.constant 0 : index
    %162 = vector.load %arg21[%c0_132, %c0_133] : memref<128x512xbf16, #tpu.memory_space<vmem>>, vector<128x512xbf16>
    %cst_134 = arith.constant dense<0.000000e+00> : vector<128x4xf32>
    %163 = tpu.matmul %162, %161, %cst_134 {dimension_numbers = #tpu.dot_dimension_numbers<[1], [0], [0], [1], [0, 0, 1, 1], [], []>} : vector<128x512xbf16>, vector<512x4xbf16>, vector<128x4xf32> -> vector<128x4xf32>
    %c0_135 = arith.constant 0 : index
    %c0_136 = arith.constant 0 : index
    %164 = vector.load %arg25[%c0_135, %c0_136] : memref<4x2xbf16, #tpu.memory_space<vmem>>, vector<4x2xbf16>
    %c0_137 = arith.constant 0 : index
    %c0_138 = arith.constant 0 : index
    %165 = vector.load %arg27[%c0_137, %c0_138] : memref<64x128xbf16, #tpu.memory_space<vmem>>, vector<64x128xbf16>
    %cst_139 = arith.constant dense<0.000000e+00> : vector<128x2xf32>
    %166 = tpu.matmul %163, %164, %cst_139 {dimension_numbers = #tpu.dot_dimension_numbers<[1], [0], [0], [1], [0, 0, 1, 1], [], []>} : vector<128x4xf32>, vector<4x2xbf16>, vector<128x2xf32> -> vector<128x2xf32>
    %cst_140 = arith.constant dense<0.000000e+00> : vector<64x2xf32>
    %167 = tpu.matmul %165, %166, %cst_140 {dimension_numbers = #tpu.dot_dimension_numbers<[1], [0], [0], [1], [0, 0, 1, 1], [], []>} : vector<64x128xbf16>, vector<128x2xf32>, vector<64x2xf32> -> vector<64x2xf32>
    %168 = arith.mulf %163, %163 : vector<128x4xf32>
    %cst_141 = arith.constant dense<0.000000e+00> : vector<128x2xf32>
    %169 = tpu.matmul %168, %164, %cst_141 {dimension_numbers = #tpu.dot_dimension_numbers<[1], [0], [0], [1], [0, 0, 1, 1], [], []>} : vector<128x4xf32>, vector<4x2xbf16>, vector<128x2xf32> -> vector<128x2xf32>
    %cst_142 = arith.constant dense<0.000000e+00> : vector<64x2xf32>
    %170 = tpu.matmul %165, %169, %cst_142 {dimension_numbers = #tpu.dot_dimension_numbers<[1], [0], [0], [1], [0, 0, 1, 1], [], []>} : vector<64x128xbf16>, vector<128x2xf32>, vector<64x2xf32> -> vector<64x2xf32>
    %cst_143 = arith.constant 2.500000e-01 : f32
    %171 = vector.broadcast %cst_143 : f32 to vector<64x2xf32>
    %172 = arith.mulf %167, %171 : vector<64x2xf32>
    %cst_144 = arith.constant 2.500000e-01 : f32
    %173 = vector.broadcast %cst_144 : f32 to vector<64x2xf32>
    %174 = arith.mulf %170, %173 : vector<64x2xf32>
    %175 = arith.mulf %172, %172 : vector<64x2xf32>
    %176 = arith.subf %174, %175 : vector<64x2xf32>
    %cst_145 = arith.constant 9.99999974E-6 : f32
    %177 = vector.broadcast %cst_145 : f32 to vector<64x2xf32>
    %178 = arith.addf %176, %177 : vector<64x2xf32>
    %179 = math.rsqrt %178 : vector<64x2xf32>
    %c0_146 = arith.constant 0 : index
    %c0_147 = arith.constant 0 : index
    %180 = vector.load %arg23[%c0_146, %c0_147] : memref<64x1xf32, #tpu.memory_space<vmem>>, vector<64x1xf32>
    %181 = vector.broadcast %180 : vector<64x1xf32> to vector<64x2xf32>
    %182 = arith.mulf %181, %179 : vector<64x2xf32>
    %c0_148 = arith.constant 0 : index
    %c0_149 = arith.constant 0 : index
    %183 = vector.load %arg24[%c0_148, %c0_149] : memref<64x1xf32, #tpu.memory_space<vmem>>, vector<64x1xf32>
    %184 = arith.mulf %182, %172 : vector<64x2xf32>
    %185 = vector.broadcast %183 : vector<64x1xf32> to vector<64x2xf32>
    %186 = arith.subf %185, %184 : vector<64x2xf32>
    %c0_150 = arith.constant 0 : index
    %c0_151 = arith.constant 0 : index
    %187 = vector.load %arg28[%c0_150, %c0_151] : memref<128x64xbf16, #tpu.memory_space<vmem>>, vector<128x64xbf16>
    %cst_152 = arith.constant dense<0.000000e+00> : vector<128x2xf32>
    %188 = tpu.matmul %187, %182, %cst_152 {dimension_numbers = #tpu.dot_dimension_numbers<[1], [0], [0], [1], [0, 0, 1, 1], [], []>} : vector<128x64xbf16>, vector<64x2xf32>, vector<128x2xf32> -> vector<128x2xf32>
    %c0_153 = arith.constant 0 : index
    %c0_154 = arith.constant 0 : index
    %189 = vector.load %arg26[%c0_153, %c0_154] : memref<2x4xbf16, #tpu.memory_space<vmem>>, vector<2x4xbf16>
    %cst_155 = arith.constant dense<0.000000e+00> : vector<128x4xf32>
    %190 = tpu.matmul %188, %189, %cst_155 {dimension_numbers = #tpu.dot_dimension_numbers<[1], [0], [0], [1], [0, 0, 1, 1], [], []>} : vector<128x2xf32>, vector<2x4xbf16>, vector<128x4xf32> -> vector<128x4xf32>
    %c0_156 = arith.constant 0 : index
    %c0_157 = arith.constant 0 : index
    %191 = vector.load %arg28[%c0_156, %c0_157] : memref<128x64xbf16, #tpu.memory_space<vmem>>, vector<128x64xbf16>
    %cst_158 = arith.constant dense<0.000000e+00> : vector<128x2xf32>
    %192 = tpu.matmul %191, %186, %cst_158 {dimension_numbers = #tpu.dot_dimension_numbers<[1], [0], [0], [1], [0, 0, 1, 1], [], []>} : vector<128x64xbf16>, vector<64x2xf32>, vector<128x2xf32> -> vector<128x2xf32>
    %c0_159 = arith.constant 0 : index
    %c0_160 = arith.constant 0 : index
    %193 = vector.load %arg26[%c0_159, %c0_160] : memref<2x4xbf16, #tpu.memory_space<vmem>>, vector<2x4xbf16>
    %cst_161 = arith.constant dense<0.000000e+00> : vector<128x4xf32>
    %194 = tpu.matmul %192, %193, %cst_161 {dimension_numbers = #tpu.dot_dimension_numbers<[1], [0], [0], [1], [0, 0, 1, 1], [], []>} : vector<128x2xf32>, vector<2x4xbf16>, vector<128x4xf32> -> vector<128x4xf32>
    %195 = arith.mulf %190, %163 : vector<128x4xf32>
    %196 = arith.addf %195, %194 : vector<128x4xf32>
    %cst_162 = arith.constant 0.000000e+00 : f32
    %197 = vector.broadcast %cst_162 : f32 to vector<128x4xf32>
    %198 = arith.cmpf oge, %196, %197 : vector<128x4xf32>
    %cst_163 = arith.constant 2.000000e-01 : f32
    %199 = vector.broadcast %cst_163 : f32 to vector<128x4xf32>
    %200 = arith.mulf %199, %196 : vector<128x4xf32>
    %201 = arith.select %198, %196, %200 : vector<128x4xi1>, vector<128x4xf32>
    %202 = arith.truncf %201 : vector<128x4xf32> to vector<128x4xbf16>
    %c0_164 = arith.constant 0 : index
    %c0_165 = arith.constant 0 : index
    %c0_166 = arith.constant 0 : index
    %203 = vector.load %arg30[%c0_164, %c0_165, %c0_166] : memref<4x4x2xbf16, #tpu.memory_space<vmem>>, vector<1x4x2xbf16>
    %204 = vector.shape_cast %203 : vector<1x4x2xbf16> to vector<4x2xbf16>
    %cst_167 = arith.constant dense<0.000000e+00> : vector<128x2xf32>
    %205 = tpu.matmul %202, %204, %cst_167 {dimension_numbers = #tpu.dot_dimension_numbers<[1], [0], [0], [1], [0, 0, 1, 1], [], []>} : vector<128x4xbf16>, vector<4x2xbf16>, vector<128x2xf32> -> vector<128x2xf32>
    %206 = arith.truncf %205 : vector<128x2xf32> to vector<128x2xbf16>
    %c1_168 = arith.constant 1 : index
    %c0_169 = arith.constant 0 : index
    %c0_170 = arith.constant 0 : index
    %207 = vector.load %arg30[%c1_168, %c0_169, %c0_170] : memref<4x4x2xbf16, #tpu.memory_space<vmem>>, vector<1x4x2xbf16>
    %208 = vector.shape_cast %207 : vector<1x4x2xbf16> to vector<4x2xbf16>
    %cst_171 = arith.constant dense<0.000000e+00> : vector<128x2xf32>
    %209 = tpu.matmul %202, %208, %cst_171 {dimension_numbers = #tpu.dot_dimension_numbers<[1], [0], [0], [1], [0, 0, 1, 1], [], []>} : vector<128x4xbf16>, vector<4x2xbf16>, vector<128x2xf32> -> vector<128x2xf32>
    %210 = arith.truncf %209 : vector<128x2xf32> to vector<128x2xbf16>
    %c2_172 = arith.constant 2 : index
    %c0_173 = arith.constant 0 : index
    %c0_174 = arith.constant 0 : index
    %211 = vector.load %arg30[%c2_172, %c0_173, %c0_174] : memref<4x4x2xbf16, #tpu.memory_space<vmem>>, vector<1x4x2xbf16>
    %212 = vector.shape_cast %211 : vector<1x4x2xbf16> to vector<4x2xbf16>
    %cst_175 = arith.constant dense<0.000000e+00> : vector<128x2xf32>
    %213 = tpu.matmul %202, %212, %cst_175 {dimension_numbers = #tpu.dot_dimension_numbers<[1], [0], [0], [1], [0, 0, 1, 1], [], []>} : vector<128x4xbf16>, vector<4x2xbf16>, vector<128x2xf32> -> vector<128x2xf32>
    %214 = arith.truncf %213 : vector<128x2xf32> to vector<128x2xbf16>
    %c3_176 = arith.constant 3 : index
    %c0_177 = arith.constant 0 : index
    %c0_178 = arith.constant 0 : index
    %215 = vector.load %arg30[%c3_176, %c0_177, %c0_178] : memref<4x4x2xbf16, #tpu.memory_space<vmem>>, vector<1x4x2xbf16>
    %216 = vector.shape_cast %215 : vector<1x4x2xbf16> to vector<4x2xbf16>
    %cst_179 = arith.constant dense<0.000000e+00> : vector<128x2xf32>
    %217 = tpu.matmul %202, %216, %cst_179 {dimension_numbers = #tpu.dot_dimension_numbers<[1], [0], [0], [1], [0, 0, 1, 1], [], []>} : vector<128x4xbf16>, vector<4x2xbf16>, vector<128x2xf32> -> vector<128x2xf32>
    %218 = arith.truncf %217 : vector<128x2xf32> to vector<128x2xbf16>
    %219 = tpu.concatenate %206, %210, %214, %218 in 0 : vector<128x2xbf16>, vector<128x2xbf16>, vector<128x2xbf16>, vector<128x2xbf16> -> vector<512x2xbf16>
    %c0_180 = arith.constant 0 : index
    %c0_181 = arith.constant 0 : index
    %220 = vector.load %arg29[%c0_180, %c0_181] : memref<1x512xbf16, #tpu.memory_space<vmem>>, vector<1x512xbf16>
    %cst_182 = arith.constant dense<0.000000e+00> : vector<1x2xf32>
    %221 = tpu.matmul %220, %219, %cst_182 {dimension_numbers = #tpu.dot_dimension_numbers<[1], [0], [0], [1], [0, 0, 1, 1], [], []>} : vector<1x512xbf16>, vector<512x2xbf16>, vector<1x2xf32> -> vector<1x2xf32>
    %c0_183 = arith.constant 0 : index
    %c0_184 = arith.constant 0 : index
    %222 = vector.load %arg31[%c0_183, %c0_184] : memref<1x1xf32, #tpu.memory_space<vmem>>, vector<1x1xf32>
    %223 = vector.broadcast %222 : vector<1x1xf32> to vector<1x2xf32>
    %224 = arith.addf %221, %223 : vector<1x2xf32>
    %c0_185 = arith.constant 0 : index
    %c0_186 = arith.constant 0 : index
    %225 = vector.load %arg32[%c0_185, %c0_186] : memref<1x2xf32, #tpu.memory_space<vmem>>, vector<1x2xf32>
    tpu.vector_store %arg32[%c0_185, %c0_186], %224 {strides = array<i32>} : memref<1x2xf32, #tpu.memory_space<vmem>>, vector<1x2xf32>,
    return
  }
  func.func @transform_0(%arg0: i32) -> (i32, i32) {
    %c0_i32 = arith.constant 0 : i32
    %c0_i32_0 = arith.constant 0 : i32
    %c0_i32_1 = arith.constant 0 : i32
    return %c0_i32, %c0_i32_0 : i32, i32
  }
  func.func @transform_1(%arg0: i32) -> (i32, i32) {
    %c0_i32 = arith.constant 0 : i32
    %c0_i32_0 = arith.constant 0 : i32
    %c0_i32_1 = arith.constant 0 : i32
    return %c0_i32, %c0_i32_0 : i32, i32
  }
  func.func @transform_2(%arg0: i32) -> (i32, i32, i32) {
    %c0_i32 = arith.constant 0 : i32
    %c0_i32_0 = arith.constant 0 : i32
    %c0_i32_1 = arith.constant 0 : i32
    %c0_i32_2 = arith.constant 0 : i32
    return %c0_i32, %c0_i32_0, %c0_i32_1 : i32, i32, i32
  }
  func.func @transform_3(%arg0: i32) -> (i32, i32) {
    %c0_i32 = arith.constant 0 : i32
    %c0_i32_0 = arith.constant 0 : i32
    %c0_i32_1 = arith.constant 0 : i32
    return %c0_i32, %c0_i32_0 : i32, i32
  }
  func.func @transform_4(%arg0: i32) -> (i32, i32) {
    %c0_i32 = arith.constant 0 : i32
    %c0_i32_0 = arith.constant 0 : i32
    %c0_i32_1 = arith.constant 0 : i32
    return %c0_i32, %c0_i32_0 : i32, i32
  }
  func.func @transform_5(%arg0: i32) -> (i32, i32, i32) {
    %c0_i32 = arith.constant 0 : i32
    %c0_i32_0 = arith.constant 0 : i32
    %c0_i32_1 = arith.constant 0 : i32
    %c0_i32_2 = arith.constant 0 : i32
    return %c0_i32, %c0_i32_0, %c0_i32_1 : i32, i32, i32
  }
  func.func @transform_6(%arg0: i32) -> (i32, i32) {
    %c0_i32 = arith.constant 0 : i32
    %c0_i32_0 = arith.constant 0 : i32
    %c0_i32_1 = arith.constant 0 : i32
    return %c0_i32, %c0_i32_0 : i32, i32
  }
  func.func @transform_7(%arg0: i32) -> (i32, i32) {
    %c0_i32 = arith.constant 0 : i32
    %c0_i32_0 = arith.constant 0 : i32
    %c0_i32_1 = arith.constant 0 : i32
    return %c0_i32, %c0_i32_0 : i32, i32
  }
  func.func @transform_8(%arg0: i32) -> (i32, i32) {
    %c0_i32 = arith.constant 0 : i32
    %c0_i32_0 = arith.constant 0 : i32
    %c0_i32_1 = arith.constant 0 : i32
    return %c0_i32, %c0_i32_0 : i32, i32
  }
  func.func @transform_9(%arg0: i32) -> (i32, i32) {
    %c0_i32 = arith.constant 0 : i32
    %c0_i32_0 = arith.constant 0 : i32
    %c0_i32_1 = arith.constant 0 : i32
    return %c0_i32, %c0_i32_0 : i32, i32
  }
  func.func @transform_10(%arg0: i32) -> (i32, i32) {
    %c0_i32 = arith.constant 0 : i32
    %c0_i32_0 = arith.constant 0 : i32
    %c0_i32_1 = arith.constant 0 : i32
    return %c0_i32, %c0_i32_0 : i32, i32
  }
  func.func @transform_11(%arg0: i32) -> (i32, i32) {
    %c0_i32 = arith.constant 0 : i32
    %c0_i32_0 = arith.constant 0 : i32
    %c0_i32_1 = arith.constant 0 : i32
    return %c0_i32, %c0_i32_0 : i32, i32
  }
  func.func @transform_12(%arg0: i32) -> (i32, i32) {
    %c0_i32 = arith.constant 0 : i32
    %c0_i32_0 = arith.constant 0 : i32
    %c0_i32_1 = arith.constant 0 : i32
    return %c0_i32, %c0_i32_0 : i32, i32
  }
  func.func @transform_13(%arg0: i32) -> (i32, i32, i32) {
    %c0_i32 = arith.constant 0 : i32
    %c0_i32_0 = arith.constant 0 : i32
    %c0_i32_1 = arith.constant 0 : i32
    %c0_i32_2 = arith.constant 0 : i32
    return %c0_i32, %c0_i32_0, %c0_i32_1 : i32, i32, i32
  }
  func.func @transform_14(%arg0: i32) -> (i32, i32) {
    %c0_i32 = arith.constant 0 : i32
    %c0_i32_0 = arith.constant 0 : i32
    %c0_i32_1 = arith.constant 0 : i32
    return %c0_i32, %c0_i32_0 : i32, i32
  }
  func.func @transform_15(%arg0: i32) -> (i32, i32) {
    %c0_i32 = arith.constant 0 : i32
    %c0_i32_0 = arith.constant 0 : i32
    %c0_i32_1 = arith.constant 0 : i32
    return %c0_i32, %c0_i32_0 : i32, i32
  }
  func.func @transform_16(%arg0: i32) -> (i32, i32) {
    %c0_i32 = arith.constant 0 : i32
    %c0_i32_0 = arith.constant 0 : i32
    %c0_i32_1 = arith.constant 0 : i32
    return %c0_i32, %c0_i32_0 : i32, i32
  }
  func.func @transform_17(%arg0: i32) -> (i32, i32) {
    %c0_i32 = arith.constant 0 : i32
    %c0_i32_0 = arith.constant 0 : i32
    %c0_i32_1 = arith.constant 0 : i32
    return %c0_i32, %c0_i32_0 : i32, i32
  }
  func.func @transform_18(%arg0: i32) -> (i32, i32) {
    %c0_i32 = arith.constant 0 : i32
    %c0_i32_0 = arith.constant 0 : i32
    %c0_i32_1 = arith.constant 0 : i32
    return %c0_i32, %c0_i32_0 : i32, i32
  }
  func.func @transform_19(%arg0: i32) -> (i32, i32) {
    %c0_i32 = arith.constant 0 : i32
    %c0_i32_0 = arith.constant 0 : i32
    %c0_i32_1 = arith.constant 0 : i32
    return %c0_i32, %c0_i32_0 : i32, i32
  }
  func.func @transform_20(%arg0: i32) -> (i32, i32) {
    %c0_i32 = arith.constant 0 : i32
    %c0_i32_0 = arith.constant 0 : i32
    %c0_i32_1 = arith.constant 0 : i32
    return %c0_i32, %c0_i32_0 : i32, i32
  }
  func.func @transform_21(%arg0: i32) -> (i32, i32, i32) {
    %c0_i32 = arith.constant 0 : i32
    %c0_i32_0 = arith.constant 0 : i32
    %c0_i32_1 = arith.constant 0 : i32
    %c0_i32_2 = arith.constant 0 : i32
    return %c0_i32, %c0_i32_0, %c0_i32_1 : i32, i32, i32
  }
  func.func @transform_22(%arg0: i32) -> (i32, i32) {
    %c0_i32 = arith.constant 0 : i32
    %c0_i32_0 = arith.constant 0 : i32
    %c0_i32_1 = arith.constant 0 : i32
    return %c0_i32, %c0_i32_0 : i32, i32
  }
  func.func @transform_23(%arg0: i32) -> (i32, i32) {
    %c0_i32 = arith.constant 0 : i32
    %c0_i32_0 = arith.constant 0 : i32
    %c0_i32_1 = arith.constant 0 : i32
    return %c0_i32, %c0_i32_0 : i32, i32
  }
  func.func @transform_24(%arg0: i32) -> (i32, i32) {
    %c0_i32 = arith.constant 0 : i32
    %c0_i32_0 = arith.constant 0 : i32
    %c0_i32_1 = arith.constant 0 : i32
    return %c0_i32, %c0_i32_0 : i32, i32
  }
  func.func @transform_25(%arg0: i32) -> (i32, i32) {
    %c0_i32 = arith.constant 0 : i32
    %c0_i32_0 = arith.constant 0 : i32
    %c0_i32_1 = arith.constant 0 : i32
    return %c0_i32, %c0_i32_0 : i32, i32
  }
  func.func @transform_26(%arg0: i32) -> (i32, i32) {
    %c0_i32 = arith.constant 0 : i32
    %c0_i32_0 = arith.constant 0 : i32
    %c0_i32_1 = arith.constant 0 : i32
    return %c0_i32, %c0_i32_0 : i32, i32
  }
  func.func @transform_27(%arg0: i32) -> (i32, i32) {
    %c0_i32 = arith.constant 0 : i32
    %c0_i32_0 = arith.constant 0 : i32
    %c0_i32_1 = arith.constant 0 : i32
    return %c0_i32, %c0_i32_0 : i32, i32
  }
  func.func @transform_28(%arg0: i32) -> (i32, i32) {
    %c0_i32 = arith.constant 0 : i32
    %c0_i32_0 = arith.constant 0 : i32
    %c0_i32_1 = arith.constant 0 : i32
    return %c0_i32, %c0_i32_0 : i32, i32
  }
  func.func @transform_29(%arg0: i32) -> (i32, i32, i32) {
    %c0_i32 = arith.constant 0 : i32
    %c0_i32_0 = arith.constant 0 : i32
    %c0_i32_1 = arith.constant 0 : i32
    %c0_i32_2 = arith.constant 0 : i32
    return %c0_i32, %c0_i32_0, %c0_i32_1 : i32, i32, i32
  }
  func.func @transform_30(%arg0: i32) -> (i32, i32) {
    %c0_i32 = arith.constant 0 : i32
    %c0_i32_0 = arith.constant 0 : i32
    %c0_i32_1 = arith.constant 0 : i32
    return %c0_i32, %c0_i32_0 : i32, i32
  }
  func.func @transform_31(%arg0: i32) -> (i32, i32) {
    %c0_i32 = arith.constant 0 : i32
    %c0_i32_0 = arith.constant 0 : i32
    %c0_i32_1 = arith.constant 0 : i32
    return %c0_i32, %c0_i32_0 : i32, i32
  }
}

</mosaic_0001>

<llo_original>
// kernel: discriminator_forward_pallas.1
$region0: #{discriminator_forward_pallas.1}
  #allocation0 [shape = 'u32[]', space=smem, size = 0x4, offset = 0x4, fixed_abs, tag = 'smem constant byte address 0x4 - core index']
  #allocation1 [shape = 'u32[144,128]{1,0:T(1,128)}', space=vmem, size = 0x12000, scoped, tag = 'internal scratch']
  #allocation2 [shape = 'f32[1,1]{1,0:T(1,128)S(1)}', space=vmem, size = 0x200, scoped, tag = 'scoped memory for discriminator_forward_pallas.1']
  %s0 = inlined_call_operand.smem [shape: u32[32], index: -1, kind: input, shape index: {}]
  %s1 = sld [smem:[%s0]]
  %s2 = scalar_lea.smem %s0, 1
  %s3 = sld [smem:[%s2]]
  %s4 = scalar_lea.smem %s0, 2
  %s5 = sld [smem:[%s4]]
  %s6 = scalar_lea.smem %s0, 3
  %s7 = sld [smem:[%s6]]
  %s8 = scalar_lea.smem %s0, 4
  %s9 = sld [smem:[%s8]]
  %s10 = scalar_lea.smem %s0, 5
  %s11 = sld [smem:[%s10]]
  %s12 = scalar_lea.smem %s0, 6
  %s13 = sld [smem:[%s12]]
  %s14 = scalar_lea.smem %s0, 7
  %s15 = sld [smem:[%s14]]
  %s16 = scalar_lea.smem %s0, 8
  %s17 = sld [smem:[%s16]]
  %s18 = scalar_lea.smem %s0, 9
  %s19 = sld [smem:[%s18]]
  %s20 = scalar_lea.smem %s0, 10
  %s21 = sld [smem:[%s20]]
  %s22 = scalar_lea.smem %s0, 11
  %s23 = sld [smem:[%s22]]
  %s24 = scalar_lea.smem %s0, 12
  %s25 = sld [smem:[%s24]]
  %s26 = scalar_lea.smem %s0, 13
  %s27 = sld [smem:[%s26]]
  %s28 = scalar_lea.smem %s0, 14
  %s29 = sld [smem:[%s28]]
  %s30 = scalar_lea.smem %s0, 15
  %s31 = sld [smem:[%s30]]
  %s32 = scalar_lea.smem %s0, 16
  %s33 = sld [smem:[%s32]]
  %s34 = scalar_lea.smem %s0, 17
  %s35 = sld [smem:[%s34]]
  %s36 = scalar_lea.smem %s0, 18
  %s37 = sld [smem:[%s36]]
  %s38 = scalar_lea.smem %s0, 19
  %s39 = sld [smem:[%s38]]
  %s40 = scalar_lea.smem %s0, 20
  %s41 = sld [smem:[%s40]]
  %s42 = scalar_lea.smem %s0, 21
  %s43 = sld [smem:[%s42]]
  %s44 = scalar_lea.smem %s0, 22
  %s45 = sld [smem:[%s44]]
  %s46 = scalar_lea.smem %s0, 23
  %s47 = sld [smem:[%s46]]
  %s48 = scalar_lea.smem %s0, 24
  %s49 = sld [smem:[%s48]]
  %s50 = scalar_lea.smem %s0, 25
  %s51 = sld [smem:[%s50]]
  %s52 = scalar_lea.smem %s0, 26
  %s53 = sld [smem:[%s52]]
  %s54 = scalar_lea.smem %s0, 27
  %s55 = sld [smem:[%s54]]
  %s56 = scalar_lea.smem %s0, 28
  %s57 = sld [smem:[%s56]]
  %s58 = scalar_lea.smem %s0, 29
  %s59 = sld [smem:[%s58]]
  %s60 = scalar_lea.smem %s0, 30
  %s61 = sld [smem:[%s60]]
  %s62 = scalar_lea.smem %s0, 31
  %s63 = sld [smem:[%s62]]
  %s64 = sld [smem:[#allocation0]]
  $region134: #{discriminator_forward_pallas.1} parent=0
    _
  %s66 = ssub.s32 1, %s64
  %s67 = scalar_select 0, %s66, %s64
  %v68 = vstv %s61
  %69 = vst [vmem:[#allocation2] sm:$0x1] %v68
  $region1: #{discriminator_forward_pallas.1} parent=0
    #allocation3 [shape = 'u8[512]{0}', space=vmem, size = 0x400, scoped, tag = 'output window, operand 0, single buffered']
    #allocation4 [shape = 's32[1]{0}', space=sflag, size = 0x4, scoped, tag = 'scoped memory for discriminator_forward_pallas.1']
    %70 = vsyncpa [#allocation4], 0
    // Predicated region
    $region2: #{discriminator_forward_pallas.1} parent=1 // pred_check
      _
    $region3: #{discriminator_forward_pallas.1} parent=1 // pred_check_branch
      %72 = sbr.rel (0) target = $region5
    $region4: #{discriminator_forward_pallas.1} parent=1 // pred_region
      _
    $region5: #{discriminator_forward_pallas.1} parent=1 // pred_fallthru
      _
    // Predicated region
    $region6: #{discriminator_forward_pallas.1} parent=1 // pred_check
      _
    $region7: #{discriminator_forward_pallas.1} parent=1 // pred_check_branch
      %74 = sbr.rel (0) target = $region9
    $region8: #{discriminator_forward_pallas.1} parent=1 // pred_region
      _
    $region9: #{discriminator_forward_pallas.1} parent=1 // pred_fallthru
      _
    // Predicated region
    $region10: #{discriminator_forward_pallas.1} parent=1 // pred_check
      _
    $region11: #{discriminator_forward_pallas.1} parent=1 // pred_check_branch
      %76 = sbr.rel (0) target = $region13
    $region12: #{discriminator_forward_pallas.1} parent=1 // pred_region
      _
    $region13: #{discriminator_forward_pallas.1} parent=1 // pred_fallthru
      _
    // Predicated region
    $region14: #{discriminator_forward_pallas.1} parent=1 // pred_check
      _
    $region15: #{discriminator_forward_pallas.1} parent=1 // pred_check_branch
      %78 = sbr.rel (0) target = $region17
    $region16: #{discriminator_forward_pallas.1} parent=1 // pred_region
      _
    $region17: #{discriminator_forward_pallas.1} parent=1 // pred_fallthru
      _
    // Predicated region
    $region18: #{discriminator_forward_pallas.1} parent=1 // pred_check
      _
    $region19: #{discriminator_forward_pallas.1} parent=1 // pred_check_branch
      %80 = sbr.rel (0) target = $region21
    $region20: #{discriminator_forward_pallas.1} parent=1 // pred_region
      _
    $region21: #{discriminator_forward_pallas.1} parent=1 // pred_fallthru
      _
    // Predicated region
    $region22: #{discriminator_forward_pallas.1} parent=1 // pred_check
      _
    $region23: #{discriminator_forward_pallas.1} parent=1 // pred_check_branch
      %82 = sbr.rel (0) target = $region25
    $region24: #{discriminator_forward_pallas.1} parent=1 // pred_region
      _
    $region25: #{discriminator_forward_pallas.1} parent=1 // pred_fallthru
      _
    // Predicated region
    $region26: #{discriminator_forward_pallas.1} parent=1 // pred_check
      _
    $region27: #{discriminator_forward_pallas.1} parent=1 // pred_check_branch
      %84 = sbr.rel (0) target = $region29
    $region28: #{discriminator_forward_pallas.1} parent=1 // pred_region
      _
    $region29: #{discriminator_forward_pallas.1} parent=1 // pred_fallthru
      _
    // Predicated region
    $region30: #{discriminator_forward_pallas.1} parent=1 // pred_check
      _
    $region31: #{discriminator_forward_pallas.1} parent=1 // pred_check_branch
      %86 = sbr.rel (0) target = $region33
    $region32: #{discriminator_forward_pallas.1} parent=1 // pred_region
      _
    $region33: #{discriminator_forward_pallas.1} parent=1 // pred_fallthru
      _
    // Predicated region
    $region34: #{discriminator_forward_pallas.1} parent=1 // pred_check
      _
    $region35: #{discriminator_forward_pallas.1} parent=1 // pred_check_branch
      %88 = sbr.rel (0) target = $region37
    $region36: #{discriminator_forward_pallas.1} parent=1 // pred_region
      _
    $region37: #{discriminator_forward_pallas.1} parent=1 // pred_fallthru
      _
    // Predicated region
    $region38: #{discriminator_forward_pallas.1} parent=1 // pred_check
      _
    $region39: #{discriminator_forward_pallas.1} parent=1 // pred_check_branch
      %90 = sbr.rel (0) target = $region41
    $region40: #{discriminator_forward_pallas.1} parent=1 // pred_region
      _
    $region41: #{discriminator_forward_pallas.1} parent=1 // pred_fallthru
      _
    // Predicated region
    $region42: #{discriminator_forward_pallas.1} parent=1 // pred_check
      _
    $region43: #{discriminator_forward_pallas.1} parent=1 // pred_check_branch
      %92 = sbr.rel (0) target = $region45
    $region44: #{discriminator_forward_pallas.1} parent=1 // pred_region
      _
    $region45: #{discriminator_forward_pallas.1} parent=1 // pred_fallthru
      _
    // Predicated region
    $region46: #{discriminator_forward_pallas.1} parent=1 // pred_check
      _
    $region47: #{discriminator_forward_pallas.1} parent=1 // pred_check_branch
      %94 = sbr.rel (0) target = $region49
    $region48: #{discriminator_forward_pallas.1} parent=1 // pred_region
      _
    $region49: #{discriminator_forward_pallas.1} parent=1 // pred_fallthru
      _
    // Predicated region
    $region50: #{discriminator_forward_pallas.1} parent=1 // pred_check
      _
    $region51: #{discriminator_forward_pallas.1} parent=1 // pred_check_branch
      %96 = sbr.rel (0) target = $region53
    $region52: #{discriminator_forward_pallas.1} parent=1 // pred_region
      _
    $region53: #{discriminator_forward_pallas.1} parent=1 // pred_fallthru
      _
    // Predicated region
    $region54: #{discriminator_forward_pallas.1} parent=1 // pred_check
      _
    $region55: #{discriminator_forward_pallas.1} parent=1 // pred_check_branch
      %98 = sbr.rel (0) target = $region57
    $region56: #{discriminator_forward_pallas.1} parent=1 // pred_region
      _
    $region57: #{discriminator_forward_pallas.1} parent=1 // pred_fallthru
      _
    // Predicated region
    $region58: #{discriminator_forward_pallas.1} parent=1 // pred_check
      _
    $region59: #{discriminator_forward_pallas.1} parent=1 // pred_check_branch
      %100 = sbr.rel (0) target = $region61
    $region60: #{discriminator_forward_pallas.1} parent=1 // pred_region
      _
    $region61: #{discriminator_forward_pallas.1} parent=1 // pred_fallthru
      _
    // Predicated region
    $region62: #{discriminator_forward_pallas.1} parent=1 // pred_check
      _
    $region63: #{discriminator_forward_pallas.1} parent=1 // pred_check_branch
      %102 = sbr.rel (0) target = $region65
    $region64: #{discriminator_forward_pallas.1} parent=1 // pred_region
      _
    $region65: #{discriminator_forward_pallas.1} parent=1 // pred_fallthru
      _
    // Predicated region
    $region66: #{discriminator_forward_pallas.1} parent=1 // pred_check
      _
    $region67: #{discriminator_forward_pallas.1} parent=1 // pred_check_branch
      %104 = sbr.rel (0) target = $region69
    $region68: #{discriminator_forward_pallas.1} parent=1 // pred_region
      _
    $region69: #{discriminator_forward_pallas.1} parent=1 // pred_fallthru
      _
    // Predicated region
    $region70: #{discriminator_forward_pallas.1} parent=1 // pred_check
      _
    $region71: #{discriminator_forward_pallas.1} parent=1 // pred_check_branch
      %106 = sbr.rel (0) target = $region73
    $region72: #{discriminator_forward_pallas.1} parent=1 // pred_region
      _
    $region73: #{discriminator_forward_pallas.1} parent=1 // pred_fallthru
      _
    // Predicated region
    $region74: #{discriminator_forward_pallas.1} parent=1 // pred_check
      _
    $region75: #{discriminator_forward_pallas.1} parent=1 // pred_check_branch
      %108 = sbr.rel (0) target = $region77
    $region76: #{discriminator_forward_pallas.1} parent=1 // pred_region
      _
    $region77: #{discriminator_forward_pallas.1} parent=1 // pred_fallthru
      _
    // Predicated region
    $region78: #{discriminator_forward_pallas.1} parent=1 // pred_check
      _
    $region79: #{discriminator_forward_pallas.1} parent=1 // pred_check_branch
      %110 = sbr.rel (0) target = $region81
    $region80: #{discriminator_forward_pallas.1} parent=1 // pred_region
      _
    $region81: #{discriminator_forward_pallas.1} parent=1 // pred_fallthru
      _
    // Predicated region
    $region82: #{discriminator_forward_pallas.1} parent=1 // pred_check
      _
    $region83: #{discriminator_forward_pallas.1} parent=1 // pred_check_branch
      %112 = sbr.rel (0) target = $region85
    $region84: #{discriminator_forward_pallas.1} parent=1 // pred_region
      _
    $region85: #{discriminator_forward_pallas.1} parent=1 // pred_fallthru
      _
    // Predicated region
    $region86: #{discriminator_forward_pallas.1} parent=1 // pred_check
      _
    $region87: #{discriminator_forward_pallas.1} parent=1 // pred_check_branch
      %114 = sbr.rel (0) target = $region89
    $region88: #{discriminator_forward_pallas.1} parent=1 // pred_region
      _
    $region89: #{discriminator_forward_pallas.1} parent=1 // pred_fallthru
      _
    // Predicated region
    $region90: #{discriminator_forward_pallas.1} parent=1 // pred_check
      _
    $region91: #{discriminator_forward_pallas.1} parent=1 // pred_check_branch
      %116 = sbr.rel (0) target = $region93
    $region92: #{discriminator_forward_pallas.1} parent=1 // pred_region
      _
    $region93: #{discriminator_forward_pallas.1} parent=1 // pred_fallthru
      _
    // Predicated region
    $region94: #{discriminator_forward_pallas.1} parent=1 // pred_check
      _
    $region95: #{discriminator_forward_pallas.1} parent=1 // pred_check_branch
      %118 = sbr.rel (0) target = $region97
    $region96: #{discriminator_forward_pallas.1} parent=1 // pred_region
      _
    $region97: #{discriminator_forward_pallas.1} parent=1 // pred_fallthru
      _
    // Predicated region
    $region98: #{discriminator_forward_pallas.1} parent=1 // pred_check
      _
    $region99: #{discriminator_forward_pallas.1} parent=1 // pred_check_branch
      %120 = sbr.rel (0) target = $region101
    $region100: #{discriminator_forward_pallas.1} parent=1 // pred_region
      _
    $region101: #{discriminator_forward_pallas.1} parent=1 // pred_fallthru
      _
    // Predicated region
    $region102: #{discriminator_forward_pallas.1} parent=1 // pred_check
      _
    $region103: #{discriminator_forward_pallas.1} parent=1 // pred_check_branch
      %122 = sbr.rel (0) target = $region105
    $region104: #{discriminator_forward_pallas.1} parent=1 // pred_region
      _
    $region105: #{discriminator_forward_pallas.1} parent=1 // pred_fallthru
      _
    // Predicated region
    $region106: #{discriminator_forward_pallas.1} parent=1 // pred_check
      _
    $region107: #{discriminator_forward_pallas.1} parent=1 // pred_check_branch
      %124 = sbr.rel (0) target = $region109
    $region108: #{discriminator_forward_pallas.1} parent=1 // pred_region
      _
    $region109: #{discriminator_forward_pallas.1} parent=1 // pred_fallthru
      _
    // Predicated region
    $region110: #{discriminator_forward_pallas.1} parent=1 // pred_check
      _
    $region111: #{discriminator_forward_pallas.1} parent=1 // pred_check_branch
      %126 = sbr.rel (0) target = $region113
    $region112: #{discriminator_forward_pallas.1} parent=1 // pred_region
      _
    $region113: #{discriminator_forward_pallas.1} parent=1 // pred_fallthru
      _
    // Predicated region
    $region114: #{discriminator_forward_pallas.1} parent=1 // pred_check
      _
    $region115: #{discriminator_forward_pallas.1} parent=1 // pred_check_branch
      %128 = sbr.rel (0) target = $region117
    $region116: #{discriminator_forward_pallas.1} parent=1 // pred_region
      _
    $region117: #{discriminator_forward_pallas.1} parent=1 // pred_fallthru
      _
    // Predicated region
    $region118: #{discriminator_forward_pallas.1} parent=1 // pred_check
      _
    $region119: #{discriminator_forward_pallas.1} parent=1 // pred_check_branch
      %130 = sbr.rel (0) target = $region121
    $region120: #{discriminator_forward_pallas.1} parent=1 // pred_region
      _
    $region121: #{discriminator_forward_pallas.1} parent=1 // pred_fallthru
      _
    // Predicated region
    $region122: #{discriminator_forward_pallas.1} parent=1 // pred_check
      _
    $region123: #{discriminator_forward_pallas.1} parent=1 // pred_check_branch
      %132 = sbr.rel (0) target = $region125
    $region124: #{discriminator_forward_pallas.1} parent=1 // pred_region
      _
    $region125: #{discriminator_forward_pallas.1} parent=1 // pred_fallthru
      _
    %v134 = vld [vmem:[%s1] sm:$0xf]
    %v135 = vld [vmem:[%s1 + $0x4] sm:$0xf]
    %v136 = vld [vmem:[%s1 + $0x8] sm:$0xf]
    %v137 = vld [vmem:[%s1 + $0xc] sm:$0xf]
    %v138 = vld [vmem:[%s1 + $0x10] sm:$0xf]
    %v139 = vld [vmem:[%s1 + $0x14] sm:$0xf]
    %v140 = vld [vmem:[%s1 + $0x18] sm:$0xf]
    %v141 = vld [vmem:[%s1 + $0x1c] sm:$0xf]
    %v142 = vld [vmem:[%s1 + $0x20] sm:$0xf]
    %v143 = vld [vmem:[%s1 + $0x24] sm:$0xf]
    %v144 = vld [vmem:[%s1 + $0x28] sm:$0xf]
    %v145 = vld [vmem:[%s1 + $0x2c] sm:$0xf]
    %v146 = vld [vmem:[%s5] sm:$0xf]
    %v147 = vld [vmem:[%s5 + $0x4] sm:$0xf]
    %v148 = vld [vmem:[%s5 + $0x8] sm:$0xf]
    %v149 = vld [vmem:[%s5 + $0xc] sm:$0xf]
    %v150 = vld [vmem:[%s5 + $0x10] sm:$0xf]
    %v151 = vld [vmem:[%s5 + $0x14] sm:$0xf]
    %v152 = vld [vmem:[%s5 + $0x18] sm:$0xf]
    %v153 = vld [vmem:[%s5 + $0x1c] sm:$0xf]
    %v154 = vld [vmem:[%s5 + $0x20] sm:$0xf]
    %v155 = vld [vmem:[%s5 + $0x24] sm:$0xf]
    %v156 = vld [vmem:[%s5 + $0x28] sm:$0xf]
    %v157 = vld [vmem:[%s5 + $0x2c] sm:$0xf]
    %v158 = vld [vmem:[%s5 + $0x30] sm:$0xf]
    %v159 = vld [vmem:[%s5 + $0x34] sm:$0xf]
    %v160 = vld [vmem:[%s5 + $0x38] sm:$0xf]
    %v161 = vld [vmem:[%s5 + $0x3c] sm:$0xf]
    %v174 = vunpack.c.l.b16 %v134
    %v175 = vunpack.c.l.b16 %v135
    %v176 = vunpack.c.l.b16 %v136
    %v177 = vunpack.c.l.b16 %v137
    %v178 = vunpack.c.l.b16 %v138
    %v179 = vunpack.c.l.b16 %v139
    %v180 = vunpack.c.l.b16 %v140
    %v181 = vunpack.c.l.b16 %v141
    %v182 = vunpack.c.l.b16 %v142
    %v183 = vunpack.c.l.b16 %v143
    %v184 = vunpack.c.l.b16 %v144
    %v185 = vunpack.c.l.b16 %v145
    %v186 = vpack.c.b16 %v175, %v174
    %v187 = vpack.c.b16 %v177, %v176
    %v188 = vpack.c.b16 %v179, %v178
    %v189 = vpack.c.b16 %v181, %v180
    %v190 = vpack.c.b16 %v183, %v182
    %v191 = vpack.c.b16 %v185, %v184
    %v214 = vunpack.c.l.b16 %v146
    %v215 = vunpack.c.l.b16 %v147
    %v216 = vunpack.c.l.b16 %v148
    %v217 = vunpack.c.l.b16 %v149
    %v218 = vunpack.c.l.b16 %v150
    %v219 = vunpack.c.l.b16 %v151
    %v220 = vunpack.c.l.b16 %v152
    %v221 = vunpack.c.l.b16 %v153
    %v222 = vunpack.c.l.b16 %v154
    %v223 = vunpack.c.l.b16 %v155
    %v224 = vunpack.c.l.b16 %v156
    %v225 = vunpack.c.l.b16 %v157
    %v226 = vunpack.c.l.b16 %v158
    %v227 = vunpack.c.l.b16 %v159
    %v228 = vunpack.c.l.b16 %v160
    %v229 = vunpack.c.l.b16 %v161
    %v230 = vpack.c.b16 %v215, %v214
    %v231 = vpack.c.b16 %v217, %v216
    %v232 = vpack.c.b16 %v219, %v218
    %v233 = vpack.c.b16 %v221, %v220
    %v234 = vpack.c.b16 %v223, %v222
    %v235 = vpack.c.b16 %v225, %v224
    %v236 = vpack.c.b16 %v227, %v226
    %v237 = vpack.c.b16 %v229, %v228
    %246 = vmatprep.subr.bf16.mxu0 0
    %247 = vmatpush1.bf16.msra.mxu0 %v237
    %248 = vmatprep.subr.bf16.mxu0 0
    %249 = vmatpush1.bf16.msra.mxu0 %v236
    %250 = vmatprep.subr.bf16.mxu0 0
    %251 = vmatpush1.bf16.msra.mxu0 %v235
    %252 = vmatprep.subr.bf16.mxu0 0
    %253 = vmatpush1.bf16.msra.mxu0 %v234
    %254 = vmatprep.subr.bf16.mxu0 0
    %255 = vmatpush1.bf16.msra.mxu0 %v233
    %256 = vmatprep.subr.bf16.mxu0 0
    %257 = vmatpush1.bf16.msra.mxu0 %v232
    %258 = vmatprep.subr.bf16.mxu0 0
    %259 = vmatpush1.bf16.msra.mxu0 %v231
    %260 = vmatprep.subr.bf16.mxu0 0
    %261 = vmatpush1.bf16.msra.mxu0 %v230
    %262 = vmatprep.subr.bf16.mxu0 0
    %263 = vmatpush2.bf16.msra.mxu0 0
    %264 = vmatprep.subr.bf16.mxu0 0
    %265 = vmatpush2.bf16.msra.mxu0 0
    %266 = vmatprep.subr.bf16.mxu0 0
    %267 = vmatpush2.bf16.msra.mxu0 0
    %268 = vmatprep.subr.bf16.mxu0 0
    %269 = vmatpush2.bf16.msra.mxu0 0
    %270 = vmatprep.subr.bf16.mxu0 0
    %271 = vmatpush2.bf16.msra.mxu0 0
    %272 = vmatprep.subr.bf16.mxu0 0
    %273 = vmatpush2.bf16.msra.mxu0 0
    %274 = vmatprep.subr.bf16.mxu0 0
    %275 = vmatpush2.bf16.msra.mxu0 0
    %276 = vmatprep.subr.bf16.mxu0 0
    %277 = vmatpush2.bf16.msra.mxu0 0
    %278 = vmatprep.mubr.bf16.mxu0 0
    %279 = vmatmul.mubr.bf16.gmra.mxu0 %v186
    %v280 = vpop.f32.mrf.mxu0
    %v281 = vadd.f32 0.0, %v280
    %v282 = vpop.f32.mrf.mxu0
    %v283 = vpop.f32.mrf.mxu0
    %v284 = vadd.f32 0.0, %v283
    %v285 = vpop.f32.mrf.mxu0
    %286 = vmatprep.mubr.bf16.mxu0 0
    %287 = vmatmul.mubr.bf16.gmra.mxu0 %v187
    %v288 = vpop.f32.mrf.mxu0
    %v289 = vadd.f32 0.0, %v288
    %v290 = vpop.f32.mrf.mxu0
    %v291 = vpop.f32.mrf.mxu0
    %v292 = vadd.f32 0.0, %v291
    %v293 = vpop.f32.mrf.mxu0
    %294 = vmatprep.mubr.bf16.mxu0 0
    %295 = vmatmul.mubr.bf16.gmra.mxu0 %v188
    %v296 = vpop.f32.mrf.mxu0
    %v297 = vadd.f32 0.0, %v296
    %v298 = vpop.f32.mrf.mxu0
    %v299 = vpop.f32.mrf.mxu0
    %v300 = vadd.f32 0.0, %v299
    %v301 = vpop.f32.mrf.mxu0
    %302 = vmatprep.mubr.bf16.mxu0 0
    %303 = vmatmul.mubr.bf16.gmra.mxu0 %v189
    %v304 = vpop.f32.mrf.mxu0
    %v305 = vadd.f32 0.0, %v304
    %v306 = vpop.f32.mrf.mxu0
    %v307 = vpop.f32.mrf.mxu0
    %v308 = vadd.f32 0.0, %v307
    %v309 = vpop.f32.mrf.mxu0
    %310 = vmatprep.mubr.bf16.mxu0 0
    %311 = vmatmul.mubr.bf16.gmra.mxu0 %v190
    %v312 = vpop.f32.mrf.mxu0
    %v313 = vadd.f32 0.0, %v312
    %v314 = vpop.f32.mrf.mxu0
    %v315 = vpop.f32.mrf.mxu0
    %v316 = vadd.f32 0.0, %v315
    %v317 = vpop.f32.mrf.mxu0
    %318 = vmatprep.mubr.bf16.mxu0 0
    %319 = vmatmul.mubr.bf16.gmra.mxu0 %v191
    %v320 = vpop.f32.mrf.mxu0
    %v321 = vadd.f32 0.0, %v320
    %v322 = vpop.f32.mrf.mxu0
    %v323 = vpop.f32.mrf.mxu0
    %v324 = vadd.f32 0.0, %v323
    %v325 = vpop.f32.mrf.mxu0
    %326 = vdwg.mxu0
    %v327 = vpack.c.bf16 %v284, %v281
    %v328 = vpack.c.bf16 %v292, %v289
    %v329 = vpack.c.bf16 %v300, %v297
    %v330 = vpack.c.bf16 %v308, %v305
    %v331 = vpack.c.bf16 %v316, %v313
    %v332 = vpack.c.bf16 %v324, %v321
    %s333 = scalar_lea.vmem %s5, 64
    %v334 = vld [vmem:[%s333] sm:$0xf]
    %v335 = vld [vmem:[%s333 + $0x4] sm:$0xf]
    %v336 = vld [vmem:[%s333 + $0x8] sm:$0xf]
    %v337 = vld [vmem:[%s333 + $0xc] sm:$0xf]
    %v338 = vld [vmem:[%s333 + $0x10] sm:$0xf]
    %v339 = vld [vmem:[%s333 + $0x14] sm:$0xf]
    %v340 = vld [vmem:[%s333 + $0x18] sm:$0xf]
    %v341 = vld [vmem:[%s333 + $0x1c] sm:$0xf]
    %v342 = vld [vmem:[%s333 + $0x20] sm:$0xf]
    %v343 = vld [vmem:[%s333 + $0x24] sm:$0xf]
    %v344 = vld [vmem:[%s333 + $0x28] sm:$0xf]
    %v345 = vld [vmem:[%s333 + $0x2c] sm:$0xf]
    %v346 = vld [vmem:[%s333 + $0x30] sm:$0xf]
    %v347 = vld [vmem:[%s333 + $0x34] sm:$0xf]
    %v348 = vld [vmem:[%s333 + $0x38] sm:$0xf]
    %v349 = vld [vmem:[%s333 + $0x3c] sm:$0xf]
    %v366 = vunpack.c.l.b16 %v334
    %v367 = vunpack.c.l.b16 %v335
    %v368 = vunpack.c.l.b16 %v336
    %v369 = vunpack.c.l.b16 %v337
    %v370 = vunpack.c.l.b16 %v338
    %v371 = vunpack.c.l.b16 %v339
    %v372 = vunpack.c.l.b16 %v340
    %v373 = vunpack.c.l.b16 %v341
    %v374 = vunpack.c.l.b16 %v342
    %v375 = vunpack.c.l.b16 %v343
    %v376 = vunpack.c.l.b16 %v344
    %v377 = vunpack.c.l.b16 %v345
    %v378 = vunpack.c.l.b16 %v346
    %v379 = vunpack.c.l.b16 %v347
    %v380 = vunpack.c.l.b16 %v348
    %v381 = vunpack.c.l.b16 %v349
    %v382 = vpack.c.b16 %v367, %v366
    %v383 = vpack.c.b16 %v369, %v368
    %v384 = vpack.c.b16 %v371, %v370
    %v385 = vpack.c.b16 %v373, %v372
    %v386 = vpack.c.b16 %v375, %v374
    %v387 = vpack.c.b16 %v377, %v376
    %v388 = vpack.c.b16 %v379, %v378
    %v389 = vpack.c.b16 %v381, %v380
    %398 = vmatprep.subr.bf16.mxu0 0
    %399 = vmatpush1.bf16.msra.mxu0 %v389
    %400 = vmatprep.subr.bf16.mxu0 0
    %401 = vmatpush1.bf16.msra.mxu0 %v388
    %402 = vmatprep.subr.bf16.mxu0 0
    %403 = vmatpush1.bf16.msra.mxu0 %v387
    %404 = vmatprep.subr.bf16.mxu0 0
    %405 = vmatpush1.bf16.msra.mxu0 %v386
    %406 = vmatprep.subr.bf16.mxu0 0
    %407 = vmatpush1.bf16.msra.mxu0 %v385
    %408 = vmatprep.subr.bf16.mxu0 0
    %409 = vmatpush1.bf16.msra.mxu0 %v384
    %410 = vmatprep.subr.bf16.mxu0 0
    %411 = vmatpush1.bf16.msra.mxu0 %v383
    %412 = vmatprep.subr.bf16.mxu0 0
    %413 = vmatpush1.bf16.msra.mxu0 %v382
    %414 = vmatprep.subr.bf16.mxu0 0
    %415 = vmatpush2.bf16.msra.mxu0 0
    %416 = vmatprep.subr.bf16.mxu0 0
    %417 = vmatpush2.bf16.msra.mxu0 0
    %418 = vmatprep.subr.bf16.mxu0 0
    %419 = vmatpush2.bf16.msra.mxu0 0
    %420 = vmatprep.subr.bf16.mxu0 0
    %421 = vmatpush2.bf16.msra.mxu0 0
    %422 = vmatprep.subr.bf16.mxu0 0
    %423 = vmatpush2.bf16.msra.mxu0 0
    %424 = vmatprep.subr.bf16.mxu0 0
    %425 = vmatpush2.bf16.msra.mxu0 0
    %426 = vmatprep.subr.bf16.mxu0 0
    %427 = vmatpush2.bf16.msra.mxu0 0
    %428 = vmatprep.subr.bf16.mxu0 0
    %429 = vmatpush2.bf16.msra.mxu0 0
    %430 = vmatprep.mubr.bf16.mxu0 0
    %431 = vmatmul.mubr.bf16.gmra.mxu0 %v186
    %v432 = vpop.f32.mrf.mxu0
    %v433 = vadd.f32 0.0, %v432
    %v434 = vpop.f32.mrf.mxu0
    %v435 = vpop.f32.mrf.mxu0
    %v436 = vadd.f32 0.0, %v435
    %v437 = vpop.f32.mrf.mxu0
    %438 = vmatprep.mubr.bf16.mxu0 0
    %439 = vmatmul.mubr.bf16.gmra.mxu0 %v187
    %v440 = vpop.f32.mrf.mxu0
    %v441 = vadd.f32 0.0, %v440
    %v442 = vpop.f32.mrf.mxu0
    %v443 = vpop.f32.mrf.mxu0
    %v444 = vadd.f32 0.0, %v443
    %v445 = vpop.f32.mrf.mxu0
    %446 = vmatprep.mubr.bf16.mxu0 0
    %447 = vmatmul.mubr.bf16.gmra.mxu0 %v188
    %v448 = vpop.f32.mrf.mxu0
    %v449 = vadd.f32 0.0, %v448
    %v450 = vpop.f32.mrf.mxu0
    %v451 = vpop.f32.mrf.mxu0
    %v452 = vadd.f32 0.0, %v451
    %v453 = vpop.f32.mrf.mxu0
    %454 = vmatprep.mubr.bf16.mxu0 0
    %455 = vmatmul.mubr.bf16.gmra.mxu0 %v189
    %v456 = vpop.f32.mrf.mxu0
    %v457 = vadd.f32 0.0, %v456
    %v458 = vpop.f32.mrf.mxu0
    %v459 = vpop.f32.mrf.mxu0
    %v460 = vadd.f32 0.0, %v459
    %v461 = vpop.f32.mrf.mxu0
    %462 = vmatprep.mubr.bf16.mxu0 0
    %463 = vmatmul.mubr.bf16.gmra.mxu0 %v190
    %v464 = vpop.f32.mrf.mxu0
    %v465 = vadd.f32 0.0, %v464
    %v466 = vpop.f32.mrf.mxu0
    %v467 = vpop.f32.mrf.mxu0
    %v468 = vadd.f32 0.0, %v467
    %v469 = vpop.f32.mrf.mxu0
    %470 = vmatprep.mubr.bf16.mxu0 0
    %471 = vmatmul.mubr.bf16.gmra.mxu0 %v191
    %v472 = vpop.f32.mrf.mxu0
    %v473 = vadd.f32 0.0, %v472
    %v474 = vpop.f32.mrf.mxu0
    %v475 = vpop.f32.mrf.mxu0
    %v476 = vadd.f32 0.0, %v475
    %v477 = vpop.f32.mrf.mxu0
    %478 = vdwg.mxu0
    %v479 = vpack.c.bf16 %v436, %v433
    %v480 = vpack.c.bf16 %v444, %v441
    %v481 = vpack.c.bf16 %v452, %v449
    %v482 = vpack.c.bf16 %v460, %v457
    %v483 = vpack.c.bf16 %v468, %v465
    %v484 = vpack.c.bf16 %v476, %v473
    %s485 = scalar_lea.vmem %s5, 128
    %v486 = vld [vmem:[%s485] sm:$0xf]
    %v487 = vld [vmem:[%s485 + $0x4] sm:$0xf]
    %v488 = vld [vmem:[%s485 + $0x8] sm:$0xf]
    %v489 = vld [vmem:[%s485 + $0xc] sm:$0xf]
    %v490 = vld [vmem:[%s485 + $0x10] sm:$0xf]
    %v491 = vld [vmem:[%s485 + $0x14] sm:$0xf]
    %v492 = vld [vmem:[%s485 + $0x18] sm:$0xf]
    %v493 = vld [vmem:[%s485 + $0x1c] sm:$0xf]
    %v494 = vld [vmem:[%s485 + $0x20] sm:$0xf]
    %v495 = vld [vmem:[%s485 + $0x24] sm:$0xf]
    %v496 = vld [vmem:[%s485 + $0x28] sm:$0xf]
    %v497 = vld [vmem:[%s485 + $0x2c] sm:$0xf]
    %v498 = vld [vmem:[%s485 + $0x30] sm:$0xf]
    %v499 = vld [vmem:[%s485 + $0x34] sm:$0xf]
    %v500 = vld [vmem:[%s485 + $0x38] sm:$0xf]
    %v501 = vld [vmem:[%s485 + $0x3c] sm:$0xf]
    %v518 = vunpack.c.l.b16 %v486
    %v519 = vunpack.c.l.b16 %v487
    %v520 = vunpack.c.l.b16 %v488
    %v521 = vunpack.c.l.b16 %v489
    %v522 = vunpack.c.l.b16 %v490
    %v523 = vunpack.c.l.b16 %v491
    %v524 = vunpack.c.l.b16 %v492
    %v525 = vunpack.c.l.b16 %v493
    %v526 = vunpack.c.l.b16 %v494
    %v527 = vunpack.c.l.b16 %v495
    %v528 = vunpack.c.l.b16 %v496
    %v529 = vunpack.c.l.b16 %v497
    %v530 = vunpack.c.l.b16 %v498
    %v531 = vunpack.c.l.b16 %v499
    %v532 = vunpack.c.l.b16 %v500
    %v533 = vunpack.c.l.b16 %v501
    %v534 = vpack.c.b16 %v519, %v518
    %v535 = vpack.c.b16 %v521, %v520
    %v536 = vpack.c.b16 %v523, %v522
    %v537 = vpack.c.b16 %v525, %v524
    %v538 = vpack.c.b16 %v527, %v526
    %v539 = vpack.c.b16 %v529, %v528
    %v540 = vpack.c.b16 %v531, %v530
    %v541 = vpack.c.b16 %v533, %v532
    %550 = vmatprep.subr.bf16.mxu0 0
    %551 = vmatpush1.bf16.msra.mxu0 %v541
    %552 = vmatprep.subr.bf16.mxu0 0
    %553 = vmatpush1.bf16.msra.mxu0 %v540
    %554 = vmatprep.subr.bf16.mxu0 0
    %555 = vmatpush1.bf16.msra.mxu0 %v539
    %556 = vmatprep.subr.bf16.mxu0 0
    %557 = vmatpush1.bf16.msra.mxu0 %v538
    %558 = vmatprep.subr.bf16.mxu0 0
    %559 = vmatpush1.bf16.msra.mxu0 %v537
    %560 = vmatprep.subr.bf16.mxu0 0
    %561 = vmatpush1.bf16.msra.mxu0 %v536
    %562 = vmatprep.subr.bf16.mxu0 0
    %563 = vmatpush1.bf16.msra.mxu0 %v535
    %564 = vmatprep.subr.bf16.mxu0 0
    %565 = vmatpush1.bf16.msra.mxu0 %v534
    %566 = vmatprep.subr.bf16.mxu0 0
    %567 = vmatpush2.bf16.msra.mxu0 0
    %568 = vmatprep.subr.bf16.mxu0 0
    %569 = vmatpush2.bf16.msra.mxu0 0
    %570 = vmatprep.subr.bf16.mxu0 0
    %571 = vmatpush2.bf16.msra.mxu0 0
    %572 = vmatprep.subr.bf16.mxu0 0
    %573 = vmatpush2.bf16.msra.mxu0 0
    %574 = vmatprep.subr.bf16.mxu0 0
    %575 = vmatpush2.bf16.msra.mxu0 0
    %576 = vmatprep.subr.bf16.mxu0 0
    %577 = vmatpush2.bf16.msra.mxu0 0
    %578 = vmatprep.subr.bf16.mxu0 0
    %579 = vmatpush2.bf16.msra.mxu0 0
    %580 = vmatprep.subr.bf16.mxu0 0
    %581 = vmatpush2.bf16.msra.mxu0 0
    %582 = vmatprep.mubr.bf16.mxu0 0
    %583 = vmatmul.mubr.bf16.gmra.mxu0 %v186
    %v584 = vpop.f32.mrf.mxu0
    %v585 = vadd.f32 0.0, %v584
    %v586 = vpop.f32.mrf.mxu0
    %v587 = vpop.f32.mrf.mxu0
    %v588 = vadd.f32 0.0, %v587
    %v589 = vpop.f32.mrf.mxu0
    %590 = vmatprep.mubr.bf16.mxu0 0
    %591 = vmatmul.mubr.bf16.gmra.mxu0 %v187
    %v592 = vpop.f32.mrf.mxu0
    %v593 = vadd.f32 0.0, %v592
    %v594 = vpop.f32.mrf.mxu0
    %v595 = vpop.f32.mrf.mxu0
    %v596 = vadd.f32 0.0, %v595
    %v597 = vpop.f32.mrf.mxu0
    %598 = vmatprep.mubr.bf16.mxu0 0
    %599 = vmatmul.mubr.bf16.gmra.mxu0 %v188
    %v600 = vpop.f32.mrf.mxu0
    %v601 = vadd.f32 0.0, %v600
    %v602 = vpop.f32.mrf.mxu0
    %v603 = vpop.f32.mrf.mxu0
    %v604 = vadd.f32 0.0, %v603
    %v605 = vpop.f32.mrf.mxu0
    %606 = vmatprep.mubr.bf16.mxu0 0
    %607 = vmatmul.mubr.bf16.gmra.mxu0 %v189
    %v608 = vpop.f32.mrf.mxu0
    %v609 = vadd.f32 0.0, %v608
    %v610 = vpop.f32.mrf.mxu0
    %v611 = vpop.f32.mrf.mxu0
    %v612 = vadd.f32 0.0, %v611
    %v613 = vpop.f32.mrf.mxu0
    %614 = vmatprep.mubr.bf16.mxu0 0
    %615 = vmatmul.mubr.bf16.gmra.mxu0 %v190
    %v616 = vpop.f32.mrf.mxu0
    %v617 = vadd.f32 0.0, %v616
    %v618 = vpop.f32.mrf.mxu0
    %v619 = vpop.f32.mrf.mxu0
    %v620 = vadd.f32 0.0, %v619
    %v621 = vpop.f32.mrf.mxu0
    %622 = vmatprep.mubr.bf16.mxu0 0
    %623 = vmatmul.mubr.bf16.gmra.mxu0 %v191
    %v624 = vpop.f32.mrf.mxu0
    %v625 = vadd.f32 0.0, %v624
    %v626 = vpop.f32.mrf.mxu0
    %v627 = vpop.f32.mrf.mxu0
    %v628 = vadd.f32 0.0, %v627
    %v629 = vpop.f32.mrf.mxu0
    %630 = vdwg.mxu0
    %v631 = vpack.c.bf16 %v588, %v585
    %v632 = vpack.c.bf16 %v596, %v593
    %v633 = vpack.c.bf16 %v604, %v601
    %v634 = vpack.c.bf16 %v612, %v609
    %v635 = vpack.c.bf16 %v620, %v617
    %v636 = vpack.c.bf16 %v628, %v625
    %s637 = scalar_lea.vmem %s5, 192
    %v638 = vld [vmem:[%s637] sm:$0xf]
    %v639 = vld [vmem:[%s637 + $0x4] sm:$0xf]
    %v640 = vld [vmem:[%s637 + $0x8] sm:$0xf]
    %v641 = vld [vmem:[%s637 + $0xc] sm:$0xf]
    %v642 = vld [vmem:[%s637 + $0x10] sm:$0xf]
    %v643 = vld [vmem:[%s637 + $0x14] sm:$0xf]
    %v644 = vld [vmem:[%s637 + $0x18] sm:$0xf]
    %v645 = vld [vmem:[%s637 + $0x1c] sm:$0xf]
    %v646 = vld [vmem:[%s637 + $0x20] sm:$0xf]
    %v647 = vld [vmem:[%s637 + $0x24] sm:$0xf]
    %v648 = vld [vmem:[%s637 + $0x28] sm:$0xf]
    %v649 = vld [vmem:[%s637 + $0x2c] sm:$0xf]
    %v650 = vld [vmem:[%s637 + $0x30] sm:$0xf]
    %v651 = vld [vmem:[%s637 + $0x34] sm:$0xf]
    %v652 = vld [vmem:[%s637 + $0x38] sm:$0xf]
    %v653 = vld [vmem:[%s637 + $0x3c] sm:$0xf]
    %v670 = vunpack.c.l.b16 %v638
    %v671 = vunpack.c.l.b16 %v639
    %v672 = vunpack.c.l.b16 %v640
    %v673 = vunpack.c.l.b16 %v641
    %v674 = vunpack.c.l.b16 %v642
    %v675 = vunpack.c.l.b16 %v643
    %v676 = vunpack.c.l.b16 %v644
    %v677 = vunpack.c.l.b16 %v645
    %v678 = vunpack.c.l.b16 %v646
    %v679 = vunpack.c.l.b16 %v647
    %v680 = vunpack.c.l.b16 %v648
    %v681 = vunpack.c.l.b16 %v649
    %v682 = vunpack.c.l.b16 %v650
    %v683 = vunpack.c.l.b16 %v651
    %v684 = vunpack.c.l.b16 %v652
    %v685 = vunpack.c.l.b16 %v653
    %v686 = vpack.c.b16 %v671, %v670
    %v687 = vpack.c.b16 %v673, %v672
    %v688 = vpack.c.b16 %v675, %v674
    %v689 = vpack.c.b16 %v677, %v676
    %v690 = vpack.c.b16 %v679, %v678
    %v691 = vpack.c.b16 %v681, %v680
    %v692 = vpack.c.b16 %v683, %v682
    %v693 = vpack.c.b16 %v685, %v684
    %702 = vmatprep.subr.bf16.mxu0 0
    %703 = vmatpush1.bf16.msra.mxu0 %v693
    %704 = vmatprep.subr.bf16.mxu0 0
    %705 = vmatpush1.bf16.msra.mxu0 %v692
    %706 = vmatprep.subr.bf16.mxu0 0
    %707 = vmatpush1.bf16.msra.mxu0 %v691
    %708 = vmatprep.subr.bf16.mxu0 0
    %709 = vmatpush1.bf16.msra.mxu0 %v690
    %710 = vmatprep.subr.bf16.mxu0 0
    %711 = vmatpush1.bf16.msra.mxu0 %v689
    %712 = vmatprep.subr.bf16.mxu0 0
    %713 = vmatpush1.bf16.msra.mxu0 %v688
    %714 = vmatprep.subr.bf16.mxu0 0
    %715 = vmatpush1.bf16.msra.mxu0 %v687
    %716 = vmatprep.subr.bf16.mxu0 0
    %717 = vmatpush1.bf16.msra.mxu0 %v686
    %718 = vmatprep.subr.bf16.mxu0 0
    %719 = vmatpush2.bf16.msra.mxu0 0
    %720 = vmatprep.subr.bf16.mxu0 0
    %721 = vmatpush2.bf16.msra.mxu0 0
    %722 = vmatprep.subr.bf16.mxu0 0
    %723 = vmatpush2.bf16.msra.mxu0 0
    %724 = vmatprep.subr.bf16.mxu0 0
    %725 = vmatpush2.bf16.msra.mxu0 0
    %726 = vmatprep.subr.bf16.mxu0 0
    %727 = vmatpush2.bf16.msra.mxu0 0
    %728 = vmatprep.subr.bf16.mxu0 0
    %729 = vmatpush2.bf16.msra.mxu0 0
    %730 = vmatprep.subr.bf16.mxu0 0
    %731 = vmatpush2.bf16.msra.mxu0 0
    %732 = vmatprep.subr.bf16.mxu0 0
    %733 = vmatpush2.bf16.msra.mxu0 0
    %734 = vmatprep.mubr.bf16.mxu0 0
    %735 = vmatmul.mubr.bf16.gmra.mxu0 %v186
    %v736 = vpop.f32.mrf.mxu0
    %v737 = vadd.f32 0.0, %v736
    %v738 = vpop.f32.mrf.mxu0
    %v739 = vpop.f32.mrf.mxu0
    %v740 = vadd.f32 0.0, %v739
    %v741 = vpop.f32.mrf.mxu0
    %742 = vmatprep.mubr.bf16.mxu0 0
    %743 = vmatmul.mubr.bf16.gmra.mxu0 %v187
    %v744 = vpop.f32.mrf.mxu0
    %v745 = vadd.f32 0.0, %v744
    %v746 = vpop.f32.mrf.mxu0
    %v747 = vpop.f32.mrf.mxu0
    %v748 = vadd.f32 0.0, %v747
    %v749 = vpop.f32.mrf.mxu0
    %750 = vmatprep.mubr.bf16.mxu0 0
    %751 = vmatmul.mubr.bf16.gmra.mxu0 %v188
    %v752 = vpop.f32.mrf.mxu0
    %v753 = vadd.f32 0.0, %v752
    %v754 = vpop.f32.mrf.mxu0
    %v755 = vpop.f32.mrf.mxu0
    %v756 = vadd.f32 0.0, %v755
    %v757 = vpop.f32.mrf.mxu0
    %758 = vmatprep.mubr.bf16.mxu0 0
    %759 = vmatmul.mubr.bf16.gmra.mxu0 %v189
    %v760 = vpop.f32.mrf.mxu0
    %v761 = vadd.f32 0.0, %v760
    %v762 = vpop.f32.mrf.mxu0
    %v763 = vpop.f32.mrf.mxu0
    %v764 = vadd.f32 0.0, %v763
    %v765 = vpop.f32.mrf.mxu0
    %766 = vmatprep.mubr.bf16.mxu0 0
    %767 = vmatmul.mubr.bf16.gmra.mxu0 %v190
    %v768 = vpop.f32.mrf.mxu0
    %v769 = vadd.f32 0.0, %v768
    %v770 = vpop.f32.mrf.mxu0
    %v771 = vpop.f32.mrf.mxu0
    %v772 = vadd.f32 0.0, %v771
    %v773 = vpop.f32.mrf.mxu0
    %774 = vmatprep.mubr.bf16.mxu0 0
    %775 = vmatmul.mubr.bf16.gmra.mxu0 %v191
    %v776 = vpop.f32.mrf.mxu0
    %v777 = vadd.f32 0.0, %v776
    %v778 = vpop.f32.mrf.mxu0
    %v779 = vpop.f32.mrf.mxu0
    %v780 = vadd.f32 0.0, %v779
    %v781 = vpop.f32.mrf.mxu0
    %782 = vdwg.mxu0
    %v783 = vpack.c.bf16 %v740, %v737
    %v784 = vpack.c.bf16 %v748, %v745
    %v785 = vpack.c.bf16 %v756, %v753
    %v786 = vpack.c.bf16 %v764, %v761
    %v787 = vpack.c.bf16 %v772, %v769
    %v788 = vpack.c.bf16 %v780, %v777
    %v789 = vld [vmem:[%s3] sm:$0xff]
    %v790 = vld [vmem:[%s3 + $0x8] sm:$0xf]
    %v791 = vld [vmem:[%s3 + $0xc] sm:$0xff]
    %v792 = vld [vmem:[%s3 + $0x14] sm:$0xf]
    %v793 = vld [vmem:[%s3 + $0x18] sm:$0xff]
    %v794 = vld [vmem:[%s3 + $0x20] sm:$0xf]
    %v795 = vld [vmem:[%s3 + $0x24] sm:$0xff]
    %v796 = vld [vmem:[%s3 + $0x2c] sm:$0xf]
    %v797 = vld [vmem:[%s3 + $0x30] sm:$0xff]
    %v798 = vld [vmem:[%s3 + $0x38] sm:$0xf]
    %v799 = vld [vmem:[%s3 + $0x3c] sm:$0xff]
    %v800 = vld [vmem:[%s3 + $0x44] sm:$0xf]
    %v801 = vld [vmem:[%s3 + $0x48] sm:$0xff]
    %v802 = vld [vmem:[%s3 + $0x50] sm:$0xf]
    %v803 = vld [vmem:[%s3 + $0x54] sm:$0xff]
    %v804 = vld [vmem:[%s3 + $0x5c] sm:$0xf]
    %v805 = vld [vmem:[%s3 + $0x60] sm:$0xff]
    %v806 = vld [vmem:[%s3 + $0x68] sm:$0xf]
    %v807 = vld [vmem:[%s3 + $0x6c] sm:$0xff]
    %v808 = vld [vmem:[%s3 + $0x74] sm:$0xf]
    %v809 = vld [vmem:[%s3 + $0x78] sm:$0xff]
    %v810 = vld [vmem:[%s3 + $0x80] sm:$0xf]
    %v811 = vld [vmem:[%s3 + $0x84] sm:$0xff]
    %v812 = vld [vmem:[%s3 + $0x8c] sm:$0xf]
    %v813 = vld [vmem:[%s3 + $0x90] sm:$0xff]
    %v814 = vld [vmem:[%s3 + $0x98] sm:$0xf]
    %v815 = vld [vmem:[%s3 + $0x9c] sm:$0xff]
    %v816 = vld [vmem:[%s3 + $0xa4] sm:$0xf]
    %v817 = vld [vmem:[%s3 + $0xa8] sm:$0xff]
    %v818 = vld [vmem:[%s3 + $0xb0] sm:$0xf]
    %v819 = vld [vmem:[%s3 + $0xb4] sm:$0xff]
    %v820 = vld [vmem:[%s3 + $0xbc] sm:$0xf]
    %v821 = vld [vmem:[%s7] sm:$0xff]
    %v822 = vld [vmem:[%s7 + $0x8] sm:$0xff]
    %v823 = vld [vmem:[%s7 + $0x10] sm:$0xff]
    %v824 = vld [vmem:[%s7 + $0x18] sm:$0xff]
    %v825 = vld [vmem:[%s7 + $0x20] sm:$0xff]
    %v826 = vld [vmem:[%s7 + $0x28] sm:$0xff]
    %v827 = vld [vmem:[%s7 + $0x30] sm:$0xff]
    %v828 = vld [vmem:[%s7 + $0x38] sm:$0xff]
    %v829 = vld [vmem:[%s7 + $0x40] sm:$0xff]
    %v830 = vld [vmem:[%s7 + $0x48] sm:$0xff]
    %v831 = vld [vmem:[%s7 + $0x50] sm:$0xff]
    %v832 = vld [vmem:[%s7 + $0x58] sm:$0xff]
    %v833 = vld [vmem:[%s7 + $0x60] sm:$0xff]
    %v834 = vld [vmem:[%s7 + $0x68] sm:$0xff]
    %v835 = vld [vmem:[%s7 + $0x70] sm:$0xff]
    %v836 = vld [vmem:[%s7 + $0x78] sm:$0xff]
    %838 = vset.pattern.permute.xlu0 0
    %839 = vperm.xlu0 %838, %v821
    %v840 = vpop.permute.xlu0 %839
    %843 = vset.pattern.permute.xlu0 0
    %844 = vperm.xlu0 %843, %v822
    %v845 = vpop.permute.xlu0 %844
    %848 = vset.pattern.permute.xlu0 0
    %849 = vperm.xlu0 %848, %v823
    %v850 = vpop.permute.xlu0 %849
    %853 = vset.pattern.permute.xlu0 0
    %854 = vperm.xlu0 %853, %v824
    %v855 = vpop.permute.xlu0 %854
    %858 = vset.pattern.permute.xlu0 0
    %859 = vperm.xlu0 %858, %v825
    %v860 = vpop.permute.xlu0 %859
    %863 = vset.pattern.permute.xlu0 0
    %864 = vperm.xlu0 %863, %v826
    %v865 = vpop.permute.xlu0 %864
    %868 = vset.pattern.permute.xlu0 0
    %869 = vperm.xlu0 %868, %v827
    %v870 = vpop.permute.xlu0 %869
    %873 = vset.pattern.permute.xlu0 0
    %874 = vperm.xlu0 %873, %v828
    %v875 = vpop.permute.xlu0 %874
    %878 = vset.pattern.permute.xlu0 0
    %879 = vperm.xlu0 %878, %v829
    %v880 = vpop.permute.xlu0 %879
    %883 = vset.pattern.permute.xlu0 0
    %884 = vperm.xlu0 %883, %v830
    %v885 = vpop.permute.xlu0 %884
    %888 = vset.pattern.permute.xlu0 0
    %889 = vperm.xlu0 %888, %v831
    %v890 = vpop.permute.xlu0 %889
    %893 = vset.pattern.permute.xlu0 0
    %894 = vperm.xlu0 %893, %v832
    %v895 = vpop.permute.xlu0 %894
    %898 = vset.pattern.permute.xlu0 0
    %899 = vperm.xlu0 %898, %v833
    %v900 = vpop.permute.xlu0 %899
    %903 = vset.pattern.permute.xlu0 0
    %904 = vperm.xlu0 %903, %v834
    %v905 = vpop.permute.xlu0 %904
    %908 = vset.pattern.permute.xlu0 0
    %909 = vperm.xlu0 %908, %v835
    %v910 = vpop.permute.xlu0 %909
    %913 = vset.pattern.permute.xlu0 0
    %914 = vperm.xlu0 %913, %v836
    %v915 = vpop.permute.xlu0 %914
    %v949 = vunpack.c.l.b16 %v789
    %v950 = vunpack.c.h.b16 %v789
    %v951 = vunpack.c.l.b16 %v790
    %v952 = vunpack.c.l.b16 %v791
    %v953 = vunpack.c.h.b16 %v791
    %v954 = vunpack.c.l.b16 %v792
    %v955 = vunpack.c.l.b16 %v793
    %v956 = vunpack.c.h.b16 %v793
    %v957 = vunpack.c.l.b16 %v794
    %v958 = vunpack.c.l.b16 %v795
    %v959 = vunpack.c.h.b16 %v795
    %v960 = vunpack.c.l.b16 %v796
    %v961 = vunpack.c.l.b16 %v797
    %v962 = vunpack.c.h.b16 %v797
    %v963 = vunpack.c.l.b16 %v798
    %v964 = vunpack.c.l.b16 %v799
    %v965 = vunpack.c.h.b16 %v799
    %v966 = vunpack.c.l.b16 %v800
    %v967 = vunpack.c.l.b16 %v801
    %v968 = vunpack.c.h.b16 %v801
    %v969 = vunpack.c.l.b16 %v802
    %v970 = vunpack.c.l.b16 %v803
    %v971 = vunpack.c.h.b16 %v803
    %v972 = vunpack.c.l.b16 %v804
    %v973 = vunpack.c.l.b16 %v805
    %v974 = vunpack.c.h.b16 %v805
    %v975 = vunpack.c.l.b16 %v806
    %v976 = vunpack.c.l.b16 %v807
    %v977 = vunpack.c.h.b16 %v807
    %v978 = vunpack.c.l.b16 %v808
    %v979 = vunpack.c.l.b16 %v809
    %v980 = vunpack.c.h.b16 %v809
    %v981 = vunpack.c.l.b16 %v810
    %v982 = vunpack.c.l.b16 %v811
    %v983 = vunpack.c.h.b16 %v811
    %v984 = vunpack.c.l.b16 %v812
    %v985 = vunpack.c.l.b16 %v813
    %v986 = vunpack.c.h.b16 %v813
    %v987 = vunpack.c.l.b16 %v814
    %v988 = vunpack.c.l.b16 %v815
    %v989 = vunpack.c.h.b16 %v815
    %v990 = vunpack.c.l.b16 %v816
    %v991 = vunpack.c.l.b16 %v817
    %v992 = vunpack.c.h.b16 %v817
    %v993 = vunpack.c.l.b16 %v818
    %v994 = vunpack.c.l.b16 %v819
    %v995 = vunpack.c.h.b16 %v819
    %v996 = vunpack.c.l.b16 %v820
    %v997 = vpack.c.b16 %v952, %v949
    %v998 = vpack.c.b16 %v953, %v950
    %v999 = vpack.c.b16 %v954, %v951
    %v1000 = vpack.c.b16 %v958, %v955
    %v1001 = vpack.c.b16 %v959, %v956
    %v1002 = vpack.c.b16 %v960, %v957
    %v1003 = vpack.c.b16 %v964, %v961
    %v1004 = vpack.c.b16 %v965, %v962
    %v1005 = vpack.c.b16 %v966, %v963
    %v1006 = vpack.c.b16 %v970, %v967
    %v1007 = vpack.c.b16 %v971, %v968
    %v1008 = vpack.c.b16 %v972, %v969
    %v1009 = vpack.c.b16 %v976, %v973
    %v1010 = vpack.c.b16 %v977, %v974
    %v1011 = vpack.c.b16 %v978, %v975
    %v1012 = vpack.c.b16 %v982, %v979
    %v1013 = vpack.c.b16 %v983, %v980
    %v1014 = vpack.c.b16 %v984, %v981
    %v1015 = vpack.c.b16 %v988, %v985
    %v1016 = vpack.c.b16 %v989, %v986
    %v1017 = vpack.c.b16 %v990, %v987
    %v1018 = vpack.c.b16 %v994, %v991
    %v1019 = vpack.c.b16 %v995, %v992
    %v1020 = vpack.c.b16 %v996, %v993
    %1045 = vmatprep.subr.bf16.mxu0 0
    %1046 = vmatpush1.bf16.msra.mxu0 %v480
    %1047 = vmatprep.subr.bf16.mxu0 0
    %1048 = vmatpush1.bf16.msra.mxu0 %v479
    %1049 = vmatprep.subr.bf16.mxu0 0
    %1050 = vmatpush1.bf16.msra.mxu0 %v332
    %1051 = vmatprep.subr.bf16.mxu0 0
    %1052 = vmatpush1.bf16.msra.mxu0 %v331
    %1053 = vmatprep.subr.bf16.mxu0 0
    %1054 = vmatpush1.bf16.msra.mxu0 %v330
    %1055 = vmatprep.subr.bf16.mxu0 0
    %1056 = vmatpush1.bf16.msra.mxu0 %v329
    %1057 = vmatprep.subr.bf16.mxu0 0
    %1058 = vmatpush1.bf16.msra.mxu0 %v328
    %1059 = vmatprep.subr.bf16.mxu0 0
    %1060 = vmatpush1.bf16.msra.mxu0 %v327
    %1061 = vmatprep.subr.bf16.mxu0 0
    %1062 = vmatpush2.bf16.msra.mxu0 %v634
    %1063 = vmatprep.subr.bf16.mxu0 0
    %1064 = vmatpush2.bf16.msra.mxu0 %v633
    %1065 = vmatprep.subr.bf16.mxu0 0
    %1066 = vmatpush2.bf16.msra.mxu0 %v632
    %1067 = vmatprep.subr.bf16.mxu0 0
    %1068 = vmatpush2.bf16.msra.mxu0 %v631
    %1069 = vmatprep.subr.bf16.mxu0 0
    %1070 = vmatpush2.bf16.msra.mxu0 %v484
    %1071 = vmatprep.subr.bf16.mxu0 0
    %1072 = vmatpush2.bf16.msra.mxu0 %v483
    %1073 = vmatprep.subr.bf16.mxu0 0
    %1074 = vmatpush2.bf16.msra.mxu0 %v482
    %1075 = vmatprep.subr.bf16.mxu0 0
    %1076 = vmatpush2.bf16.msra.mxu0 %v481
    %1077 = vmatprep.mubr.bf16.mxu0 %v998
    %1078 = vmatmul.mubr.bf16.gmra.mxu0 %v997
    %v1079 = vpop.f32.mrf.mxu0
    %v1080 = vadd.f32 %v840, %v1079
    %v1081 = vpop.f32.mrf.mxu0
    %v1082 = vpop.f32.mrf.mxu0
    %v1083 = vadd.f32 %v845, %v1082
    %v1084 = vpop.f32.mrf.mxu0
    %1085 = vmatprep.mubr.bf16.mxu0 %v1001
    %1086 = vmatmul.mubr.bf16.gmra.mxu0 %v1000
    %v1087 = vpop.f32.mrf.mxu0
    %v1088 = vadd.f32 %v850, %v1087
    %v1089 = vpop.f32.mrf.mxu0
    %v1090 = vpop.f32.mrf.mxu0
    %v1091 = vadd.f32 %v855, %v1090
    %v1092 = vpop.f32.mrf.mxu0
    %1093 = vmatprep.mubr.bf16.mxu0 %v1004
    %1094 = vmatmul.mubr.bf16.gmra.mxu0 %v1003
    %v1095 = vpop.f32.mrf.mxu0
    %v1096 = vadd.f32 %v860, %v1095
    %v1097 = vpop.f32.mrf.mxu0
    %v1098 = vpop.f32.mrf.mxu0
    %v1099 = vadd.f32 %v865, %v1098
    %v1100 = vpop.f32.mrf.mxu0
    %1101 = vmatprep.mubr.bf16.mxu0 %v1007
    %1102 = vmatmul.mubr.bf16.gmra.mxu0 %v1006
    %v1103 = vpop.f32.mrf.mxu0
    %v1104 = vadd.f32 %v870, %v1103
    %v1105 = vpop.f32.mrf.mxu0
    %v1106 = vpop.f32.mrf.mxu0
    %v1107 = vadd.f32 %v875, %v1106
    %v1108 = vpop.f32.mrf.mxu0
    %1109 = vmatprep.mubr.bf16.mxu0 %v1010
    %1110 = vmatmul.mubr.bf16.gmra.mxu0 %v1009
    %v1111 = vpop.f32.mrf.mxu0
    %v1112 = vadd.f32 %v880, %v1111
    %v1113 = vpop.f32.mrf.mxu0
    %v1114 = vpop.f32.mrf.mxu0
    %v1115 = vadd.f32 %v885, %v1114
    %v1116 = vpop.f32.mrf.mxu0
    %1117 = vmatprep.mubr.bf16.mxu0 %v1013
    %1118 = vmatmul.mubr.bf16.gmra.mxu0 %v1012
    %v1119 = vpop.f32.mrf.mxu0
    %v1120 = vadd.f32 %v890, %v1119
    %v1121 = vpop.f32.mrf.mxu0
    %v1122 = vpop.f32.mrf.mxu0
    %v1123 = vadd.f32 %v895, %v1122
    %v1124 = vpop.f32.mrf.mxu0
    %1125 = vmatprep.mubr.bf16.mxu0 %v1016
    %1126 = vmatmul.mubr.bf16.gmra.mxu0 %v1015
    %v1127 = vpop.f32.mrf.mxu0
    %v1128 = vadd.f32 %v900, %v1127
    %v1129 = vpop.f32.mrf.mxu0
    %v1130 = vpop.f32.mrf.mxu0
    %v1131 = vadd.f32 %v905, %v1130
    %v1132 = vpop.f32.mrf.mxu0
    %1133 = vmatprep.mubr.bf16.mxu0 %v1019
    %1134 = vmatmul.mubr.bf16.gmra.mxu0 %v1018
    %v1135 = vpop.f32.mrf.mxu0
    %v1136 = vadd.f32 %v910, %v1135
    %v1137 = vpop.f32.mrf.mxu0
    %v1138 = vpop.f32.mrf.mxu0
    %v1139 = vadd.f32 %v915, %v1138
    %v1140 = vpop.f32.mrf.mxu0
    %1141 = vdwg.mxu0
    %1142 = vmatprep.subr.bf16.mxu0 0
    %1143 = vmatpush1.bf16.msra.mxu0 %v788
    %1144 = vmatprep.subr.bf16.mxu0 0
    %1145 = vmatpush1.bf16.msra.mxu0 %v787
    %1146 = vmatprep.subr.bf16.mxu0 0
    %1147 = vmatpush1.bf16.msra.mxu0 %v786
    %1148 = vmatprep.subr.bf16.mxu0 0
    %1149 = vmatpush1.bf16.msra.mxu0 %v785
    %1150 = vmatprep.subr.bf16.mxu0 0
    %1151 = vmatpush1.bf16.msra.mxu0 %v784
    %1152 = vmatprep.subr.bf16.mxu0 0
    %1153 = vmatpush1.bf16.msra.mxu0 %v783
    %1154 = vmatprep.subr.bf16.mxu0 0
    %1155 = vmatpush1.bf16.msra.mxu0 %v636
    %1156 = vmatprep.subr.bf16.mxu0 0
    %1157 = vmatpush1.bf16.msra.mxu0 %v635
    %1158 = vmatprep.subr.bf16.mxu0 0
    %1159 = vmatpush2.bf16.msra.mxu0 0
    %1160 = vmatprep.subr.bf16.mxu0 0
    %1161 = vmatpush2.bf16.msra.mxu0 0
    %1162 = vmatprep.subr.bf16.mxu0 0
    %1163 = vmatpush2.bf16.msra.mxu0 0
    %1164 = vmatprep.subr.bf16.mxu0 0
    %1165 = vmatpush2.bf16.msra.mxu0 0
    %1166 = vmatprep.subr.bf16.mxu0 0
    %1167 = vmatpush2.bf16.msra.mxu0 0
    %1168 = vmatprep.subr.bf16.mxu0 0
    %1169 = vmatpush2.bf16.msra.mxu0 0
    %1170 = vmatprep.subr.bf16.mxu0 0
    %1171 = vmatpush2.bf16.msra.mxu0 0
    %1172 = vmatprep.subr.bf16.mxu0 0
    %1173 = vmatpush2.bf16.msra.mxu0 0
    %1174 = vmatprep.mubr.bf16.mxu0 0
    %1175 = vmatmul.mubr.bf16.gmra.mxu0 %v999
    %v1176 = vpop.f32.mrf.mxu0
    %v1177 = vadd.f32 %v1080, %v1176
    %v1178 = vpop.f32.mrf.mxu0
    %v1179 = vpop.f32.mrf.mxu0
    %v1180 = vadd.f32 %v1083, %v1179
    %v1181 = vpop.f32.mrf.mxu0
    %1182 = vmatprep.mubr.bf16.mxu0 0
    %1183 = vmatmul.mubr.bf16.gmra.mxu0 %v1002
    %v1184 = vpop.f32.mrf.mxu0
    %v1185 = vadd.f32 %v1088, %v1184
    %v1186 = vpop.f32.mrf.mxu0
    %v1187 = vpop.f32.mrf.mxu0
    %v1188 = vadd.f32 %v1091, %v1187
    %v1189 = vpop.f32.mrf.mxu0
    %1190 = vmatprep.mubr.bf16.mxu0 0
    %1191 = vmatmul.mubr.bf16.gmra.mxu0 %v1005
    %v1192 = vpop.f32.mrf.mxu0
    %v1193 = vadd.f32 %v1096, %v1192
    %v1194 = vpop.f32.mrf.mxu0
    %v1195 = vpop.f32.mrf.mxu0
    %v1196 = vadd.f32 %v1099, %v1195
    %v1197 = vpop.f32.mrf.mxu0
    %1198 = vmatprep.mubr.bf16.mxu0 0
    %1199 = vmatmul.mubr.bf16.gmra.mxu0 %v1008
    %v1200 = vpop.f32.mrf.mxu0
    %v1201 = vadd.f32 %v1104, %v1200
    %v1202 = vpop.f32.mrf.mxu0
    %v1203 = vpop.f32.mrf.mxu0
    %v1204 = vadd.f32 %v1107, %v1203
    %v1205 = vpop.f32.mrf.mxu0
    %1206 = vmatprep.mubr.bf16.mxu0 0
    %1207 = vmatmul.mubr.bf16.gmra.mxu0 %v1011
    %v1208 = vpop.f32.mrf.mxu0
    %v1209 = vadd.f32 %v1112, %v1208
    %v1210 = vpop.f32.mrf.mxu0
    %v1211 = vpop.f32.mrf.mxu0
    %v1212 = vadd.f32 %v1115, %v1211
    %v1213 = vpop.f32.mrf.mxu0
    %1214 = vmatprep.mubr.bf16.mxu0 0
    %1215 = vmatmul.mubr.bf16.gmra.mxu0 %v1014
    %v1216 = vpop.f32.mrf.mxu0
    %v1217 = vadd.f32 %v1120, %v1216
    %v1218 = vpop.f32.mrf.mxu0
    %v1219 = vpop.f32.mrf.mxu0
    %v1220 = vadd.f32 %v1123, %v1219
    %v1221 = vpop.f32.mrf.mxu0
    %1222 = vmatprep.mubr.bf16.mxu0 0
    %1223 = vmatmul.mubr.bf16.gmra.mxu0 %v1017
    %v1224 = vpop.f32.mrf.mxu0
    %v1225 = vadd.f32 %v1128, %v1224
    %v1226 = vpop.f32.mrf.mxu0
    %v1227 = vpop.f32.mrf.mxu0
    %v1228 = vadd.f32 %v1131, %v1227
    %v1229 = vpop.f32.mrf.mxu0
    %1230 = vmatprep.mubr.bf16.mxu0 0
    %1231 = vmatmul.mubr.bf16.gmra.mxu0 %v1020
    %v1232 = vpop.f32.mrf.mxu0
    %v1233 = vadd.f32 %v1136, %v1232
    %v1234 = vpop.f32.mrf.mxu0
    %v1235 = vpop.f32.mrf.mxu0
    %v1236 = vadd.f32 %v1139, %v1235
    %v1237 = vpop.f32.mrf.mxu0
    %1238 = vdwg.mxu0
    %vm1239 = vcmp.ge.f32.partialorder %v1177, 0.0
    %vm1240 = vcmp.ge.f32.partialorder %v1180, 0.0
    %vm1241 = vcmp.ge.f32.partialorder %v1185, 0.0
    %vm1242 = vcmp.ge.f32.partialorder %v1188, 0.0
    %vm1243 = vcmp.ge.f32.partialorder %v1193, 0.0
    %vm1244 = vcmp.ge.f32.partialorder %v1196, 0.0
    %vm1245 = vcmp.ge.f32.partialorder %v1201, 0.0
    %vm1246 = vcmp.ge.f32.partialorder %v1204, 0.0
    %vm1247 = vcmp.ge.f32.partialorder %v1209, 0.0
    %vm1248 = vcmp.ge.f32.partialorder %v1212, 0.0
    %vm1249 = vcmp.ge.f32.partialorder %v1217, 0.0
    %vm1250 = vcmp.ge.f32.partialorder %v1220, 0.0
    %vm1251 = vcmp.ge.f32.partialorder %v1225, 0.0
    %vm1252 = vcmp.ge.f32.partialorder %v1228, 0.0
    %vm1253 = vcmp.ge.f32.partialorder %v1233, 0.0
    %vm1254 = vcmp.ge.f32.partialorder %v1236, 0.0
    %v1255 = vmul.f32 %v1177, 0.2
    %v1256 = vmul.f32 %v1180, 0.2
    %v1257 = vmul.f32 %v1185, 0.2
    %v1258 = vmul.f32 %v1188, 0.2
    %v1259 = vmul.f32 %v1193, 0.2
    %v1260 = vmul.f32 %v1196, 0.2
    %v1261 = vmul.f32 %v1201, 0.2
    %v1262 = vmul.f32 %v1204, 0.2
    %v1263 = vmul.f32 %v1209, 0.2
    %v1264 = vmul.f32 %v1212, 0.2
    %v1265 = vmul.f32 %v1217, 0.2
    %v1266 = vmul.f32 %v1220, 0.2
    %v1267 = vmul.f32 %v1225, 0.2
    %v1268 = vmul.f32 %v1228, 0.2
    %v1269 = vmul.f32 %v1233, 0.2
    %v1270 = vmul.f32 %v1236, 0.2
    %v1271 = vsel %vm1239, %v1177, %v1255
    %v1272 = vsel %vm1240, %v1180, %v1256
    %v1273 = vsel %vm1241, %v1185, %v1257
    %v1274 = vsel %vm1242, %v1188, %v1258
    %v1275 = vsel %vm1243, %v1193, %v1259
    %v1276 = vsel %vm1244, %v1196, %v1260
    %v1277 = vsel %vm1245, %v1201, %v1261
    %v1278 = vsel %vm1246, %v1204, %v1262
    %v1279 = vsel %vm1247, %v1209, %v1263
    %v1280 = vsel %vm1248, %v1212, %v1264
    %v1281 = vsel %vm1249, %v1217, %v1265
    %v1282 = vsel %vm1250, %v1220, %v1266
    %v1283 = vsel %vm1251, %v1225, %v1267
    %v1284 = vsel %vm1252, %v1228, %v1268
    %v1285 = vsel %vm1253, %v1233, %v1269
    %v1286 = vsel %vm1254, %v1236, %v1270
    %v1287 = vpack.c.bf16 %v1272, %v1271
    %v1288 = vpack.c.bf16 %v1274, %v1273
    %v1289 = vpack.c.bf16 %v1276, %v1275
    %v1290 = vpack.c.bf16 %v1278, %v1277
    %v1291 = vpack.c.bf16 %v1280, %v1279
    %v1292 = vpack.c.bf16 %v1282, %v1281
    %v1293 = vpack.c.bf16 %v1284, %v1283
    %v1294 = vpack.c.bf16 %v1286, %v1285
    %v1295 = vld [vmem:[%s11] sm:$0xf]
    %v1296 = vld [vmem:[%s11 + $0x4] sm:$0xf]
    %v1297 = vld [vmem:[%s11 + $0x8] sm:$0xf]
    %v1298 = vld [vmem:[%s11 + $0xc] sm:$0xf]
    %v1303 = vunpack.c.l.b16 %v1295
    %v1304 = vunpack.c.l.b16 %v1296
    %v1305 = vunpack.c.l.b16 %v1297
    %v1306 = vunpack.c.l.b16 %v1298
    %v1307 = vpack.c.b16 %v1304, %v1303
    %v1308 = vpack.c.b16 %v1306, %v1305
    %vm1311 = vcmask 261120
    %v1313 = vsel %vm1311, %v1287, 0
    %v1316 = vsel %vm1311, %v1288, 0
    %v1319 = vsel %vm1311, %v1289, 0
    %v1322 = vsel %vm1311, %v1290, 0
    %v1325 = vsel %vm1311, %v1291, 0
    %v1328 = vsel %vm1311, %v1292, 0
    %v1331 = vsel %vm1311, %v1293, 0
    %v1334 = vsel %vm1311, %v1294, 0
    %1336 = vmatprep.subr.bf16.mxu0 0
    %1337 = vmatpush1.bf16.msra.mxu0 0
    %1338 = vmatprep.subr.bf16.mxu0 0
    %1339 = vmatpush1.bf16.msra.mxu0 0
    %1340 = vmatprep.subr.bf16.mxu0 0
    %1341 = vmatpush1.bf16.msra.mxu0 0
    %1342 = vmatprep.subr.bf16.mxu0 0
    %1343 = vmatpush1.bf16.msra.mxu0 0
    %1344 = vmatprep.subr.bf16.mxu0 0
    %1345 = vmatpush1.bf16.msra.mxu0 0
    %1346 = vmatprep.subr.bf16.mxu0 0
    %1347 = vmatpush1.bf16.msra.mxu0 0
    %1348 = vmatprep.subr.bf16.mxu0 0
    %1349 = vmatpush1.bf16.msra.mxu0 %v1308
    %1350 = vmatprep.subr.bf16.mxu0 0
    %1351 = vmatpush1.bf16.msra.mxu0 %v1307
    %1352 = vmatprep.subr.bf16.mxu0 0
    %1353 = vmatpush2.bf16.msra.mxu0 0
    %1354 = vmatprep.subr.bf16.mxu0 0
    %1355 = vmatpush2.bf16.msra.mxu0 0
    %1356 = vmatprep.subr.bf16.mxu0 0
    %1357 = vmatpush2.bf16.msra.mxu0 0
    %1358 = vmatprep.subr.bf16.mxu0 0
    %1359 = vmatpush2.bf16.msra.mxu0 0
    %1360 = vmatprep.subr.bf16.mxu0 0
    %1361 = vmatpush2.bf16.msra.mxu0 0
    %1362 = vmatprep.subr.bf16.mxu0 0
    %1363 = vmatpush2.bf16.msra.mxu0 0
    %1364 = vmatprep.subr.bf16.mxu0 0
    %1365 = vmatpush2.bf16.msra.mxu0 0
    %1366 = vmatprep.subr.bf16.mxu0 0
    %1367 = vmatpush2.bf16.msra.mxu0 0
    %1368 = vmatprep.mubr.bf16.mxu0 0
    %1369 = vmatmul.mubr.bf16.gmra.mxu0 %v1313
    %v1370 = vpop.f32.mrf.mxu0
    %v1371 = vadd.f32 0.0, %v1370
    %v1372 = vpop.f32.mrf.mxu0
    %v1373 = vpop.f32.mrf.mxu0
    %v1374 = vadd.f32 0.0, %v1373
    %v1375 = vpop.f32.mrf.mxu0
    %1376 = vmatprep.mubr.bf16.mxu0 0
    %1377 = vmatmul.mubr.bf16.gmra.mxu0 %v1316
    %v1378 = vpop.f32.mrf.mxu0
    %v1379 = vadd.f32 0.0, %v1378
    %v1380 = vpop.f32.mrf.mxu0
    %v1381 = vpop.f32.mrf.mxu0
    %v1382 = vadd.f32 0.0, %v1381
    %v1383 = vpop.f32.mrf.mxu0
    %1384 = vmatprep.mubr.bf16.mxu0 0
    %1385 = vmatmul.mubr.bf16.gmra.mxu0 %v1319
    %v1386 = vpop.f32.mrf.mxu0
    %v1387 = vadd.f32 0.0, %v1386
    %v1388 = vpop.f32.mrf.mxu0
    %v1389 = vpop.f32.mrf.mxu0
    %v1390 = vadd.f32 0.0, %v1389
    %v1391 = vpop.f32.mrf.mxu0
    %1392 = vmatprep.mubr.bf16.mxu0 0
    %1393 = vmatmul.mubr.bf16.gmra.mxu0 %v1322
    %v1394 = vpop.f32.mrf.mxu0
    %v1395 = vadd.f32 0.0, %v1394
    %v1396 = vpop.f32.mrf.mxu0
    %v1397 = vpop.f32.mrf.mxu0
    %v1398 = vadd.f32 0.0, %v1397
    %v1399 = vpop.f32.mrf.mxu0
    %1400 = vmatprep.mubr.bf16.mxu0 0
    %1401 = vmatmul.mubr.bf16.gmra.mxu0 %v1325
    %v1402 = vpop.f32.mrf.mxu0
    %v1403 = vadd.f32 0.0, %v1402
    %v1404 = vpop.f32.mrf.mxu0
    %v1405 = vpop.f32.mrf.mxu0
    %v1406 = vadd.f32 0.0, %v1405
    %v1407 = vpop.f32.mrf.mxu0
    %1408 = vmatprep.mubr.bf16.mxu0 0
    %1409 = vmatmul.mubr.bf16.gmra.mxu0 %v1328
    %v1410 = vpop.f32.mrf.mxu0
    %v1411 = vadd.f32 0.0, %v1410
    %v1412 = vpop.f32.mrf.mxu0
    %v1413 = vpop.f32.mrf.mxu0
    %v1414 = vadd.f32 0.0, %v1413
    %v1415 = vpop.f32.mrf.mxu0
    %1416 = vmatprep.mubr.bf16.mxu0 0
    %1417 = vmatmul.mubr.bf16.gmra.mxu0 %v1331
    %v1418 = vpop.f32.mrf.mxu0
    %v1419 = vadd.f32 0.0, %v1418
    %v1420 = vpop.f32.mrf.mxu0
    %v1421 = vpop.f32.mrf.mxu0
    %v1422 = vadd.f32 0.0, %v1421
    %v1423 = vpop.f32.mrf.mxu0
    %1424 = vmatprep.mubr.bf16.mxu0 0
    %1425 = vmatmul.mubr.bf16.gmra.mxu0 %v1334
    %v1426 = vpop.f32.mrf.mxu0
    %v1427 = vadd.f32 0.0, %v1426
    %v1428 = vpop.f32.mrf.mxu0
    %v1429 = vpop.f32.mrf.mxu0
    %v1430 = vadd.f32 0.0, %v1429
    %v1431 = vpop.f32.mrf.mxu0
    %1432 = vdwg.mxu0
    %v1433 = vpack.c.bf16 %v1374, %v1371
    %v1434 = vpack.c.bf16 %v1382, %v1379
    %v1435 = vpack.c.bf16 %v1390, %v1387
    %v1436 = vpack.c.bf16 %v1398, %v1395
    %v1437 = vpack.c.bf16 %v1406, %v1403
    %v1438 = vpack.c.bf16 %v1414, %v1411
    %v1439 = vpack.c.bf16 %v1422, %v1419
    %v1440 = vpack.c.bf16 %v1430, %v1427
    %s1441 = scalar_lea.vmem %s11, 16
    %v1442 = vld [vmem:[%s1441] sm:$0xf]
    %v1443 = vld [vmem:[%s1441 + $0x4] sm:$0xf]
    %v1444 = vld [vmem:[%s1441 + $0x8] sm:$0xf]
    %v1445 = vld [vmem:[%s1441 + $0xc] sm:$0xf]
    %v1450 = vunpack.c.l.b16 %v1442
    %v1451 = vunpack.c.l.b16 %v1443
    %v1452 = vunpack.c.l.b16 %v1444
    %v1453 = vunpack.c.l.b16 %v1445
    %v1454 = vpack.c.b16 %v1451, %v1450
    %v1455 = vpack.c.b16 %v1453, %v1452
    %1458 = vmatprep.subr.bf16.mxu0 0
    %1459 = vmatpush1.bf16.msra.mxu0 0
    %1460 = vmatprep.subr.bf16.mxu0 0
    %1461 = vmatpush1.bf16.msra.mxu0 0
    %1462 = vmatprep.subr.bf16.mxu0 0
    %1463 = vmatpush1.bf16.msra.mxu0 0
    %1464 = vmatprep.subr.bf16.mxu0 0
    %1465 = vmatpush1.bf16.msra.mxu0 0
    %1466 = vmatprep.subr.bf16.mxu0 0
    %1467 = vmatpush1.bf16.msra.mxu0 0
    %1468 = vmatprep.subr.bf16.mxu0 0
    %1469 = vmatpush1.bf16.msra.mxu0 0
    %1470 = vmatprep.subr.bf16.mxu0 0
    %1471 = vmatpush1.bf16.msra.mxu0 %v1455
    %1472 = vmatprep.subr.bf16.mxu0 0
    %1473 = vmatpush1.bf16.msra.mxu0 %v1454
    %1474 = vmatprep.subr.bf16.mxu0 0
    %1475 = vmatpush2.bf16.msra.mxu0 0
    %1476 = vmatprep.subr.bf16.mxu0 0
    %1477 = vmatpush2.bf16.msra.mxu0 0
    %1478 = vmatprep.subr.bf16.mxu0 0
    %1479 = vmatpush2.bf16.msra.mxu0 0
    %1480 = vmatprep.subr.bf16.mxu0 0
    %1481 = vmatpush2.bf16.msra.mxu0 0
    %1482 = vmatprep.subr.bf16.mxu0 0
    %1483 = vmatpush2.bf16.msra.mxu0 0
    %1484 = vmatprep.subr.bf16.mxu0 0
    %1485 = vmatpush2.bf16.msra.mxu0 0
    %1486 = vmatprep.subr.bf16.mxu0 0
    %1487 = vmatpush2.bf16.msra.mxu0 0
    %1488 = vmatprep.subr.bf16.mxu0 0
    %1489 = vmatpush2.bf16.msra.mxu0 0
    %1490 = vmatprep.mubr.bf16.mxu0 0
    %1491 = vmatmul.mubr.bf16.gmra.mxu0 %v1313
    %v1492 = vpop.f32.mrf.mxu0
    %v1493 = vadd.f32 0.0, %v1492
    %v1494 = vpop.f32.mrf.mxu0
    %v1495 = vpop.f32.mrf.mxu0
    %v1496 = vadd.f32 0.0, %v1495
    %v1497 = vpop.f32.mrf.mxu0
    %1498 = vmatprep.mubr.bf16.mxu0 0
    %1499 = vmatmul.mubr.bf16.gmra.mxu0 %v1316
    %v1500 = vpop.f32.mrf.mxu0
    %v1501 = vadd.f32 0.0, %v1500
    %v1502 = vpop.f32.mrf.mxu0
    %v1503 = vpop.f32.mrf.mxu0
    %v1504 = vadd.f32 0.0, %v1503
    %v1505 = vpop.f32.mrf.mxu0
    %1506 = vmatprep.mubr.bf16.mxu0 0
    %1507 = vmatmul.mubr.bf16.gmra.mxu0 %v1319
    %v1508 = vpop.f32.mrf.mxu0
    %v1509 = vadd.f32 0.0, %v1508
    %v1510 = vpop.f32.mrf.mxu0
    %v1511 = vpop.f32.mrf.mxu0
    %v1512 = vadd.f32 0.0, %v1511
    %v1513 = vpop.f32.mrf.mxu0
    %1514 = vmatprep.mubr.bf16.mxu0 0
    %1515 = vmatmul.mubr.bf16.gmra.mxu0 %v1322
    %v1516 = vpop.f32.mrf.mxu0
    %v1517 = vadd.f32 0.0, %v1516
    %v1518 = vpop.f32.mrf.mxu0
    %v1519 = vpop.f32.mrf.mxu0
    %v1520 = vadd.f32 0.0, %v1519
    %v1521 = vpop.f32.mrf.mxu0
    %1522 = vmatprep.mubr.bf16.mxu0 0
    %1523 = vmatmul.mubr.bf16.gmra.mxu0 %v1325
    %v1524 = vpop.f32.mrf.mxu0
    %v1525 = vadd.f32 0.0, %v1524
    %v1526 = vpop.f32.mrf.mxu0
    %v1527 = vpop.f32.mrf.mxu0
    %v1528 = vadd.f32 0.0, %v1527
    %v1529 = vpop.f32.mrf.mxu0
    %1530 = vmatprep.mubr.bf16.mxu0 0
    %1531 = vmatmul.mubr.bf16.gmra.mxu0 %v1328
    %v1532 = vpop.f32.mrf.mxu0
    %v1533 = vadd.f32 0.0, %v1532
    %v1534 = vpop.f32.mrf.mxu0
    %v1535 = vpop.f32.mrf.mxu0
    %v1536 = vadd.f32 0.0, %v1535
    %v1537 = vpop.f32.mrf.mxu0
    %1538 = vmatprep.mubr.bf16.mxu0 0
    %1539 = vmatmul.mubr.bf16.gmra.mxu0 %v1331
    %v1540 = vpop.f32.mrf.mxu0
    %v1541 = vadd.f32 0.0, %v1540
    %v1542 = vpop.f32.mrf.mxu0
    %v1543 = vpop.f32.mrf.mxu0
    %v1544 = vadd.f32 0.0, %v1543
    %v1545 = vpop.f32.mrf.mxu0
    %1546 = vmatprep.mubr.bf16.mxu0 0
    %1547 = vmatmul.mubr.bf16.gmra.mxu0 %v1334
    %v1548 = vpop.f32.mrf.mxu0
    %v1549 = vadd.f32 0.0, %v1548
    %v1550 = vpop.f32.mrf.mxu0
    %v1551 = vpop.f32.mrf.mxu0
    %v1552 = vadd.f32 0.0, %v1551
    %v1553 = vpop.f32.mrf.mxu0
    %1554 = vdwg.mxu0
    %v1555 = vpack.c.bf16 %v1496, %v1493
    %v1556 = vpack.c.bf16 %v1504, %v1501
    %v1557 = vpack.c.bf16 %v1512, %v1509
    %v1558 = vpack.c.bf16 %v1520, %v1517
    %v1559 = vpack.c.bf16 %v1528, %v1525
    %v1560 = vpack.c.bf16 %v1536, %v1533
    %v1561 = vpack.c.bf16 %v1544, %v1541
    %v1562 = vpack.c.bf16 %v1552, %v1549
    %s1563 = scalar_lea.vmem %s11, 32
    %v1564 = vld [vmem:[%s1563] sm:$0xf]
    %v1565 = vld [vmem:[%s1563 + $0x4] sm:$0xf]
    %v1566 = vld [vmem:[%s1563 + $0x8] sm:$0xf]
    %v1567 = vld [vmem:[%s1563 + $0xc] sm:$0xf]
    %v1572 = vunpack.c.l.b16 %v1564
    %v1573 = vunpack.c.l.b16 %v1565
    %v1574 = vunpack.c.l.b16 %v1566
    %v1575 = vunpack.c.l.b16 %v1567
    %v1576 = vpack.c.b16 %v1573, %v1572
    %v1577 = vpack.c.b16 %v1575, %v1574
    %1580 = vmatprep.subr.bf16.mxu0 0
    %1581 = vmatpush1.bf16.msra.mxu0 0
    %1582 = vmatprep.subr.bf16.mxu0 0
    %1583 = vmatpush1.bf16.msra.mxu0 0
    %1584 = vmatprep.subr.bf16.mxu0 0
    %1585 = vmatpush1.bf16.msra.mxu0 0
    %1586 = vmatprep.subr.bf16.mxu0 0
    %1587 = vmatpush1.bf16.msra.mxu0 0
    %1588 = vmatprep.subr.bf16.mxu0 0
    %1589 = vmatpush1.bf16.msra.mxu0 0
    %1590 = vmatprep.subr.bf16.mxu0 0
    %1591 = vmatpush1.bf16.msra.mxu0 0
    %1592 = vmatprep.subr.bf16.mxu0 0
    %1593 = vmatpush1.bf16.msra.mxu0 %v1577
    %1594 = vmatprep.subr.bf16.mxu0 0
    %1595 = vmatpush1.bf16.msra.mxu0 %v1576
    %1596 = vmatprep.subr.bf16.mxu0 0
    %1597 = vmatpush2.bf16.msra.mxu0 0
    %1598 = vmatprep.subr.bf16.mxu0 0
    %1599 = vmatpush2.bf16.msra.mxu0 0
    %1600 = vmatprep.subr.bf16.mxu0 0
    %1601 = vmatpush2.bf16.msra.mxu0 0
    %1602 = vmatprep.subr.bf16.mxu0 0
    %1603 = vmatpush2.bf16.msra.mxu0 0
    %1604 = vmatprep.subr.bf16.mxu0 0
    %1605 = vmatpush2.bf16.msra.mxu0 0
    %1606 = vmatprep.subr.bf16.mxu0 0
    %1607 = vmatpush2.bf16.msra.mxu0 0
    %1608 = vmatprep.subr.bf16.mxu0 0
    %1609 = vmatpush2.bf16.msra.mxu0 0
    %1610 = vmatprep.subr.bf16.mxu0 0
    %1611 = vmatpush2.bf16.msra.mxu0 0
    %1612 = vmatprep.mubr.bf16.mxu0 0
    %1613 = vmatmul.mubr.bf16.gmra.mxu0 %v1313
    %v1614 = vpop.f32.mrf.mxu0
    %v1615 = vadd.f32 0.0, %v1614
    %v1616 = vpop.f32.mrf.mxu0
    %v1617 = vpop.f32.mrf.mxu0
    %v1618 = vadd.f32 0.0, %v1617
    %v1619 = vpop.f32.mrf.mxu0
    %1620 = vmatprep.mubr.bf16.mxu0 0
    %1621 = vmatmul.mubr.bf16.gmra.mxu0 %v1316
    %v1622 = vpop.f32.mrf.mxu0
    %v1623 = vadd.f32 0.0, %v1622
    %v1624 = vpop.f32.mrf.mxu0
    %v1625 = vpop.f32.mrf.mxu0
    %v1626 = vadd.f32 0.0, %v1625
    %v1627 = vpop.f32.mrf.mxu0
    %1628 = vmatprep.mubr.bf16.mxu0 0
    %1629 = vmatmul.mubr.bf16.gmra.mxu0 %v1319
    %v1630 = vpop.f32.mrf.mxu0
    %v1631 = vadd.f32 0.0, %v1630
    %v1632 = vpop.f32.mrf.mxu0
    %v1633 = vpop.f32.mrf.mxu0
    %v1634 = vadd.f32 0.0, %v1633
    %v1635 = vpop.f32.mrf.mxu0
    %1636 = vmatprep.mubr.bf16.mxu0 0
    %1637 = vmatmul.mubr.bf16.gmra.mxu0 %v1322
    %v1638 = vpop.f32.mrf.mxu0
    %v1639 = vadd.f32 0.0, %v1638
    %v1640 = vpop.f32.mrf.mxu0
    %v1641 = vpop.f32.mrf.mxu0
    %v1642 = vadd.f32 0.0, %v1641
    %v1643 = vpop.f32.mrf.mxu0
    %1644 = vmatprep.mubr.bf16.mxu0 0
    %1645 = vmatmul.mubr.bf16.gmra.mxu0 %v1325
    %v1646 = vpop.f32.mrf.mxu0
    %v1647 = vadd.f32 0.0, %v1646
    %v1648 = vpop.f32.mrf.mxu0
    %v1649 = vpop.f32.mrf.mxu0
    %v1650 = vadd.f32 0.0, %v1649
    %v1651 = vpop.f32.mrf.mxu0
    %1652 = vmatprep.mubr.bf16.mxu0 0
    %1653 = vmatmul.mubr.bf16.gmra.mxu0 %v1328
    %v1654 = vpop.f32.mrf.mxu0
    %v1655 = vadd.f32 0.0, %v1654
    %v1656 = vpop.f32.mrf.mxu0
    %v1657 = vpop.f32.mrf.mxu0
    %v1658 = vadd.f32 0.0, %v1657
    %v1659 = vpop.f32.mrf.mxu0
    %1660 = vmatprep.mubr.bf16.mxu0 0
    %1661 = vmatmul.mubr.bf16.gmra.mxu0 %v1331
    %v1662 = vpop.f32.mrf.mxu0
    %v1663 = vadd.f32 0.0, %v1662
    %v1664 = vpop.f32.mrf.mxu0
    %v1665 = vpop.f32.mrf.mxu0
    %v1666 = vadd.f32 0.0, %v1665
    %v1667 = vpop.f32.mrf.mxu0
    %1668 = vmatprep.mubr.bf16.mxu0 0
    %1669 = vmatmul.mubr.bf16.gmra.mxu0 %v1334
    %v1670 = vpop.f32.mrf.mxu0
    %v1671 = vadd.f32 0.0, %v1670
    %v1672 = vpop.f32.mrf.mxu0
    %v1673 = vpop.f32.mrf.mxu0
    %v1674 = vadd.f32 0.0, %v1673
    %v1675 = vpop.f32.mrf.mxu0
    %1676 = vdwg.mxu0
    %v1677 = vpack.c.bf16 %v1618, %v1615
    %v1678 = vpack.c.bf16 %v1626, %v1623
    %v1679 = vpack.c.bf16 %v1634, %v1631
    %v1680 = vpack.c.bf16 %v1642, %v1639
    %v1681 = vpack.c.bf16 %v1650, %v1647
    %v1682 = vpack.c.bf16 %v1658, %v1655
    %v1683 = vpack.c.bf16 %v1666, %v1663
    %v1684 = vpack.c.bf16 %v1674, %v1671
    %s1685 = scalar_lea.vmem %s11, 48
    %v1686 = vld [vmem:[%s1685] sm:$0xf]
    %v1687 = vld [vmem:[%s1685 + $0x4] sm:$0xf]
    %v1688 = vld [vmem:[%s1685 + $0x8] sm:$0xf]
    %v1689 = vld [vmem:[%s1685 + $0xc] sm:$0xf]
    %v1694 = vunpack.c.l.b16 %v1686
    %v1695 = vunpack.c.l.b16 %v1687
    %v1696 = vunpack.c.l.b16 %v1688
    %v1697 = vunpack.c.l.b16 %v1689
    %v1698 = vpack.c.b16 %v1695, %v1694
    %v1699 = vpack.c.b16 %v1697, %v1696
    %1702 = vmatprep.subr.bf16.mxu0 0
    %1703 = vmatpush1.bf16.msra.mxu0 0
    %1704 = vmatprep.subr.bf16.mxu0 0
    %1705 = vmatpush1.bf16.msra.mxu0 0
    %1706 = vmatprep.subr.bf16.mxu0 0
    %1707 = vmatpush1.bf16.msra.mxu0 0
    %1708 = vmatprep.subr.bf16.mxu0 0
    %1709 = vmatpush1.bf16.msra.mxu0 0
    %1710 = vmatprep.subr.bf16.mxu0 0
    %1711 = vmatpush1.bf16.msra.mxu0 0
    %1712 = vmatprep.subr.bf16.mxu0 0
    %1713 = vmatpush1.bf16.msra.mxu0 0
    %1714 = vmatprep.subr.bf16.mxu0 0
    %1715 = vmatpush1.bf16.msra.mxu0 %v1699
    %1716 = vmatprep.subr.bf16.mxu0 0
    %1717 = vmatpush1.bf16.msra.mxu0 %v1698
    %1718 = vmatprep.subr.bf16.mxu0 0
    %1719 = vmatpush2.bf16.msra.mxu0 0
    %1720 = vmatprep.subr.bf16.mxu0 0
    %1721 = vmatpush2.bf16.msra.mxu0 0
    %1722 = vmatprep.subr.bf16.mxu0 0
    %1723 = vmatpush2.bf16.msra.mxu0 0
    %1724 = vmatprep.subr.bf16.mxu0 0
    %1725 = vmatpush2.bf16.msra.mxu0 0
    %1726 = vmatprep.subr.bf16.mxu0 0
    %1727 = vmatpush2.bf16.msra.mxu0 0
    %1728 = vmatprep.subr.bf16.mxu0 0
    %1729 = vmatpush2.bf16.msra.mxu0 0
    %1730 = vmatprep.subr.bf16.mxu0 0
    %1731 = vmatpush2.bf16.msra.mxu0 0
    %1732 = vmatprep.subr.bf16.mxu0 0
    %1733 = vmatpush2.bf16.msra.mxu0 0
    %1734 = vmatprep.mubr.bf16.mxu0 0
    %1735 = vmatmul.mubr.bf16.gmra.mxu0 %v1313
    %v1736 = vpop.f32.mrf.mxu0
    %v1737 = vadd.f32 0.0, %v1736
    %v1738 = vpop.f32.mrf.mxu0
    %v1739 = vpop.f32.mrf.mxu0
    %v1740 = vadd.f32 0.0, %v1739
    %v1741 = vpop.f32.mrf.mxu0
    %1742 = vmatprep.mubr.bf16.mxu0 0
    %1743 = vmatmul.mubr.bf16.gmra.mxu0 %v1316
    %v1744 = vpop.f32.mrf.mxu0
    %v1745 = vadd.f32 0.0, %v1744
    %v1746 = vpop.f32.mrf.mxu0
    %v1747 = vpop.f32.mrf.mxu0
    %v1748 = vadd.f32 0.0, %v1747
    %v1749 = vpop.f32.mrf.mxu0
    %1750 = vmatprep.mubr.bf16.mxu0 0
    %1751 = vmatmul.mubr.bf16.gmra.mxu0 %v1319
    %v1752 = vpop.f32.mrf.mxu0
    %v1753 = vadd.f32 0.0, %v1752
    %v1754 = vpop.f32.mrf.mxu0
    %v1755 = vpop.f32.mrf.mxu0
    %v1756 = vadd.f32 0.0, %v1755
    %v1757 = vpop.f32.mrf.mxu0
    %1758 = vmatprep.mubr.bf16.mxu0 0
    %1759 = vmatmul.mubr.bf16.gmra.mxu0 %v1322
    %v1760 = vpop.f32.mrf.mxu0
    %v1761 = vadd.f32 0.0, %v1760
    %v1762 = vpop.f32.mrf.mxu0
    %v1763 = vpop.f32.mrf.mxu0
    %v1764 = vadd.f32 0.0, %v1763
    %v1765 = vpop.f32.mrf.mxu0
    %1766 = vmatprep.mubr.bf16.mxu0 0
    %1767 = vmatmul.mubr.bf16.gmra.mxu0 %v1325
    %v1768 = vpop.f32.mrf.mxu0
    %v1769 = vadd.f32 0.0, %v1768
    %v1770 = vpop.f32.mrf.mxu0
    %v1771 = vpop.f32.mrf.mxu0
    %v1772 = vadd.f32 0.0, %v1771
    %v1773 = vpop.f32.mrf.mxu0
    %1774 = vmatprep.mubr.bf16.mxu0 0
    %1775 = vmatmul.mubr.bf16.gmra.mxu0 %v1328
    %v1776 = vpop.f32.mrf.mxu0
    %v1777 = vadd.f32 0.0, %v1776
    %v1778 = vpop.f32.mrf.mxu0
    %v1779 = vpop.f32.mrf.mxu0
    %v1780 = vadd.f32 0.0, %v1779
    %v1781 = vpop.f32.mrf.mxu0
    %1782 = vmatprep.mubr.bf16.mxu0 0
    %1783 = vmatmul.mubr.bf16.gmra.mxu0 %v1331
    %v1784 = vpop.f32.mrf.mxu0
    %v1785 = vadd.f32 0.0, %v1784
    %v1786 = vpop.f32.mrf.mxu0
    %v1787 = vpop.f32.mrf.mxu0
    %v1788 = vadd.f32 0.0, %v1787
    %v1789 = vpop.f32.mrf.mxu0
    %1790 = vmatprep.mubr.bf16.mxu0 0
    %1791 = vmatmul.mubr.bf16.gmra.mxu0 %v1334
    %v1792 = vpop.f32.mrf.mxu0
    %v1793 = vadd.f32 0.0, %v1792
    %v1794 = vpop.f32.mrf.mxu0
    %v1795 = vpop.f32.mrf.mxu0
    %v1796 = vadd.f32 0.0, %v1795
    %v1797 = vpop.f32.mrf.mxu0
    %1798 = vdwg.mxu0
    %v1799 = vpack.c.bf16 %v1740, %v1737
    %v1800 = vpack.c.bf16 %v1748, %v1745
    %v1801 = vpack.c.bf16 %v1756, %v1753
    %v1802 = vpack.c.bf16 %v1764, %v1761
    %v1803 = vpack.c.bf16 %v1772, %v1769
    %v1804 = vpack.c.bf16 %v1780, %v1777
    %v1805 = vpack.c.bf16 %v1788, %v1785
    %v1806 = vpack.c.bf16 %v1796, %v1793
    %v1807 = vld [vmem:[%s9] sm:$0xff]
    %v1808 = vld [vmem:[%s9 + $0x8] sm:$0xff]
    %v1809 = vld [vmem:[%s9 + $0x10] sm:$0xff]
    %v1810 = vld [vmem:[%s9 + $0x18] sm:$0xff]
    %v1811 = vld [vmem:[%s9 + $0x20] sm:$0xff]
    %v1812 = vld [vmem:[%s9 + $0x28] sm:$0xff]
    %v1813 = vld [vmem:[%s9 + $0x30] sm:$0xff]
    %v1814 = vld [vmem:[%s9 + $0x38] sm:$0xff]
    %v1815 = vld [vmem:[%s9 + $0x40] sm:$0xff]
    %v1816 = vld [vmem:[%s9 + $0x48] sm:$0xff]
    %v1817 = vld [vmem:[%s9 + $0x50] sm:$0xff]
    %v1818 = vld [vmem:[%s9 + $0x58] sm:$0xff]
    %v1819 = vld [vmem:[%s9 + $0x60] sm:$0xff]
    %v1820 = vld [vmem:[%s9 + $0x68] sm:$0xff]
    %v1821 = vld [vmem:[%s9 + $0x70] sm:$0xff]
    %v1822 = vld [vmem:[%s9 + $0x78] sm:$0xff]
    %v1823 = vld [vmem:[%s9 + $0x80] sm:$0xff]
    %v1824 = vld [vmem:[%s9 + $0x88] sm:$0xff]
    %v1825 = vld [vmem:[%s9 + $0x90] sm:$0xff]
    %v1826 = vld [vmem:[%s9 + $0x98] sm:$0xff]
    %v1827 = vld [vmem:[%s9 + $0xa0] sm:$0xff]
    %v1828 = vld [vmem:[%s9 + $0xa8] sm:$0xff]
    %v1829 = vld [vmem:[%s9 + $0xb0] sm:$0xff]
    %v1830 = vld [vmem:[%s9 + $0xb8] sm:$0xff]
    %v1831 = vld [vmem:[%s9 + $0xc0] sm:$0xff]
    %v1832 = vld [vmem:[%s9 + $0xc8] sm:$0xff]
    %v1833 = vld [vmem:[%s9 + $0xd0] sm:$0xff]
    %v1834 = vld [vmem:[%s9 + $0xd8] sm:$0xff]
    %v1835 = vld [vmem:[%s9 + $0xe0] sm:$0xff]
    %v1836 = vld [vmem:[%s9 + $0xe8] sm:$0xff]
    %v1837 = vld [vmem:[%s9 + $0xf0] sm:$0xff]
    %v1838 = vld [vmem:[%s9 + $0xf8] sm:$0xff]
    %v1871 = vunpack.c.l.b16 %v1807
    %v1872 = vunpack.c.h.b16 %v1807
    %v1873 = vunpack.c.l.b16 %v1808
    %v1874 = vunpack.c.h.b16 %v1808
    %v1875 = vunpack.c.l.b16 %v1809
    %v1876 = vunpack.c.h.b16 %v1809
    %v1877 = vunpack.c.l.b16 %v1810
    %v1878 = vunpack.c.h.b16 %v1810
    %v1879 = vunpack.c.l.b16 %v1811
    %v1880 = vunpack.c.h.b16 %v1811
    %v1881 = vunpack.c.l.b16 %v1812
    %v1882 = vunpack.c.h.b16 %v1812
    %v1883 = vunpack.c.l.b16 %v1813
    %v1884 = vunpack.c.h.b16 %v1813
    %v1885 = vunpack.c.l.b16 %v1814
    %v1886 = vunpack.c.h.b16 %v1814
    %v1887 = vunpack.c.l.b16 %v1815
    %v1888 = vunpack.c.h.b16 %v1815
    %v1889 = vunpack.c.l.b16 %v1816
    %v1890 = vunpack.c.h.b16 %v1816
    %v1891 = vunpack.c.l.b16 %v1817
    %v1892 = vunpack.c.h.b16 %v1817
    %v1893 = vunpack.c.l.b16 %v1818
    %v1894 = vunpack.c.h.b16 %v1818
    %v1895 = vunpack.c.l.b16 %v1819
    %v1896 = vunpack.c.h.b16 %v1819
    %v1897 = vunpack.c.l.b16 %v1820
    %v1898 = vunpack.c.h.b16 %v1820
    %v1899 = vunpack.c.l.b16 %v1821
    %v1900 = vunpack.c.h.b16 %v1821
    %v1901 = vunpack.c.l.b16 %v1822
    %v1902 = vunpack.c.h.b16 %v1822
    %v1903 = vunpack.c.l.b16 %v1823
    %v1904 = vunpack.c.h.b16 %v1823
    %v1905 = vunpack.c.l.b16 %v1824
    %v1906 = vunpack.c.h.b16 %v1824
    %v1907 = vunpack.c.l.b16 %v1825
    %v1908 = vunpack.c.h.b16 %v1825
    %v1909 = vunpack.c.l.b16 %v1826
    %v1910 = vunpack.c.h.b16 %v1826
    %v1911 = vunpack.c.l.b16 %v1827
    %v1912 = vunpack.c.h.b16 %v1827
    %v1913 = vunpack.c.l.b16 %v1828
    %v1914 = vunpack.c.h.b16 %v1828
    %v1915 = vunpack.c.l.b16 %v1829
    %v1916 = vunpack.c.h.b16 %v1829
    %v1917 = vunpack.c.l.b16 %v1830
    %v1918 = vunpack.c.h.b16 %v1830
    %v1919 = vunpack.c.l.b16 %v1831
    %v1920 = vunpack.c.h.b16 %v1831
    %v1921 = vunpack.c.l.b16 %v1832
    %v1922 = vunpack.c.h.b16 %v1832
    %v1923 = vunpack.c.l.b16 %v1833
    %v1924 = vunpack.c.h.b16 %v1833
    %v1925 = vunpack.c.l.b16 %v1834
    %v1926 = vunpack.c.h.b16 %v1834
    %v1927 = vunpack.c.l.b16 %v1835
    %v1928 = vunpack.c.h.b16 %v1835
    %v1929 = vunpack.c.l.b16 %v1836
    %v1930 = vunpack.c.h.b16 %v1836
    %v1931 = vunpack.c.l.b16 %v1837
    %v1932 = vunpack.c.h.b16 %v1837
    %v1933 = vunpack.c.l.b16 %v1838
    %v1934 = vunpack.c.h.b16 %v1838
    %v1935 = vpack.c.b16 %v1875, %v1871
    %v1936 = vpack.c.b16 %v1876, %v1872
    %v1937 = vpack.c.b16 %v1877, %v1873
    %v1938 = vpack.c.b16 %v1878, %v1874
    %v1939 = vpack.c.b16 %v1883, %v1879
    %v1940 = vpack.c.b16 %v1884, %v1880
    %v1941 = vpack.c.b16 %v1885, %v1881
    %v1942 = vpack.c.b16 %v1886, %v1882
    %v1943 = vpack.c.b16 %v1891, %v1887
    %v1944 = vpack.c.b16 %v1892, %v1888
    %v1945 = vpack.c.b16 %v1893, %v1889
    %v1946 = vpack.c.b16 %v1894, %v1890
    %v1947 = vpack.c.b16 %v1899, %v1895
    %v1948 = vpack.c.b16 %v1900, %v1896
    %v1949 = vpack.c.b16 %v1901, %v1897
    %v1950 = vpack.c.b16 %v1902, %v1898
    %v1951 = vpack.c.b16 %v1907, %v1903
    %v1952 = vpack.c.b16 %v1908, %v1904
    %v1953 = vpack.c.b16 %v1909, %v1905
    %v1954 = vpack.c.b16 %v1910, %v1906
    %v1955 = vpack.c.b16 %v1915, %v1911
    %v1956 = vpack.c.b16 %v1916, %v1912
    %v1957 = vpack.c.b16 %v1917, %v1913
    %v1958 = vpack.c.b16 %v1918, %v1914
    %v1959 = vpack.c.b16 %v1923, %v1919
    %v1960 = vpack.c.b16 %v1924, %v1920
    %v1961 = vpack.c.b16 %v1925, %v1921
    %v1962 = vpack.c.b16 %v1926, %v1922
    %v1963 = vpack.c.b16 %v1931, %v1927
    %v1964 = vpack.c.b16 %v1932, %v1928
    %v1965 = vpack.c.b16 %v1933, %v1929
    %v1966 = vpack.c.b16 %v1934, %v1930
    %1999 = vmatprep.subr.bf16.mxu0 0
    %2000 = vmatpush1.bf16.msra.mxu0 %v1440
    %2001 = vmatprep.subr.bf16.mxu0 0
    %2002 = vmatpush1.bf16.msra.mxu0 %v1439
    %2003 = vmatprep.subr.bf16.mxu0 0
    %2004 = vmatpush1.bf16.msra.mxu0 %v1438
    %2005 = vmatprep.subr.bf16.mxu0 0
    %2006 = vmatpush1.bf16.msra.mxu0 %v1437
    %2007 = vmatprep.subr.bf16.mxu0 0
    %2008 = vmatpush1.bf16.msra.mxu0 %v1436
    %2009 = vmatprep.subr.bf16.mxu0 0
    %2010 = vmatpush1.bf16.msra.mxu0 %v1435
    %2011 = vmatprep.subr.bf16.mxu0 0
    %2012 = vmatpush1.bf16.msra.mxu0 %v1434
    %2013 = vmatprep.subr.bf16.mxu0 0
    %2014 = vmatpush1.bf16.msra.mxu0 %v1433
    %2015 = vmatprep.subr.bf16.mxu0 0
    %2016 = vmatpush2.bf16.msra.mxu0 %v1562
    %2017 = vmatprep.subr.bf16.mxu0 0
    %2018 = vmatpush2.bf16.msra.mxu0 %v1561
    %2019 = vmatprep.subr.bf16.mxu0 0
    %2020 = vmatpush2.bf16.msra.mxu0 %v1560
    %2021 = vmatprep.subr.bf16.mxu0 0
    %2022 = vmatpush2.bf16.msra.mxu0 %v1559
    %2023 = vmatprep.subr.bf16.mxu0 0
    %2024 = vmatpush2.bf16.msra.mxu0 %v1558
    %2025 = vmatprep.subr.bf16.mxu0 0
    %2026 = vmatpush2.bf16.msra.mxu0 %v1557
    %2027 = vmatprep.subr.bf16.mxu0 0
    %2028 = vmatpush2.bf16.msra.mxu0 %v1556
    %2029 = vmatprep.subr.bf16.mxu0 0
    %2030 = vmatpush2.bf16.msra.mxu0 %v1555
    %2031 = vmatprep.mubr.bf16.mxu0 %v1936
    %2032 = vmatmul.mubr.bf16.gmra.mxu0 %v1935
    %v2033 = vpop.f32.mrf.mxu0
    %v2034 = vadd.f32 0.0, %v2033
    %v2035 = vpop.f32.mrf.mxu0
    %v2036 = vpop.f32.mrf.mxu0
    %v2037 = vadd.f32 0.0, %v2036
    %v2038 = vpop.f32.mrf.mxu0
    %2039 = vmatprep.mubr.bf16.mxu0 %v1940
    %2040 = vmatmul.mubr.bf16.gmra.mxu0 %v1939
    %v2041 = vpop.f32.mrf.mxu0
    %v2042 = vadd.f32 0.0, %v2041
    %v2043 = vpop.f32.mrf.mxu0
    %v2044 = vpop.f32.mrf.mxu0
    %v2045 = vadd.f32 0.0, %v2044
    %v2046 = vpop.f32.mrf.mxu0
    %2047 = vmatprep.mubr.bf16.mxu0 %v1944
    %2048 = vmatmul.mubr.bf16.gmra.mxu0 %v1943
    %v2049 = vpop.f32.mrf.mxu0
    %v2050 = vadd.f32 0.0, %v2049
    %v2051 = vpop.f32.mrf.mxu0
    %v2052 = vpop.f32.mrf.mxu0
    %v2053 = vadd.f32 0.0, %v2052
    %v2054 = vpop.f32.mrf.mxu0
    %2055 = vmatprep.mubr.bf16.mxu0 %v1948
    %2056 = vmatmul.mubr.bf16.gmra.mxu0 %v1947
    %v2057 = vpop.f32.mrf.mxu0
    %v2058 = vadd.f32 0.0, %v2057
    %v2059 = vpop.f32.mrf.mxu0
    %v2060 = vpop.f32.mrf.mxu0
    %v2061 = vadd.f32 0.0, %v2060
    %v2062 = vpop.f32.mrf.mxu0
    %2063 = vmatprep.mubr.bf16.mxu0 %v1952
    %2064 = vmatmul.mubr.bf16.gmra.mxu0 %v1951
    %v2065 = vpop.f32.mrf.mxu0
    %v2066 = vadd.f32 0.0, %v2065
    %v2067 = vpop.f32.mrf.mxu0
    %v2068 = vpop.f32.mrf.mxu0
    %v2069 = vadd.f32 0.0, %v2068
    %v2070 = vpop.f32.mrf.mxu0
    %2071 = vmatprep.mubr.bf16.mxu0 %v1956
    %2072 = vmatmul.mubr.bf16.gmra.mxu0 %v1955
    %v2073 = vpop.f32.mrf.mxu0
    %v2074 = vadd.f32 0.0, %v2073
    %v2075 = vpop.f32.mrf.mxu0
    %v2076 = vpop.f32.mrf.mxu0
    %v2077 = vadd.f32 0.0, %v2076
    %v2078 = vpop.f32.mrf.mxu0
    %2079 = vmatprep.mubr.bf16.mxu0 %v1960
    %2080 = vmatmul.mubr.bf16.gmra.mxu0 %v1959
    %v2081 = vpop.f32.mrf.mxu0
    %v2082 = vadd.f32 0.0, %v2081
    %v2083 = vpop.f32.mrf.mxu0
    %v2084 = vpop.f32.mrf.mxu0
    %v2085 = vadd.f32 0.0, %v2084
    %v2086 = vpop.f32.mrf.mxu0
    %2087 = vmatprep.mubr.bf16.mxu0 %v1964
    %2088 = vmatmul.mubr.bf16.gmra.mxu0 %v1963
    %v2089 = vpop.f32.mrf.mxu0
    %v2090 = vadd.f32 0.0, %v2089
    %v2091 = vpop.f32.mrf.mxu0
    %v2092 = vpop.f32.mrf.mxu0
    %v2093 = vadd.f32 0.0, %v2092
    %v2094 = vpop.f32.mrf.mxu0
    %2095 = vdwg.mxu0
    %2096 = vmatprep.subr.bf16.mxu0 0
    %2097 = vmatpush1.bf16.msra.mxu0 %v1684
    %2098 = vmatprep.subr.bf16.mxu0 0
    %2099 = vmatpush1.bf16.msra.mxu0 %v1683
    %2100 = vmatprep.subr.bf16.mxu0 0
    %2101 = vmatpush1.bf16.msra.mxu0 %v1682
    %2102 = vmatprep.subr.bf16.mxu0 0
    %2103 = vmatpush1.bf16.msra.mxu0 %v1681
    %2104 = vmatprep.subr.bf16.mxu0 0
    %2105 = vmatpush1.bf16.msra.mxu0 %v1680
    %2106 = vmatprep.subr.bf16.mxu0 0
    %2107 = vmatpush1.bf16.msra.mxu0 %v1679
    %2108 = vmatprep.subr.bf16.mxu0 0
    %2109 = vmatpush1.bf16.msra.mxu0 %v1678
    %2110 = vmatprep.subr.bf16.mxu0 0
    %2111 = vmatpush1.bf16.msra.mxu0 %v1677
    %2112 = vmatprep.subr.bf16.mxu0 0
    %2113 = vmatpush2.bf16.msra.mxu0 %v1806
    %2114 = vmatprep.subr.bf16.mxu0 0
    %2115 = vmatpush2.bf16.msra.mxu0 %v1805
    %2116 = vmatprep.subr.bf16.mxu0 0
    %2117 = vmatpush2.bf16.msra.mxu0 %v1804
    %2118 = vmatprep.subr.bf16.mxu0 0
    %2119 = vmatpush2.bf16.msra.mxu0 %v1803
    %2120 = vmatprep.subr.bf16.mxu0 0
    %2121 = vmatpush2.bf16.msra.mxu0 %v1802
    %2122 = vmatprep.subr.bf16.mxu0 0
    %2123 = vmatpush2.bf16.msra.mxu0 %v1801
    %2124 = vmatprep.subr.bf16.mxu0 0
    %2125 = vmatpush2.bf16.msra.mxu0 %v1800
    %2126 = vmatprep.subr.bf16.mxu0 0
    %2127 = vmatpush2.bf16.msra.mxu0 %v1799
    %2128 = vmatprep.mubr.bf16.mxu0 %v1938
    %2129 = vmatmul.mubr.bf16.gmra.mxu0 %v1937
    %v2130 = vpop.f32.mrf.mxu0
    %v2131 = vadd.f32 %v2034, %v2130
    %v2132 = vpop.f32.mrf.mxu0
    %v2133 = vpop.f32.mrf.mxu0
    %v2134 = vadd.f32 %v2037, %v2133
    %v2135 = vpop.f32.mrf.mxu0
    %2136 = vmatprep.mubr.bf16.mxu0 %v1942
    %2137 = vmatmul.mubr.bf16.gmra.mxu0 %v1941
    %v2138 = vpop.f32.mrf.mxu0
    %v2139 = vadd.f32 %v2042, %v2138
    %v2140 = vpop.f32.mrf.mxu0
    %v2141 = vpop.f32.mrf.mxu0
    %v2142 = vadd.f32 %v2045, %v2141
    %v2143 = vpop.f32.mrf.mxu0
    %2144 = vmatprep.mubr.bf16.mxu0 %v1946
    %2145 = vmatmul.mubr.bf16.gmra.mxu0 %v1945
    %v2146 = vpop.f32.mrf.mxu0
    %v2147 = vadd.f32 %v2050, %v2146
    %v2148 = vpop.f32.mrf.mxu0
    %v2149 = vpop.f32.mrf.mxu0
    %v2150 = vadd.f32 %v2053, %v2149
    %v2151 = vpop.f32.mrf.mxu0
    %2152 = vmatprep.mubr.bf16.mxu0 %v1950
    %2153 = vmatmul.mubr.bf16.gmra.mxu0 %v1949
    %v2154 = vpop.f32.mrf.mxu0
    %v2155 = vadd.f32 %v2058, %v2154
    %v2156 = vpop.f32.mrf.mxu0
    %v2157 = vpop.f32.mrf.mxu0
    %v2158 = vadd.f32 %v2061, %v2157
    %v2159 = vpop.f32.mrf.mxu0
    %2160 = vmatprep.mubr.bf16.mxu0 %v1954
    %2161 = vmatmul.mubr.bf16.gmra.mxu0 %v1953
    %v2162 = vpop.f32.mrf.mxu0
    %v2163 = vadd.f32 %v2066, %v2162
    %v2164 = vpop.f32.mrf.mxu0
    %v2165 = vpop.f32.mrf.mxu0
    %v2166 = vadd.f32 %v2069, %v2165
    %v2167 = vpop.f32.mrf.mxu0
    %2168 = vmatprep.mubr.bf16.mxu0 %v1958
    %2169 = vmatmul.mubr.bf16.gmra.mxu0 %v1957
    %v2170 = vpop.f32.mrf.mxu0
    %v2171 = vadd.f32 %v2074, %v2170
    %v2172 = vpop.f32.mrf.mxu0
    %v2173 = vpop.f32.mrf.mxu0
    %v2174 = vadd.f32 %v2077, %v2173
    %v2175 = vpop.f32.mrf.mxu0
    %2176 = vmatprep.mubr.bf16.mxu0 %v1962
    %2177 = vmatmul.mubr.bf16.gmra.mxu0 %v1961
    %v2178 = vpop.f32.mrf.mxu0
    %v2179 = vadd.f32 %v2082, %v2178
    %v2180 = vpop.f32.mrf.mxu0
    %v2181 = vpop.f32.mrf.mxu0
    %v2182 = vadd.f32 %v2085, %v2181
    %v2183 = vpop.f32.mrf.mxu0
    %2184 = vmatprep.mubr.bf16.mxu0 %v1966
    %2185 = vmatmul.mubr.bf16.gmra.mxu0 %v1965
    %v2186 = vpop.f32.mrf.mxu0
    %v2187 = vadd.f32 %v2090, %v2186
    %v2188 = vpop.f32.mrf.mxu0
    %v2189 = vpop.f32.mrf.mxu0
    %v2190 = vadd.f32 %v2093, %v2189
    %v2191 = vpop.f32.mrf.mxu0
    %2192 = vdwg.mxu0
    %v2193 = vld [vmem:[%s17] sm:$0xf]
    %v2194 = vld [vmem:[%s17 + $0x4] sm:$0xf]
    %v2195 = vld [vmem:[%s21] sm:$0xf]
    %v2196 = vld [vmem:[%s21 + $0x4] sm:$0xf]
    %v2199 = vunpack.c.l.b16 %v2193
    %v2200 = vunpack.c.l.b16 %v2194
    %v2201 = vpack.c.b16 %v2200, %v2199
    %vm2203 = vcmask 130048
    %v2205 = vsel %vm2203, %v2131, 0
    %v2208 = vsel %vm2203, %v2134, 0
    %v2211 = vsel %vm2203, %v2139, 0
    %v2214 = vsel %vm2203, %v2142, 0
    %v2217 = vsel %vm2203, %v2147, 0
    %v2220 = vsel %vm2203, %v2150, 0
    %v2223 = vsel %vm2203, %v2155, 0
    %v2226 = vsel %vm2203, %v2158, 0
    %v2229 = vsel %vm2203, %v2163, 0
    %v2232 = vsel %vm2203, %v2166, 0
    %v2235 = vsel %vm2203, %v2171, 0
    %v2238 = vsel %vm2203, %v2174, 0
    %v2241 = vsel %vm2203, %v2179, 0
    %v2244 = vsel %vm2203, %v2182, 0
    %v2247 = vsel %vm2203, %v2187, 0
    %v2250 = vsel %vm2203, %v2190, 0
    %2252 = vmatprep.subr.bf16.mxu0 0
    %2253 = vmatpush1.bf16.msra.mxu0 0
    %2254 = vmatprep.subr.bf16.mxu0 0
    %2255 = vmatpush1.bf16.msra.mxu0 0
    %2256 = vmatprep.subr.bf16.mxu0 0
    %2257 = vmatpush1.bf16.msra.mxu0 0
    %2258 = vmatprep.subr.bf16.mxu0 0
    %2259 = vmatpush1.bf16.msra.mxu0 0
    %2260 = vmatprep.subr.bf16.mxu0 0
    %2261 = vmatpush1.bf16.msra.mxu0 0
    %2262 = vmatprep.subr.bf16.mxu0 0
    %2263 = vmatpush1.bf16.msra.mxu0 0
    %2264 = vmatprep.subr.bf16.mxu0 0
    %2265 = vmatpush1.bf16.msra.mxu0 0
    %2266 = vmatprep.subr.bf16.mxu0 0
    %2267 = vmatpush1.bf16.msra.mxu0 %v2201
    %2268 = vmatprep.subr.bf16.mxu0 0
    %2269 = vmatpush2.bf16.msra.mxu0 0
    %2270 = vmatprep.subr.bf16.mxu0 0
    %2271 = vmatpush2.bf16.msra.mxu0 0
    %2272 = vmatprep.subr.bf16.mxu0 0
    %2273 = vmatpush2.bf16.msra.mxu0 0
    %2274 = vmatprep.subr.bf16.mxu0 0
    %2275 = vmatpush2.bf16.msra.mxu0 0
    %2276 = vmatprep.subr.bf16.mxu0 0
    %2277 = vmatpush2.bf16.msra.mxu0 0
    %2278 = vmatprep.subr.bf16.mxu0 0
    %2279 = vmatpush2.bf16.msra.mxu0 0
    %2280 = vmatprep.subr.bf16.mxu0 0
    %2281 = vmatpush2.bf16.msra.mxu0 0
    %2282 = vmatprep.subr.bf16.mxu0 0
    %2283 = vmatpush2.bf16.msra.mxu0 0
    %2284 = vmatprep.mubr.f32.mxu0 0.0
    %2285 = vmatmul.mubr.f32.gmra.mxu0 %v2205
    %v2286 = vpop.f32.mrf.mxu0
    %v2287 = vadd.f32 0.0, %v2286
    %v2288 = vpop.f32.mrf.mxu0
    %2289 = vmatprep.mubr.f32.mxu0 0.0
    %2290 = vmatmul.mubr.f32.gmra.mxu0 %v2208
    %v2291 = vpop.f32.mrf.mxu0
    %v2292 = vadd.f32 0.0, %v2291
    %v2293 = vpop.f32.mrf.mxu0
    %2294 = vmatprep.mubr.f32.mxu0 0.0
    %2295 = vmatmul.mubr.f32.gmra.mxu0 %v2211
    %v2296 = vpop.f32.mrf.mxu0
    %v2297 = vadd.f32 0.0, %v2296
    %v2298 = vpop.f32.mrf.mxu0
    %2299 = vmatprep.mubr.f32.mxu0 0.0
    %2300 = vmatmul.mubr.f32.gmra.mxu0 %v2214
    %v2301 = vpop.f32.mrf.mxu0
    %v2302 = vadd.f32 0.0, %v2301
    %v2303 = vpop.f32.mrf.mxu0
    %2304 = vmatprep.mubr.f32.mxu0 0.0
    %2305 = vmatmul.mubr.f32.gmra.mxu0 %v2217
    %v2306 = vpop.f32.mrf.mxu0
    %v2307 = vadd.f32 0.0, %v2306
    %v2308 = vpop.f32.mrf.mxu0
    %2309 = vmatprep.mubr.f32.mxu0 0.0
    %2310 = vmatmul.mubr.f32.gmra.mxu0 %v2220
    %v2311 = vpop.f32.mrf.mxu0
    %v2312 = vadd.f32 0.0, %v2311
    %v2313 = vpop.f32.mrf.mxu0
    %2314 = vmatprep.mubr.f32.mxu0 0.0
    %2315 = vmatmul.mubr.f32.gmra.mxu0 %v2223
    %v2316 = vpop.f32.mrf.mxu0
    %v2317 = vadd.f32 0.0, %v2316
    %v2318 = vpop.f32.mrf.mxu0
    %2319 = vmatprep.mubr.f32.mxu0 0.0
    %2320 = vmatmul.mubr.f32.gmra.mxu0 %v2226
    %v2321 = vpop.f32.mrf.mxu0
    %v2322 = vadd.f32 0.0, %v2321
    %v2323 = vpop.f32.mrf.mxu0
    %2324 = vmatprep.mubr.f32.mxu0 0.0
    %2325 = vmatmul.mubr.f32.gmra.mxu0 %v2229
    %v2326 = vpop.f32.mrf.mxu0
    %v2327 = vadd.f32 0.0, %v2326
    %v2328 = vpop.f32.mrf.mxu0
    %2329 = vmatprep.mubr.f32.mxu0 0.0
    %2330 = vmatmul.mubr.f32.gmra.mxu0 %v2232
    %v2331 = vpop.f32.mrf.mxu0
    %v2332 = vadd.f32 0.0, %v2331
    %v2333 = vpop.f32.mrf.mxu0
    %2334 = vmatprep.mubr.f32.mxu0 0.0
    %2335 = vmatmul.mubr.f32.gmra.mxu0 %v2235
    %v2336 = vpop.f32.mrf.mxu0
    %v2337 = vadd.f32 0.0, %v2336
    %v2338 = vpop.f32.mrf.mxu0
    %2339 = vmatprep.mubr.f32.mxu0 0.0
    %2340 = vmatmul.mubr.f32.gmra.mxu0 %v2238
    %v2341 = vpop.f32.mrf.mxu0
    %v2342 = vadd.f32 0.0, %v2341
    %v2343 = vpop.f32.mrf.mxu0
    %2344 = vmatprep.mubr.f32.mxu0 0.0
    %2345 = vmatmul.mubr.f32.gmra.mxu0 %v2241
    %v2346 = vpop.f32.mrf.mxu0
    %v2347 = vadd.f32 0.0, %v2346
    %v2348 = vpop.f32.mrf.mxu0
    %2349 = vmatprep.mubr.f32.mxu0 0.0
    %2350 = vmatmul.mubr.f32.gmra.mxu0 %v2244
    %v2351 = vpop.f32.mrf.mxu0
    %v2352 = vadd.f32 0.0, %v2351
    %v2353 = vpop.f32.mrf.mxu0
    %2354 = vmatprep.mubr.f32.mxu0 0.0
    %2355 = vmatmul.mubr.f32.gmra.mxu0 %v2247
    %v2356 = vpop.f32.mrf.mxu0
    %v2357 = vadd.f32 0.0, %v2356
    %v2358 = vpop.f32.mrf.mxu0
    %2359 = vmatprep.mubr.f32.mxu0 0.0
    %2360 = vmatmul.mubr.f32.gmra.mxu0 %v2250
    %v2361 = vpop.f32.mrf.mxu0
    %v2362 = vadd.f32 0.0, %v2361
    %v2363 = vpop.f32.mrf.mxu0
    %2364 = vdwg.mxu0
    %v2367 = vunpack.c.l.b16 %v2195
    %v2368 = vunpack.c.l.b16 %v2196
    %v2369 = vpack.c.b16 %v2368, %v2367
    %2371 = vmatprep.subr.mxu0 0.0
    %2372 = vmatpush1.msra.mxu0 %v2362
    %2373 = vmatprep.subr.mxu0 0.0
    %2374 = vmatpush1.msra.mxu0 %v2357
    %2375 = vmatprep.subr.mxu0 0.0
    %2376 = vmatpush1.msra.mxu0 %v2352
    %2377 = vmatprep.subr.mxu0 0.0
    %2378 = vmatpush1.msra.mxu0 %v2347
    %2379 = vmatprep.subr.mxu0 0.0
    %2380 = vmatpush1.msra.mxu0 %v2342
    %2381 = vmatprep.subr.mxu0 0.0
    %2382 = vmatpush1.msra.mxu0 %v2337
    %2383 = vmatprep.subr.mxu0 0.0
    %2384 = vmatpush1.msra.mxu0 %v2332
    %2385 = vmatprep.subr.mxu0 0.0
    %2386 = vmatpush1.msra.mxu0 %v2327
    %2387 = vmatprep.subr.mxu0 0.0
    %2388 = vmatpush1.msra.mxu0 %v2322
    %2389 = vmatprep.subr.mxu0 0.0
    %2390 = vmatpush1.msra.mxu0 %v2317
    %2391 = vmatprep.subr.mxu0 0.0
    %2392 = vmatpush1.msra.mxu0 %v2312
    %2393 = vmatprep.subr.mxu0 0.0
    %2394 = vmatpush1.msra.mxu0 %v2307
    %2395 = vmatprep.subr.mxu0 0.0
    %2396 = vmatpush1.msra.mxu0 %v2302
    %2397 = vmatprep.subr.mxu0 0.0
    %2398 = vmatpush1.msra.mxu0 %v2297
    %2399 = vmatprep.subr.mxu0 0.0
    %2400 = vmatpush1.msra.mxu0 %v2292
    %2401 = vmatprep.subr.mxu0 0.0
    %2402 = vmatpush1.msra.mxu0 %v2287
    %2403 = vmatprep.subr.mxu0 0.0
    %2404 = vmatpush2.msra.mxu0 0.0
    %2405 = vmatprep.subr.mxu0 0.0
    %2406 = vmatpush2.msra.mxu0 0.0
    %2407 = vmatprep.subr.mxu0 0.0
    %2408 = vmatpush2.msra.mxu0 0.0
    %2409 = vmatprep.subr.mxu0 0.0
    %2410 = vmatpush2.msra.mxu0 0.0
    %2411 = vmatprep.subr.mxu0 0.0
    %2412 = vmatpush2.msra.mxu0 0.0
    %2413 = vmatprep.subr.mxu0 0.0
    %2414 = vmatpush2.msra.mxu0 0.0
    %2415 = vmatprep.subr.mxu0 0.0
    %2416 = vmatpush2.msra.mxu0 0.0
    %2417 = vmatprep.subr.mxu0 0.0
    %2418 = vmatpush2.msra.mxu0 0.0
    %2419 = vmatprep.subr.mxu0 0.0
    %2420 = vmatpush2.msra.mxu0 0.0
    %2421 = vmatprep.subr.mxu0 0.0
    %2422 = vmatpush2.msra.mxu0 0.0
    %2423 = vmatprep.subr.mxu0 0.0
    %2424 = vmatpush2.msra.mxu0 0.0
    %2425 = vmatprep.subr.mxu0 0.0
    %2426 = vmatpush2.msra.mxu0 0.0
    %2427 = vmatprep.subr.mxu0 0.0
    %2428 = vmatpush2.msra.mxu0 0.0
    %2429 = vmatprep.subr.mxu0 0.0
    %2430 = vmatpush2.msra.mxu0 0.0
    %2431 = vmatprep.subr.mxu0 0.0
    %2432 = vmatpush2.msra.mxu0 0.0
    %2433 = vmatprep.subr.mxu0 0.0
    %2434 = vmatpush2.msra.mxu0 0.0
    %2435 = vmatprep.mubr.bf16.mxu0 0
    %2436 = vmatmul.mubr.bf16.gmra.mxu0 %v2369
    %v2437 = vpop.f32.mrf.mxu0
    %v2438 = vadd.f32 0.0, %v2437
    %v2439 = vpop.f32.mrf.mxu0
    %v2440 = vpop.f32.mrf.mxu0
    %v2441 = vadd.f32 0.0, %v2440
    %v2442 = vpop.f32.mrf.mxu0
    %2443 = vdwg.mxu0
    %v2444 = vmul.f32 %v2131, %v2131
    %v2445 = vmul.f32 %v2134, %v2134
    %v2446 = vmul.f32 %v2139, %v2139
    %v2447 = vmul.f32 %v2142, %v2142
    %v2448 = vmul.f32 %v2147, %v2147
    %v2449 = vmul.f32 %v2150, %v2150
    %v2450 = vmul.f32 %v2155, %v2155
    %v2451 = vmul.f32 %v2158, %v2158
    %v2452 = vmul.f32 %v2163, %v2163
    %v2453 = vmul.f32 %v2166, %v2166
    %v2454 = vmul.f32 %v2171, %v2171
    %v2455 = vmul.f32 %v2174, %v2174
    %v2456 = vmul.f32 %v2179, %v2179
    %v2457 = vmul.f32 %v2182, %v2182
    %v2458 = vmul.f32 %v2187, %v2187
    %v2459 = vmul.f32 %v2190, %v2190
    %v2461 = vsel %vm2203, %v2444, 0
    %v2464 = vsel %vm2203, %v2445, 0
    %v2467 = vsel %vm2203, %v2446, 0
    %v2470 = vsel %vm2203, %v2447, 0
    %v2473 = vsel %vm2203, %v2448, 0
    %v2476 = vsel %vm2203, %v2449, 0
    %v2479 = vsel %vm2203, %v2450, 0
    %v2482 = vsel %vm2203, %v2451, 0
    %v2485 = vsel %vm2203, %v2452, 0
    %v2488 = vsel %vm2203, %v2453, 0
    %v2491 = vsel %vm2203, %v2454, 0
    %v2494 = vsel %vm2203, %v2455, 0
    %v2497 = vsel %vm2203, %v2456, 0
    %v2500 = vsel %vm2203, %v2457, 0
    %v2503 = vsel %vm2203, %v2458, 0
    %v2506 = vsel %vm2203, %v2459, 0
    %2508 = vmatprep.subr.bf16.mxu0 0
    %2509 = vmatpush1.bf16.msra.mxu0 0
    %2510 = vmatprep.subr.bf16.mxu0 0
    %2511 = vmatpush1.bf16.msra.mxu0 0
    %2512 = vmatprep.subr.bf16.mxu0 0
    %2513 = vmatpush1.bf16.msra.mxu0 0
    %2514 = vmatprep.subr.bf16.mxu0 0
    %2515 = vmatpush1.bf16.msra.mxu0 0
    %2516 = vmatprep.subr.bf16.mxu0 0
    %2517 = vmatpush1.bf16.msra.mxu0 0
    %2518 = vmatprep.subr.bf16.mxu0 0
    %2519 = vmatpush1.bf16.msra.mxu0 0
    %2520 = vmatprep.subr.bf16.mxu0 0
    %2521 = vmatpush1.bf16.msra.mxu0 0
    %2522 = vmatprep.subr.bf16.mxu0 0
    %2523 = vmatpush1.bf16.msra.mxu0 %v2201
    %2524 = vmatprep.subr.bf16.mxu0 0
    %2525 = vmatpush2.bf16.msra.mxu0 0
    %2526 = vmatprep.subr.bf16.mxu0 0
    %2527 = vmatpush2.bf16.msra.mxu0 0
    %2528 = vmatprep.subr.bf16.mxu0 0
    %2529 = vmatpush2.bf16.msra.mxu0 0
    %2530 = vmatprep.subr.bf16.mxu0 0
    %2531 = vmatpush2.bf16.msra.mxu0 0
    %2532 = vmatprep.subr.bf16.mxu0 0
    %2533 = vmatpush2.bf16.msra.mxu0 0
    %2534 = vmatprep.subr.bf16.mxu0 0
    %2535 = vmatpush2.bf16.msra.mxu0 0
    %2536 = vmatprep.subr.bf16.mxu0 0
    %2537 = vmatpush2.bf16.msra.mxu0 0
    %2538 = vmatprep.subr.bf16.mxu0 0
    %2539 = vmatpush2.bf16.msra.mxu0 0
    %2540 = vmatprep.mubr.f32.mxu0 0.0
    %2541 = vmatmul.mubr.f32.gmra.mxu0 %v2461
    %v2542 = vpop.f32.mrf.mxu0
    %v2543 = vadd.f32 0.0, %v2542
    %v2544 = vpop.f32.mrf.mxu0
    %2545 = vmatprep.mubr.f32.mxu0 0.0
    %2546 = vmatmul.mubr.f32.gmra.mxu0 %v2464
    %v2547 = vpop.f32.mrf.mxu0
    %v2548 = vadd.f32 0.0, %v2547
    %v2549 = vpop.f32.mrf.mxu0
    %2550 = vmatprep.mubr.f32.mxu0 0.0
    %2551 = vmatmul.mubr.f32.gmra.mxu0 %v2467
    %v2552 = vpop.f32.mrf.mxu0
    %v2553 = vadd.f32 0.0, %v2552
    %v2554 = vpop.f32.mrf.mxu0
    %2555 = vmatprep.mubr.f32.mxu0 0.0
    %2556 = vmatmul.mubr.f32.gmra.mxu0 %v2470
    %v2557 = vpop.f32.mrf.mxu0
    %v2558 = vadd.f32 0.0, %v2557
    %v2559 = vpop.f32.mrf.mxu0
    %2560 = vmatprep.mubr.f32.mxu0 0.0
    %2561 = vmatmul.mubr.f32.gmra.mxu0 %v2473
    %v2562 = vpop.f32.mrf.mxu0
    %v2563 = vadd.f32 0.0, %v2562
    %v2564 = vpop.f32.mrf.mxu0
    %2565 = vmatprep.mubr.f32.mxu0 0.0
    %2566 = vmatmul.mubr.f32.gmra.mxu0 %v2476
    %v2567 = vpop.f32.mrf.mxu0
    %v2568 = vadd.f32 0.0, %v2567
    %v2569 = vpop.f32.mrf.mxu0
    %2570 = vmatprep.mubr.f32.mxu0 0.0
    %2571 = vmatmul.mubr.f32.gmra.mxu0 %v2479
    %v2572 = vpop.f32.mrf.mxu0
    %v2573 = vadd.f32 0.0, %v2572
    %v2574 = vpop.f32.mrf.mxu0
    %2575 = vmatprep.mubr.f32.mxu0 0.0
    %2576 = vmatmul.mubr.f32.gmra.mxu0 %v2482
    %v2577 = vpop.f32.mrf.mxu0
    %v2578 = vadd.f32 0.0, %v2577
    %v2579 = vpop.f32.mrf.mxu0
    %2580 = vmatprep.mubr.f32.mxu0 0.0
    %2581 = vmatmul.mubr.f32.gmra.mxu0 %v2485
    %v2582 = vpop.f32.mrf.mxu0
    %v2583 = vadd.f32 0.0, %v2582
    %v2584 = vpop.f32.mrf.mxu0
    %2585 = vmatprep.mubr.f32.mxu0 0.0
    %2586 = vmatmul.mubr.f32.gmra.mxu0 %v2488
    %v2587 = vpop.f32.mrf.mxu0
    %v2588 = vadd.f32 0.0, %v2587
    %v2589 = vpop.f32.mrf.mxu0
    %2590 = vmatprep.mubr.f32.mxu0 0.0
    %2591 = vmatmul.mubr.f32.gmra.mxu0 %v2491
    %v2592 = vpop.f32.mrf.mxu0
    %v2593 = vadd.f32 0.0, %v2592
    %v2594 = vpop.f32.mrf.mxu0
    %2595 = vmatprep.mubr.f32.mxu0 0.0
    %2596 = vmatmul.mubr.f32.gmra.mxu0 %v2494
    %v2597 = vpop.f32.mrf.mxu0
    %v2598 = vadd.f32 0.0, %v2597
    %v2599 = vpop.f32.mrf.mxu0
    %2600 = vmatprep.mubr.f32.mxu0 0.0
    %2601 = vmatmul.mubr.f32.gmra.mxu0 %v2497
    %v2602 = vpop.f32.mrf.mxu0
    %v2603 = vadd.f32 0.0, %v2602
    %v2604 = vpop.f32.mrf.mxu0
    %2605 = vmatprep.mubr.f32.mxu0 0.0
    %2606 = vmatmul.mubr.f32.gmra.mxu0 %v2500
    %v2607 = vpop.f32.mrf.mxu0
    %v2608 = vadd.f32 0.0, %v2607
    %v2609 = vpop.f32.mrf.mxu0
    %2610 = vmatprep.mubr.f32.mxu0 0.0
    %2611 = vmatmul.mubr.f32.gmra.mxu0 %v2503
    %v2612 = vpop.f32.mrf.mxu0
    %v2613 = vadd.f32 0.0, %v2612
    %v2614 = vpop.f32.mrf.mxu0
    %2615 = vmatprep.mubr.f32.mxu0 0.0
    %2616 = vmatmul.mubr.f32.gmra.mxu0 %v2506
    %v2617 = vpop.f32.mrf.mxu0
    %v2618 = vadd.f32 0.0, %v2617
    %v2619 = vpop.f32.mrf.mxu0
    %2620 = vdwg.mxu0
    %2621 = vmatprep.subr.mxu0 0.0
    %2622 = vmatpush1.msra.mxu0 %v2618
    %2623 = vmatprep.subr.mxu0 0.0
    %2624 = vmatpush1.msra.mxu0 %v2613
    %2625 = vmatprep.subr.mxu0 0.0
    %2626 = vmatpush1.msra.mxu0 %v2608
    %2627 = vmatprep.subr.mxu0 0.0
    %2628 = vmatpush1.msra.mxu0 %v2603
    %2629 = vmatprep.subr.mxu0 0.0
    %2630 = vmatpush1.msra.mxu0 %v2598
    %2631 = vmatprep.subr.mxu0 0.0
    %2632 = vmatpush1.msra.mxu0 %v2593
    %2633 = vmatprep.subr.mxu0 0.0
    %2634 = vmatpush1.msra.mxu0 %v2588
    %2635 = vmatprep.subr.mxu0 0.0
    %2636 = vmatpush1.msra.mxu0 %v2583
    %2637 = vmatprep.subr.mxu0 0.0
    %2638 = vmatpush1.msra.mxu0 %v2578
    %2639 = vmatprep.subr.mxu0 0.0
    %2640 = vmatpush1.msra.mxu0 %v2573
    %2641 = vmatprep.subr.mxu0 0.0
    %2642 = vmatpush1.msra.mxu0 %v2568
    %2643 = vmatprep.subr.mxu0 0.0
    %2644 = vmatpush1.msra.mxu0 %v2563
    %2645 = vmatprep.subr.mxu0 0.0
    %2646 = vmatpush1.msra.mxu0 %v2558
    %2647 = vmatprep.subr.mxu0 0.0
    %2648 = vmatpush1.msra.mxu0 %v2553
    %2649 = vmatprep.subr.mxu0 0.0
    %2650 = vmatpush1.msra.mxu0 %v2548
    %2651 = vmatprep.subr.mxu0 0.0
    %2652 = vmatpush1.msra.mxu0 %v2543
    %2653 = vmatprep.subr.mxu0 0.0
    %2654 = vmatpush2.msra.mxu0 0.0
    %2655 = vmatprep.subr.mxu0 0.0
    %2656 = vmatpush2.msra.mxu0 0.0
    %2657 = vmatprep.subr.mxu0 0.0
    %2658 = vmatpush2.msra.mxu0 0.0
    %2659 = vmatprep.subr.mxu0 0.0
    %2660 = vmatpush2.msra.mxu0 0.0
    %2661 = vmatprep.subr.mxu0 0.0
    %2662 = vmatpush2.msra.mxu0 0.0
    %2663 = vmatprep.subr.mxu0 0.0
    %2664 = vmatpush2.msra.mxu0 0.0
    %2665 = vmatprep.subr.mxu0 0.0
    %2666 = vmatpush2.msra.mxu0 0.0
    %2667 = vmatprep.subr.mxu0 0.0
    %2668 = vmatpush2.msra.mxu0 0.0
    %2669 = vmatprep.subr.mxu0 0.0
    %2670 = vmatpush2.msra.mxu0 0.0
    %2671 = vmatprep.subr.mxu0 0.0
    %2672 = vmatpush2.msra.mxu0 0.0
    %2673 = vmatprep.subr.mxu0 0.0
    %2674 = vmatpush2.msra.mxu0 0.0
    %2675 = vmatprep.subr.mxu0 0.0
    %2676 = vmatpush2.msra.mxu0 0.0
    %2677 = vmatprep.subr.mxu0 0.0
    %2678 = vmatpush2.msra.mxu0 0.0
    %2679 = vmatprep.subr.mxu0 0.0
    %2680 = vmatpush2.msra.mxu0 0.0
    %2681 = vmatprep.subr.mxu0 0.0
    %2682 = vmatpush2.msra.mxu0 0.0
    %2683 = vmatprep.subr.mxu0 0.0
    %2684 = vmatpush2.msra.mxu0 0.0
    %2685 = vmatprep.mubr.bf16.mxu0 0
    %2686 = vmatmul.mubr.bf16.gmra.mxu0 %v2369
    %v2687 = vpop.f32.mrf.mxu0
    %v2688 = vadd.f32 0.0, %v2687
    %v2689 = vpop.f32.mrf.mxu0
    %v2690 = vpop.f32.mrf.mxu0
    %v2691 = vadd.f32 0.0, %v2690
    %v2692 = vpop.f32.mrf.mxu0
    %2693 = vdwg.mxu0
    %v2694 = vmul.f32 %v2438, 0.015625
    %v2695 = vmul.f32 %v2441, 0.015625
    %v2696 = vmul.f32 %v2688, 0.015625
    %v2697 = vmul.f32 %v2691, 0.015625
    %v2698 = vmul.f32 %v2694, %v2694
    %v2699 = vmul.f32 %v2695, %v2695
    %v2700 = vsub.f32 %v2696, %v2698
    %v2701 = vsub.f32 %v2697, %v2699
    %v2702 = vadd.f32 %v2700, 1e-05
    %v2703 = vadd.f32 %v2701, 1e-05
    %v2704 = vrsqrt.pop %v2702
    %v2705 = vrsqrt.pop %v2703
    %v2706 = vld [vmem:[%s13] sm:$0xff]
    %v2707 = vld [vmem:[%s13 + $0x8] sm:$0xff]
    %2709 = vset.pattern.permute.xlu0 0
    %2710 = vperm.xlu0 %2709, %v2706
    %v2711 = vpop.permute.xlu0 %2710
    %2714 = vset.pattern.permute.xlu0 0
    %2715 = vperm.xlu0 %2714, %v2707
    %v2716 = vpop.permute.xlu0 %2715
    %v2718 = vmul.f32 %v2711, %v2704
    %v2719 = vmul.f32 %v2716, %v2705
    %v2720 = vld [vmem:[%s15] sm:$0xff]
    %v2721 = vld [vmem:[%s15 + $0x8] sm:$0xff]
    %v2722 = vmul.f32 %v2718, %v2694
    %v2723 = vmul.f32 %v2719, %v2695
    %2725 = vset.pattern.permute.xlu0 0
    %2726 = vperm.xlu0 %2725, %v2720
    %v2727 = vpop.permute.xlu0 %2726
    %2730 = vset.pattern.permute.xlu0 0
    %2731 = vperm.xlu0 %2730, %v2721
    %v2732 = vpop.permute.xlu0 %2731
    %v2734 = vsub.f32 %v2727, %v2722
    %v2735 = vsub.f32 %v2732, %v2723
    %v2736 = vld [vmem:[%s23] sm:$0xf]
    %v2737 = vld [vmem:[%s23 + $0x4] sm:$0xf]
    %v2738 = vld [vmem:[%s23 + $0x8] sm:$0xf]
    %v2739 = vld [vmem:[%s23 + $0xc] sm:$0xf]
    %v2740 = vld [vmem:[%s23 + $0x10] sm:$0xf]
    %v2741 = vld [vmem:[%s23 + $0x14] sm:$0xf]
    %v2742 = vld [vmem:[%s23 + $0x18] sm:$0xf]
    %v2743 = vld [vmem:[%s23 + $0x1c] sm:$0xf]
    %v2744 = vld [vmem:[%s23 + $0x20] sm:$0xf]
    %v2745 = vld [vmem:[%s23 + $0x24] sm:$0xf]
    %v2746 = vld [vmem:[%s23 + $0x28] sm:$0xf]
    %v2747 = vld [vmem:[%s23 + $0x2c] sm:$0xf]
    %v2748 = vld [vmem:[%s23 + $0x30] sm:$0xf]
    %v2749 = vld [vmem:[%s23 + $0x34] sm:$0xf]
    %v2750 = vld [vmem:[%s23 + $0x38] sm:$0xf]
    %v2751 = vld [vmem:[%s23 + $0x3c] sm:$0xf]
    %v2768 = vunpack.c.l.b16 %v2736
    %v2769 = vunpack.c.l.b16 %v2737
    %v2770 = vunpack.c.l.b16 %v2738
    %v2771 = vunpack.c.l.b16 %v2739
    %v2772 = vunpack.c.l.b16 %v2740
    %v2773 = vunpack.c.l.b16 %v2741
    %v2774 = vunpack.c.l.b16 %v2742
    %v2775 = vunpack.c.l.b16 %v2743
    %v2776 = vunpack.c.l.b16 %v2744
    %v2777 = vunpack.c.l.b16 %v2745
    %v2778 = vunpack.c.l.b16 %v2746
    %v2779 = vunpack.c.l.b16 %v2747
    %v2780 = vunpack.c.l.b16 %v2748
    %v2781 = vunpack.c.l.b16 %v2749
    %v2782 = vunpack.c.l.b16 %v2750
    %v2783 = vunpack.c.l.b16 %v2751
    %v2784 = vpack.c.b16 %v2769, %v2768
    %v2785 = vpack.c.b16 %v2771, %v2770
    %v2786 = vpack.c.b16 %v2773, %v2772
    %v2787 = vpack.c.b16 %v2775, %v2774
    %v2788 = vpack.c.b16 %v2777, %v2776
    %v2789 = vpack.c.b16 %v2779, %v2778
    %v2790 = vpack.c.b16 %v2781, %v2780
    %v2791 = vpack.c.b16 %v2783, %v2782
    %v2793 = vsel %vm2203, %v2784, 0
    %v2796 = vsel %vm2203, %v2785, 0
    %v2799 = vsel %vm2203, %v2786, 0
    %v2802 = vsel %vm2203, %v2787, 0
    %v2805 = vsel %vm2203, %v2788, 0
    %v2808 = vsel %vm2203, %v2789, 0
    %v2811 = vsel %vm2203, %v2790, 0
    %v2814 = vsel %vm2203, %v2791, 0
    %2816 = vmatprep.subr.mxu0 0.0
    %2817 = vmatpush1.msra.mxu0 0.0
    %2818 = vmatprep.subr.mxu0 0.0
    %2819 = vmatpush1.msra.mxu0 0.0
    %2820 = vmatprep.subr.mxu0 0.0
    %2821 = vmatpush1.msra.mxu0 0.0
    %2822 = vmatprep.subr.mxu0 0.0
    %2823 = vmatpush1.msra.mxu0 0.0
    %2824 = vmatprep.subr.mxu0 0.0
    %2825 = vmatpush1.msra.mxu0 0.0
    %2826 = vmatprep.subr.mxu0 0.0
    %2827 = vmatpush1.msra.mxu0 0.0
    %2828 = vmatprep.subr.mxu0 0.0
    %2829 = vmatpush1.msra.mxu0 0.0
    %2830 = vmatprep.subr.mxu0 0.0
    %2831 = vmatpush1.msra.mxu0 0.0
    %2832 = vmatprep.subr.mxu0 0.0
    %2833 = vmatpush1.msra.mxu0 0.0
    %2834 = vmatprep.subr.mxu0 0.0
    %2835 = vmatpush1.msra.mxu0 0.0
    %2836 = vmatprep.subr.mxu0 0.0
    %2837 = vmatpush1.msra.mxu0 0.0
    %2838 = vmatprep.subr.mxu0 0.0
    %2839 = vmatpush1.msra.mxu0 0.0
    %2840 = vmatprep.subr.mxu0 0.0
    %2841 = vmatpush1.msra.mxu0 0.0
    %2842 = vmatprep.subr.mxu0 0.0
    %2843 = vmatpush1.msra.mxu0 0.0
    %2844 = vmatprep.subr.mxu0 0.0
    %2845 = vmatpush1.msra.mxu0 %v2719
    %2846 = vmatprep.subr.mxu0 0.0
    %2847 = vmatpush1.msra.mxu0 %v2718
    %2848 = vmatprep.subr.mxu0 0.0
    %2849 = vmatpush2.msra.mxu0 0.0
    %2850 = vmatprep.subr.mxu0 0.0
    %2851 = vmatpush2.msra.mxu0 0.0
    %2852 = vmatprep.subr.mxu0 0.0
    %2853 = vmatpush2.msra.mxu0 0.0
    %2854 = vmatprep.subr.mxu0 0.0
    %2855 = vmatpush2.msra.mxu0 0.0
    %2856 = vmatprep.subr.mxu0 0.0
    %2857 = vmatpush2.msra.mxu0 0.0
    %2858 = vmatprep.subr.mxu0 0.0
    %2859 = vmatpush2.msra.mxu0 0.0
    %2860 = vmatprep.subr.mxu0 0.0
    %2861 = vmatpush2.msra.mxu0 0.0
    %2862 = vmatprep.subr.mxu0 0.0
    %2863 = vmatpush2.msra.mxu0 0.0
    %2864 = vmatprep.subr.mxu0 0.0
    %2865 = vmatpush2.msra.mxu0 0.0
    %2866 = vmatprep.subr.mxu0 0.0
    %2867 = vmatpush2.msra.mxu0 0.0
    %2868 = vmatprep.subr.mxu0 0.0
    %2869 = vmatpush2.msra.mxu0 0.0
    %2870 = vmatprep.subr.mxu0 0.0
    %2871 = vmatpush2.msra.mxu0 0.0
    %2872 = vmatprep.subr.mxu0 0.0
    %2873 = vmatpush2.msra.mxu0 0.0
    %2874 = vmatprep.subr.mxu0 0.0
    %2875 = vmatpush2.msra.mxu0 0.0
    %2876 = vmatprep.subr.mxu0 0.0
    %2877 = vmatpush2.msra.mxu0 0.0
    %2878 = vmatprep.subr.mxu0 0.0
    %2879 = vmatpush2.msra.mxu0 0.0
    %2880 = vmatprep.mubr.bf16.mxu0 0
    %2881 = vmatmul.mubr.bf16.gmra.mxu0 %v2793
    %v2882 = vpop.f32.mrf.mxu0
    %v2883 = vadd.f32 0.0, %v2882
    %v2884 = vpop.f32.mrf.mxu0
    %v2885 = vpop.f32.mrf.mxu0
    %v2886 = vadd.f32 0.0, %v2885
    %v2887 = vpop.f32.mrf.mxu0
    %2888 = vmatprep.mubr.bf16.mxu0 0
    %2889 = vmatmul.mubr.bf16.gmra.mxu0 %v2796
    %v2890 = vpop.f32.mrf.mxu0
    %v2891 = vadd.f32 0.0, %v2890
    %v2892 = vpop.f32.mrf.mxu0
    %v2893 = vpop.f32.mrf.mxu0
    %v2894 = vadd.f32 0.0, %v2893
    %v2895 = vpop.f32.mrf.mxu0
    %2896 = vmatprep.mubr.bf16.mxu0 0
    %2897 = vmatmul.mubr.bf16.gmra.mxu0 %v2799
    %v2898 = vpop.f32.mrf.mxu0
    %v2899 = vadd.f32 0.0, %v2898
    %v2900 = vpop.f32.mrf.mxu0
    %v2901 = vpop.f32.mrf.mxu0
    %v2902 = vadd.f32 0.0, %v2901
    %v2903 = vpop.f32.mrf.mxu0
    %2904 = vmatprep.mubr.bf16.mxu0 0
    %2905 = vmatmul.mubr.bf16.gmra.mxu0 %v2802
    %v2906 = vpop.f32.mrf.mxu0
    %v2907 = vadd.f32 0.0, %v2906
    %v2908 = vpop.f32.mrf.mxu0
    %v2909 = vpop.f32.mrf.mxu0
    %v2910 = vadd.f32 0.0, %v2909
    %v2911 = vpop.f32.mrf.mxu0
    %2912 = vmatprep.mubr.bf16.mxu0 0
    %2913 = vmatmul.mubr.bf16.gmra.mxu0 %v2805
    %v2914 = vpop.f32.mrf.mxu0
    %v2915 = vadd.f32 0.0, %v2914
    %v2916 = vpop.f32.mrf.mxu0
    %v2917 = vpop.f32.mrf.mxu0
    %v2918 = vadd.f32 0.0, %v2917
    %v2919 = vpop.f32.mrf.mxu0
    %2920 = vmatprep.mubr.bf16.mxu0 0
    %2921 = vmatmul.mubr.bf16.gmra.mxu0 %v2808
    %v2922 = vpop.f32.mrf.mxu0
    %v2923 = vadd.f32 0.0, %v2922
    %v2924 = vpop.f32.mrf.mxu0
    %v2925 = vpop.f32.mrf.mxu0
    %v2926 = vadd.f32 0.0, %v2925
    %v2927 = vpop.f32.mrf.mxu0
    %2928 = vmatprep.mubr.bf16.mxu0 0
    %2929 = vmatmul.mubr.bf16.gmra.mxu0 %v2811
    %v2930 = vpop.f32.mrf.mxu0
    %v2931 = vadd.f32 0.0, %v2930
    %v2932 = vpop.f32.mrf.mxu0
    %v2933 = vpop.f32.mrf.mxu0
    %v2934 = vadd.f32 0.0, %v2933
    %v2935 = vpop.f32.mrf.mxu0
    %2936 = vmatprep.mubr.bf16.mxu0 0
    %2937 = vmatmul.mubr.bf16.gmra.mxu0 %v2814
    %v2938 = vpop.f32.mrf.mxu0
    %v2939 = vadd.f32 0.0, %v2938
    %v2940 = vpop.f32.mrf.mxu0
    %v2941 = vpop.f32.mrf.mxu0
    %v2942 = vadd.f32 0.0, %v2941
    %v2943 = vpop.f32.mrf.mxu0
    %2944 = vdwg.mxu0
    %v2945 = vld [vmem:[%s19] sm:$0x1]
    %vm2946 = vcmask 15360
    %v2948 = vsel %vm2946, %v2883, 0
    %v2951 = vsel %vm2946, %v2886, 0
    %v2954 = vsel %vm2946, %v2891, 0
    %v2957 = vsel %vm2946, %v2894, 0
    %v2960 = vsel %vm2946, %v2899, 0
    %v2963 = vsel %vm2946, %v2902, 0
    %v2966 = vsel %vm2946, %v2907, 0
    %v2969 = vsel %vm2946, %v2910, 0
    %v2972 = vsel %vm2946, %v2915, 0
    %v2975 = vsel %vm2946, %v2918, 0
    %v2978 = vsel %vm2946, %v2923, 0
    %v2981 = vsel %vm2946, %v2926, 0
    %v2984 = vsel %vm2946, %v2931, 0
    %v2987 = vsel %vm2946, %v2934, 0
    %v2990 = vsel %vm2946, %v2939, 0
    %v2993 = vsel %vm2946, %v2942, 0
    %vm2995 = vcmask 1040384
    %v2997 = vsel %vm2995, %v2945, 0
    %2999 = vmatprep.subr.bf16.mxu0 0
    %3000 = vmatpush1.bf16.msra.mxu0 0
    %3001 = vmatprep.subr.bf16.mxu0 0
    %3002 = vmatpush1.bf16.msra.mxu0 0
    %3003 = vmatprep.subr.bf16.mxu0 0
    %3004 = vmatpush1.bf16.msra.mxu0 0
    %3005 = vmatprep.subr.bf16.mxu0 0
    %3006 = vmatpush1.bf16.msra.mxu0 0
    %3007 = vmatprep.subr.bf16.mxu0 0
    %3008 = vmatpush1.bf16.msra.mxu0 0
    %3009 = vmatprep.subr.bf16.mxu0 0
    %3010 = vmatpush1.bf16.msra.mxu0 0
    %3011 = vmatprep.subr.bf16.mxu0 0
    %3012 = vmatpush1.bf16.msra.mxu0 0
    %3013 = vmatprep.subr.bf16.mxu0 0
    %3014 = vmatpush1.bf16.msra.mxu0 %v2997
    %3015 = vmatprep.subr.bf16.mxu0 0
    %3016 = vmatpush2.bf16.msra.mxu0 0
    %3017 = vmatprep.subr.bf16.mxu0 0
    %3018 = vmatpush2.bf16.msra.mxu0 0
    %3019 = vmatprep.subr.bf16.mxu0 0
    %3020 = vmatpush2.bf16.msra.mxu0 0
    %3021 = vmatprep.subr.bf16.mxu0 0
    %3022 = vmatpush2.bf16.msra.mxu0 0
    %3023 = vmatprep.subr.bf16.mxu0 0
    %3024 = vmatpush2.bf16.msra.mxu0 0
    %3025 = vmatprep.subr.bf16.mxu0 0
    %3026 = vmatpush2.bf16.msra.mxu0 0
    %3027 = vmatprep.subr.bf16.mxu0 0
    %3028 = vmatpush2.bf16.msra.mxu0 0
    %3029 = vmatprep.subr.bf16.mxu0 0
    %3030 = vmatpush2.bf16.msra.mxu0 0
    %3031 = vmatprep.mubr.f32.mxu0 0.0
    %3032 = vmatmul.mubr.f32.gmra.mxu0 %v2948
    %v3033 = vpop.f32.mrf.mxu0
    %v3034 = vadd.f32 0.0, %v3033
    %v3035 = vpop.f32.mrf.mxu0
    %3036 = vmatprep.mubr.f32.mxu0 0.0
    %3037 = vmatmul.mubr.f32.gmra.mxu0 %v2951
    %v3038 = vpop.f32.mrf.mxu0
    %v3039 = vadd.f32 0.0, %v3038
    %v3040 = vpop.f32.mrf.mxu0
    %3041 = vmatprep.mubr.f32.mxu0 0.0
    %3042 = vmatmul.mubr.f32.gmra.mxu0 %v2954
    %v3043 = vpop.f32.mrf.mxu0
    %v3044 = vadd.f32 0.0, %v3043
    %v3045 = vpop.f32.mrf.mxu0
    %3046 = vmatprep.mubr.f32.mxu0 0.0
    %3047 = vmatmul.mubr.f32.gmra.mxu0 %v2957
    %v3048 = vpop.f32.mrf.mxu0
    %v3049 = vadd.f32 0.0, %v3048
    %v3050 = vpop.f32.mrf.mxu0
    %3051 = vmatprep.mubr.f32.mxu0 0.0
    %3052 = vmatmul.mubr.f32.gmra.mxu0 %v2960
    %v3053 = vpop.f32.mrf.mxu0
    %v3054 = vadd.f32 0.0, %v3053
    %v3055 = vpop.f32.mrf.mxu0
    %3056 = vmatprep.mubr.f32.mxu0 0.0
    %3057 = vmatmul.mubr.f32.gmra.mxu0 %v2963
    %v3058 = vpop.f32.mrf.mxu0
    %v3059 = vadd.f32 0.0, %v3058
    %v3060 = vpop.f32.mrf.mxu0
    %3061 = vmatprep.mubr.f32.mxu0 0.0
    %3062 = vmatmul.mubr.f32.gmra.mxu0 %v2966
    %v3063 = vpop.f32.mrf.mxu0
    %v3064 = vadd.f32 0.0, %v3063
    %v3065 = vpop.f32.mrf.mxu0
    %3066 = vmatprep.mubr.f32.mxu0 0.0
    %3067 = vmatmul.mubr.f32.gmra.mxu0 %v2969
    %v3068 = vpop.f32.mrf.mxu0
    %v3069 = vadd.f32 0.0, %v3068
    %v3070 = vpop.f32.mrf.mxu0
    %3071 = vmatprep.mubr.f32.mxu0 0.0
    %3072 = vmatmul.mubr.f32.gmra.mxu0 %v2972
    %v3073 = vpop.f32.mrf.mxu0
    %v3074 = vadd.f32 0.0, %v3073
    %v3075 = vpop.f32.mrf.mxu0
    %3076 = vmatprep.mubr.f32.mxu0 0.0
    %3077 = vmatmul.mubr.f32.gmra.mxu0 %v2975
    %v3078 = vpop.f32.mrf.mxu0
    %v3079 = vadd.f32 0.0, %v3078
    %v3080 = vpop.f32.mrf.mxu0
    %3081 = vmatprep.mubr.f32.mxu0 0.0
    %3082 = vmatmul.mubr.f32.gmra.mxu0 %v2978
    %v3083 = vpop.f32.mrf.mxu0
    %v3084 = vadd.f32 0.0, %v3083
    %v3085 = vpop.f32.mrf.mxu0
    %3086 = vmatprep.mubr.f32.mxu0 0.0
    %3087 = vmatmul.mubr.f32.gmra.mxu0 %v2981
    %v3088 = vpop.f32.mrf.mxu0
    %v3089 = vadd.f32 0.0, %v3088
    %v3090 = vpop.f32.mrf.mxu0
    %3091 = vmatprep.mubr.f32.mxu0 0.0
    %3092 = vmatmul.mubr.f32.gmra.mxu0 %v2984
    %v3093 = vpop.f32.mrf.mxu0
    %v3094 = vadd.f32 0.0, %v3093
    %v3095 = vpop.f32.mrf.mxu0
    %3096 = vmatprep.mubr.f32.mxu0 0.0
    %3097 = vmatmul.mubr.f32.gmra.mxu0 %v2987
    %v3098 = vpop.f32.mrf.mxu0
    %v3099 = vadd.f32 0.0, %v3098
    %v3100 = vpop.f32.mrf.mxu0
    %3101 = vmatprep.mubr.f32.mxu0 0.0
    %3102 = vmatmul.mubr.f32.gmra.mxu0 %v2990
    %v3103 = vpop.f32.mrf.mxu0
    %v3104 = vadd.f32 0.0, %v3103
    %v3105 = vpop.f32.mrf.mxu0
    %3106 = vmatprep.mubr.f32.mxu0 0.0
    %3107 = vmatmul.mubr.f32.gmra.mxu0 %v2993
    %v3108 = vpop.f32.mrf.mxu0
    %v3109 = vadd.f32 0.0, %v3108
    %v3110 = vpop.f32.mrf.mxu0
    %3111 = vdwg.mxu0
    %3112 = vmatprep.subr.mxu0 0.0
    %3113 = vmatpush1.msra.mxu0 0.0
    %3114 = vmatprep.subr.mxu0 0.0
    %3115 = vmatpush1.msra.mxu0 0.0
    %3116 = vmatprep.subr.mxu0 0.0
    %3117 = vmatpush1.msra.mxu0 0.0
    %3118 = vmatprep.subr.mxu0 0.0
    %3119 = vmatpush1.msra.mxu0 0.0
    %3120 = vmatprep.subr.mxu0 0.0
    %3121 = vmatpush1.msra.mxu0 0.0
    %3122 = vmatprep.subr.mxu0 0.0
    %3123 = vmatpush1.msra.mxu0 0.0
    %3124 = vmatprep.subr.mxu0 0.0
    %3125 = vmatpush1.msra.mxu0 0.0
    %3126 = vmatprep.subr.mxu0 0.0
    %3127 = vmatpush1.msra.mxu0 0.0
    %3128 = vmatprep.subr.mxu0 0.0
    %3129 = vmatpush1.msra.mxu0 0.0
    %3130 = vmatprep.subr.mxu0 0.0
    %3131 = vmatpush1.msra.mxu0 0.0
    %3132 = vmatprep.subr.mxu0 0.0
    %3133 = vmatpush1.msra.mxu0 0.0
    %3134 = vmatprep.subr.mxu0 0.0
    %3135 = vmatpush1.msra.mxu0 0.0
    %3136 = vmatprep.subr.mxu0 0.0
    %3137 = vmatpush1.msra.mxu0 0.0
    %3138 = vmatprep.subr.mxu0 0.0
    %3139 = vmatpush1.msra.mxu0 0.0
    %3140 = vmatprep.subr.mxu0 0.0
    %3141 = vmatpush1.msra.mxu0 %v2735
    %3142 = vmatprep.subr.mxu0 0.0
    %3143 = vmatpush1.msra.mxu0 %v2734
    %3144 = vmatprep.subr.mxu0 0.0
    %3145 = vmatpush2.msra.mxu0 0.0
    %3146 = vmatprep.subr.mxu0 0.0
    %3147 = vmatpush2.msra.mxu0 0.0
    %3148 = vmatprep.subr.mxu0 0.0
    %3149 = vmatpush2.msra.mxu0 0.0
    %3150 = vmatprep.subr.mxu0 0.0
    %3151 = vmatpush2.msra.mxu0 0.0
    %3152 = vmatprep.subr.mxu0 0.0
    %3153 = vmatpush2.msra.mxu0 0.0
    %3154 = vmatprep.subr.mxu0 0.0
    %3155 = vmatpush2.msra.mxu0 0.0
    %3156 = vmatprep.subr.mxu0 0.0
    %3157 = vmatpush2.msra.mxu0 0.0
    %3158 = vmatprep.subr.mxu0 0.0
    %3159 = vmatpush2.msra.mxu0 0.0
    %3160 = vmatprep.subr.mxu0 0.0
    %3161 = vmatpush2.msra.mxu0 0.0
    %3162 = vmatprep.subr.mxu0 0.0
    %3163 = vmatpush2.msra.mxu0 0.0
    %3164 = vmatprep.subr.mxu0 0.0
    %3165 = vmatpush2.msra.mxu0 0.0
    %3166 = vmatprep.subr.mxu0 0.0
    %3167 = vmatpush2.msra.mxu0 0.0
    %3168 = vmatprep.subr.mxu0 0.0
    %3169 = vmatpush2.msra.mxu0 0.0
    %3170 = vmatprep.subr.mxu0 0.0
    %3171 = vmatpush2.msra.mxu0 0.0
    %3172 = vmatprep.subr.mxu0 0.0
    %3173 = vmatpush2.msra.mxu0 0.0
    %3174 = vmatprep.subr.mxu0 0.0
    %3175 = vmatpush2.msra.mxu0 0.0
    %3176 = vmatprep.mubr.bf16.mxu0 0
    %3177 = vmatmul.mubr.bf16.gmra.mxu0 %v2793
    %v3178 = vpop.f32.mrf.mxu0
    %v3179 = vadd.f32 0.0, %v3178
    %v3180 = vpop.f32.mrf.mxu0
    %v3181 = vpop.f32.mrf.mxu0
    %v3182 = vadd.f32 0.0, %v3181
    %v3183 = vpop.f32.mrf.mxu0
    %3184 = vmatprep.mubr.bf16.mxu0 0
    %3185 = vmatmul.mubr.bf16.gmra.mxu0 %v2796
    %v3186 = vpop.f32.mrf.mxu0
    %v3187 = vadd.f32 0.0, %v3186
    %v3188 = vpop.f32.mrf.mxu0
    %v3189 = vpop.f32.mrf.mxu0
    %v3190 = vadd.f32 0.0, %v3189
    %v3191 = vpop.f32.mrf.mxu0
    %3192 = vmatprep.mubr.bf16.mxu0 0
    %3193 = vmatmul.mubr.bf16.gmra.mxu0 %v2799
    %v3194 = vpop.f32.mrf.mxu0
    %v3195 = vadd.f32 0.0, %v3194
    %v3196 = vpop.f32.mrf.mxu0
    %v3197 = vpop.f32.mrf.mxu0
    %v3198 = vadd.f32 0.0, %v3197
    %v3199 = vpop.f32.mrf.mxu0
    %3200 = vmatprep.mubr.bf16.mxu0 0
    %3201 = vmatmul.mubr.bf16.gmra.mxu0 %v2802
    %v3202 = vpop.f32.mrf.mxu0
    %v3203 = vadd.f32 0.0, %v3202
    %v3204 = vpop.f32.mrf.mxu0
    %v3205 = vpop.f32.mrf.mxu0
    %v3206 = vadd.f32 0.0, %v3205
    %v3207 = vpop.f32.mrf.mxu0
    %3208 = vmatprep.mubr.bf16.mxu0 0
    %3209 = vmatmul.mubr.bf16.gmra.mxu0 %v2805
    %v3210 = vpop.f32.mrf.mxu0
    %v3211 = vadd.f32 0.0, %v3210
    %v3212 = vpop.f32.mrf.mxu0
    %v3213 = vpop.f32.mrf.mxu0
    %v3214 = vadd.f32 0.0, %v3213
    %v3215 = vpop.f32.mrf.mxu0
    %3216 = vmatprep.mubr.bf16.mxu0 0
    %3217 = vmatmul.mubr.bf16.gmra.mxu0 %v2808
    %v3218 = vpop.f32.mrf.mxu0
    %v3219 = vadd.f32 0.0, %v3218
    %v3220 = vpop.f32.mrf.mxu0
    %v3221 = vpop.f32.mrf.mxu0
    %v3222 = vadd.f32 0.0, %v3221
    %v3223 = vpop.f32.mrf.mxu0
    %3224 = vmatprep.mubr.bf16.mxu0 0
    %3225 = vmatmul.mubr.bf16.gmra.mxu0 %v2811
    %v3226 = vpop.f32.mrf.mxu0
    %v3227 = vadd.f32 0.0, %v3226
    %v3228 = vpop.f32.mrf.mxu0
    %v3229 = vpop.f32.mrf.mxu0
    %v3230 = vadd.f32 0.0, %v3229
    %v3231 = vpop.f32.mrf.mxu0
    %3232 = vmatprep.mubr.bf16.mxu0 0
    %3233 = vmatmul.mubr.bf16.gmra.mxu0 %v2814
    %v3234 = vpop.f32.mrf.mxu0
    %v3235 = vadd.f32 0.0, %v3234
    %v3236 = vpop.f32.mrf.mxu0
    %v3237 = vpop.f32.mrf.mxu0
    %v3238 = vadd.f32 0.0, %v3237
    %v3239 = vpop.f32.mrf.mxu0
    %3240 = vdwg.mxu0
    %v3242 = vsel %vm2946, %v3179, 0
    %v3245 = vsel %vm2946, %v3182, 0
    %v3248 = vsel %vm2946, %v3187, 0
    %v3251 = vsel %vm2946, %v3190, 0
    %v3254 = vsel %vm2946, %v3195, 0
    %v3257 = vsel %vm2946, %v3198, 0
    %v3260 = vsel %vm2946, %v3203, 0
    %v3263 = vsel %vm2946, %v3206, 0
    %v3266 = vsel %vm2946, %v3211, 0
    %v3269 = vsel %vm2946, %v3214, 0
    %v3272 = vsel %vm2946, %v3219, 0
    %v3275 = vsel %vm2946, %v3222, 0
    %v3278 = vsel %vm2946, %v3227, 0
    %v3281 = vsel %vm2946, %v3230, 0
    %v3284 = vsel %vm2946, %v3235, 0
    %v3287 = vsel %vm2946, %v3238, 0
    %3289 = vmatprep.subr.bf16.mxu0 0
    %3290 = vmatpush1.bf16.msra.mxu0 0
    %3291 = vmatprep.subr.bf16.mxu0 0
    %3292 = vmatpush1.bf16.msra.mxu0 0
    %3293 = vmatprep.subr.bf16.mxu0 0
    %3294 = vmatpush1.bf16.msra.mxu0 0
    %3295 = vmatprep.subr.bf16.mxu0 0
    %3296 = vmatpush1.bf16.msra.mxu0 0
    %3297 = vmatprep.subr.bf16.mxu0 0
    %3298 = vmatpush1.bf16.msra.mxu0 0
    %3299 = vmatprep.subr.bf16.mxu0 0
    %3300 = vmatpush1.bf16.msra.mxu0 0
    %3301 = vmatprep.subr.bf16.mxu0 0
    %3302 = vmatpush1.bf16.msra.mxu0 0
    %3303 = vmatprep.subr.bf16.mxu0 0
    %3304 = vmatpush1.bf16.msra.mxu0 %v2997
    %3305 = vmatprep.subr.bf16.mxu0 0
    %3306 = vmatpush2.bf16.msra.mxu0 0
    %3307 = vmatprep.subr.bf16.mxu0 0
    %3308 = vmatpush2.bf16.msra.mxu0 0
    %3309 = vmatprep.subr.bf16.mxu0 0
    %3310 = vmatpush2.bf16.msra.mxu0 0
    %3311 = vmatprep.subr.bf16.mxu0 0
    %3312 = vmatpush2.bf16.msra.mxu0 0
    %3313 = vmatprep.subr.bf16.mxu0 0
    %3314 = vmatpush2.bf16.msra.mxu0 0
    %3315 = vmatprep.subr.bf16.mxu0 0
    %3316 = vmatpush2.bf16.msra.mxu0 0
    %3317 = vmatprep.subr.bf16.mxu0 0
    %3318 = vmatpush2.bf16.msra.mxu0 0
    %3319 = vmatprep.subr.bf16.mxu0 0
    %3320 = vmatpush2.bf16.msra.mxu0 0
    %3321 = vmatprep.mubr.f32.mxu0 0.0
    %3322 = vmatmul.mubr.f32.gmra.mxu0 %v3242
    %v3323 = vpop.f32.mrf.mxu0
    %v3324 = vadd.f32 0.0, %v3323
    %v3325 = vpop.f32.mrf.mxu0
    %3326 = vmatprep.mubr.f32.mxu0 0.0
    %3327 = vmatmul.mubr.f32.gmra.mxu0 %v3245
    %v3328 = vpop.f32.mrf.mxu0
    %v3329 = vadd.f32 0.0, %v3328
    %v3330 = vpop.f32.mrf.mxu0
    %3331 = vmatprep.mubr.f32.mxu0 0.0
    %3332 = vmatmul.mubr.f32.gmra.mxu0 %v3248
    %v3333 = vpop.f32.mrf.mxu0
    %v3334 = vadd.f32 0.0, %v3333
    %v3335 = vpop.f32.mrf.mxu0
    %3336 = vmatprep.mubr.f32.mxu0 0.0
    %3337 = vmatmul.mubr.f32.gmra.mxu0 %v3251
    %v3338 = vpop.f32.mrf.mxu0
    %v3339 = vadd.f32 0.0, %v3338
    %v3340 = vpop.f32.mrf.mxu0
    %3341 = vmatprep.mubr.f32.mxu0 0.0
    %3342 = vmatmul.mubr.f32.gmra.mxu0 %v3254
    %v3343 = vpop.f32.mrf.mxu0
    %v3344 = vadd.f32 0.0, %v3343
    %v3345 = vpop.f32.mrf.mxu0
    %3346 = vmatprep.mubr.f32.mxu0 0.0
    %3347 = vmatmul.mubr.f32.gmra.mxu0 %v3257
    %v3348 = vpop.f32.mrf.mxu0
    %v3349 = vadd.f32 0.0, %v3348
    %v3350 = vpop.f32.mrf.mxu0
    %3351 = vmatprep.mubr.f32.mxu0 0.0
    %3352 = vmatmul.mubr.f32.gmra.mxu0 %v3260
    %v3353 = vpop.f32.mrf.mxu0
    %v3354 = vadd.f32 0.0, %v3353
    %v3355 = vpop.f32.mrf.mxu0
    %3356 = vmatprep.mubr.f32.mxu0 0.0
    %3357 = vmatmul.mubr.f32.gmra.mxu0 %v3263
    %v3358 = vpop.f32.mrf.mxu0
    %v3359 = vadd.f32 0.0, %v3358
    %v3360 = vpop.f32.mrf.mxu0
    %3361 = vmatprep.mubr.f32.mxu0 0.0
    %3362 = vmatmul.mubr.f32.gmra.mxu0 %v3266
    %v3363 = vpop.f32.mrf.mxu0
    %v3364 = vadd.f32 0.0, %v3363
    %v3365 = vpop.f32.mrf.mxu0
    %3366 = vmatprep.mubr.f32.mxu0 0.0
    %3367 = vmatmul.mubr.f32.gmra.mxu0 %v3269
    %v3368 = vpop.f32.mrf.mxu0
    %v3369 = vadd.f32 0.0, %v3368
    %v3370 = vpop.f32.mrf.mxu0
    %3371 = vmatprep.mubr.f32.mxu0 0.0
    %3372 = vmatmul.mubr.f32.gmra.mxu0 %v3272
    %v3373 = vpop.f32.mrf.mxu0
    %v3374 = vadd.f32 0.0, %v3373
    %v3375 = vpop.f32.mrf.mxu0
    %3376 = vmatprep.mubr.f32.mxu0 0.0
    %3377 = vmatmul.mubr.f32.gmra.mxu0 %v3275
    %v3378 = vpop.f32.mrf.mxu0
    %v3379 = vadd.f32 0.0, %v3378
    %v3380 = vpop.f32.mrf.mxu0
    %3381 = vmatprep.mubr.f32.mxu0 0.0
    %3382 = vmatmul.mubr.f32.gmra.mxu0 %v3278
    %v3383 = vpop.f32.mrf.mxu0
    %v3384 = vadd.f32 0.0, %v3383
    %v3385 = vpop.f32.mrf.mxu0
    %3386 = vmatprep.mubr.f32.mxu0 0.0
    %3387 = vmatmul.mubr.f32.gmra.mxu0 %v3281
    %v3388 = vpop.f32.mrf.mxu0
    %v3389 = vadd.f32 0.0, %v3388
    %v3390 = vpop.f32.mrf.mxu0
    %3391 = vmatprep.mubr.f32.mxu0 0.0
    %3392 = vmatmul.mubr.f32.gmra.mxu0 %v3284
    %v3393 = vpop.f32.mrf.mxu0
    %v3394 = vadd.f32 0.0, %v3393
    %v3395 = vpop.f32.mrf.mxu0
    %3396 = vmatprep.mubr.f32.mxu0 0.0
    %3397 = vmatmul.mubr.f32.gmra.mxu0 %v3287
    %v3398 = vpop.f32.mrf.mxu0
    %v3399 = vadd.f32 0.0, %v3398
    %v3400 = vpop.f32.mrf.mxu0
    %3401 = vdwg.mxu0
    %v3402 = vmul.f32 %v3034, %v2131
    %v3403 = vmul.f32 %v3039, %v2134
    %v3404 = vmul.f32 %v3044, %v2139
    %v3405 = vmul.f32 %v3049, %v2142
    %v3406 = vmul.f32 %v3054, %v2147
    %v3407 = vmul.f32 %v3059, %v2150
    %v3408 = vmul.f32 %v3064, %v2155
    %v3409 = vmul.f32 %v3069, %v2158
    %v3410 = vmul.f32 %v3074, %v2163
    %v3411 = vmul.f32 %v3079, %v2166
    %v3412 = vmul.f32 %v3084, %v2171
    %v3413 = vmul.f32 %v3089, %v2174
    %v3414 = vmul.f32 %v3094, %v2179
    %v3415 = vmul.f32 %v3099, %v2182
    %v3416 = vmul.f32 %v3104, %v2187
    %v3417 = vmul.f32 %v3109, %v2190
    %v3418 = vadd.f32 %v3402, %v3324
    %v3419 = vadd.f32 %v3403, %v3329
    %v3420 = vadd.f32 %v3404, %v3334
    %v3421 = vadd.f32 %v3405, %v3339
    %v3422 = vadd.f32 %v3406, %v3344
    %v3423 = vadd.f32 %v3407, %v3349
    %v3424 = vadd.f32 %v3408, %v3354
    %v3425 = vadd.f32 %v3409, %v3359
    %v3426 = vadd.f32 %v3410, %v3364
    %v3427 = vadd.f32 %v3411, %v3369
    %v3428 = vadd.f32 %v3412, %v3374
    %v3429 = vadd.f32 %v3413, %v3379
    %v3430 = vadd.f32 %v3414, %v3384
    %v3431 = vadd.f32 %v3415, %v3389
    %v3432 = vadd.f32 %v3416, %v3394
    %v3433 = vadd.f32 %v3417, %v3399
    %vm3434 = vcmp.ge.f32.partialorder %v3418, 0.0
    %vm3435 = vcmp.ge.f32.partialorder %v3419, 0.0
    %vm3436 = vcmp.ge.f32.partialorder %v3420, 0.0
    %vm3437 = vcmp.ge.f32.partialorder %v3421, 0.0
    %vm3438 = vcmp.ge.f32.partialorder %v3422, 0.0
    %vm3439 = vcmp.ge.f32.partialorder %v3423, 0.0
    %vm3440 = vcmp.ge.f32.partialorder %v3424, 0.0
    %vm3441 = vcmp.ge.f32.partialorder %v3425, 0.0
    %vm3442 = vcmp.ge.f32.partialorder %v3426, 0.0
    %vm3443 = vcmp.ge.f32.partialorder %v3427, 0.0
    %vm3444 = vcmp.ge.f32.partialorder %v3428, 0.0
    %vm3445 = vcmp.ge.f32.partialorder %v3429, 0.0
    %vm3446 = vcmp.ge.f32.partialorder %v3430, 0.0
    %vm3447 = vcmp.ge.f32.partialorder %v3431, 0.0
    %vm3448 = vcmp.ge.f32.partialorder %v3432, 0.0
    %vm3449 = vcmp.ge.f32.partialorder %v3433, 0.0
    %v3450 = vmul.f32 %v3418, 0.2
    %v3451 = vmul.f32 %v3419, 0.2
    %v3452 = vmul.f32 %v3420, 0.2
    %v3453 = vmul.f32 %v3421, 0.2
    %v3454 = vmul.f32 %v3422, 0.2
    %v3455 = vmul.f32 %v3423, 0.2
    %v3456 = vmul.f32 %v3424, 0.2
    %v3457 = vmul.f32 %v3425, 0.2
    %v3458 = vmul.f32 %v3426, 0.2
    %v3459 = vmul.f32 %v3427, 0.2
    %v3460 = vmul.f32 %v3428, 0.2
    %v3461 = vmul.f32 %v3429, 0.2
    %v3462 = vmul.f32 %v3430, 0.2
    %v3463 = vmul.f32 %v3431, 0.2
    %v3464 = vmul.f32 %v3432, 0.2
    %v3465 = vmul.f32 %v3433, 0.2
    %v3466 = vsel %vm3434, %v3418, %v3450
    %v3467 = vsel %vm3435, %v3419, %v3451
    %v3468 = vsel %vm3436, %v3420, %v3452
    %v3469 = vsel %vm3437, %v3421, %v3453
    %v3470 = vsel %vm3438, %v3422, %v3454
    %v3471 = vsel %vm3439, %v3423, %v3455
    %v3472 = vsel %vm3440, %v3424, %v3456
    %v3473 = vsel %vm3441, %v3425, %v3457
    %v3474 = vsel %vm3442, %v3426, %v3458
    %v3475 = vsel %vm3443, %v3427, %v3459
    %v3476 = vsel %vm3444, %v3428, %v3460
    %v3477 = vsel %vm3445, %v3429, %v3461
    %v3478 = vsel %vm3446, %v3430, %v3462
    %v3479 = vsel %vm3447, %v3431, %v3463
    %v3480 = vsel %vm3448, %v3432, %v3464
    %v3481 = vsel %vm3449, %v3433, %v3465
    %v3482 = vpack.c.bf16 %v3467, %v3466
    %v3483 = vpack.c.bf16 %v3469, %v3468
    %v3484 = vpack.c.bf16 %v3471, %v3470
    %v3485 = vpack.c.bf16 %v3473, %v3472
    %v3486 = vpack.c.bf16 %v3475, %v3474
    %v3487 = vpack.c.bf16 %v3477, %v3476
    %v3488 = vpack.c.bf16 %v3479, %v3478
    %v3489 = vpack.c.bf16 %v3481, %v3480
    %v3490 = vld [vmem:[%s27] sm:$0xf]
    %v3491 = vld [vmem:[%s27 + $0x4] sm:$0xf]
    %v3494 = vunpack.c.l.b16 %v3490
    %v3495 = vunpack.c.l.b16 %v3491
    %v3496 = vpack.c.b16 %v3495, %v3494
    %v3499 = vsel %vm2203, %v3482, 0
    %v3502 = vsel %vm2203, %v3483, 0
    %v3505 = vsel %vm2203, %v3484, 0
    %v3508 = vsel %vm2203, %v3485, 0
    %v3511 = vsel %vm2203, %v3486, 0
    %v3514 = vsel %vm2203, %v3487, 0
    %v3517 = vsel %vm2203, %v3488, 0
    %v3520 = vsel %vm2203, %v3489, 0
    %3522 = vmatprep.subr.bf16.mxu0 0
    %3523 = vmatpush1.bf16.msra.mxu0 0
    %3524 = vmatprep.subr.bf16.mxu0 0
    %3525 = vmatpush1.bf16.msra.mxu0 0
    %3526 = vmatprep.subr.bf16.mxu0 0
    %3527 = vmatpush1.bf16.msra.mxu0 0
    %3528 = vmatprep.subr.bf16.mxu0 0
    %3529 = vmatpush1.bf16.msra.mxu0 0
    %3530 = vmatprep.subr.bf16.mxu0 0
    %3531 = vmatpush1.bf16.msra.mxu0 0
    %3532 = vmatprep.subr.bf16.mxu0 0
    %3533 = vmatpush1.bf16.msra.mxu0 0
    %3534 = vmatprep.subr.bf16.mxu0 0
    %3535 = vmatpush1.bf16.msra.mxu0 0
    %3536 = vmatprep.subr.bf16.mxu0 0
    %3537 = vmatpush1.bf16.msra.mxu0 %v3496
    %3538 = vmatprep.subr.bf16.mxu0 0
    %3539 = vmatpush2.bf16.msra.mxu0 0
    %3540 = vmatprep.subr.bf16.mxu0 0
    %3541 = vmatpush2.bf16.msra.mxu0 0
    %3542 = vmatprep.subr.bf16.mxu0 0
    %3543 = vmatpush2.bf16.msra.mxu0 0
    %3544 = vmatprep.subr.bf16.mxu0 0
    %3545 = vmatpush2.bf16.msra.mxu0 0
    %3546 = vmatprep.subr.bf16.mxu0 0
    %3547 = vmatpush2.bf16.msra.mxu0 0
    %3548 = vmatprep.subr.bf16.mxu0 0
    %3549 = vmatpush2.bf16.msra.mxu0 0
    %3550 = vmatprep.subr.bf16.mxu0 0
    %3551 = vmatpush2.bf16.msra.mxu0 0
    %3552 = vmatprep.subr.bf16.mxu0 0
    %3553 = vmatpush2.bf16.msra.mxu0 0
    %3554 = vmatprep.mubr.bf16.mxu0 0
    %3555 = vmatmul.mubr.bf16.gmra.mxu0 %v3499
    %v3556 = vpop.f32.mrf.mxu0
    %v3557 = vadd.f32 0.0, %v3556
    %v3558 = vpop.f32.mrf.mxu0
    %v3559 = vpop.f32.mrf.mxu0
    %v3560 = vadd.f32 0.0, %v3559
    %v3561 = vpop.f32.mrf.mxu0
    %3562 = vmatprep.mubr.bf16.mxu0 0
    %3563 = vmatmul.mubr.bf16.gmra.mxu0 %v3502
    %v3564 = vpop.f32.mrf.mxu0
    %v3565 = vadd.f32 0.0, %v3564
    %v3566 = vpop.f32.mrf.mxu0
    %v3567 = vpop.f32.mrf.mxu0
    %v3568 = vadd.f32 0.0, %v3567
    %v3569 = vpop.f32.mrf.mxu0
    %3570 = vmatprep.mubr.bf16.mxu0 0
    %3571 = vmatmul.mubr.bf16.gmra.mxu0 %v3505
    %v3572 = vpop.f32.mrf.mxu0
    %v3573 = vadd.f32 0.0, %v3572
    %v3574 = vpop.f32.mrf.mxu0
    %v3575 = vpop.f32.mrf.mxu0
    %v3576 = vadd.f32 0.0, %v3575
    %v3577 = vpop.f32.mrf.mxu0
    %3578 = vmatprep.mubr.bf16.mxu0 0
    %3579 = vmatmul.mubr.bf16.gmra.mxu0 %v3508
    %v3580 = vpop.f32.mrf.mxu0
    %v3581 = vadd.f32 0.0, %v3580
    %v3582 = vpop.f32.mrf.mxu0
    %v3583 = vpop.f32.mrf.mxu0
    %v3584 = vadd.f32 0.0, %v3583
    %v3585 = vpop.f32.mrf.mxu0
    %3586 = vmatprep.mubr.bf16.mxu0 0
    %3587 = vmatmul.mubr.bf16.gmra.mxu0 %v3511
    %v3588 = vpop.f32.mrf.mxu0
    %v3589 = vadd.f32 0.0, %v3588
    %v3590 = vpop.f32.mrf.mxu0
    %v3591 = vpop.f32.mrf.mxu0
    %v3592 = vadd.f32 0.0, %v3591
    %v3593 = vpop.f32.mrf.mxu0
    %3594 = vmatprep.mubr.bf16.mxu0 0
    %3595 = vmatmul.mubr.bf16.gmra.mxu0 %v3514
    %v3596 = vpop.f32.mrf.mxu0
    %v3597 = vadd.f32 0.0, %v3596
    %v3598 = vpop.f32.mrf.mxu0
    %v3599 = vpop.f32.mrf.mxu0
    %v3600 = vadd.f32 0.0, %v3599
    %v3601 = vpop.f32.mrf.mxu0
    %3602 = vmatprep.mubr.bf16.mxu0 0
    %3603 = vmatmul.mubr.bf16.gmra.mxu0 %v3517
    %v3604 = vpop.f32.mrf.mxu0
    %v3605 = vadd.f32 0.0, %v3604
    %v3606 = vpop.f32.mrf.mxu0
    %v3607 = vpop.f32.mrf.mxu0
    %v3608 = vadd.f32 0.0, %v3607
    %v3609 = vpop.f32.mrf.mxu0
    %3610 = vmatprep.mubr.bf16.mxu0 0
    %3611 = vmatmul.mubr.bf16.gmra.mxu0 %v3520
    %v3612 = vpop.f32.mrf.mxu0
    %v3613 = vadd.f32 0.0, %v3612
    %v3614 = vpop.f32.mrf.mxu0
    %v3615 = vpop.f32.mrf.mxu0
    %v3616 = vadd.f32 0.0, %v3615
    %v3617 = vpop.f32.mrf.mxu0
    %3618 = vdwg.mxu0
    %v3619 = vpack.c.bf16 %v3560, %v3557
    %v3620 = vpack.c.bf16 %v3568, %v3565
    %v3621 = vpack.c.bf16 %v3576, %v3573
    %v3622 = vpack.c.bf16 %v3584, %v3581
    %v3623 = vpack.c.bf16 %v3592, %v3589
    %v3624 = vpack.c.bf16 %v3600, %v3597
    %v3625 = vpack.c.bf16 %v3608, %v3605
    %v3626 = vpack.c.bf16 %v3616, %v3613
    %s3627 = scalar_lea.vmem %s27, 8
    %v3628 = vld [vmem:[%s3627] sm:$0xf]
    %v3629 = vld [vmem:[%s3627 + $0x4] sm:$0xf]
    %v3632 = vunpack.c.l.b16 %v3628
    %v3633 = vunpack.c.l.b16 %v3629
    %v3634 = vpack.c.b16 %v3633, %v3632
    %3636 = vmatprep.subr.bf16.mxu0 0
    %3637 = vmatpush1.bf16.msra.mxu0 0
    %3638 = vmatprep.subr.bf16.mxu0 0
    %3639 = vmatpush1.bf16.msra.mxu0 0
    %3640 = vmatprep.subr.bf16.mxu0 0
    %3641 = vmatpush1.bf16.msra.mxu0 0
    %3642 = vmatprep.subr.bf16.mxu0 0
    %3643 = vmatpush1.bf16.msra.mxu0 0
    %3644 = vmatprep.subr.bf16.mxu0 0
    %3645 = vmatpush1.bf16.msra.mxu0 0
    %3646 = vmatprep.subr.bf16.mxu0 0
    %3647 = vmatpush1.bf16.msra.mxu0 0
    %3648 = vmatprep.subr.bf16.mxu0 0
    %3649 = vmatpush1.bf16.msra.mxu0 0
    %3650 = vmatprep.subr.bf16.mxu0 0
    %3651 = vmatpush1.bf16.msra.mxu0 %v3634
    %3652 = vmatprep.subr.bf16.mxu0 0
    %3653 = vmatpush2.bf16.msra.mxu0 0
    %3654 = vmatprep.subr.bf16.mxu0 0
    %3655 = vmatpush2.bf16.msra.mxu0 0
    %3656 = vmatprep.subr.bf16.mxu0 0
    %3657 = vmatpush2.bf16.msra.mxu0 0
    %3658 = vmatprep.subr.bf16.mxu0 0
    %3659 = vmatpush2.bf16.msra.mxu0 0
    %3660 = vmatprep.subr.bf16.mxu0 0
    %3661 = vmatpush2.bf16.msra.mxu0 0
    %3662 = vmatprep.subr.bf16.mxu0 0
    %3663 = vmatpush2.bf16.msra.mxu0 0
    %3664 = vmatprep.subr.bf16.mxu0 0
    %3665 = vmatpush2.bf16.msra.mxu0 0
    %3666 = vmatprep.subr.bf16.mxu0 0
    %3667 = vmatpush2.bf16.msra.mxu0 0
    %3668 = vmatprep.mubr.bf16.mxu0 0
    %3669 = vmatmul.mubr.bf16.gmra.mxu0 %v3499
    %v3670 = vpop.f32.mrf.mxu0
    %v3671 = vadd.f32 0.0, %v3670
    %v3672 = vpop.f32.mrf.mxu0
    %v3673 = vpop.f32.mrf.mxu0
    %v3674 = vadd.f32 0.0, %v3673
    %v3675 = vpop.f32.mrf.mxu0
    %3676 = vmatprep.mubr.bf16.mxu0 0
    %3677 = vmatmul.mubr.bf16.gmra.mxu0 %v3502
    %v3678 = vpop.f32.mrf.mxu0
    %v3679 = vadd.f32 0.0, %v3678
    %v3680 = vpop.f32.mrf.mxu0
    %v3681 = vpop.f32.mrf.mxu0
    %v3682 = vadd.f32 0.0, %v3681
    %v3683 = vpop.f32.mrf.mxu0
    %3684 = vmatprep.mubr.bf16.mxu0 0
    %3685 = vmatmul.mubr.bf16.gmra.mxu0 %v3505
    %v3686 = vpop.f32.mrf.mxu0
    %v3687 = vadd.f32 0.0, %v3686
    %v3688 = vpop.f32.mrf.mxu0
    %v3689 = vpop.f32.mrf.mxu0
    %v3690 = vadd.f32 0.0, %v3689
    %v3691 = vpop.f32.mrf.mxu0
    %3692 = vmatprep.mubr.bf16.mxu0 0
    %3693 = vmatmul.mubr.bf16.gmra.mxu0 %v3508
    %v3694 = vpop.f32.mrf.mxu0
    %v3695 = vadd.f32 0.0, %v3694
    %v3696 = vpop.f32.mrf.mxu0
    %v3697 = vpop.f32.mrf.mxu0
    %v3698 = vadd.f32 0.0, %v3697
    %v3699 = vpop.f32.mrf.mxu0
    %3700 = vmatprep.mubr.bf16.mxu0 0
    %3701 = vmatmul.mubr.bf16.gmra.mxu0 %v3511
    %v3702 = vpop.f32.mrf.mxu0
    %v3703 = vadd.f32 0.0, %v3702
    %v3704 = vpop.f32.mrf.mxu0
    %v3705 = vpop.f32.mrf.mxu0
    %v3706 = vadd.f32 0.0, %v3705
    %v3707 = vpop.f32.mrf.mxu0
    %3708 = vmatprep.mubr.bf16.mxu0 0
    %3709 = vmatmul.mubr.bf16.gmra.mxu0 %v3514
    %v3710 = vpop.f32.mrf.mxu0
    %v3711 = vadd.f32 0.0, %v3710
    %v3712 = vpop.f32.mrf.mxu0
    %v3713 = vpop.f32.mrf.mxu0
    %v3714 = vadd.f32 0.0, %v3713
    %v3715 = vpop.f32.mrf.mxu0
    %3716 = vmatprep.mubr.bf16.mxu0 0
    %3717 = vmatmul.mubr.bf16.gmra.mxu0 %v3517
    %v3718 = vpop.f32.mrf.mxu0
    %v3719 = vadd.f32 0.0, %v3718
    %v3720 = vpop.f32.mrf.mxu0
    %v3721 = vpop.f32.mrf.mxu0
    %v3722 = vadd.f32 0.0, %v3721
    %v3723 = vpop.f32.mrf.mxu0
    %3724 = vmatprep.mubr.bf16.mxu0 0
    %3725 = vmatmul.mubr.bf16.gmra.mxu0 %v3520
    %v3726 = vpop.f32.mrf.mxu0
    %v3727 = vadd.f32 0.0, %v3726
    %v3728 = vpop.f32.mrf.mxu0
    %v3729 = vpop.f32.mrf.mxu0
    %v3730 = vadd.f32 0.0, %v3729
    %v3731 = vpop.f32.mrf.mxu0
    %3732 = vdwg.mxu0
    %v3733 = vpack.c.bf16 %v3674, %v3671
    %v3734 = vpack.c.bf16 %v3682, %v3679
    %v3735 = vpack.c.bf16 %v3690, %v3687
    %v3736 = vpack.c.bf16 %v3698, %v3695
    %v3737 = vpack.c.bf16 %v3706, %v3703
    %v3738 = vpack.c.bf16 %v3714, %v3711
    %v3739 = vpack.c.bf16 %v3722, %v3719
    %v3740 = vpack.c.bf16 %v3730, %v3727
    %s3741 = scalar_lea.vmem %s27, 16
    %v3742 = vld [vmem:[%s3741] sm:$0xf]
    %v3743 = vld [vmem:[%s3741 + $0x4] sm:$0xf]
    %v3746 = vunpack.c.l.b16 %v3742
    %v3747 = vunpack.c.l.b16 %v3743
    %v3748 = vpack.c.b16 %v3747, %v3746
    %3750 = vmatprep.subr.bf16.mxu0 0
    %3751 = vmatpush1.bf16.msra.mxu0 0
    %3752 = vmatprep.subr.bf16.mxu0 0
    %3753 = vmatpush1.bf16.msra.mxu0 0
    %3754 = vmatprep.subr.bf16.mxu0 0
    %3755 = vmatpush1.bf16.msra.mxu0 0
    %3756 = vmatprep.subr.bf16.mxu0 0
    %3757 = vmatpush1.bf16.msra.mxu0 0
    %3758 = vmatprep.subr.bf16.mxu0 0
    %3759 = vmatpush1.bf16.msra.mxu0 0
    %3760 = vmatprep.subr.bf16.mxu0 0
    %3761 = vmatpush1.bf16.msra.mxu0 0
    %3762 = vmatprep.subr.bf16.mxu0 0
    %3763 = vmatpush1.bf16.msra.mxu0 0
    %3764 = vmatprep.subr.bf16.mxu0 0
    %3765 = vmatpush1.bf16.msra.mxu0 %v3748
    %3766 = vmatprep.subr.bf16.mxu0 0
    %3767 = vmatpush2.bf16.msra.mxu0 0
    %3768 = vmatprep.subr.bf16.mxu0 0
    %3769 = vmatpush2.bf16.msra.mxu0 0
    %3770 = vmatprep.subr.bf16.mxu0 0
    %3771 = vmatpush2.bf16.msra.mxu0 0
    %3772 = vmatprep.subr.bf16.mxu0 0
    %3773 = vmatpush2.bf16.msra.mxu0 0
    %3774 = vmatprep.subr.bf16.mxu0 0
    %3775 = vmatpush2.bf16.msra.mxu0 0
    %3776 = vmatprep.subr.bf16.mxu0 0
    %3777 = vmatpush2.bf16.msra.mxu0 0
    %3778 = vmatprep.subr.bf16.mxu0 0
    %3779 = vmatpush2.bf16.msra.mxu0 0
    %3780 = vmatprep.subr.bf16.mxu0 0
    %3781 = vmatpush2.bf16.msra.mxu0 0
    %3782 = vmatprep.mubr.bf16.mxu0 0
    %3783 = vmatmul.mubr.bf16.gmra.mxu0 %v3499
    %v3784 = vpop.f32.mrf.mxu0
    %v3785 = vadd.f32 0.0, %v3784
    %v3786 = vpop.f32.mrf.mxu0
    %v3787 = vpop.f32.mrf.mxu0
    %v3788 = vadd.f32 0.0, %v3787
    %v3789 = vpop.f32.mrf.mxu0
    %3790 = vmatprep.mubr.bf16.mxu0 0
    %3791 = vmatmul.mubr.bf16.gmra.mxu0 %v3502
    %v3792 = vpop.f32.mrf.mxu0
    %v3793 = vadd.f32 0.0, %v3792
    %v3794 = vpop.f32.mrf.mxu0
    %v3795 = vpop.f32.mrf.mxu0
    %v3796 = vadd.f32 0.0, %v3795
    %v3797 = vpop.f32.mrf.mxu0
    %3798 = vmatprep.mubr.bf16.mxu0 0
    %3799 = vmatmul.mubr.bf16.gmra.mxu0 %v3505
    %v3800 = vpop.f32.mrf.mxu0
    %v3801 = vadd.f32 0.0, %v3800
    %v3802 = vpop.f32.mrf.mxu0
    %v3803 = vpop.f32.mrf.mxu0
    %v3804 = vadd.f32 0.0, %v3803
    %v3805 = vpop.f32.mrf.mxu0
    %3806 = vmatprep.mubr.bf16.mxu0 0
    %3807 = vmatmul.mubr.bf16.gmra.mxu0 %v3508
    %v3808 = vpop.f32.mrf.mxu0
    %v3809 = vadd.f32 0.0, %v3808
    %v3810 = vpop.f32.mrf.mxu0
    %v3811 = vpop.f32.mrf.mxu0
    %v3812 = vadd.f32 0.0, %v3811
    %v3813 = vpop.f32.mrf.mxu0
    %3814 = vmatprep.mubr.bf16.mxu0 0
    %3815 = vmatmul.mubr.bf16.gmra.mxu0 %v3511
    %v3816 = vpop.f32.mrf.mxu0
    %v3817 = vadd.f32 0.0, %v3816
    %v3818 = vpop.f32.mrf.mxu0
    %v3819 = vpop.f32.mrf.mxu0
    %v3820 = vadd.f32 0.0, %v3819
    %v3821 = vpop.f32.mrf.mxu0
    %3822 = vmatprep.mubr.bf16.mxu0 0
    %3823 = vmatmul.mubr.bf16.gmra.mxu0 %v3514
    %v3824 = vpop.f32.mrf.mxu0
    %v3825 = vadd.f32 0.0, %v3824
    %v3826 = vpop.f32.mrf.mxu0
    %v3827 = vpop.f32.mrf.mxu0
    %v3828 = vadd.f32 0.0, %v3827
    %v3829 = vpop.f32.mrf.mxu0
    %3830 = vmatprep.mubr.bf16.mxu0 0
    %3831 = vmatmul.mubr.bf16.gmra.mxu0 %v3517
    %v3832 = vpop.f32.mrf.mxu0
    %v3833 = vadd.f32 0.0, %v3832
    %v3834 = vpop.f32.mrf.mxu0
    %v3835 = vpop.f32.mrf.mxu0
    %v3836 = vadd.f32 0.0, %v3835
    %v3837 = vpop.f32.mrf.mxu0
    %3838 = vmatprep.mubr.bf16.mxu0 0
    %3839 = vmatmul.mubr.bf16.gmra.mxu0 %v3520
    %v3840 = vpop.f32.mrf.mxu0
    %v3841 = vadd.f32 0.0, %v3840
    %v3842 = vpop.f32.mrf.mxu0
    %v3843 = vpop.f32.mrf.mxu0
    %v3844 = vadd.f32 0.0, %v3843
    %v3845 = vpop.f32.mrf.mxu0
    %3846 = vdwg.mxu0
    %v3847 = vpack.c.bf16 %v3788, %v3785
    %v3848 = vpack.c.bf16 %v3796, %v3793
    %v3849 = vpack.c.bf16 %v3804, %v3801
    %v3850 = vpack.c.bf16 %v3812, %v3809
    %v3851 = vpack.c.bf16 %v3820, %v3817
    %v3852 = vpack.c.bf16 %v3828, %v3825
    %v3853 = vpack.c.bf16 %v3836, %v3833
    %v3854 = vpack.c.bf16 %v3844, %v3841
    %s3855 = scalar_lea.vmem %s27, 24
    %v3856 = vld [vmem:[%s3855] sm:$0xf]
    %v3857 = vld [vmem:[%s3855 + $0x4] sm:$0xf]
    %v3860 = vunpack.c.l.b16 %v3856
    %v3861 = vunpack.c.l.b16 %v3857
    %v3862 = vpack.c.b16 %v3861, %v3860
    %3864 = vmatprep.subr.bf16.mxu0 0
    %3865 = vmatpush1.bf16.msra.mxu0 0
    %3866 = vmatprep.subr.bf16.mxu0 0
    %3867 = vmatpush1.bf16.msra.mxu0 0
    %3868 = vmatprep.subr.bf16.mxu0 0
    %3869 = vmatpush1.bf16.msra.mxu0 0
    %3870 = vmatprep.subr.bf16.mxu0 0
    %3871 = vmatpush1.bf16.msra.mxu0 0
    %3872 = vmatprep.subr.bf16.mxu0 0
    %3873 = vmatpush1.bf16.msra.mxu0 0
    %3874 = vmatprep.subr.bf16.mxu0 0
    %3875 = vmatpush1.bf16.msra.mxu0 0
    %3876 = vmatprep.subr.bf16.mxu0 0
    %3877 = vmatpush1.bf16.msra.mxu0 0
    %3878 = vmatprep.subr.bf16.mxu0 0
    %3879 = vmatpush1.bf16.msra.mxu0 %v3862
    %3880 = vmatprep.subr.bf16.mxu0 0
    %3881 = vmatpush2.bf16.msra.mxu0 0
    %3882 = vmatprep.subr.bf16.mxu0 0
    %3883 = vmatpush2.bf16.msra.mxu0 0
    %3884 = vmatprep.subr.bf16.mxu0 0
    %3885 = vmatpush2.bf16.msra.mxu0 0
    %3886 = vmatprep.subr.bf16.mxu0 0
    %3887 = vmatpush2.bf16.msra.mxu0 0
    %3888 = vmatprep.subr.bf16.mxu0 0
    %3889 = vmatpush2.bf16.msra.mxu0 0
    %3890 = vmatprep.subr.bf16.mxu0 0
    %3891 = vmatpush2.bf16.msra.mxu0 0
    %3892 = vmatprep.subr.bf16.mxu0 0
    %3893 = vmatpush2.bf16.msra.mxu0 0
    %3894 = vmatprep.subr.bf16.mxu0 0
    %3895 = vmatpush2.bf16.msra.mxu0 0
    %3896 = vmatprep.mubr.bf16.mxu0 0
    %3897 = vmatmul.mubr.bf16.gmra.mxu0 %v3499
    %v3898 = vpop.f32.mrf.mxu0
    %v3899 = vadd.f32 0.0, %v3898
    %v3900 = vpop.f32.mrf.mxu0
    %v3901 = vpop.f32.mrf.mxu0
    %v3902 = vadd.f32 0.0, %v3901
    %v3903 = vpop.f32.mrf.mxu0
    %3904 = vmatprep.mubr.bf16.mxu0 0
    %3905 = vmatmul.mubr.bf16.gmra.mxu0 %v3502
    %v3906 = vpop.f32.mrf.mxu0
    %v3907 = vadd.f32 0.0, %v3906
    %v3908 = vpop.f32.mrf.mxu0
    %v3909 = vpop.f32.mrf.mxu0
    %v3910 = vadd.f32 0.0, %v3909
    %v3911 = vpop.f32.mrf.mxu0
    %3912 = vmatprep.mubr.bf16.mxu0 0
    %3913 = vmatmul.mubr.bf16.gmra.mxu0 %v3505
    %v3914 = vpop.f32.mrf.mxu0
    %v3915 = vadd.f32 0.0, %v3914
    %v3916 = vpop.f32.mrf.mxu0
    %v3917 = vpop.f32.mrf.mxu0
    %v3918 = vadd.f32 0.0, %v3917
    %v3919 = vpop.f32.mrf.mxu0
    %3920 = vmatprep.mubr.bf16.mxu0 0
    %3921 = vmatmul.mubr.bf16.gmra.mxu0 %v3508
    %v3922 = vpop.f32.mrf.mxu0
    %v3923 = vadd.f32 0.0, %v3922
    %v3924 = vpop.f32.mrf.mxu0
    %v3925 = vpop.f32.mrf.mxu0
    %v3926 = vadd.f32 0.0, %v3925
    %v3927 = vpop.f32.mrf.mxu0
    %3928 = vmatprep.mubr.bf16.mxu0 0
    %3929 = vmatmul.mubr.bf16.gmra.mxu0 %v3511
    %v3930 = vpop.f32.mrf.mxu0
    %v3931 = vadd.f32 0.0, %v3930
    %v3932 = vpop.f32.mrf.mxu0
    %v3933 = vpop.f32.mrf.mxu0
    %v3934 = vadd.f32 0.0, %v3933
    %v3935 = vpop.f32.mrf.mxu0
    %3936 = vmatprep.mubr.bf16.mxu0 0
    %3937 = vmatmul.mubr.bf16.gmra.mxu0 %v3514
    %v3938 = vpop.f32.mrf.mxu0
    %v3939 = vadd.f32 0.0, %v3938
    %v3940 = vpop.f32.mrf.mxu0
    %v3941 = vpop.f32.mrf.mxu0
    %v3942 = vadd.f32 0.0, %v3941
    %v3943 = vpop.f32.mrf.mxu0
    %3944 = vmatprep.mubr.bf16.mxu0 0
    %3945 = vmatmul.mubr.bf16.gmra.mxu0 %v3517
    %v3946 = vpop.f32.mrf.mxu0
    %v3947 = vadd.f32 0.0, %v3946
    %v3948 = vpop.f32.mrf.mxu0
    %v3949 = vpop.f32.mrf.mxu0
    %v3950 = vadd.f32 0.0, %v3949
    %v3951 = vpop.f32.mrf.mxu0
    %3952 = vmatprep.mubr.bf16.mxu0 0
    %3953 = vmatmul.mubr.bf16.gmra.mxu0 %v3520
    %v3954 = vpop.f32.mrf.mxu0
    %v3955 = vadd.f32 0.0, %v3954
    %v3956 = vpop.f32.mrf.mxu0
    %v3957 = vpop.f32.mrf.mxu0
    %v3958 = vadd.f32 0.0, %v3957
    %v3959 = vpop.f32.mrf.mxu0
    %3960 = vdwg.mxu0
    %v3961 = vpack.c.bf16 %v3902, %v3899
    %v3962 = vpack.c.bf16 %v3910, %v3907
    %v3963 = vpack.c.bf16 %v3918, %v3915
    %v3964 = vpack.c.bf16 %v3926, %v3923
    %v3965 = vpack.c.bf16 %v3934, %v3931
    %v3966 = vpack.c.bf16 %v3942, %v3939
    %v3967 = vpack.c.bf16 %v3950, %v3947
    %v3968 = vpack.c.bf16 %v3958, %v3955
    %v3969 = vld [vmem:[%s25] sm:$0xff]
    %v3970 = vld [vmem:[%s25 + $0x8] sm:$0xff]
    %v3971 = vld [vmem:[%s25 + $0x10] sm:$0xff]
    %v3972 = vld [vmem:[%s25 + $0x18] sm:$0xff]
    %v3973 = vld [vmem:[%s25 + $0x20] sm:$0xff]
    %v3974 = vld [vmem:[%s25 + $0x28] sm:$0xff]
    %v3975 = vld [vmem:[%s25 + $0x30] sm:$0xff]
    %v3976 = vld [vmem:[%s25 + $0x38] sm:$0xff]
    %v3977 = vld [vmem:[%s25 + $0x40] sm:$0xff]
    %v3978 = vld [vmem:[%s25 + $0x48] sm:$0xff]
    %v3979 = vld [vmem:[%s25 + $0x50] sm:$0xff]
    %v3980 = vld [vmem:[%s25 + $0x58] sm:$0xff]
    %v3981 = vld [vmem:[%s25 + $0x60] sm:$0xff]
    %v3982 = vld [vmem:[%s25 + $0x68] sm:$0xff]
    %v3983 = vld [vmem:[%s25 + $0x70] sm:$0xff]
    %v3984 = vld [vmem:[%s25 + $0x78] sm:$0xff]
    %v3985 = vld [vmem:[%s25 + $0x80] sm:$0xff]
    %v3986 = vld [vmem:[%s25 + $0x88] sm:$0xff]
    %v3987 = vld [vmem:[%s25 + $0x90] sm:$0xff]
    %v3988 = vld [vmem:[%s25 + $0x98] sm:$0xff]
    %v3989 = vld [vmem:[%s25 + $0xa0] sm:$0xff]
    %v3990 = vld [vmem:[%s25 + $0xa8] sm:$0xff]
    %v3991 = vld [vmem:[%s25 + $0xb0] sm:$0xff]
    %v3992 = vld [vmem:[%s25 + $0xb8] sm:$0xff]
    %v3993 = vld [vmem:[%s25 + $0xc0] sm:$0xff]
    %v3994 = vld [vmem:[%s25 + $0xc8] sm:$0xff]
    %v3995 = vld [vmem:[%s25 + $0xd0] sm:$0xff]
    %v3996 = vld [vmem:[%s25 + $0xd8] sm:$0xff]
    %v3997 = vld [vmem:[%s25 + $0xe0] sm:$0xff]
    %v3998 = vld [vmem:[%s25 + $0xe8] sm:$0xff]
    %v3999 = vld [vmem:[%s25 + $0xf0] sm:$0xff]
    %v4000 = vld [vmem:[%s25 + $0xf8] sm:$0xff]
    %v4033 = vunpack.c.l.b16 %v3969
    %v4034 = vunpack.c.h.b16 %v3969
    %v4035 = vunpack.c.l.b16 %v3970
    %v4036 = vunpack.c.h.b16 %v3970
    %v4037 = vunpack.c.l.b16 %v3971
    %v4038 = vunpack.c.h.b16 %v3971
    %v4039 = vunpack.c.l.b16 %v3972
    %v4040 = vunpack.c.h.b16 %v3972
    %v4041 = vunpack.c.l.b16 %v3973
    %v4042 = vunpack.c.h.b16 %v3973
    %v4043 = vunpack.c.l.b16 %v3974
    %v4044 = vunpack.c.h.b16 %v3974
    %v4045 = vunpack.c.l.b16 %v3975
    %v4046 = vunpack.c.h.b16 %v3975
    %v4047 = vunpack.c.l.b16 %v3976
    %v4048 = vunpack.c.h.b16 %v3976
    %v4049 = vunpack.c.l.b16 %v3977
    %v4050 = vunpack.c.h.b16 %v3977
    %v4051 = vunpack.c.l.b16 %v3978
    %v4052 = vunpack.c.h.b16 %v3978
    %v4053 = vunpack.c.l.b16 %v3979
    %v4054 = vunpack.c.h.b16 %v3979
    %v4055 = vunpack.c.l.b16 %v3980
    %v4056 = vunpack.c.h.b16 %v3980
    %v4057 = vunpack.c.l.b16 %v3981
    %v4058 = vunpack.c.h.b16 %v3981
    %v4059 = vunpack.c.l.b16 %v3982
    %v4060 = vunpack.c.h.b16 %v3982
    %v4061 = vunpack.c.l.b16 %v3983
    %v4062 = vunpack.c.h.b16 %v3983
    %v4063 = vunpack.c.l.b16 %v3984
    %v4064 = vunpack.c.h.b16 %v3984
    %v4065 = vunpack.c.l.b16 %v3985
    %v4066 = vunpack.c.h.b16 %v3985
    %v4067 = vunpack.c.l.b16 %v3986
    %v4068 = vunpack.c.h.b16 %v3986
    %v4069 = vunpack.c.l.b16 %v3987
    %v4070 = vunpack.c.h.b16 %v3987
    %v4071 = vunpack.c.l.b16 %v3988
    %v4072 = vunpack.c.h.b16 %v3988
    %v4073 = vunpack.c.l.b16 %v3989
    %v4074 = vunpack.c.h.b16 %v3989
    %v4075 = vunpack.c.l.b16 %v3990
    %v4076 = vunpack.c.h.b16 %v3990
    %v4077 = vunpack.c.l.b16 %v3991
    %v4078 = vunpack.c.h.b16 %v3991
    %v4079 = vunpack.c.l.b16 %v3992
    %v4080 = vunpack.c.h.b16 %v3992
    %v4081 = vunpack.c.l.b16 %v3993
    %v4082 = vunpack.c.h.b16 %v3993
    %v4083 = vunpack.c.l.b16 %v3994
    %v4084 = vunpack.c.h.b16 %v3994
    %v4085 = vunpack.c.l.b16 %v3995
    %v4086 = vunpack.c.h.b16 %v3995
    %v4087 = vunpack.c.l.b16 %v3996
    %v4088 = vunpack.c.h.b16 %v3996
    %v4089 = vunpack.c.l.b16 %v3997
    %v4090 = vunpack.c.h.b16 %v3997
    %v4091 = vunpack.c.l.b16 %v3998
    %v4092 = vunpack.c.h.b16 %v3998
    %v4093 = vunpack.c.l.b16 %v3999
    %v4094 = vunpack.c.h.b16 %v3999
    %v4095 = vunpack.c.l.b16 %v4000
    %v4096 = vunpack.c.h.b16 %v4000
    %v4097 = vpack.c.b16 %v4037, %v4033
    %v4098 = vpack.c.b16 %v4038, %v4034
    %v4099 = vpack.c.b16 %v4039, %v4035
    %v4100 = vpack.c.b16 %v4040, %v4036
    %v4101 = vpack.c.b16 %v4045, %v4041
    %v4102 = vpack.c.b16 %v4046, %v4042
    %v4103 = vpack.c.b16 %v4047, %v4043
    %v4104 = vpack.c.b16 %v4048, %v4044
    %v4105 = vpack.c.b16 %v4053, %v4049
    %v4106 = vpack.c.b16 %v4054, %v4050
    %v4107 = vpack.c.b16 %v4055, %v4051
    %v4108 = vpack.c.b16 %v4056, %v4052
    %v4109 = vpack.c.b16 %v4061, %v4057
    %v4110 = vpack.c.b16 %v4062, %v4058
    %v4111 = vpack.c.b16 %v4063, %v4059
    %v4112 = vpack.c.b16 %v4064, %v4060
    %v4113 = vpack.c.b16 %v4069, %v4065
    %v4114 = vpack.c.b16 %v4070, %v4066
    %v4115 = vpack.c.b16 %v4071, %v4067
    %v4116 = vpack.c.b16 %v4072, %v4068
    %v4117 = vpack.c.b16 %v4077, %v4073
    %v4118 = vpack.c.b16 %v4078, %v4074
    %v4119 = vpack.c.b16 %v4079, %v4075
    %v4120 = vpack.c.b16 %v4080, %v4076
    %v4121 = vpack.c.b16 %v4085, %v4081
    %v4122 = vpack.c.b16 %v4086, %v4082
    %v4123 = vpack.c.b16 %v4087, %v4083
    %v4124 = vpack.c.b16 %v4088, %v4084
    %v4125 = vpack.c.b16 %v4093, %v4089
    %v4126 = vpack.c.b16 %v4094, %v4090
    %v4127 = vpack.c.b16 %v4095, %v4091
    %v4128 = vpack.c.b16 %v4096, %v4092
    %4161 = vmatprep.subr.bf16.mxu0 0
    %4162 = vmatpush1.bf16.msra.mxu0 %v3626
    %4163 = vmatprep.subr.bf16.mxu0 0
    %4164 = vmatpush1.bf16.msra.mxu0 %v3625
    %4165 = vmatprep.subr.bf16.mxu0 0
    %4166 = vmatpush1.bf16.msra.mxu0 %v3624
    %4167 = vmatprep.subr.bf16.mxu0 0
    %4168 = vmatpush1.bf16.msra.mxu0 %v3623
    %4169 = vmatprep.subr.bf16.mxu0 0
    %4170 = vmatpush1.bf16.msra.mxu0 %v3622
    %4171 = vmatprep.subr.bf16.mxu0 0
    %4172 = vmatpush1.bf16.msra.mxu0 %v3621
    %4173 = vmatprep.subr.bf16.mxu0 0
    %4174 = vmatpush1.bf16.msra.mxu0 %v3620
    %4175 = vmatprep.subr.bf16.mxu0 0
    %4176 = vmatpush1.bf16.msra.mxu0 %v3619
    %4177 = vmatprep.subr.bf16.mxu0 0
    %4178 = vmatpush2.bf16.msra.mxu0 %v3740
    %4179 = vmatprep.subr.bf16.mxu0 0
    %4180 = vmatpush2.bf16.msra.mxu0 %v3739
    %4181 = vmatprep.subr.bf16.mxu0 0
    %4182 = vmatpush2.bf16.msra.mxu0 %v3738
    %4183 = vmatprep.subr.bf16.mxu0 0
    %4184 = vmatpush2.bf16.msra.mxu0 %v3737
    %4185 = vmatprep.subr.bf16.mxu0 0
    %4186 = vmatpush2.bf16.msra.mxu0 %v3736
    %4187 = vmatprep.subr.bf16.mxu0 0
    %4188 = vmatpush2.bf16.msra.mxu0 %v3735
    %4189 = vmatprep.subr.bf16.mxu0 0
    %4190 = vmatpush2.bf16.msra.mxu0 %v3734
    %4191 = vmatprep.subr.bf16.mxu0 0
    %4192 = vmatpush2.bf16.msra.mxu0 %v3733
    %4193 = vmatprep.mubr.bf16.mxu0 %v4098
    %4194 = vmatmul.mubr.bf16.gmra.mxu0 %v4097
    %v4195 = vpop.f32.mrf.mxu0
    %v4196 = vadd.f32 0.0, %v4195
    %v4197 = vpop.f32.mrf.mxu0
    %v4198 = vpop.f32.mrf.mxu0
    %v4199 = vadd.f32 0.0, %v4198
    %v4200 = vpop.f32.mrf.mxu0
    %4201 = vmatprep.mubr.bf16.mxu0 %v4102
    %4202 = vmatmul.mubr.bf16.gmra.mxu0 %v4101
    %v4203 = vpop.f32.mrf.mxu0
    %v4204 = vadd.f32 0.0, %v4203
    %v4205 = vpop.f32.mrf.mxu0
    %v4206 = vpop.f32.mrf.mxu0
    %v4207 = vadd.f32 0.0, %v4206
    %v4208 = vpop.f32.mrf.mxu0
    %4209 = vmatprep.mubr.bf16.mxu0 %v4106
    %4210 = vmatmul.mubr.bf16.gmra.mxu0 %v4105
    %v4211 = vpop.f32.mrf.mxu0
    %v4212 = vadd.f32 0.0, %v4211
    %v4213 = vpop.f32.mrf.mxu0
    %v4214 = vpop.f32.mrf.mxu0
    %v4215 = vadd.f32 0.0, %v4214
    %v4216 = vpop.f32.mrf.mxu0
    %4217 = vmatprep.mubr.bf16.mxu0 %v4110
    %4218 = vmatmul.mubr.bf16.gmra.mxu0 %v4109
    %v4219 = vpop.f32.mrf.mxu0
    %v4220 = vadd.f32 0.0, %v4219
    %v4221 = vpop.f32.mrf.mxu0
    %v4222 = vpop.f32.mrf.mxu0
    %v4223 = vadd.f32 0.0, %v4222
    %v4224 = vpop.f32.mrf.mxu0
    %4225 = vmatprep.mubr.bf16.mxu0 %v4114
    %4226 = vmatmul.mubr.bf16.gmra.mxu0 %v4113
    %v4227 = vpop.f32.mrf.mxu0
    %v4228 = vadd.f32 0.0, %v4227
    %v4229 = vpop.f32.mrf.mxu0
    %v4230 = vpop.f32.mrf.mxu0
    %v4231 = vadd.f32 0.0, %v4230
    %v4232 = vpop.f32.mrf.mxu0
    %4233 = vmatprep.mubr.bf16.mxu0 %v4118
    %4234 = vmatmul.mubr.bf16.gmra.mxu0 %v4117
    %v4235 = vpop.f32.mrf.mxu0
    %v4236 = vadd.f32 0.0, %v4235
    %v4237 = vpop.f32.mrf.mxu0
    %v4238 = vpop.f32.mrf.mxu0
    %v4239 = vadd.f32 0.0, %v4238
    %v4240 = vpop.f32.mrf.mxu0
    %4241 = vmatprep.mubr.bf16.mxu0 %v4122
    %4242 = vmatmul.mubr.bf16.gmra.mxu0 %v4121
    %v4243 = vpop.f32.mrf.mxu0
    %v4244 = vadd.f32 0.0, %v4243
    %v4245 = vpop.f32.mrf.mxu0
    %v4246 = vpop.f32.mrf.mxu0
    %v4247 = vadd.f32 0.0, %v4246
    %v4248 = vpop.f32.mrf.mxu0
    %4249 = vmatprep.mubr.bf16.mxu0 %v4126
    %4250 = vmatmul.mubr.bf16.gmra.mxu0 %v4125
    %v4251 = vpop.f32.mrf.mxu0
    %v4252 = vadd.f32 0.0, %v4251
    %v4253 = vpop.f32.mrf.mxu0
    %v4254 = vpop.f32.mrf.mxu0
    %v4255 = vadd.f32 0.0, %v4254
    %v4256 = vpop.f32.mrf.mxu0
    %4257 = vdwg.mxu0
    %4258 = vmatprep.subr.bf16.mxu0 0
    %4259 = vmatpush1.bf16.msra.mxu0 %v3854
    %4260 = vmatprep.subr.bf16.mxu0 0
    %4261 = vmatpush1.bf16.msra.mxu0 %v3853
    %4262 = vmatprep.subr.bf16.mxu0 0
    %4263 = vmatpush1.bf16.msra.mxu0 %v3852
    %4264 = vmatprep.subr.bf16.mxu0 0
    %4265 = vmatpush1.bf16.msra.mxu0 %v3851
    %4266 = vmatprep.subr.bf16.mxu0 0
    %4267 = vmatpush1.bf16.msra.mxu0 %v3850
    %4268 = vmatprep.subr.bf16.mxu0 0
    %4269 = vmatpush1.bf16.msra.mxu0 %v3849
    %4270 = vmatprep.subr.bf16.mxu0 0
    %4271 = vmatpush1.bf16.msra.mxu0 %v3848
    %4272 = vmatprep.subr.bf16.mxu0 0
    %4273 = vmatpush1.bf16.msra.mxu0 %v3847
    %4274 = vmatprep.subr.bf16.mxu0 0
    %4275 = vmatpush2.bf16.msra.mxu0 %v3968
    %4276 = vmatprep.subr.bf16.mxu0 0
    %4277 = vmatpush2.bf16.msra.mxu0 %v3967
    %4278 = vmatprep.subr.bf16.mxu0 0
    %4279 = vmatpush2.bf16.msra.mxu0 %v3966
    %4280 = vmatprep.subr.bf16.mxu0 0
    %4281 = vmatpush2.bf16.msra.mxu0 %v3965
    %4282 = vmatprep.subr.bf16.mxu0 0
    %4283 = vmatpush2.bf16.msra.mxu0 %v3964
    %4284 = vmatprep.subr.bf16.mxu0 0
    %4285 = vmatpush2.bf16.msra.mxu0 %v3963
    %4286 = vmatprep.subr.bf16.mxu0 0
    %4287 = vmatpush2.bf16.msra.mxu0 %v3962
    %4288 = vmatprep.subr.bf16.mxu0 0
    %4289 = vmatpush2.bf16.msra.mxu0 %v3961
    %4290 = vmatprep.mubr.bf16.mxu0 %v4100
    %4291 = vmatmul.mubr.bf16.gmra.mxu0 %v4099
    %v4292 = vpop.f32.mrf.mxu0
    %v4293 = vadd.f32 %v4196, %v4292
    %v4294 = vpop.f32.mrf.mxu0
    %v4295 = vpop.f32.mrf.mxu0
    %v4296 = vadd.f32 %v4199, %v4295
    %v4297 = vpop.f32.mrf.mxu0
    %4298 = vmatprep.mubr.bf16.mxu0 %v4104
    %4299 = vmatmul.mubr.bf16.gmra.mxu0 %v4103
    %v4300 = vpop.f32.mrf.mxu0
    %v4301 = vadd.f32 %v4204, %v4300
    %v4302 = vpop.f32.mrf.mxu0
    %v4303 = vpop.f32.mrf.mxu0
    %v4304 = vadd.f32 %v4207, %v4303
    %v4305 = vpop.f32.mrf.mxu0
    %4306 = vmatprep.mubr.bf16.mxu0 %v4108
    %4307 = vmatmul.mubr.bf16.gmra.mxu0 %v4107
    %v4308 = vpop.f32.mrf.mxu0
    %v4309 = vadd.f32 %v4212, %v4308
    %v4310 = vpop.f32.mrf.mxu0
    %v4311 = vpop.f32.mrf.mxu0
    %v4312 = vadd.f32 %v4215, %v4311
    %v4313 = vpop.f32.mrf.mxu0
    %4314 = vmatprep.mubr.bf16.mxu0 %v4112
    %4315 = vmatmul.mubr.bf16.gmra.mxu0 %v4111
    %v4316 = vpop.f32.mrf.mxu0
    %v4317 = vadd.f32 %v4220, %v4316
    %v4318 = vpop.f32.mrf.mxu0
    %v4319 = vpop.f32.mrf.mxu0
    %v4320 = vadd.f32 %v4223, %v4319
    %v4321 = vpop.f32.mrf.mxu0
    %4322 = vmatprep.mubr.bf16.mxu0 %v4116
    %4323 = vmatmul.mubr.bf16.gmra.mxu0 %v4115
    %v4324 = vpop.f32.mrf.mxu0
    %v4325 = vadd.f32 %v4228, %v4324
    %v4326 = vpop.f32.mrf.mxu0
    %v4327 = vpop.f32.mrf.mxu0
    %v4328 = vadd.f32 %v4231, %v4327
    %v4329 = vpop.f32.mrf.mxu0
    %4330 = vmatprep.mubr.bf16.mxu0 %v4120
    %4331 = vmatmul.mubr.bf16.gmra.mxu0 %v4119
    %v4332 = vpop.f32.mrf.mxu0
    %v4333 = vadd.f32 %v4236, %v4332
    %v4334 = vpop.f32.mrf.mxu0
    %v4335 = vpop.f32.mrf.mxu0
    %v4336 = vadd.f32 %v4239, %v4335
    %v4337 = vpop.f32.mrf.mxu0
    %4338 = vmatprep.mubr.bf16.mxu0 %v4124
    %4339 = vmatmul.mubr.bf16.gmra.mxu0 %v4123
    %v4340 = vpop.f32.mrf.mxu0
    %v4341 = vadd.f32 %v4244, %v4340
    %v4342 = vpop.f32.mrf.mxu0
    %v4343 = vpop.f32.mrf.mxu0
    %v4344 = vadd.f32 %v4247, %v4343
    %v4345 = vpop.f32.mrf.mxu0
    %4346 = vmatprep.mubr.bf16.mxu0 %v4128
    %4347 = vmatmul.mubr.bf16.gmra.mxu0 %v4127
    %v4348 = vpop.f32.mrf.mxu0
    %v4349 = vadd.f32 %v4252, %v4348
    %v4350 = vpop.f32.mrf.mxu0
    %v4351 = vpop.f32.mrf.mxu0
    %v4352 = vadd.f32 %v4255, %v4351
    %v4353 = vpop.f32.mrf.mxu0
    %4354 = vdwg.mxu0
    %v4355 = vld [vmem:[%s33] sm:$0xf]
    %v4356 = vld [vmem:[%s37] sm:$0xf]
    %v4357 = vld [vmem:[%s37 + $0x4] sm:$0xf]
    %v4358 = vld [vmem:[%s37 + $0x8] sm:$0xf]
    %v4359 = vld [vmem:[%s37 + $0xc] sm:$0xf]
    %vm4360 = vcmask 64512
    %v4362 = vsel %vm4360, %v4293, 0
    %v4365 = vsel %vm4360, %v4296, 0
    %v4368 = vsel %vm4360, %v4301, 0
    %v4371 = vsel %vm4360, %v4304, 0
    %v4374 = vsel %vm4360, %v4309, 0
    %v4377 = vsel %vm4360, %v4312, 0
    %v4380 = vsel %vm4360, %v4317, 0
    %v4383 = vsel %vm4360, %v4320, 0
    %v4386 = vsel %vm4360, %v4325, 0
    %v4389 = vsel %vm4360, %v4328, 0
    %v4392 = vsel %vm4360, %v4333, 0
    %v4395 = vsel %vm4360, %v4336, 0
    %v4398 = vsel %vm4360, %v4341, 0
    %v4401 = vsel %vm4360, %v4344, 0
    %v4404 = vsel %vm4360, %v4349, 0
    %v4407 = vsel %vm4360, %v4352, 0
    %vm4409 = vcmask 1043456
    %v4411 = vsel %vm4409, %v4355, 0
    %4413 = vmatprep.subr.bf16.mxu0 0
    %4414 = vmatpush1.bf16.msra.mxu0 0
    %4415 = vmatprep.subr.bf16.mxu0 0
    %4416 = vmatpush1.bf16.msra.mxu0 0
    %4417 = vmatprep.subr.bf16.mxu0 0
    %4418 = vmatpush1.bf16.msra.mxu0 0
    %4419 = vmatprep.subr.bf16.mxu0 0
    %4420 = vmatpush1.bf16.msra.mxu0 0
    %4421 = vmatprep.subr.bf16.mxu0 0
    %4422 = vmatpush1.bf16.msra.mxu0 0
    %4423 = vmatprep.subr.bf16.mxu0 0
    %4424 = vmatpush1.bf16.msra.mxu0 0
    %4425 = vmatprep.subr.bf16.mxu0 0
    %4426 = vmatpush1.bf16.msra.mxu0 0
    %4427 = vmatprep.subr.bf16.mxu0 0
    %4428 = vmatpush1.bf16.msra.mxu0 %v4411
    %4429 = vmatprep.subr.bf16.mxu0 0
    %4430 = vmatpush2.bf16.msra.mxu0 0
    %4431 = vmatprep.subr.bf16.mxu0 0
    %4432 = vmatpush2.bf16.msra.mxu0 0
    %4433 = vmatprep.subr.bf16.mxu0 0
    %4434 = vmatpush2.bf16.msra.mxu0 0
    %4435 = vmatprep.subr.bf16.mxu0 0
    %4436 = vmatpush2.bf16.msra.mxu0 0
    %4437 = vmatprep.subr.bf16.mxu0 0
    %4438 = vmatpush2.bf16.msra.mxu0 0
    %4439 = vmatprep.subr.bf16.mxu0 0
    %4440 = vmatpush2.bf16.msra.mxu0 0
    %4441 = vmatprep.subr.bf16.mxu0 0
    %4442 = vmatpush2.bf16.msra.mxu0 0
    %4443 = vmatprep.subr.bf16.mxu0 0
    %4444 = vmatpush2.bf16.msra.mxu0 0
    %4445 = vmatprep.mubr.f32.mxu0 0.0
    %4446 = vmatmul.mubr.f32.gmra.mxu0 %v4362
    %v4447 = vpop.f32.mrf.mxu0
    %v4448 = vadd.f32 0.0, %v4447
    %v4449 = vpop.f32.mrf.mxu0
    %4450 = vmatprep.mubr.f32.mxu0 0.0
    %4451 = vmatmul.mubr.f32.gmra.mxu0 %v4365
    %v4452 = vpop.f32.mrf.mxu0
    %v4453 = vadd.f32 0.0, %v4452
    %v4454 = vpop.f32.mrf.mxu0
    %4455 = vmatprep.mubr.f32.mxu0 0.0
    %4456 = vmatmul.mubr.f32.gmra.mxu0 %v4368
    %v4457 = vpop.f32.mrf.mxu0
    %v4458 = vadd.f32 0.0, %v4457
    %v4459 = vpop.f32.mrf.mxu0
    %4460 = vmatprep.mubr.f32.mxu0 0.0
    %4461 = vmatmul.mubr.f32.gmra.mxu0 %v4371
    %v4462 = vpop.f32.mrf.mxu0
    %v4463 = vadd.f32 0.0, %v4462
    %v4464 = vpop.f32.mrf.mxu0
    %4465 = vmatprep.mubr.f32.mxu0 0.0
    %4466 = vmatmul.mubr.f32.gmra.mxu0 %v4374
    %v4467 = vpop.f32.mrf.mxu0
    %v4468 = vadd.f32 0.0, %v4467
    %v4469 = vpop.f32.mrf.mxu0
    %4470 = vmatprep.mubr.f32.mxu0 0.0
    %4471 = vmatmul.mubr.f32.gmra.mxu0 %v4377
    %v4472 = vpop.f32.mrf.mxu0
    %v4473 = vadd.f32 0.0, %v4472
    %v4474 = vpop.f32.mrf.mxu0
    %4475 = vmatprep.mubr.f32.mxu0 0.0
    %4476 = vmatmul.mubr.f32.gmra.mxu0 %v4380
    %v4477 = vpop.f32.mrf.mxu0
    %v4478 = vadd.f32 0.0, %v4477
    %v4479 = vpop.f32.mrf.mxu0
    %4480 = vmatprep.mubr.f32.mxu0 0.0
    %4481 = vmatmul.mubr.f32.gmra.mxu0 %v4383
    %v4482 = vpop.f32.mrf.mxu0
    %v4483 = vadd.f32 0.0, %v4482
    %v4484 = vpop.f32.mrf.mxu0
    %4485 = vmatprep.mubr.f32.mxu0 0.0
    %4486 = vmatmul.mubr.f32.gmra.mxu0 %v4386
    %v4487 = vpop.f32.mrf.mxu0
    %v4488 = vadd.f32 0.0, %v4487
    %v4489 = vpop.f32.mrf.mxu0
    %4490 = vmatprep.mubr.f32.mxu0 0.0
    %4491 = vmatmul.mubr.f32.gmra.mxu0 %v4389
    %v4492 = vpop.f32.mrf.mxu0
    %v4493 = vadd.f32 0.0, %v4492
    %v4494 = vpop.f32.mrf.mxu0
    %4495 = vmatprep.mubr.f32.mxu0 0.0
    %4496 = vmatmul.mubr.f32.gmra.mxu0 %v4392
    %v4497 = vpop.f32.mrf.mxu0
    %v4498 = vadd.f32 0.0, %v4497
    %v4499 = vpop.f32.mrf.mxu0
    %4500 = vmatprep.mubr.f32.mxu0 0.0
    %4501 = vmatmul.mubr.f32.gmra.mxu0 %v4395
    %v4502 = vpop.f32.mrf.mxu0
    %v4503 = vadd.f32 0.0, %v4502
    %v4504 = vpop.f32.mrf.mxu0
    %4505 = vmatprep.mubr.f32.mxu0 0.0
    %4506 = vmatmul.mubr.f32.gmra.mxu0 %v4398
    %v4507 = vpop.f32.mrf.mxu0
    %v4508 = vadd.f32 0.0, %v4507
    %v4509 = vpop.f32.mrf.mxu0
    %4510 = vmatprep.mubr.f32.mxu0 0.0
    %4511 = vmatmul.mubr.f32.gmra.mxu0 %v4401
    %v4512 = vpop.f32.mrf.mxu0
    %v4513 = vadd.f32 0.0, %v4512
    %v4514 = vpop.f32.mrf.mxu0
    %4515 = vmatprep.mubr.f32.mxu0 0.0
    %4516 = vmatmul.mubr.f32.gmra.mxu0 %v4404
    %v4517 = vpop.f32.mrf.mxu0
    %v4518 = vadd.f32 0.0, %v4517
    %v4519 = vpop.f32.mrf.mxu0
    %4520 = vmatprep.mubr.f32.mxu0 0.0
    %4521 = vmatmul.mubr.f32.gmra.mxu0 %v4407
    %v4522 = vpop.f32.mrf.mxu0
    %v4523 = vadd.f32 0.0, %v4522
    %v4524 = vpop.f32.mrf.mxu0
    %4525 = vdwg.mxu0
    %v4530 = vunpack.c.l.b16 %v4356
    %v4531 = vunpack.c.l.b16 %v4357
    %v4532 = vunpack.c.l.b16 %v4358
    %v4533 = vunpack.c.l.b16 %v4359
    %v4534 = vpack.c.b16 %v4531, %v4530
    %v4535 = vpack.c.b16 %v4533, %v4532
    %4538 = vmatprep.subr.mxu0 0.0
    %4539 = vmatpush1.msra.mxu0 %v4523
    %4540 = vmatprep.subr.mxu0 0.0
    %4541 = vmatpush1.msra.mxu0 %v4518
    %4542 = vmatprep.subr.mxu0 0.0
    %4543 = vmatpush1.msra.mxu0 %v4513
    %4544 = vmatprep.subr.mxu0 0.0
    %4545 = vmatpush1.msra.mxu0 %v4508
    %4546 = vmatprep.subr.mxu0 0.0
    %4547 = vmatpush1.msra.mxu0 %v4503
    %4548 = vmatprep.subr.mxu0 0.0
    %4549 = vmatpush1.msra.mxu0 %v4498
    %4550 = vmatprep.subr.mxu0 0.0
    %4551 = vmatpush1.msra.mxu0 %v4493
    %4552 = vmatprep.subr.mxu0 0.0
    %4553 = vmatpush1.msra.mxu0 %v4488
    %4554 = vmatprep.subr.mxu0 0.0
    %4555 = vmatpush1.msra.mxu0 %v4483
    %4556 = vmatprep.subr.mxu0 0.0
    %4557 = vmatpush1.msra.mxu0 %v4478
    %4558 = vmatprep.subr.mxu0 0.0
    %4559 = vmatpush1.msra.mxu0 %v4473
    %4560 = vmatprep.subr.mxu0 0.0
    %4561 = vmatpush1.msra.mxu0 %v4468
    %4562 = vmatprep.subr.mxu0 0.0
    %4563 = vmatpush1.msra.mxu0 %v4463
    %4564 = vmatprep.subr.mxu0 0.0
    %4565 = vmatpush1.msra.mxu0 %v4458
    %4566 = vmatprep.subr.mxu0 0.0
    %4567 = vmatpush1.msra.mxu0 %v4453
    %4568 = vmatprep.subr.mxu0 0.0
    %4569 = vmatpush1.msra.mxu0 %v4448
    %4570 = vmatprep.subr.mxu0 0.0
    %4571 = vmatpush2.msra.mxu0 0.0
    %4572 = vmatprep.subr.mxu0 0.0
    %4573 = vmatpush2.msra.mxu0 0.0
    %4574 = vmatprep.subr.mxu0 0.0
    %4575 = vmatpush2.msra.mxu0 0.0
    %4576 = vmatprep.subr.mxu0 0.0
    %4577 = vmatpush2.msra.mxu0 0.0
    %4578 = vmatprep.subr.mxu0 0.0
    %4579 = vmatpush2.msra.mxu0 0.0
    %4580 = vmatprep.subr.mxu0 0.0
    %4581 = vmatpush2.msra.mxu0 0.0
    %4582 = vmatprep.subr.mxu0 0.0
    %4583 = vmatpush2.msra.mxu0 0.0
    %4584 = vmatprep.subr.mxu0 0.0
    %4585 = vmatpush2.msra.mxu0 0.0
    %4586 = vmatprep.subr.mxu0 0.0
    %4587 = vmatpush2.msra.mxu0 0.0
    %4588 = vmatprep.subr.mxu0 0.0
    %4589 = vmatpush2.msra.mxu0 0.0
    %4590 = vmatprep.subr.mxu0 0.0
    %4591 = vmatpush2.msra.mxu0 0.0
    %4592 = vmatprep.subr.mxu0 0.0
    %4593 = vmatpush2.msra.mxu0 0.0
    %4594 = vmatprep.subr.mxu0 0.0
    %4595 = vmatpush2.msra.mxu0 0.0
    %4596 = vmatprep.subr.mxu0 0.0
    %4597 = vmatpush2.msra.mxu0 0.0
    %4598 = vmatprep.subr.mxu0 0.0
    %4599 = vmatpush2.msra.mxu0 0.0
    %4600 = vmatprep.subr.mxu0 0.0
    %4601 = vmatpush2.msra.mxu0 0.0
    %4602 = vmatprep.mubr.bf16.mxu0 0
    %4603 = vmatmul.mubr.bf16.gmra.mxu0 %v4534
    %v4604 = vpop.f32.mrf.mxu0
    %v4605 = vadd.f32 0.0, %v4604
    %v4606 = vpop.f32.mrf.mxu0
    %v4607 = vpop.f32.mrf.mxu0
    %v4608 = vadd.f32 0.0, %v4607
    %v4609 = vpop.f32.mrf.mxu0
    %4610 = vmatprep.mubr.bf16.mxu0 0
    %4611 = vmatmul.mubr.bf16.gmra.mxu0 %v4535
    %v4612 = vpop.f32.mrf.mxu0
    %v4613 = vadd.f32 0.0, %v4612
    %v4614 = vpop.f32.mrf.mxu0
    %v4615 = vpop.f32.mrf.mxu0
    %v4616 = vadd.f32 0.0, %v4615
    %v4617 = vpop.f32.mrf.mxu0
    %4618 = vdwg.mxu0
    %v4619 = vmul.f32 %v4293, %v4293
    %v4620 = vmul.f32 %v4296, %v4296
    %v4621 = vmul.f32 %v4301, %v4301
    %v4622 = vmul.f32 %v4304, %v4304
    %v4623 = vmul.f32 %v4309, %v4309
    %v4624 = vmul.f32 %v4312, %v4312
    %v4625 = vmul.f32 %v4317, %v4317
    %v4626 = vmul.f32 %v4320, %v4320
    %v4627 = vmul.f32 %v4325, %v4325
    %v4628 = vmul.f32 %v4328, %v4328
    %v4629 = vmul.f32 %v4333, %v4333
    %v4630 = vmul.f32 %v4336, %v4336
    %v4631 = vmul.f32 %v4341, %v4341
    %v4632 = vmul.f32 %v4344, %v4344
    %v4633 = vmul.f32 %v4349, %v4349
    %v4634 = vmul.f32 %v4352, %v4352
    %v4636 = vsel %vm4360, %v4619, 0
    %v4639 = vsel %vm4360, %v4620, 0
    %v4642 = vsel %vm4360, %v4621, 0
    %v4645 = vsel %vm4360, %v4622, 0
    %v4648 = vsel %vm4360, %v4623, 0
    %v4651 = vsel %vm4360, %v4624, 0
    %v4654 = vsel %vm4360, %v4625, 0
    %v4657 = vsel %vm4360, %v4626, 0
    %v4660 = vsel %vm4360, %v4627, 0
    %v4663 = vsel %vm4360, %v4628, 0
    %v4666 = vsel %vm4360, %v4629, 0
    %v4669 = vsel %vm4360, %v4630, 0
    %v4672 = vsel %vm4360, %v4631, 0
    %v4675 = vsel %vm4360, %v4632, 0
    %v4678 = vsel %vm4360, %v4633, 0
    %v4681 = vsel %vm4360, %v4634, 0
    %4683 = vmatprep.subr.bf16.mxu0 0
    %4684 = vmatpush1.bf16.msra.mxu0 0
    %4685 = vmatprep.subr.bf16.mxu0 0
    %4686 = vmatpush1.bf16.msra.mxu0 0
    %4687 = vmatprep.subr.bf16.mxu0 0
    %4688 = vmatpush1.bf16.msra.mxu0 0
    %4689 = vmatprep.subr.bf16.mxu0 0
    %4690 = vmatpush1.bf16.msra.mxu0 0
    %4691 = vmatprep.subr.bf16.mxu0 0
    %4692 = vmatpush1.bf16.msra.mxu0 0
    %4693 = vmatprep.subr.bf16.mxu0 0
    %4694 = vmatpush1.bf16.msra.mxu0 0
    %4695 = vmatprep.subr.bf16.mxu0 0
    %4696 = vmatpush1.bf16.msra.mxu0 0
    %4697 = vmatprep.subr.bf16.mxu0 0
    %4698 = vmatpush1.bf16.msra.mxu0 %v4411
    %4699 = vmatprep.subr.bf16.mxu0 0
    %4700 = vmatpush2.bf16.msra.mxu0 0
    %4701 = vmatprep.subr.bf16.mxu0 0
    %4702 = vmatpush2.bf16.msra.mxu0 0
    %4703 = vmatprep.subr.bf16.mxu0 0
    %4704 = vmatpush2.bf16.msra.mxu0 0
    %4705 = vmatprep.subr.bf16.mxu0 0
    %4706 = vmatpush2.bf16.msra.mxu0 0
    %4707 = vmatprep.subr.bf16.mxu0 0
    %4708 = vmatpush2.bf16.msra.mxu0 0
    %4709 = vmatprep.subr.bf16.mxu0 0
    %4710 = vmatpush2.bf16.msra.mxu0 0
    %4711 = vmatprep.subr.bf16.mxu0 0
    %4712 = vmatpush2.bf16.msra.mxu0 0
    %4713 = vmatprep.subr.bf16.mxu0 0
    %4714 = vmatpush2.bf16.msra.mxu0 0
    %4715 = vmatprep.mubr.f32.mxu0 0.0
    %4716 = vmatmul.mubr.f32.gmra.mxu0 %v4636
    %v4717 = vpop.f32.mrf.mxu0
    %v4718 = vadd.f32 0.0, %v4717
    %v4719 = vpop.f32.mrf.mxu0
    %4720 = vmatprep.mubr.f32.mxu0 0.0
    %4721 = vmatmul.mubr.f32.gmra.mxu0 %v4639
    %v4722 = vpop.f32.mrf.mxu0
    %v4723 = vadd.f32 0.0, %v4722
    %v4724 = vpop.f32.mrf.mxu0
    %4725 = vmatprep.mubr.f32.mxu0 0.0
    %4726 = vmatmul.mubr.f32.gmra.mxu0 %v4642
    %v4727 = vpop.f32.mrf.mxu0
    %v4728 = vadd.f32 0.0, %v4727
    %v4729 = vpop.f32.mrf.mxu0
    %4730 = vmatprep.mubr.f32.mxu0 0.0
    %4731 = vmatmul.mubr.f32.gmra.mxu0 %v4645
    %v4732 = vpop.f32.mrf.mxu0
    %v4733 = vadd.f32 0.0, %v4732
    %v4734 = vpop.f32.mrf.mxu0
    %4735 = vmatprep.mubr.f32.mxu0 0.0
    %4736 = vmatmul.mubr.f32.gmra.mxu0 %v4648
    %v4737 = vpop.f32.mrf.mxu0
    %v4738 = vadd.f32 0.0, %v4737
    %v4739 = vpop.f32.mrf.mxu0
    %4740 = vmatprep.mubr.f32.mxu0 0.0
    %4741 = vmatmul.mubr.f32.gmra.mxu0 %v4651
    %v4742 = vpop.f32.mrf.mxu0
    %v4743 = vadd.f32 0.0, %v4742
    %v4744 = vpop.f32.mrf.mxu0
    %4745 = vmatprep.mubr.f32.mxu0 0.0
    %4746 = vmatmul.mubr.f32.gmra.mxu0 %v4654
    %v4747 = vpop.f32.mrf.mxu0
    %v4748 = vadd.f32 0.0, %v4747
    %v4749 = vpop.f32.mrf.mxu0
    %4750 = vmatprep.mubr.f32.mxu0 0.0
    %4751 = vmatmul.mubr.f32.gmra.mxu0 %v4657
    %v4752 = vpop.f32.mrf.mxu0
    %v4753 = vadd.f32 0.0, %v4752
    %v4754 = vpop.f32.mrf.mxu0
    %4755 = vmatprep.mubr.f32.mxu0 0.0
    %4756 = vmatmul.mubr.f32.gmra.mxu0 %v4660
    %v4757 = vpop.f32.mrf.mxu0
    %v4758 = vadd.f32 0.0, %v4757
    %v4759 = vpop.f32.mrf.mxu0
    %4760 = vmatprep.mubr.f32.mxu0 0.0
    %4761 = vmatmul.mubr.f32.gmra.mxu0 %v4663
    %v4762 = vpop.f32.mrf.mxu0
    %v4763 = vadd.f32 0.0, %v4762
    %v4764 = vpop.f32.mrf.mxu0
    %4765 = vmatprep.mubr.f32.mxu0 0.0
    %4766 = vmatmul.mubr.f32.gmra.mxu0 %v4666
    %v4767 = vpop.f32.mrf.mxu0
    %v4768 = vadd.f32 0.0, %v4767
    %v4769 = vpop.f32.mrf.mxu0
    %4770 = vmatprep.mubr.f32.mxu0 0.0
    %4771 = vmatmul.mubr.f32.gmra.mxu0 %v4669
    %v4772 = vpop.f32.mrf.mxu0
    %v4773 = vadd.f32 0.0, %v4772
    %v4774 = vpop.f32.mrf.mxu0
    %4775 = vmatprep.mubr.f32.mxu0 0.0
    %4776 = vmatmul.mubr.f32.gmra.mxu0 %v4672
    %v4777 = vpop.f32.mrf.mxu0
    %v4778 = vadd.f32 0.0, %v4777
    %v4779 = vpop.f32.mrf.mxu0
    %4780 = vmatprep.mubr.f32.mxu0 0.0
    %4781 = vmatmul.mubr.f32.gmra.mxu0 %v4675
    %v4782 = vpop.f32.mrf.mxu0
    %v4783 = vadd.f32 0.0, %v4782
    %v4784 = vpop.f32.mrf.mxu0
    %4785 = vmatprep.mubr.f32.mxu0 0.0
    %4786 = vmatmul.mubr.f32.gmra.mxu0 %v4678
    %v4787 = vpop.f32.mrf.mxu0
    %v4788 = vadd.f32 0.0, %v4787
    %v4789 = vpop.f32.mrf.mxu0
    %4790 = vmatprep.mubr.f32.mxu0 0.0
    %4791 = vmatmul.mubr.f32.gmra.mxu0 %v4681
    %v4792 = vpop.f32.mrf.mxu0
    %v4793 = vadd.f32 0.0, %v4792
    %v4794 = vpop.f32.mrf.mxu0
    %4795 = vdwg.mxu0
    %4796 = vmatprep.subr.mxu0 0.0
    %4797 = vmatpush1.msra.mxu0 %v4793
    %4798 = vmatprep.subr.mxu0 0.0
    %4799 = vmatpush1.msra.mxu0 %v4788
    %4800 = vmatprep.subr.mxu0 0.0
    %4801 = vmatpush1.msra.mxu0 %v4783
    %4802 = vmatprep.subr.mxu0 0.0
    %4803 = vmatpush1.msra.mxu0 %v4778
    %4804 = vmatprep.subr.mxu0 0.0
    %4805 = vmatpush1.msra.mxu0 %v4773
    %4806 = vmatprep.subr.mxu0 0.0
    %4807 = vmatpush1.msra.mxu0 %v4768
    %4808 = vmatprep.subr.mxu0 0.0
    %4809 = vmatpush1.msra.mxu0 %v4763
    %4810 = vmatprep.subr.mxu0 0.0
    %4811 = vmatpush1.msra.mxu0 %v4758
    %4812 = vmatprep.subr.mxu0 0.0
    %4813 = vmatpush1.msra.mxu0 %v4753
    %4814 = vmatprep.subr.mxu0 0.0
    %4815 = vmatpush1.msra.mxu0 %v4748
    %4816 = vmatprep.subr.mxu0 0.0
    %4817 = vmatpush1.msra.mxu0 %v4743
    %4818 = vmatprep.subr.mxu0 0.0
    %4819 = vmatpush1.msra.mxu0 %v4738
    %4820 = vmatprep.subr.mxu0 0.0
    %4821 = vmatpush1.msra.mxu0 %v4733
    %4822 = vmatprep.subr.mxu0 0.0
    %4823 = vmatpush1.msra.mxu0 %v4728
    %4824 = vmatprep.subr.mxu0 0.0
    %4825 = vmatpush1.msra.mxu0 %v4723
    %4826 = vmatprep.subr.mxu0 0.0
    %4827 = vmatpush1.msra.mxu0 %v4718
    %4828 = vmatprep.subr.mxu0 0.0
    %4829 = vmatpush2.msra.mxu0 0.0
    %4830 = vmatprep.subr.mxu0 0.0
    %4831 = vmatpush2.msra.mxu0 0.0
    %4832 = vmatprep.subr.mxu0 0.0
    %4833 = vmatpush2.msra.mxu0 0.0
    %4834 = vmatprep.subr.mxu0 0.0
    %4835 = vmatpush2.msra.mxu0 0.0
    %4836 = vmatprep.subr.mxu0 0.0
    %4837 = vmatpush2.msra.mxu0 0.0
    %4838 = vmatprep.subr.mxu0 0.0
    %4839 = vmatpush2.msra.mxu0 0.0
    %4840 = vmatprep.subr.mxu0 0.0
    %4841 = vmatpush2.msra.mxu0 0.0
    %4842 = vmatprep.subr.mxu0 0.0
    %4843 = vmatpush2.msra.mxu0 0.0
    %4844 = vmatprep.subr.mxu0 0.0
    %4845 = vmatpush2.msra.mxu0 0.0
    %4846 = vmatprep.subr.mxu0 0.0
    %4847 = vmatpush2.msra.mxu0 0.0
    %4848 = vmatprep.subr.mxu0 0.0
    %4849 = vmatpush2.msra.mxu0 0.0
    %4850 = vmatprep.subr.mxu0 0.0
    %4851 = vmatpush2.msra.mxu0 0.0
    %4852 = vmatprep.subr.mxu0 0.0
    %4853 = vmatpush2.msra.mxu0 0.0
    %4854 = vmatprep.subr.mxu0 0.0
    %4855 = vmatpush2.msra.mxu0 0.0
    %4856 = vmatprep.subr.mxu0 0.0
    %4857 = vmatpush2.msra.mxu0 0.0
    %4858 = vmatprep.subr.mxu0 0.0
    %4859 = vmatpush2.msra.mxu0 0.0
    %4860 = vmatprep.mubr.bf16.mxu0 0
    %4861 = vmatmul.mubr.bf16.gmra.mxu0 %v4534
    %v4862 = vpop.f32.mrf.mxu0
    %v4863 = vadd.f32 0.0, %v4862
    %v4864 = vpop.f32.mrf.mxu0
    %v4865 = vpop.f32.mrf.mxu0
    %v4866 = vadd.f32 0.0, %v4865
    %v4867 = vpop.f32.mrf.mxu0
    %4868 = vmatprep.mubr.bf16.mxu0 0
    %4869 = vmatmul.mubr.bf16.gmra.mxu0 %v4535
    %v4870 = vpop.f32.mrf.mxu0
    %v4871 = vadd.f32 0.0, %v4870
    %v4872 = vpop.f32.mrf.mxu0
    %v4873 = vpop.f32.mrf.mxu0
    %v4874 = vadd.f32 0.0, %v4873
    %v4875 = vpop.f32.mrf.mxu0
    %4876 = vdwg.mxu0
    %v4877 = vmul.f32 %v4605, 0.0625
    %v4878 = vmul.f32 %v4608, 0.0625
    %v4879 = vmul.f32 %v4613, 0.0625
    %v4880 = vmul.f32 %v4616, 0.0625
    %v4881 = vmul.f32 %v4863, 0.0625
    %v4882 = vmul.f32 %v4866, 0.0625
    %v4883 = vmul.f32 %v4871, 0.0625
    %v4884 = vmul.f32 %v4874, 0.0625
    %v4885 = vmul.f32 %v4877, %v4877
    %v4886 = vmul.f32 %v4878, %v4878
    %v4887 = vmul.f32 %v4879, %v4879
    %v4888 = vmul.f32 %v4880, %v4880
    %v4889 = vsub.f32 %v4881, %v4885
    %v4890 = vsub.f32 %v4882, %v4886
    %v4891 = vsub.f32 %v4883, %v4887
    %v4892 = vsub.f32 %v4884, %v4888
    %v4893 = vadd.f32 %v4889, 1e-05
    %v4894 = vadd.f32 %v4890, 1e-05
    %v4895 = vadd.f32 %v4891, 1e-05
    %v4896 = vadd.f32 %v4892, 1e-05
    %v4897 = vrsqrt.pop %v4893
    %v4898 = vrsqrt.pop %v4894
    %v4899 = vrsqrt.pop %v4895
    %v4900 = vrsqrt.pop %v4896
    %v4901 = vld [vmem:[%s29] sm:$0xff]
    %v4902 = vld [vmem:[%s29 + $0x8] sm:$0xff]
    %v4903 = vld [vmem:[%s29 + $0x10] sm:$0xff]
    %v4904 = vld [vmem:[%s29 + $0x18] sm:$0xff]
    %4906 = vset.pattern.permute.xlu0 0
    %4907 = vperm.xlu0 %4906, %v4901
    %v4908 = vpop.permute.xlu0 %4907
    %4911 = vset.pattern.permute.xlu0 0
    %4912 = vperm.xlu0 %4911, %v4902
    %v4913 = vpop.permute.xlu0 %4912
    %4916 = vset.pattern.permute.xlu0 0
    %4917 = vperm.xlu0 %4916, %v4903
    %v4918 = vpop.permute.xlu0 %4917
    %4921 = vset.pattern.permute.xlu0 0
    %4922 = vperm.xlu0 %4921, %v4904
    %v4923 = vpop.permute.xlu0 %4922
    %v4925 = vmul.f32 %v4908, %v4897
    %v4926 = vmul.f32 %v4913, %v4898
    %v4927 = vmul.f32 %v4918, %v4899
    %v4928 = vmul.f32 %v4923, %v4900
    %v4929 = vld [vmem:[%s31] sm:$0xff]
    %v4930 = vld [vmem:[%s31 + $0x8] sm:$0xff]
    %v4931 = vld [vmem:[%s31 + $0x10] sm:$0xff]
    %v4932 = vld [vmem:[%s31 + $0x18] sm:$0xff]
    %v4933 = vmul.f32 %v4925, %v4877
    %v4934 = vmul.f32 %v4926, %v4878
    %v4935 = vmul.f32 %v4927, %v4879
    %v4936 = vmul.f32 %v4928, %v4880
    %4938 = vset.pattern.permute.xlu0 0
    %4939 = vperm.xlu0 %4938, %v4929
    %v4940 = vpop.permute.xlu0 %4939
    %4943 = vset.pattern.permute.xlu0 0
    %4944 = vperm.xlu0 %4943, %v4930
    %v4945 = vpop.permute.xlu0 %4944
    %4948 = vset.pattern.permute.xlu0 0
    %4949 = vperm.xlu0 %4948, %v4931
    %v4950 = vpop.permute.xlu0 %4949
    %4953 = vset.pattern.permute.xlu0 0
    %4954 = vperm.xlu0 %4953, %v4932
    %v4955 = vpop.permute.xlu0 %4954
    %v4957 = vsub.f32 %v4940, %v4933
    %v4958 = vsub.f32 %v4945, %v4934
    %v4959 = vsub.f32 %v4950, %v4935
    %v4960 = vsub.f32 %v4955, %v4936
    %v4961 = vld [vmem:[%s39] sm:$0xf]
    %v4962 = vld [vmem:[%s39 + $0x4] sm:$0xf]
    %v4963 = vld [vmem:[%s39 + $0x8] sm:$0xf]
    %v4964 = vld [vmem:[%s39 + $0xc] sm:$0xf]
    %v4965 = vld [vmem:[%s39 + $0x10] sm:$0xf]
    %v4966 = vld [vmem:[%s39 + $0x14] sm:$0xf]
    %v4967 = vld [vmem:[%s39 + $0x18] sm:$0xf]
    %v4968 = vld [vmem:[%s39 + $0x1c] sm:$0xf]
    %v4969 = vld [vmem:[%s39 + $0x20] sm:$0xf]
    %v4970 = vld [vmem:[%s39 + $0x24] sm:$0xf]
    %v4971 = vld [vmem:[%s39 + $0x28] sm:$0xf]
    %v4972 = vld [vmem:[%s39 + $0x2c] sm:$0xf]
    %v4973 = vld [vmem:[%s39 + $0x30] sm:$0xf]
    %v4974 = vld [vmem:[%s39 + $0x34] sm:$0xf]
    %v4975 = vld [vmem:[%s39 + $0x38] sm:$0xf]
    %v4976 = vld [vmem:[%s39 + $0x3c] sm:$0xf]
    %v4993 = vunpack.c.l.b16 %v4961
    %v4994 = vunpack.c.l.b16 %v4962
    %v4995 = vunpack.c.l.b16 %v4963
    %v4996 = vunpack.c.l.b16 %v4964
    %v4997 = vunpack.c.l.b16 %v4965
    %v4998 = vunpack.c.l.b16 %v4966
    %v4999 = vunpack.c.l.b16 %v4967
    %v5000 = vunpack.c.l.b16 %v4968
    %v5001 = vunpack.c.l.b16 %v4969
    %v5002 = vunpack.c.l.b16 %v4970
    %v5003 = vunpack.c.l.b16 %v4971
    %v5004 = vunpack.c.l.b16 %v4972
    %v5005 = vunpack.c.l.b16 %v4973
    %v5006 = vunpack.c.l.b16 %v4974
    %v5007 = vunpack.c.l.b16 %v4975
    %v5008 = vunpack.c.l.b16 %v4976
    %v5009 = vpack.c.b16 %v4994, %v4993
    %v5010 = vpack.c.b16 %v4996, %v4995
    %v5011 = vpack.c.b16 %v4998, %v4997
    %v5012 = vpack.c.b16 %v5000, %v4999
    %v5013 = vpack.c.b16 %v5002, %v5001
    %v5014 = vpack.c.b16 %v5004, %v5003
    %v5015 = vpack.c.b16 %v5006, %v5005
    %v5016 = vpack.c.b16 %v5008, %v5007
    %v5018 = vsel %vm1311, %v5009, 0
    %v5021 = vsel %vm1311, %v5010, 0
    %v5024 = vsel %vm1311, %v5011, 0
    %v5027 = vsel %vm1311, %v5012, 0
    %v5030 = vsel %vm1311, %v5013, 0
    %v5033 = vsel %vm1311, %v5014, 0
    %v5036 = vsel %vm1311, %v5015, 0
    %v5039 = vsel %vm1311, %v5016, 0
    %5041 = vmatprep.subr.mxu0 0.0
    %5042 = vmatpush1.msra.mxu0 0.0
    %5043 = vmatprep.subr.mxu0 0.0
    %5044 = vmatpush1.msra.mxu0 0.0
    %5045 = vmatprep.subr.mxu0 0.0
    %5046 = vmatpush1.msra.mxu0 0.0
    %5047 = vmatprep.subr.mxu0 0.0
    %5048 = vmatpush1.msra.mxu0 0.0
    %5049 = vmatprep.subr.mxu0 0.0
    %5050 = vmatpush1.msra.mxu0 0.0
    %5051 = vmatprep.subr.mxu0 0.0
    %5052 = vmatpush1.msra.mxu0 0.0
    %5053 = vmatprep.subr.mxu0 0.0
    %5054 = vmatpush1.msra.mxu0 0.0
    %5055 = vmatprep.subr.mxu0 0.0
    %5056 = vmatpush1.msra.mxu0 0.0
    %5057 = vmatprep.subr.mxu0 0.0
    %5058 = vmatpush1.msra.mxu0 0.0
    %5059 = vmatprep.subr.mxu0 0.0
    %5060 = vmatpush1.msra.mxu0 0.0
    %5061 = vmatprep.subr.mxu0 0.0
    %5062 = vmatpush1.msra.mxu0 0.0
    %5063 = vmatprep.subr.mxu0 0.0
    %5064 = vmatpush1.msra.mxu0 0.0
    %5065 = vmatprep.subr.mxu0 0.0
    %5066 = vmatpush1.msra.mxu0 %v4928
    %5067 = vmatprep.subr.mxu0 0.0
    %5068 = vmatpush1.msra.mxu0 %v4927
    %5069 = vmatprep.subr.mxu0 0.0
    %5070 = vmatpush1.msra.mxu0 %v4926
    %5071 = vmatprep.subr.mxu0 0.0
    %5072 = vmatpush1.msra.mxu0 %v4925
    %5073 = vmatprep.subr.mxu0 0.0
    %5074 = vmatpush2.msra.mxu0 0.0
    %5075 = vmatprep.subr.mxu0 0.0
    %5076 = vmatpush2.msra.mxu0 0.0
    %5077 = vmatprep.subr.mxu0 0.0
    %5078 = vmatpush2.msra.mxu0 0.0
    %5079 = vmatprep.subr.mxu0 0.0
    %5080 = vmatpush2.msra.mxu0 0.0
    %5081 = vmatprep.subr.mxu0 0.0
    %5082 = vmatpush2.msra.mxu0 0.0
    %5083 = vmatprep.subr.mxu0 0.0
    %5084 = vmatpush2.msra.mxu0 0.0
    %5085 = vmatprep.subr.mxu0 0.0
    %5086 = vmatpush2.msra.mxu0 0.0
    %5087 = vmatprep.subr.mxu0 0.0
    %5088 = vmatpush2.msra.mxu0 0.0
    %5089 = vmatprep.subr.mxu0 0.0
    %5090 = vmatpush2.msra.mxu0 0.0
    %5091 = vmatprep.subr.mxu0 0.0
    %5092 = vmatpush2.msra.mxu0 0.0
    %5093 = vmatprep.subr.mxu0 0.0
    %5094 = vmatpush2.msra.mxu0 0.0
    %5095 = vmatprep.subr.mxu0 0.0
    %5096 = vmatpush2.msra.mxu0 0.0
    %5097 = vmatprep.subr.mxu0 0.0
    %5098 = vmatpush2.msra.mxu0 0.0
    %5099 = vmatprep.subr.mxu0 0.0
    %5100 = vmatpush2.msra.mxu0 0.0
    %5101 = vmatprep.subr.mxu0 0.0
    %5102 = vmatpush2.msra.mxu0 0.0
    %5103 = vmatprep.subr.mxu0 0.0
    %5104 = vmatpush2.msra.mxu0 0.0
    %5105 = vmatprep.mubr.bf16.mxu0 0
    %5106 = vmatmul.mubr.bf16.gmra.mxu0 %v5018
    %v5107 = vpop.f32.mrf.mxu0
    %v5108 = vadd.f32 0.0, %v5107
    %v5109 = vpop.f32.mrf.mxu0
    %v5110 = vpop.f32.mrf.mxu0
    %v5111 = vadd.f32 0.0, %v5110
    %v5112 = vpop.f32.mrf.mxu0
    %5113 = vmatprep.mubr.bf16.mxu0 0
    %5114 = vmatmul.mubr.bf16.gmra.mxu0 %v5021
    %v5115 = vpop.f32.mrf.mxu0
    %v5116 = vadd.f32 0.0, %v5115
    %v5117 = vpop.f32.mrf.mxu0
    %v5118 = vpop.f32.mrf.mxu0
    %v5119 = vadd.f32 0.0, %v5118
    %v5120 = vpop.f32.mrf.mxu0
    %5121 = vmatprep.mubr.bf16.mxu0 0
    %5122 = vmatmul.mubr.bf16.gmra.mxu0 %v5024
    %v5123 = vpop.f32.mrf.mxu0
    %v5124 = vadd.f32 0.0, %v5123
    %v5125 = vpop.f32.mrf.mxu0
    %v5126 = vpop.f32.mrf.mxu0
    %v5127 = vadd.f32 0.0, %v5126
    %v5128 = vpop.f32.mrf.mxu0
    %5129 = vmatprep.mubr.bf16.mxu0 0
    %5130 = vmatmul.mubr.bf16.gmra.mxu0 %v5027
    %v5131 = vpop.f32.mrf.mxu0
    %v5132 = vadd.f32 0.0, %v5131
    %v5133 = vpop.f32.mrf.mxu0
    %v5134 = vpop.f32.mrf.mxu0
    %v5135 = vadd.f32 0.0, %v5134
    %v5136 = vpop.f32.mrf.mxu0
    %5137 = vmatprep.mubr.bf16.mxu0 0
    %5138 = vmatmul.mubr.bf16.gmra.mxu0 %v5030
    %v5139 = vpop.f32.mrf.mxu0
    %v5140 = vadd.f32 0.0, %v5139
    %v5141 = vpop.f32.mrf.mxu0
    %v5142 = vpop.f32.mrf.mxu0
    %v5143 = vadd.f32 0.0, %v5142
    %v5144 = vpop.f32.mrf.mxu0
    %5145 = vmatprep.mubr.bf16.mxu0 0
    %5146 = vmatmul.mubr.bf16.gmra.mxu0 %v5033
    %v5147 = vpop.f32.mrf.mxu0
    %v5148 = vadd.f32 0.0, %v5147
    %v5149 = vpop.f32.mrf.mxu0
    %v5150 = vpop.f32.mrf.mxu0
    %v5151 = vadd.f32 0.0, %v5150
    %v5152 = vpop.f32.mrf.mxu0
    %5153 = vmatprep.mubr.bf16.mxu0 0
    %5154 = vmatmul.mubr.bf16.gmra.mxu0 %v5036
    %v5155 = vpop.f32.mrf.mxu0
    %v5156 = vadd.f32 0.0, %v5155
    %v5157 = vpop.f32.mrf.mxu0
    %v5158 = vpop.f32.mrf.mxu0
    %v5159 = vadd.f32 0.0, %v5158
    %v5160 = vpop.f32.mrf.mxu0
    %5161 = vmatprep.mubr.bf16.mxu0 0
    %5162 = vmatmul.mubr.bf16.gmra.mxu0 %v5039
    %v5163 = vpop.f32.mrf.mxu0
    %v5164 = vadd.f32 0.0, %v5163
    %v5165 = vpop.f32.mrf.mxu0
    %v5166 = vpop.f32.mrf.mxu0
    %v5167 = vadd.f32 0.0, %v5166
    %v5168 = vpop.f32.mrf.mxu0
    %5169 = vdwg.mxu0
    %v5170 = vld [vmem:[%s35] sm:$0x1]
    %v5172 = vsel %vm2946, %v5108, 0
    %v5175 = vsel %vm2946, %v5111, 0
    %v5178 = vsel %vm2946, %v5116, 0
    %v5181 = vsel %vm2946, %v5119, 0
    %v5184 = vsel %vm2946, %v5124, 0
    %v5187 = vsel %vm2946, %v5127, 0
    %v5190 = vsel %vm2946, %v5132, 0
    %v5193 = vsel %vm2946, %v5135, 0
    %v5196 = vsel %vm2946, %v5140, 0
    %v5199 = vsel %vm2946, %v5143, 0
    %v5202 = vsel %vm2946, %v5148, 0
    %v5205 = vsel %vm2946, %v5151, 0
    %v5208 = vsel %vm2946, %v5156, 0
    %v5211 = vsel %vm2946, %v5159, 0
    %v5214 = vsel %vm2946, %v5164, 0
    %v5217 = vsel %vm2946, %v5167, 0
    %v5220 = vsel %vm2995, %v5170, 0
    %5222 = vmatprep.subr.bf16.mxu0 0
    %5223 = vmatpush1.bf16.msra.mxu0 0
    %5224 = vmatprep.subr.bf16.mxu0 0
    %5225 = vmatpush1.bf16.msra.mxu0 0
    %5226 = vmatprep.subr.bf16.mxu0 0
    %5227 = vmatpush1.bf16.msra.mxu0 0
    %5228 = vmatprep.subr.bf16.mxu0 0
    %5229 = vmatpush1.bf16.msra.mxu0 0
    %5230 = vmatprep.subr.bf16.mxu0 0
    %5231 = vmatpush1.bf16.msra.mxu0 0
    %5232 = vmatprep.subr.bf16.mxu0 0
    %5233 = vmatpush1.bf16.msra.mxu0 0
    %5234 = vmatprep.subr.bf16.mxu0 0
    %5235 = vmatpush1.bf16.msra.mxu0 0
    %5236 = vmatprep.subr.bf16.mxu0 0
    %5237 = vmatpush1.bf16.msra.mxu0 %v5220
    %5238 = vmatprep.subr.bf16.mxu0 0
    %5239 = vmatpush2.bf16.msra.mxu0 0
    %5240 = vmatprep.subr.bf16.mxu0 0
    %5241 = vmatpush2.bf16.msra.mxu0 0
    %5242 = vmatprep.subr.bf16.mxu0 0
    %5243 = vmatpush2.bf16.msra.mxu0 0
    %5244 = vmatprep.subr.bf16.mxu0 0
    %5245 = vmatpush2.bf16.msra.mxu0 0
    %5246 = vmatprep.subr.bf16.mxu0 0
    %5247 = vmatpush2.bf16.msra.mxu0 0
    %5248 = vmatprep.subr.bf16.mxu0 0
    %5249 = vmatpush2.bf16.msra.mxu0 0
    %5250 = vmatprep.subr.bf16.mxu0 0
    %5251 = vmatpush2.bf16.msra.mxu0 0
    %5252 = vmatprep.subr.bf16.mxu0 0
    %5253 = vmatpush2.bf16.msra.mxu0 0
    %5254 = vmatprep.mubr.f32.mxu0 0.0
    %5255 = vmatmul.mubr.f32.gmra.mxu0 %v5172
    %v5256 = vpop.f32.mrf.mxu0
    %v5257 = vadd.f32 0.0, %v5256
    %v5258 = vpop.f32.mrf.mxu0
    %5259 = vmatprep.mubr.f32.mxu0 0.0
    %5260 = vmatmul.mubr.f32.gmra.mxu0 %v5175
    %v5261 = vpop.f32.mrf.mxu0
    %v5262 = vadd.f32 0.0, %v5261
    %v5263 = vpop.f32.mrf.mxu0
    %5264 = vmatprep.mubr.f32.mxu0 0.0
    %5265 = vmatmul.mubr.f32.gmra.mxu0 %v5178
    %v5266 = vpop.f32.mrf.mxu0
    %v5267 = vadd.f32 0.0, %v5266
    %v5268 = vpop.f32.mrf.mxu0
    %5269 = vmatprep.mubr.f32.mxu0 0.0
    %5270 = vmatmul.mubr.f32.gmra.mxu0 %v5181
    %v5271 = vpop.f32.mrf.mxu0
    %v5272 = vadd.f32 0.0, %v5271
    %v5273 = vpop.f32.mrf.mxu0
    %5274 = vmatprep.mubr.f32.mxu0 0.0
    %5275 = vmatmul.mubr.f32.gmra.mxu0 %v5184
    %v5276 = vpop.f32.mrf.mxu0
    %v5277 = vadd.f32 0.0, %v5276
    %v5278 = vpop.f32.mrf.mxu0
    %5279 = vmatprep.mubr.f32.mxu0 0.0
    %5280 = vmatmul.mubr.f32.gmra.mxu0 %v5187
    %v5281 = vpop.f32.mrf.mxu0
    %v5282 = vadd.f32 0.0, %v5281
    %v5283 = vpop.f32.mrf.mxu0
    %5284 = vmatprep.mubr.f32.mxu0 0.0
    %5285 = vmatmul.mubr.f32.gmra.mxu0 %v5190
    %v5286 = vpop.f32.mrf.mxu0
    %v5287 = vadd.f32 0.0, %v5286
    %v5288 = vpop.f32.mrf.mxu0
    %5289 = vmatprep.mubr.f32.mxu0 0.0
    %5290 = vmatmul.mubr.f32.gmra.mxu0 %v5193
    %v5291 = vpop.f32.mrf.mxu0
    %v5292 = vadd.f32 0.0, %v5291
    %v5293 = vpop.f32.mrf.mxu0
    %5294 = vmatprep.mubr.f32.mxu0 0.0
    %5295 = vmatmul.mubr.f32.gmra.mxu0 %v5196
    %v5296 = vpop.f32.mrf.mxu0
    %v5297 = vadd.f32 0.0, %v5296
    %v5298 = vpop.f32.mrf.mxu0
    %5299 = vmatprep.mubr.f32.mxu0 0.0
    %5300 = vmatmul.mubr.f32.gmra.mxu0 %v5199
    %v5301 = vpop.f32.mrf.mxu0
    %v5302 = vadd.f32 0.0, %v5301
    %v5303 = vpop.f32.mrf.mxu0
    %5304 = vmatprep.mubr.f32.mxu0 0.0
    %5305 = vmatmul.mubr.f32.gmra.mxu0 %v5202
    %v5306 = vpop.f32.mrf.mxu0
    %v5307 = vadd.f32 0.0, %v5306
    %v5308 = vpop.f32.mrf.mxu0
    %5309 = vmatprep.mubr.f32.mxu0 0.0
    %5310 = vmatmul.mubr.f32.gmra.mxu0 %v5205
    %v5311 = vpop.f32.mrf.mxu0
    %v5312 = vadd.f32 0.0, %v5311
    %v5313 = vpop.f32.mrf.mxu0
    %5314 = vmatprep.mubr.f32.mxu0 0.0
    %5315 = vmatmul.mubr.f32.gmra.mxu0 %v5208
    %v5316 = vpop.f32.mrf.mxu0
    %v5317 = vadd.f32 0.0, %v5316
    %v5318 = vpop.f32.mrf.mxu0
    %5319 = vmatprep.mubr.f32.mxu0 0.0
    %5320 = vmatmul.mubr.f32.gmra.mxu0 %v5211
    %v5321 = vpop.f32.mrf.mxu0
    %v5322 = vadd.f32 0.0, %v5321
    %v5323 = vpop.f32.mrf.mxu0
    %5324 = vmatprep.mubr.f32.mxu0 0.0
    %5325 = vmatmul.mubr.f32.gmra.mxu0 %v5214
    %v5326 = vpop.f32.mrf.mxu0
    %v5327 = vadd.f32 0.0, %v5326
    %v5328 = vpop.f32.mrf.mxu0
    %5329 = vmatprep.mubr.f32.mxu0 0.0
    %5330 = vmatmul.mubr.f32.gmra.mxu0 %v5217
    %v5331 = vpop.f32.mrf.mxu0
    %v5332 = vadd.f32 0.0, %v5331
    %v5333 = vpop.f32.mrf.mxu0
    %5334 = vdwg.mxu0
    %5335 = vmatprep.subr.mxu0 0.0
    %5336 = vmatpush1.msra.mxu0 0.0
    %5337 = vmatprep.subr.mxu0 0.0
    %5338 = vmatpush1.msra.mxu0 0.0
    %5339 = vmatprep.subr.mxu0 0.0
    %5340 = vmatpush1.msra.mxu0 0.0
    %5341 = vmatprep.subr.mxu0 0.0
    %5342 = vmatpush1.msra.mxu0 0.0
    %5343 = vmatprep.subr.mxu0 0.0
    %5344 = vmatpush1.msra.mxu0 0.0
    %5345 = vmatprep.subr.mxu0 0.0
    %5346 = vmatpush1.msra.mxu0 0.0
    %5347 = vmatprep.subr.mxu0 0.0
    %5348 = vmatpush1.msra.mxu0 0.0
    %5349 = vmatprep.subr.mxu0 0.0
    %5350 = vmatpush1.msra.mxu0 0.0
    %5351 = vmatprep.subr.mxu0 0.0
    %5352 = vmatpush1.msra.mxu0 0.0
    %5353 = vmatprep.subr.mxu0 0.0
    %5354 = vmatpush1.msra.mxu0 0.0
    %5355 = vmatprep.subr.mxu0 0.0
    %5356 = vmatpush1.msra.mxu0 0.0
    %5357 = vmatprep.subr.mxu0 0.0
    %5358 = vmatpush1.msra.mxu0 0.0
    %5359 = vmatprep.subr.mxu0 0.0
    %5360 = vmatpush1.msra.mxu0 %v4960
    %5361 = vmatprep.subr.mxu0 0.0
    %5362 = vmatpush1.msra.mxu0 %v4959
    %5363 = vmatprep.subr.mxu0 0.0
    %5364 = vmatpush1.msra.mxu0 %v4958
    %5365 = vmatprep.subr.mxu0 0.0
    %5366 = vmatpush1.msra.mxu0 %v4957
    %5367 = vmatprep.subr.mxu0 0.0
    %5368 = vmatpush2.msra.mxu0 0.0
    %5369 = vmatprep.subr.mxu0 0.0
    %5370 = vmatpush2.msra.mxu0 0.0
    %5371 = vmatprep.subr.mxu0 0.0
    %5372 = vmatpush2.msra.mxu0 0.0
    %5373 = vmatprep.subr.mxu0 0.0
    %5374 = vmatpush2.msra.mxu0 0.0
    %5375 = vmatprep.subr.mxu0 0.0
    %5376 = vmatpush2.msra.mxu0 0.0
    %5377 = vmatprep.subr.mxu0 0.0
    %5378 = vmatpush2.msra.mxu0 0.0
    %5379 = vmatprep.subr.mxu0 0.0
    %5380 = vmatpush2.msra.mxu0 0.0
    %5381 = vmatprep.subr.mxu0 0.0
    %5382 = vmatpush2.msra.mxu0 0.0
    %5383 = vmatprep.subr.mxu0 0.0
    %5384 = vmatpush2.msra.mxu0 0.0
    %5385 = vmatprep.subr.mxu0 0.0
    %5386 = vmatpush2.msra.mxu0 0.0
    %5387 = vmatprep.subr.mxu0 0.0
    %5388 = vmatpush2.msra.mxu0 0.0
    %5389 = vmatprep.subr.mxu0 0.0
    %5390 = vmatpush2.msra.mxu0 0.0
    %5391 = vmatprep.subr.mxu0 0.0
    %5392 = vmatpush2.msra.mxu0 0.0
    %5393 = vmatprep.subr.mxu0 0.0
    %5394 = vmatpush2.msra.mxu0 0.0
    %5395 = vmatprep.subr.mxu0 0.0
    %5396 = vmatpush2.msra.mxu0 0.0
    %5397 = vmatprep.subr.mxu0 0.0
    %5398 = vmatpush2.msra.mxu0 0.0
    %5399 = vmatprep.mubr.bf16.mxu0 0
    %5400 = vmatmul.mubr.bf16.gmra.mxu0 %v5018
    %v5401 = vpop.f32.mrf.mxu0
    %v5402 = vadd.f32 0.0, %v5401
    %v5403 = vpop.f32.mrf.mxu0
    %v5404 = vpop.f32.mrf.mxu0
    %v5405 = vadd.f32 0.0, %v5404
    %v5406 = vpop.f32.mrf.mxu0
    %5407 = vmatprep.mubr.bf16.mxu0 0
    %5408 = vmatmul.mubr.bf16.gmra.mxu0 %v5021
    %v5409 = vpop.f32.mrf.mxu0
    %v5410 = vadd.f32 0.0, %v5409
    %v5411 = vpop.f32.mrf.mxu0
    %v5412 = vpop.f32.mrf.mxu0
    %v5413 = vadd.f32 0.0, %v5412
    %v5414 = vpop.f32.mrf.mxu0
    %5415 = vmatprep.mubr.bf16.mxu0 0
    %5416 = vmatmul.mubr.bf16.gmra.mxu0 %v5024
    %v5417 = vpop.f32.mrf.mxu0
    %v5418 = vadd.f32 0.0, %v5417
    %v5419 = vpop.f32.mrf.mxu0
    %v5420 = vpop.f32.mrf.mxu0
    %v5421 = vadd.f32 0.0, %v5420
    %v5422 = vpop.f32.mrf.mxu0
    %5423 = vmatprep.mubr.bf16.mxu0 0
    %5424 = vmatmul.mubr.bf16.gmra.mxu0 %v5027
    %v5425 = vpop.f32.mrf.mxu0
    %v5426 = vadd.f32 0.0, %v5425
    %v5427 = vpop.f32.mrf.mxu0
    %v5428 = vpop.f32.mrf.mxu0
    %v5429 = vadd.f32 0.0, %v5428
    %v5430 = vpop.f32.mrf.mxu0
    %5431 = vmatprep.mubr.bf16.mxu0 0
    %5432 = vmatmul.mubr.bf16.gmra.mxu0 %v5030
    %v5433 = vpop.f32.mrf.mxu0
    %v5434 = vadd.f32 0.0, %v5433
    %v5435 = vpop.f32.mrf.mxu0
    %v5436 = vpop.f32.mrf.mxu0
    %v5437 = vadd.f32 0.0, %v5436
    %v5438 = vpop.f32.mrf.mxu0
    %5439 = vmatprep.mubr.bf16.mxu0 0
    %5440 = vmatmul.mubr.bf16.gmra.mxu0 %v5033
    %v5441 = vpop.f32.mrf.mxu0
    %v5442 = vadd.f32 0.0, %v5441
    %v5443 = vpop.f32.mrf.mxu0
    %v5444 = vpop.f32.mrf.mxu0
    %v5445 = vadd.f32 0.0, %v5444
    %v5446 = vpop.f32.mrf.mxu0
    %5447 = vmatprep.mubr.bf16.mxu0 0
    %5448 = vmatmul.mubr.bf16.gmra.mxu0 %v5036
    %v5449 = vpop.f32.mrf.mxu0
    %v5450 = vadd.f32 0.0, %v5449
    %v5451 = vpop.f32.mrf.mxu0
    %v5452 = vpop.f32.mrf.mxu0
    %v5453 = vadd.f32 0.0, %v5452
    %v5454 = vpop.f32.mrf.mxu0
    %5455 = vmatprep.mubr.bf16.mxu0 0
    %5456 = vmatmul.mubr.bf16.gmra.mxu0 %v5039
    %v5457 = vpop.f32.mrf.mxu0
    %v5458 = vadd.f32 0.0, %v5457
    %v5459 = vpop.f32.mrf.mxu0
    %v5460 = vpop.f32.mrf.mxu0
    %v5461 = vadd.f32 0.0, %v5460
    %v5462 = vpop.f32.mrf.mxu0
    %5463 = vdwg.mxu0
    %v5465 = vsel %vm2946, %v5402, 0
    %v5468 = vsel %vm2946, %v5405, 0
    %v5471 = vsel %vm2946, %v5410, 0
    %v5474 = vsel %vm2946, %v5413, 0
    %v5477 = vsel %vm2946, %v5418, 0
    %v5480 = vsel %vm2946, %v5421, 0
    %v5483 = vsel %vm2946, %v5426, 0
    %v5486 = vsel %vm2946, %v5429, 0
    %v5489 = vsel %vm2946, %v5434, 0
    %v5492 = vsel %vm2946, %v5437, 0
    %v5495 = vsel %vm2946, %v5442, 0
    %v5498 = vsel %vm2946, %v5445, 0
    %v5501 = vsel %vm2946, %v5450, 0
    %v5504 = vsel %vm2946, %v5453, 0
    %v5507 = vsel %vm2946, %v5458, 0
    %v5510 = vsel %vm2946, %v5461, 0
    %5512 = vmatprep.subr.bf16.mxu0 0
    %5513 = vmatpush1.bf16.msra.mxu0 0
    %5514 = vmatprep.subr.bf16.mxu0 0
    %5515 = vmatpush1.bf16.msra.mxu0 0
    %5516 = vmatprep.subr.bf16.mxu0 0
    %5517 = vmatpush1.bf16.msra.mxu0 0
    %5518 = vmatprep.subr.bf16.mxu0 0
    %5519 = vmatpush1.bf16.msra.mxu0 0
    %5520 = vmatprep.subr.bf16.mxu0 0
    %5521 = vmatpush1.bf16.msra.mxu0 0
    %5522 = vmatprep.subr.bf16.mxu0 0
    %5523 = vmatpush1.bf16.msra.mxu0 0
    %5524 = vmatprep.subr.bf16.mxu0 0
    %5525 = vmatpush1.bf16.msra.mxu0 0
    %5526 = vmatprep.subr.bf16.mxu0 0
    %5527 = vmatpush1.bf16.msra.mxu0 %v5220
    %5528 = vmatprep.subr.bf16.mxu0 0
    %5529 = vmatpush2.bf16.msra.mxu0 0
    %5530 = vmatprep.subr.bf16.mxu0 0
    %5531 = vmatpush2.bf16.msra.mxu0 0
    %5532 = vmatprep.subr.bf16.mxu0 0
    %5533 = vmatpush2.bf16.msra.mxu0 0
    %5534 = vmatprep.subr.bf16.mxu0 0
    %5535 = vmatpush2.bf16.msra.mxu0 0
    %5536 = vmatprep.subr.bf16.mxu0 0
    %5537 = vmatpush2.bf16.msra.mxu0 0
    %5538 = vmatprep.subr.bf16.mxu0 0
    %5539 = vmatpush2.bf16.msra.mxu0 0
    %5540 = vmatprep.subr.bf16.mxu0 0
    %5541 = vmatpush2.bf16.msra.mxu0 0
    %5542 = vmatprep.subr.bf16.mxu0 0
    %5543 = vmatpush2.bf16.msra.mxu0 0
    %5544 = vmatprep.mubr.f32.mxu0 0.0
    %5545 = vmatmul.mubr.f32.gmra.mxu0 %v5465
    %v5546 = vpop.f32.mrf.mxu0
    %v5547 = vadd.f32 0.0, %v5546
    %v5548 = vpop.f32.mrf.mxu0
    %5549 = vmatprep.mubr.f32.mxu0 0.0
    %5550 = vmatmul.mubr.f32.gmra.mxu0 %v5468
    %v5551 = vpop.f32.mrf.mxu0
    %v5552 = vadd.f32 0.0, %v5551
    %v5553 = vpop.f32.mrf.mxu0
    %5554 = vmatprep.mubr.f32.mxu0 0.0
    %5555 = vmatmul.mubr.f32.gmra.mxu0 %v5471
    %v5556 = vpop.f32.mrf.mxu0
    %v5557 = vadd.f32 0.0, %v5556
    %v5558 = vpop.f32.mrf.mxu0
    %5559 = vmatprep.mubr.f32.mxu0 0.0
    %5560 = vmatmul.mubr.f32.gmra.mxu0 %v5474
    %v5561 = vpop.f32.mrf.mxu0
    %v5562 = vadd.f32 0.0, %v5561
    %v5563 = vpop.f32.mrf.mxu0
    %5564 = vmatprep.mubr.f32.mxu0 0.0
    %5565 = vmatmul.mubr.f32.gmra.mxu0 %v5477
    %v5566 = vpop.f32.mrf.mxu0
    %v5567 = vadd.f32 0.0, %v5566
    %v5568 = vpop.f32.mrf.mxu0
    %5569 = vmatprep.mubr.f32.mxu0 0.0
    %5570 = vmatmul.mubr.f32.gmra.mxu0 %v5480
    %v5571 = vpop.f32.mrf.mxu0
    %v5572 = vadd.f32 0.0, %v5571
    %v5573 = vpop.f32.mrf.mxu0
    %5574 = vmatprep.mubr.f32.mxu0 0.0
    %5575 = vmatmul.mubr.f32.gmra.mxu0 %v5483
    %v5576 = vpop.f32.mrf.mxu0
    %v5577 = vadd.f32 0.0, %v5576
    %v5578 = vpop.f32.mrf.mxu0
    %5579 = vmatprep.mubr.f32.mxu0 0.0
    %5580 = vmatmul.mubr.f32.gmra.mxu0 %v5486
    %v5581 = vpop.f32.mrf.mxu0
    %v5582 = vadd.f32 0.0, %v5581
    %v5583 = vpop.f32.mrf.mxu0
    %5584 = vmatprep.mubr.f32.mxu0 0.0
    %5585 = vmatmul.mubr.f32.gmra.mxu0 %v5489
    %v5586 = vpop.f32.mrf.mxu0
    %v5587 = vadd.f32 0.0, %v5586
    %v5588 = vpop.f32.mrf.mxu0
    %5589 = vmatprep.mubr.f32.mxu0 0.0
    %5590 = vmatmul.mubr.f32.gmra.mxu0 %v5492
    %v5591 = vpop.f32.mrf.mxu0
    %v5592 = vadd.f32 0.0, %v5591
    %v5593 = vpop.f32.mrf.mxu0
    %5594 = vmatprep.mubr.f32.mxu0 0.0
    %5595 = vmatmul.mubr.f32.gmra.mxu0 %v5495
    %v5596 = vpop.f32.mrf.mxu0
    %v5597 = vadd.f32 0.0, %v5596
    %v5598 = vpop.f32.mrf.mxu0
    %5599 = vmatprep.mubr.f32.mxu0 0.0
    %5600 = vmatmul.mubr.f32.gmra.mxu0 %v5498
    %v5601 = vpop.f32.mrf.mxu0
    %v5602 = vadd.f32 0.0, %v5601
    %v5603 = vpop.f32.mrf.mxu0
    %5604 = vmatprep.mubr.f32.mxu0 0.0
    %5605 = vmatmul.mubr.f32.gmra.mxu0 %v5501
    %v5606 = vpop.f32.mrf.mxu0
    %v5607 = vadd.f32 0.0, %v5606
    %v5608 = vpop.f32.mrf.mxu0
    %5609 = vmatprep.mubr.f32.mxu0 0.0
    %5610 = vmatmul.mubr.f32.gmra.mxu0 %v5504
    %v5611 = vpop.f32.mrf.mxu0
    %v5612 = vadd.f32 0.0, %v5611
    %v5613 = vpop.f32.mrf.mxu0
    %5614 = vmatprep.mubr.f32.mxu0 0.0
    %5615 = vmatmul.mubr.f32.gmra.mxu0 %v5507
    %v5616 = vpop.f32.mrf.mxu0
    %v5617 = vadd.f32 0.0, %v5616
    %v5618 = vpop.f32.mrf.mxu0
    %5619 = vmatprep.mubr.f32.mxu0 0.0
    %5620 = vmatmul.mubr.f32.gmra.mxu0 %v5510
    %v5621 = vpop.f32.mrf.mxu0
    %v5622 = vadd.f32 0.0, %v5621
    %v5623 = vpop.f32.mrf.mxu0
    %5624 = vdwg.mxu0
    %v5625 = vmul.f32 %v5257, %v4293
    %v5626 = vmul.f32 %v5262, %v4296
    %v5627 = vmul.f32 %v5267, %v4301
    %v5628 = vmul.f32 %v5272, %v4304
    %v5629 = vmul.f32 %v5277, %v4309
    %v5630 = vmul.f32 %v5282, %v4312
    %v5631 = vmul.f32 %v5287, %v4317
    %v5632 = vmul.f32 %v5292, %v4320
    %v5633 = vmul.f32 %v5297, %v4325
    %v5634 = vmul.f32 %v5302, %v4328
    %v5635 = vmul.f32 %v5307, %v4333
    %v5636 = vmul.f32 %v5312, %v4336
    %v5637 = vmul.f32 %v5317, %v4341
    %v5638 = vmul.f32 %v5322, %v4344
    %v5639 = vmul.f32 %v5327, %v4349
    %v5640 = vmul.f32 %v5332, %v4352
    %v5641 = vadd.f32 %v5625, %v5547
    %v5642 = vadd.f32 %v5626, %v5552
    %v5643 = vadd.f32 %v5627, %v5557
    %v5644 = vadd.f32 %v5628, %v5562
    %v5645 = vadd.f32 %v5629, %v5567
    %v5646 = vadd.f32 %v5630, %v5572
    %v5647 = vadd.f32 %v5631, %v5577
    %v5648 = vadd.f32 %v5632, %v5582
    %v5649 = vadd.f32 %v5633, %v5587
    %v5650 = vadd.f32 %v5634, %v5592
    %v5651 = vadd.f32 %v5635, %v5597
    %v5652 = vadd.f32 %v5636, %v5602
    %v5653 = vadd.f32 %v5637, %v5607
    %v5654 = vadd.f32 %v5638, %v5612
    %v5655 = vadd.f32 %v5639, %v5617
    %v5656 = vadd.f32 %v5640, %v5622
    %vm5657 = vcmp.ge.f32.partialorder %v5641, 0.0
    %vm5658 = vcmp.ge.f32.partialorder %v5642, 0.0
    %vm5659 = vcmp.ge.f32.partialorder %v5643, 0.0
    %vm5660 = vcmp.ge.f32.partialorder %v5644, 0.0
    %vm5661 = vcmp.ge.f32.partialorder %v5645, 0.0
    %vm5662 = vcmp.ge.f32.partialorder %v5646, 0.0
    %vm5663 = vcmp.ge.f32.partialorder %v5647, 0.0
    %vm5664 = vcmp.ge.f32.partialorder %v5648, 0.0
    %vm5665 = vcmp.ge.f32.partialorder %v5649, 0.0
    %vm5666 = vcmp.ge.f32.partialorder %v5650, 0.0
    %vm5667 = vcmp.ge.f32.partialorder %v5651, 0.0
    %vm5668 = vcmp.ge.f32.partialorder %v5652, 0.0
    %vm5669 = vcmp.ge.f32.partialorder %v5653, 0.0
    %vm5670 = vcmp.ge.f32.partialorder %v5654, 0.0
    %vm5671 = vcmp.ge.f32.partialorder %v5655, 0.0
    %vm5672 = vcmp.ge.f32.partialorder %v5656, 0.0
    %v5673 = vmul.f32 %v5641, 0.2
    %v5674 = vmul.f32 %v5642, 0.2
    %v5675 = vmul.f32 %v5643, 0.2
    %v5676 = vmul.f32 %v5644, 0.2
    %v5677 = vmul.f32 %v5645, 0.2
    %v5678 = vmul.f32 %v5646, 0.2
    %v5679 = vmul.f32 %v5647, 0.2
    %v5680 = vmul.f32 %v5648, 0.2
    %v5681 = vmul.f32 %v5649, 0.2
    %v5682 = vmul.f32 %v5650, 0.2
    %v5683 = vmul.f32 %v5651, 0.2
    %v5684 = vmul.f32 %v5652, 0.2
    %v5685 = vmul.f32 %v5653, 0.2
    %v5686 = vmul.f32 %v5654, 0.2
    %v5687 = vmul.f32 %v5655, 0.2
    %v5688 = vmul.f32 %v5656, 0.2
    %v5689 = vsel %vm5657, %v5641, %v5673
    %v5690 = vsel %vm5658, %v5642, %v5674
    %v5691 = vsel %vm5659, %v5643, %v5675
    %v5692 = vsel %vm5660, %v5644, %v5676
    %v5693 = vsel %vm5661, %v5645, %v5677
    %v5694 = vsel %vm5662, %v5646, %v5678
    %v5695 = vsel %vm5663, %v5647, %v5679
    %v5696 = vsel %vm5664, %v5648, %v5680
    %v5697 = vsel %vm5665, %v5649, %v5681
    %v5698 = vsel %vm5666, %v5650, %v5682
    %v5699 = vsel %vm5667, %v5651, %v5683
    %v5700 = vsel %vm5668, %v5652, %v5684
    %v5701 = vsel %vm5669, %v5653, %v5685
    %v5702 = vsel %vm5670, %v5654, %v5686
    %v5703 = vsel %vm5671, %v5655, %v5687
    %v5704 = vsel %vm5672, %v5656, %v5688
    %v5705 = vpack.c.bf16 %v5690, %v5689
    %v5706 = vpack.c.bf16 %v5692, %v5691
    %v5707 = vpack.c.bf16 %v5694, %v5693
    %v5708 = vpack.c.bf16 %v5696, %v5695
    %v5709 = vpack.c.bf16 %v5698, %v5697
    %v5710 = vpack.c.bf16 %v5700, %v5699
    %v5711 = vpack.c.bf16 %v5702, %v5701
    %v5712 = vpack.c.bf16 %v5704, %v5703
    %v5713 = vld [vmem:[%s43] sm:$0xf]
    %v5715 = vsel %vm4360, %v5705, 0
    %v5718 = vsel %vm4360, %v5706, 0
    %v5721 = vsel %vm4360, %v5707, 0
    %v5724 = vsel %vm4360, %v5708, 0
    %v5727 = vsel %vm4360, %v5709, 0
    %v5730 = vsel %vm4360, %v5710, 0
    %v5733 = vsel %vm4360, %v5711, 0
    %v5736 = vsel %vm4360, %v5712, 0
    %v5739 = vsel %vm4409, %v5713, 0
    %5741 = vmatprep.subr.bf16.mxu0 0
    %5742 = vmatpush1.bf16.msra.mxu0 0
    %5743 = vmatprep.subr.bf16.mxu0 0
    %5744 = vmatpush1.bf16.msra.mxu0 0
    %5745 = vmatprep.subr.bf16.mxu0 0
    %5746 = vmatpush1.bf16.msra.mxu0 0
    %5747 = vmatprep.subr.bf16.mxu0 0
    %5748 = vmatpush1.bf16.msra.mxu0 0
    %5749 = vmatprep.subr.bf16.mxu0 0
    %5750 = vmatpush1.bf16.msra.mxu0 0
    %5751 = vmatprep.subr.bf16.mxu0 0
    %5752 = vmatpush1.bf16.msra.mxu0 0
    %5753 = vmatprep.subr.bf16.mxu0 0
    %5754 = vmatpush1.bf16.msra.mxu0 0
    %5755 = vmatprep.subr.bf16.mxu0 0
    %5756 = vmatpush1.bf16.msra.mxu0 %v5739
    %5757 = vmatprep.subr.bf16.mxu0 0
    %5758 = vmatpush2.bf16.msra.mxu0 0
    %5759 = vmatprep.subr.bf16.mxu0 0
    %5760 = vmatpush2.bf16.msra.mxu0 0
    %5761 = vmatprep.subr.bf16.mxu0 0
    %5762 = vmatpush2.bf16.msra.mxu0 0
    %5763 = vmatprep.subr.bf16.mxu0 0
    %5764 = vmatpush2.bf16.msra.mxu0 0
    %5765 = vmatprep.subr.bf16.mxu0 0
    %5766 = vmatpush2.bf16.msra.mxu0 0
    %5767 = vmatprep.subr.bf16.mxu0 0
    %5768 = vmatpush2.bf16.msra.mxu0 0
    %5769 = vmatprep.subr.bf16.mxu0 0
    %5770 = vmatpush2.bf16.msra.mxu0 0
    %5771 = vmatprep.subr.bf16.mxu0 0
    %5772 = vmatpush2.bf16.msra.mxu0 0
    %5773 = vmatprep.mubr.bf16.mxu0 0
    %5774 = vmatmul.mubr.bf16.gmra.mxu0 %v5715
    %v5775 = vpop.f32.mrf.mxu0
    %v5776 = vadd.f32 0.0, %v5775
    %v5777 = vpop.f32.mrf.mxu0
    %v5778 = vpop.f32.mrf.mxu0
    %v5779 = vadd.f32 0.0, %v5778
    %v5780 = vpop.f32.mrf.mxu0
    %5781 = vmatprep.mubr.bf16.mxu0 0
    %5782 = vmatmul.mubr.bf16.gmra.mxu0 %v5718
    %v5783 = vpop.f32.mrf.mxu0
    %v5784 = vadd.f32 0.0, %v5783
    %v5785 = vpop.f32.mrf.mxu0
    %v5786 = vpop.f32.mrf.mxu0
    %v5787 = vadd.f32 0.0, %v5786
    %v5788 = vpop.f32.mrf.mxu0
    %5789 = vmatprep.mubr.bf16.mxu0 0
    %5790 = vmatmul.mubr.bf16.gmra.mxu0 %v5721
    %v5791 = vpop.f32.mrf.mxu0
    %v5792 = vadd.f32 0.0, %v5791
    %v5793 = vpop.f32.mrf.mxu0
    %v5794 = vpop.f32.mrf.mxu0
    %v5795 = vadd.f32 0.0, %v5794
    %v5796 = vpop.f32.mrf.mxu0
    %5797 = vmatprep.mubr.bf16.mxu0 0
    %5798 = vmatmul.mubr.bf16.gmra.mxu0 %v5724
    %v5799 = vpop.f32.mrf.mxu0
    %v5800 = vadd.f32 0.0, %v5799
    %v5801 = vpop.f32.mrf.mxu0
    %v5802 = vpop.f32.mrf.mxu0
    %v5803 = vadd.f32 0.0, %v5802
    %v5804 = vpop.f32.mrf.mxu0
    %5805 = vmatprep.mubr.bf16.mxu0 0
    %5806 = vmatmul.mubr.bf16.gmra.mxu0 %v5727
    %v5807 = vpop.f32.mrf.mxu0
    %v5808 = vadd.f32 0.0, %v5807
    %v5809 = vpop.f32.mrf.mxu0
    %v5810 = vpop.f32.mrf.mxu0
    %v5811 = vadd.f32 0.0, %v5810
    %v5812 = vpop.f32.mrf.mxu0
    %5813 = vmatprep.mubr.bf16.mxu0 0
    %5814 = vmatmul.mubr.bf16.gmra.mxu0 %v5730
    %v5815 = vpop.f32.mrf.mxu0
    %v5816 = vadd.f32 0.0, %v5815
    %v5817 = vpop.f32.mrf.mxu0
    %v5818 = vpop.f32.mrf.mxu0
    %v5819 = vadd.f32 0.0, %v5818
    %v5820 = vpop.f32.mrf.mxu0
    %5821 = vmatprep.mubr.bf16.mxu0 0
    %5822 = vmatmul.mubr.bf16.gmra.mxu0 %v5733
    %v5823 = vpop.f32.mrf.mxu0
    %v5824 = vadd.f32 0.0, %v5823
    %v5825 = vpop.f32.mrf.mxu0
    %v5826 = vpop.f32.mrf.mxu0
    %v5827 = vadd.f32 0.0, %v5826
    %v5828 = vpop.f32.mrf.mxu0
    %5829 = vmatprep.mubr.bf16.mxu0 0
    %5830 = vmatmul.mubr.bf16.gmra.mxu0 %v5736
    %v5831 = vpop.f32.mrf.mxu0
    %v5832 = vadd.f32 0.0, %v5831
    %v5833 = vpop.f32.mrf.mxu0
    %v5834 = vpop.f32.mrf.mxu0
    %v5835 = vadd.f32 0.0, %v5834
    %v5836 = vpop.f32.mrf.mxu0
    %5837 = vdwg.mxu0
    %v5838 = vpack.c.bf16 %v5779, %v5776
    %v5839 = vpack.c.bf16 %v5787, %v5784
    %v5840 = vpack.c.bf16 %v5795, %v5792
    %v5841 = vpack.c.bf16 %v5803, %v5800
    %v5842 = vpack.c.bf16 %v5811, %v5808
    %v5843 = vpack.c.bf16 %v5819, %v5816
    %v5844 = vpack.c.bf16 %v5827, %v5824
    %v5845 = vpack.c.bf16 %v5835, %v5832
    %s5846 = scalar_lea.vmem %s43, 4
    %v5847 = vld [vmem:[%s5846] sm:$0xf]
    %v5849 = vsel %vm4409, %v5847, 0
    %5851 = vmatprep.subr.bf16.mxu0 0
    %5852 = vmatpush1.bf16.msra.mxu0 0
    %5853 = vmatprep.subr.bf16.mxu0 0
    %5854 = vmatpush1.bf16.msra.mxu0 0
    %5855 = vmatprep.subr.bf16.mxu0 0
    %5856 = vmatpush1.bf16.msra.mxu0 0
    %5857 = vmatprep.subr.bf16.mxu0 0
    %5858 = vmatpush1.bf16.msra.mxu0 0
    %5859 = vmatprep.subr.bf16.mxu0 0
    %5860 = vmatpush1.bf16.msra.mxu0 0
    %5861 = vmatprep.subr.bf16.mxu0 0
    %5862 = vmatpush1.bf16.msra.mxu0 0
    %5863 = vmatprep.subr.bf16.mxu0 0
    %5864 = vmatpush1.bf16.msra.mxu0 0
    %5865 = vmatprep.subr.bf16.mxu0 0
    %5866 = vmatpush1.bf16.msra.mxu0 %v5849
    %5867 = vmatprep.subr.bf16.mxu0 0
    %5868 = vmatpush2.bf16.msra.mxu0 0
    %5869 = vmatprep.subr.bf16.mxu0 0
    %5870 = vmatpush2.bf16.msra.mxu0 0
    %5871 = vmatprep.subr.bf16.mxu0 0
    %5872 = vmatpush2.bf16.msra.mxu0 0
    %5873 = vmatprep.subr.bf16.mxu0 0
    %5874 = vmatpush2.bf16.msra.mxu0 0
    %5875 = vmatprep.subr.bf16.mxu0 0
    %5876 = vmatpush2.bf16.msra.mxu0 0
    %5877 = vmatprep.subr.bf16.mxu0 0
    %5878 = vmatpush2.bf16.msra.mxu0 0
    %5879 = vmatprep.subr.bf16.mxu0 0
    %5880 = vmatpush2.bf16.msra.mxu0 0
    %5881 = vmatprep.subr.bf16.mxu0 0
    %5882 = vmatpush2.bf16.msra.mxu0 0
    %5883 = vmatprep.mubr.bf16.mxu0 0
    %5884 = vmatmul.mubr.bf16.gmra.mxu0 %v5715
    %v5885 = vpop.f32.mrf.mxu0
    %v5886 = vadd.f32 0.0, %v5885
    %v5887 = vpop.f32.mrf.mxu0
    %v5888 = vpop.f32.mrf.mxu0
    %v5889 = vadd.f32 0.0, %v5888
    %v5890 = vpop.f32.mrf.mxu0
    %5891 = vmatprep.mubr.bf16.mxu0 0
    %5892 = vmatmul.mubr.bf16.gmra.mxu0 %v5718
    %v5893 = vpop.f32.mrf.mxu0
    %v5894 = vadd.f32 0.0, %v5893
    %v5895 = vpop.f32.mrf.mxu0
    %v5896 = vpop.f32.mrf.mxu0
    %v5897 = vadd.f32 0.0, %v5896
    %v5898 = vpop.f32.mrf.mxu0
    %5899 = vmatprep.mubr.bf16.mxu0 0
    %5900 = vmatmul.mubr.bf16.gmra.mxu0 %v5721
    %v5901 = vpop.f32.mrf.mxu0
    %v5902 = vadd.f32 0.0, %v5901
    %v5903 = vpop.f32.mrf.mxu0
    %v5904 = vpop.f32.mrf.mxu0
    %v5905 = vadd.f32 0.0, %v5904
    %v5906 = vpop.f32.mrf.mxu0
    %5907 = vmatprep.mubr.bf16.mxu0 0
    %5908 = vmatmul.mubr.bf16.gmra.mxu0 %v5724
    %v5909 = vpop.f32.mrf.mxu0
    %v5910 = vadd.f32 0.0, %v5909
    %v5911 = vpop.f32.mrf.mxu0
    %v5912 = vpop.f32.mrf.mxu0
    %v5913 = vadd.f32 0.0, %v5912
    %v5914 = vpop.f32.mrf.mxu0
    %5915 = vmatprep.mubr.bf16.mxu0 0
    %5916 = vmatmul.mubr.bf16.gmra.mxu0 %v5727
    %v5917 = vpop.f32.mrf.mxu0
    %v5918 = vadd.f32 0.0, %v5917
    %v5919 = vpop.f32.mrf.mxu0
    %v5920 = vpop.f32.mrf.mxu0
    %v5921 = vadd.f32 0.0, %v5920
    %v5922 = vpop.f32.mrf.mxu0
    %5923 = vmatprep.mubr.bf16.mxu0 0
    %5924 = vmatmul.mubr.bf16.gmra.mxu0 %v5730
    %v5925 = vpop.f32.mrf.mxu0
    %v5926 = vadd.f32 0.0, %v5925
    %v5927 = vpop.f32.mrf.mxu0
    %v5928 = vpop.f32.mrf.mxu0
    %v5929 = vadd.f32 0.0, %v5928
    %v5930 = vpop.f32.mrf.mxu0
    %5931 = vmatprep.mubr.bf16.mxu0 0
    %5932 = vmatmul.mubr.bf16.gmra.mxu0 %v5733
    %v5933 = vpop.f32.mrf.mxu0
    %v5934 = vadd.f32 0.0, %v5933
    %v5935 = vpop.f32.mrf.mxu0
    %v5936 = vpop.f32.mrf.mxu0
    %v5937 = vadd.f32 0.0, %v5936
    %v5938 = vpop.f32.mrf.mxu0
    %5939 = vmatprep.mubr.bf16.mxu0 0
    %5940 = vmatmul.mubr.bf16.gmra.mxu0 %v5736
    %v5941 = vpop.f32.mrf.mxu0
    %v5942 = vadd.f32 0.0, %v5941
    %v5943 = vpop.f32.mrf.mxu0
    %v5944 = vpop.f32.mrf.mxu0
    %v5945 = vadd.f32 0.0, %v5944
    %v5946 = vpop.f32.mrf.mxu0
    %5947 = vdwg.mxu0
    %v5948 = vpack.c.bf16 %v5889, %v5886
    %v5949 = vpack.c.bf16 %v5897, %v5894
    %v5950 = vpack.c.bf16 %v5905, %v5902
    %v5951 = vpack.c.bf16 %v5913, %v5910
    %v5952 = vpack.c.bf16 %v5921, %v5918
    %v5953 = vpack.c.bf16 %v5929, %v5926
    %v5954 = vpack.c.bf16 %v5937, %v5934
    %v5955 = vpack.c.bf16 %v5945, %v5942
    %s5956 = scalar_lea.vmem %s43, 8
    %v5957 = vld [vmem:[%s5956] sm:$0xf]
    %v5959 = vsel %vm4409, %v5957, 0
    %5961 = vmatprep.subr.bf16.mxu0 0
    %5962 = vmatpush1.bf16.msra.mxu0 0
    %5963 = vmatprep.subr.bf16.mxu0 0
    %5964 = vmatpush1.bf16.msra.mxu0 0
    %5965 = vmatprep.subr.bf16.mxu0 0
    %5966 = vmatpush1.bf16.msra.mxu0 0
    %5967 = vmatprep.subr.bf16.mxu0 0
    %5968 = vmatpush1.bf16.msra.mxu0 0
    %5969 = vmatprep.subr.bf16.mxu0 0
    %5970 = vmatpush1.bf16.msra.mxu0 0
    %5971 = vmatprep.subr.bf16.mxu0 0
    %5972 = vmatpush1.bf16.msra.mxu0 0
    %5973 = vmatprep.subr.bf16.mxu0 0
    %5974 = vmatpush1.bf16.msra.mxu0 0
    %5975 = vmatprep.subr.bf16.mxu0 0
    %5976 = vmatpush1.bf16.msra.mxu0 %v5959
    %5977 = vmatprep.subr.bf16.mxu0 0
    %5978 = vmatpush2.bf16.msra.mxu0 0
    %5979 = vmatprep.subr.bf16.mxu0 0
    %5980 = vmatpush2.bf16.msra.mxu0 0
    %5981 = vmatprep.subr.bf16.mxu0 0
    %5982 = vmatpush2.bf16.msra.mxu0 0
    %5983 = vmatprep.subr.bf16.mxu0 0
    %5984 = vmatpush2.bf16.msra.mxu0 0
    %5985 = vmatprep.subr.bf16.mxu0 0
    %5986 = vmatpush2.bf16.msra.mxu0 0
    %5987 = vmatprep.subr.bf16.mxu0 0
    %5988 = vmatpush2.bf16.msra.mxu0 0
    %5989 = vmatprep.subr.bf16.mxu0 0
    %5990 = vmatpush2.bf16.msra.mxu0 0
    %5991 = vmatprep.subr.bf16.mxu0 0
    %5992 = vmatpush2.bf16.msra.mxu0 0
    %5993 = vmatprep.mubr.bf16.mxu0 0
    %5994 = vmatmul.mubr.bf16.gmra.mxu0 %v5715
    %v5995 = vpop.f32.mrf.mxu0
    %v5996 = vadd.f32 0.0, %v5995
    %v5997 = vpop.f32.mrf.mxu0
    %v5998 = vpop.f32.mrf.mxu0
    %v5999 = vadd.f32 0.0, %v5998
    %v6000 = vpop.f32.mrf.mxu0
    %6001 = vmatprep.mubr.bf16.mxu0 0
    %6002 = vmatmul.mubr.bf16.gmra.mxu0 %v5718
    %v6003 = vpop.f32.mrf.mxu0
    %v6004 = vadd.f32 0.0, %v6003
    %v6005 = vpop.f32.mrf.mxu0
    %v6006 = vpop.f32.mrf.mxu0
    %v6007 = vadd.f32 0.0, %v6006
    %v6008 = vpop.f32.mrf.mxu0
    %6009 = vmatprep.mubr.bf16.mxu0 0
    %6010 = vmatmul.mubr.bf16.gmra.mxu0 %v5721
    %v6011 = vpop.f32.mrf.mxu0
    %v6012 = vadd.f32 0.0, %v6011
    %v6013 = vpop.f32.mrf.mxu0
    %v6014 = vpop.f32.mrf.mxu0
    %v6015 = vadd.f32 0.0, %v6014
    %v6016 = vpop.f32.mrf.mxu0
    %6017 = vmatprep.mubr.bf16.mxu0 0
    %6018 = vmatmul.mubr.bf16.gmra.mxu0 %v5724
    %v6019 = vpop.f32.mrf.mxu0
    %v6020 = vadd.f32 0.0, %v6019
    %v6021 = vpop.f32.mrf.mxu0
    %v6022 = vpop.f32.mrf.mxu0
    %v6023 = vadd.f32 0.0, %v6022
    %v6024 = vpop.f32.mrf.mxu0
    %6025 = vmatprep.mubr.bf16.mxu0 0
    %6026 = vmatmul.mubr.bf16.gmra.mxu0 %v5727
    %v6027 = vpop.f32.mrf.mxu0
    %v6028 = vadd.f32 0.0, %v6027
    %v6029 = vpop.f32.mrf.mxu0
    %v6030 = vpop.f32.mrf.mxu0
    %v6031 = vadd.f32 0.0, %v6030
    %v6032 = vpop.f32.mrf.mxu0
    %6033 = vmatprep.mubr.bf16.mxu0 0
    %6034 = vmatmul.mubr.bf16.gmra.mxu0 %v5730
    %v6035 = vpop.f32.mrf.mxu0
    %v6036 = vadd.f32 0.0, %v6035
    %v6037 = vpop.f32.mrf.mxu0
    %v6038 = vpop.f32.mrf.mxu0
    %v6039 = vadd.f32 0.0, %v6038
    %v6040 = vpop.f32.mrf.mxu0
    %6041 = vmatprep.mubr.bf16.mxu0 0
    %6042 = vmatmul.mubr.bf16.gmra.mxu0 %v5733
    %v6043 = vpop.f32.mrf.mxu0
    %v6044 = vadd.f32 0.0, %v6043
    %v6045 = vpop.f32.mrf.mxu0
    %v6046 = vpop.f32.mrf.mxu0
    %v6047 = vadd.f32 0.0, %v6046
    %v6048 = vpop.f32.mrf.mxu0
    %6049 = vmatprep.mubr.bf16.mxu0 0
    %6050 = vmatmul.mubr.bf16.gmra.mxu0 %v5736
    %v6051 = vpop.f32.mrf.mxu0
    %v6052 = vadd.f32 0.0, %v6051
    %v6053 = vpop.f32.mrf.mxu0
    %v6054 = vpop.f32.mrf.mxu0
    %v6055 = vadd.f32 0.0, %v6054
    %v6056 = vpop.f32.mrf.mxu0
    %6057 = vdwg.mxu0
    %v6058 = vpack.c.bf16 %v5999, %v5996
    %v6059 = vpack.c.bf16 %v6007, %v6004
    %v6060 = vpack.c.bf16 %v6015, %v6012
    %v6061 = vpack.c.bf16 %v6023, %v6020
    %v6062 = vpack.c.bf16 %v6031, %v6028
    %v6063 = vpack.c.bf16 %v6039, %v6036
    %v6064 = vpack.c.bf16 %v6047, %v6044
    %v6065 = vpack.c.bf16 %v6055, %v6052
    %s6066 = scalar_lea.vmem %s43, 12
    %v6067 = vld [vmem:[%s6066] sm:$0xf]
    %v6069 = vsel %vm4409, %v6067, 0
    %6071 = vmatprep.subr.bf16.mxu0 0
    %6072 = vmatpush1.bf16.msra.mxu0 0
    %6073 = vmatprep.subr.bf16.mxu0 0
    %6074 = vmatpush1.bf16.msra.mxu0 0
    %6075 = vmatprep.subr.bf16.mxu0 0
    %6076 = vmatpush1.bf16.msra.mxu0 0
    %6077 = vmatprep.subr.bf16.mxu0 0
    %6078 = vmatpush1.bf16.msra.mxu0 0
    %6079 = vmatprep.subr.bf16.mxu0 0
    %6080 = vmatpush1.bf16.msra.mxu0 0
    %6081 = vmatprep.subr.bf16.mxu0 0
    %6082 = vmatpush1.bf16.msra.mxu0 0
    %6083 = vmatprep.subr.bf16.mxu0 0
    %6084 = vmatpush1.bf16.msra.mxu0 0
    %6085 = vmatprep.subr.bf16.mxu0 0
    %6086 = vmatpush1.bf16.msra.mxu0 %v6069
    %6087 = vmatprep.subr.bf16.mxu0 0
    %6088 = vmatpush2.bf16.msra.mxu0 0
    %6089 = vmatprep.subr.bf16.mxu0 0
    %6090 = vmatpush2.bf16.msra.mxu0 0
    %6091 = vmatprep.subr.bf16.mxu0 0
    %6092 = vmatpush2.bf16.msra.mxu0 0
    %6093 = vmatprep.subr.bf16.mxu0 0
    %6094 = vmatpush2.bf16.msra.mxu0 0
    %6095 = vmatprep.subr.bf16.mxu0 0
    %6096 = vmatpush2.bf16.msra.mxu0 0
    %6097 = vmatprep.subr.bf16.mxu0 0
    %6098 = vmatpush2.bf16.msra.mxu0 0
    %6099 = vmatprep.subr.bf16.mxu0 0
    %6100 = vmatpush2.bf16.msra.mxu0 0
    %6101 = vmatprep.subr.bf16.mxu0 0
    %6102 = vmatpush2.bf16.msra.mxu0 0
    %6103 = vmatprep.mubr.bf16.mxu0 0
    %6104 = vmatmul.mubr.bf16.gmra.mxu0 %v5715
    %v6105 = vpop.f32.mrf.mxu0
    %v6106 = vadd.f32 0.0, %v6105
    %v6107 = vpop.f32.mrf.mxu0
    %v6108 = vpop.f32.mrf.mxu0
    %v6109 = vadd.f32 0.0, %v6108
    %v6110 = vpop.f32.mrf.mxu0
    %6111 = vmatprep.mubr.bf16.mxu0 0
    %6112 = vmatmul.mubr.bf16.gmra.mxu0 %v5718
    %v6113 = vpop.f32.mrf.mxu0
    %v6114 = vadd.f32 0.0, %v6113
    %v6115 = vpop.f32.mrf.mxu0
    %v6116 = vpop.f32.mrf.mxu0
    %v6117 = vadd.f32 0.0, %v6116
    %v6118 = vpop.f32.mrf.mxu0
    %6119 = vmatprep.mubr.bf16.mxu0 0
    %6120 = vmatmul.mubr.bf16.gmra.mxu0 %v5721
    %v6121 = vpop.f32.mrf.mxu0
    %v6122 = vadd.f32 0.0, %v6121
    %v6123 = vpop.f32.mrf.mxu0
    %v6124 = vpop.f32.mrf.mxu0
    %v6125 = vadd.f32 0.0, %v6124
    %v6126 = vpop.f32.mrf.mxu0
    %6127 = vmatprep.mubr.bf16.mxu0 0
    %6128 = vmatmul.mubr.bf16.gmra.mxu0 %v5724
    %v6129 = vpop.f32.mrf.mxu0
    %v6130 = vadd.f32 0.0, %v6129
    %v6131 = vpop.f32.mrf.mxu0
    %v6132 = vpop.f32.mrf.mxu0
    %v6133 = vadd.f32 0.0, %v6132
    %v6134 = vpop.f32.mrf.mxu0
    %6135 = vmatprep.mubr.bf16.mxu0 0
    %6136 = vmatmul.mubr.bf16.gmra.mxu0 %v5727
    %v6137 = vpop.f32.mrf.mxu0
    %v6138 = vadd.f32 0.0, %v6137
    %v6139 = vpop.f32.mrf.mxu0
    %v6140 = vpop.f32.mrf.mxu0
    %v6141 = vadd.f32 0.0, %v6140
    %v6142 = vpop.f32.mrf.mxu0
    %6143 = vmatprep.mubr.bf16.mxu0 0
    %6144 = vmatmul.mubr.bf16.gmra.mxu0 %v5730
    %v6145 = vpop.f32.mrf.mxu0
    %v6146 = vadd.f32 0.0, %v6145
    %v6147 = vpop.f32.mrf.mxu0
    %v6148 = vpop.f32.mrf.mxu0
    %v6149 = vadd.f32 0.0, %v6148
    %v6150 = vpop.f32.mrf.mxu0
    %6151 = vmatprep.mubr.bf16.mxu0 0
    %6152 = vmatmul.mubr.bf16.gmra.mxu0 %v5733
    %v6153 = vpop.f32.mrf.mxu0
    %v6154 = vadd.f32 0.0, %v6153
    %v6155 = vpop.f32.mrf.mxu0
    %v6156 = vpop.f32.mrf.mxu0
    %v6157 = vadd.f32 0.0, %v6156
    %v6158 = vpop.f32.mrf.mxu0
    %6159 = vmatprep.mubr.bf16.mxu0 0
    %6160 = vmatmul.mubr.bf16.gmra.mxu0 %v5736
    %v6161 = vpop.f32.mrf.mxu0
    %v6162 = vadd.f32 0.0, %v6161
    %v6163 = vpop.f32.mrf.mxu0
    %v6164 = vpop.f32.mrf.mxu0
    %v6165 = vadd.f32 0.0, %v6164
    %v6166 = vpop.f32.mrf.mxu0
    %6167 = vdwg.mxu0
    %v6168 = vpack.c.bf16 %v6109, %v6106
    %v6169 = vpack.c.bf16 %v6117, %v6114
    %v6170 = vpack.c.bf16 %v6125, %v6122
    %v6171 = vpack.c.bf16 %v6133, %v6130
    %v6172 = vpack.c.bf16 %v6141, %v6138
    %v6173 = vpack.c.bf16 %v6149, %v6146
    %v6174 = vpack.c.bf16 %v6157, %v6154
    %v6175 = vpack.c.bf16 %v6165, %v6162
    %v6176 = vld [vmem:[%s41] sm:$0xff]
    %v6177 = vld [vmem:[%s41 + $0x8] sm:$0xff]
    %v6178 = vld [vmem:[%s41 + $0x10] sm:$0xff]
    %v6179 = vld [vmem:[%s41 + $0x18] sm:$0xff]
    %v6180 = vld [vmem:[%s41 + $0x20] sm:$0xff]
    %v6181 = vld [vmem:[%s41 + $0x28] sm:$0xff]
    %v6182 = vld [vmem:[%s41 + $0x30] sm:$0xff]
    %v6183 = vld [vmem:[%s41 + $0x38] sm:$0xff]
    %v6184 = vld [vmem:[%s41 + $0x40] sm:$0xff]
    %v6185 = vld [vmem:[%s41 + $0x48] sm:$0xff]
    %v6186 = vld [vmem:[%s41 + $0x50] sm:$0xff]
    %v6187 = vld [vmem:[%s41 + $0x58] sm:$0xff]
    %v6188 = vld [vmem:[%s41 + $0x60] sm:$0xff]
    %v6189 = vld [vmem:[%s41 + $0x68] sm:$0xff]
    %v6190 = vld [vmem:[%s41 + $0x70] sm:$0xff]
    %v6191 = vld [vmem:[%s41 + $0x78] sm:$0xff]
    %v6192 = vld [vmem:[%s41 + $0x80] sm:$0xff]
    %v6193 = vld [vmem:[%s41 + $0x88] sm:$0xff]
    %v6194 = vld [vmem:[%s41 + $0x90] sm:$0xff]
    %v6195 = vld [vmem:[%s41 + $0x98] sm:$0xff]
    %v6196 = vld [vmem:[%s41 + $0xa0] sm:$0xff]
    %v6197 = vld [vmem:[%s41 + $0xa8] sm:$0xff]
    %v6198 = vld [vmem:[%s41 + $0xb0] sm:$0xff]
    %v6199 = vld [vmem:[%s41 + $0xb8] sm:$0xff]
    %v6200 = vld [vmem:[%s41 + $0xc0] sm:$0xff]
    %v6201 = vld [vmem:[%s41 + $0xc8] sm:$0xff]
    %v6202 = vld [vmem:[%s41 + $0xd0] sm:$0xff]
    %v6203 = vld [vmem:[%s41 + $0xd8] sm:$0xff]
    %v6204 = vld [vmem:[%s41 + $0xe0] sm:$0xff]
    %v6205 = vld [vmem:[%s41 + $0xe8] sm:$0xff]
    %v6206 = vld [vmem:[%s41 + $0xf0] sm:$0xff]
    %v6207 = vld [vmem:[%s41 + $0xf8] sm:$0xff]
    %v6240 = vunpack.c.l.b16 %v6176
    %v6241 = vunpack.c.h.b16 %v6176
    %v6242 = vunpack.c.l.b16 %v6177
    %v6243 = vunpack.c.h.b16 %v6177
    %v6244 = vunpack.c.l.b16 %v6178
    %v6245 = vunpack.c.h.b16 %v6178
    %v6246 = vunpack.c.l.b16 %v6179
    %v6247 = vunpack.c.h.b16 %v6179
    %v6248 = vunpack.c.l.b16 %v6180
    %v6249 = vunpack.c.h.b16 %v6180
    %v6250 = vunpack.c.l.b16 %v6181
    %v6251 = vunpack.c.h.b16 %v6181
    %v6252 = vunpack.c.l.b16 %v6182
    %v6253 = vunpack.c.h.b16 %v6182
    %v6254 = vunpack.c.l.b16 %v6183
    %v6255 = vunpack.c.h.b16 %v6183
    %v6256 = vunpack.c.l.b16 %v6184
    %v6257 = vunpack.c.h.b16 %v6184
    %v6258 = vunpack.c.l.b16 %v6185
    %v6259 = vunpack.c.h.b16 %v6185
    %v6260 = vunpack.c.l.b16 %v6186
    %v6261 = vunpack.c.h.b16 %v6186
    %v6262 = vunpack.c.l.b16 %v6187
    %v6263 = vunpack.c.h.b16 %v6187
    %v6264 = vunpack.c.l.b16 %v6188
    %v6265 = vunpack.c.h.b16 %v6188
    %v6266 = vunpack.c.l.b16 %v6189
    %v6267 = vunpack.c.h.b16 %v6189
    %v6268 = vunpack.c.l.b16 %v6190
    %v6269 = vunpack.c.h.b16 %v6190
    %v6270 = vunpack.c.l.b16 %v6191
    %v6271 = vunpack.c.h.b16 %v6191
    %v6272 = vunpack.c.l.b16 %v6192
    %v6273 = vunpack.c.h.b16 %v6192
    %v6274 = vunpack.c.l.b16 %v6193
    %v6275 = vunpack.c.h.b16 %v6193
    %v6276 = vunpack.c.l.b16 %v6194
    %v6277 = vunpack.c.h.b16 %v6194
    %v6278 = vunpack.c.l.b16 %v6195
    %v6279 = vunpack.c.h.b16 %v6195
    %v6280 = vunpack.c.l.b16 %v6196
    %v6281 = vunpack.c.h.b16 %v6196
    %v6282 = vunpack.c.l.b16 %v6197
    %v6283 = vunpack.c.h.b16 %v6197
    %v6284 = vunpack.c.l.b16 %v6198
    %v6285 = vunpack.c.h.b16 %v6198
    %v6286 = vunpack.c.l.b16 %v6199
    %v6287 = vunpack.c.h.b16 %v6199
    %v6288 = vunpack.c.l.b16 %v6200
    %v6289 = vunpack.c.h.b16 %v6200
    %v6290 = vunpack.c.l.b16 %v6201
    %v6291 = vunpack.c.h.b16 %v6201
    %v6292 = vunpack.c.l.b16 %v6202
    %v6293 = vunpack.c.h.b16 %v6202
    %v6294 = vunpack.c.l.b16 %v6203
    %v6295 = vunpack.c.h.b16 %v6203
    %v6296 = vunpack.c.l.b16 %v6204
    %v6297 = vunpack.c.h.b16 %v6204
    %v6298 = vunpack.c.l.b16 %v6205
    %v6299 = vunpack.c.h.b16 %v6205
    %v6300 = vunpack.c.l.b16 %v6206
    %v6301 = vunpack.c.h.b16 %v6206
    %v6302 = vunpack.c.l.b16 %v6207
    %v6303 = vunpack.c.h.b16 %v6207
    %v6304 = vpack.c.b16 %v6244, %v6240
    %v6305 = vpack.c.b16 %v6245, %v6241
    %v6306 = vpack.c.b16 %v6246, %v6242
    %v6307 = vpack.c.b16 %v6247, %v6243
    %v6308 = vpack.c.b16 %v6252, %v6248
    %v6309 = vpack.c.b16 %v6253, %v6249
    %v6310 = vpack.c.b16 %v6254, %v6250
    %v6311 = vpack.c.b16 %v6255, %v6251
    %v6312 = vpack.c.b16 %v6260, %v6256
    %v6313 = vpack.c.b16 %v6261, %v6257
    %v6314 = vpack.c.b16 %v6262, %v6258
    %v6315 = vpack.c.b16 %v6263, %v6259
    %v6316 = vpack.c.b16 %v6268, %v6264
    %v6317 = vpack.c.b16 %v6269, %v6265
    %v6318 = vpack.c.b16 %v6270, %v6266
    %v6319 = vpack.c.b16 %v6271, %v6267
    %v6320 = vpack.c.b16 %v6276, %v6272
    %v6321 = vpack.c.b16 %v6277, %v6273
    %v6322 = vpack.c.b16 %v6278, %v6274
    %v6323 = vpack.c.b16 %v6279, %v6275
    %v6324 = vpack.c.b16 %v6284, %v6280
    %v6325 = vpack.c.b16 %v6285, %v6281
    %v6326 = vpack.c.b16 %v6286, %v6282
    %v6327 = vpack.c.b16 %v6287, %v6283
    %v6328 = vpack.c.b16 %v6292, %v6288
    %v6329 = vpack.c.b16 %v6293, %v6289
    %v6330 = vpack.c.b16 %v6294, %v6290
    %v6331 = vpack.c.b16 %v6295, %v6291
    %v6332 = vpack.c.b16 %v6300, %v6296
    %v6333 = vpack.c.b16 %v6301, %v6297
    %v6334 = vpack.c.b16 %v6302, %v6298
    %v6335 = vpack.c.b16 %v6303, %v6299
    %6368 = vmatprep.subr.bf16.mxu0 0
    %6369 = vmatpush1.bf16.msra.mxu0 %v5845
    %6370 = vmatprep.subr.bf16.mxu0 0
    %6371 = vmatpush1.bf16.msra.mxu0 %v5844
    %6372 = vmatprep.subr.bf16.mxu0 0
    %6373 = vmatpush1.bf16.msra.mxu0 %v5843
    %6374 = vmatprep.subr.bf16.mxu0 0
    %6375 = vmatpush1.bf16.msra.mxu0 %v5842
    %6376 = vmatprep.subr.bf16.mxu0 0
    %6377 = vmatpush1.bf16.msra.mxu0 %v5841
    %6378 = vmatprep.subr.bf16.mxu0 0
    %6379 = vmatpush1.bf16.msra.mxu0 %v5840
    %6380 = vmatprep.subr.bf16.mxu0 0
    %6381 = vmatpush1.bf16.msra.mxu0 %v5839
    %6382 = vmatprep.subr.bf16.mxu0 0
    %6383 = vmatpush1.bf16.msra.mxu0 %v5838
    %6384 = vmatprep.subr.bf16.mxu0 0
    %6385 = vmatpush2.bf16.msra.mxu0 %v5955
    %6386 = vmatprep.subr.bf16.mxu0 0
    %6387 = vmatpush2.bf16.msra.mxu0 %v5954
    %6388 = vmatprep.subr.bf16.mxu0 0
    %6389 = vmatpush2.bf16.msra.mxu0 %v5953
    %6390 = vmatprep.subr.bf16.mxu0 0
    %6391 = vmatpush2.bf16.msra.mxu0 %v5952
    %6392 = vmatprep.subr.bf16.mxu0 0
    %6393 = vmatpush2.bf16.msra.mxu0 %v5951
    %6394 = vmatprep.subr.bf16.mxu0 0
    %6395 = vmatpush2.bf16.msra.mxu0 %v5950
    %6396 = vmatprep.subr.bf16.mxu0 0
    %6397 = vmatpush2.bf16.msra.mxu0 %v5949
    %6398 = vmatprep.subr.bf16.mxu0 0
    %6399 = vmatpush2.bf16.msra.mxu0 %v5948
    %6400 = vmatprep.mubr.bf16.mxu0 %v6305
    %6401 = vmatmul.mubr.bf16.gmra.mxu0 %v6304
    %v6402 = vpop.f32.mrf.mxu0
    %v6403 = vadd.f32 0.0, %v6402
    %v6404 = vpop.f32.mrf.mxu0
    %v6405 = vpop.f32.mrf.mxu0
    %v6406 = vadd.f32 0.0, %v6405
    %v6407 = vpop.f32.mrf.mxu0
    %6408 = vmatprep.mubr.bf16.mxu0 %v6309
    %6409 = vmatmul.mubr.bf16.gmra.mxu0 %v6308
    %v6410 = vpop.f32.mrf.mxu0
    %v6411 = vadd.f32 0.0, %v6410
    %v6412 = vpop.f32.mrf.mxu0
    %v6413 = vpop.f32.mrf.mxu0
    %v6414 = vadd.f32 0.0, %v6413
    %v6415 = vpop.f32.mrf.mxu0
    %6416 = vmatprep.mubr.bf16.mxu0 %v6313
    %6417 = vmatmul.mubr.bf16.gmra.mxu0 %v6312
    %v6418 = vpop.f32.mrf.mxu0
    %v6419 = vadd.f32 0.0, %v6418
    %v6420 = vpop.f32.mrf.mxu0
    %v6421 = vpop.f32.mrf.mxu0
    %v6422 = vadd.f32 0.0, %v6421
    %v6423 = vpop.f32.mrf.mxu0
    %6424 = vmatprep.mubr.bf16.mxu0 %v6317
    %6425 = vmatmul.mubr.bf16.gmra.mxu0 %v6316
    %v6426 = vpop.f32.mrf.mxu0
    %v6427 = vadd.f32 0.0, %v6426
    %v6428 = vpop.f32.mrf.mxu0
    %v6429 = vpop.f32.mrf.mxu0
    %v6430 = vadd.f32 0.0, %v6429
    %v6431 = vpop.f32.mrf.mxu0
    %6432 = vmatprep.mubr.bf16.mxu0 %v6321
    %6433 = vmatmul.mubr.bf16.gmra.mxu0 %v6320
    %v6434 = vpop.f32.mrf.mxu0
    %v6435 = vadd.f32 0.0, %v6434
    %v6436 = vpop.f32.mrf.mxu0
    %v6437 = vpop.f32.mrf.mxu0
    %v6438 = vadd.f32 0.0, %v6437
    %v6439 = vpop.f32.mrf.mxu0
    %6440 = vmatprep.mubr.bf16.mxu0 %v6325
    %6441 = vmatmul.mubr.bf16.gmra.mxu0 %v6324
    %v6442 = vpop.f32.mrf.mxu0
    %v6443 = vadd.f32 0.0, %v6442
    %v6444 = vpop.f32.mrf.mxu0
    %v6445 = vpop.f32.mrf.mxu0
    %v6446 = vadd.f32 0.0, %v6445
    %v6447 = vpop.f32.mrf.mxu0
    %6448 = vmatprep.mubr.bf16.mxu0 %v6329
    %6449 = vmatmul.mubr.bf16.gmra.mxu0 %v6328
    %v6450 = vpop.f32.mrf.mxu0
    %v6451 = vadd.f32 0.0, %v6450
    %v6452 = vpop.f32.mrf.mxu0
    %v6453 = vpop.f32.mrf.mxu0
    %v6454 = vadd.f32 0.0, %v6453
    %v6455 = vpop.f32.mrf.mxu0
    %6456 = vmatprep.mubr.bf16.mxu0 %v6333
    %6457 = vmatmul.mubr.bf16.gmra.mxu0 %v6332
    %v6458 = vpop.f32.mrf.mxu0
    %v6459 = vadd.f32 0.0, %v6458
    %v6460 = vpop.f32.mrf.mxu0
    %v6461 = vpop.f32.mrf.mxu0
    %v6462 = vadd.f32 0.0, %v6461
    %v6463 = vpop.f32.mrf.mxu0
    %6464 = vdwg.mxu0
    %6465 = vmatprep.subr.bf16.mxu0 0
    %6466 = vmatpush1.bf16.msra.mxu0 %v6065
    %6467 = vmatprep.subr.bf16.mxu0 0
    %6468 = vmatpush1.bf16.msra.mxu0 %v6064
    %6469 = vmatprep.subr.bf16.mxu0 0
    %6470 = vmatpush1.bf16.msra.mxu0 %v6063
    %6471 = vmatprep.subr.bf16.mxu0 0
    %6472 = vmatpush1.bf16.msra.mxu0 %v6062
    %6473 = vmatprep.subr.bf16.mxu0 0
    %6474 = vmatpush1.bf16.msra.mxu0 %v6061
    %6475 = vmatprep.subr.bf16.mxu0 0
    %6476 = vmatpush1.bf16.msra.mxu0 %v6060
    %6477 = vmatprep.subr.bf16.mxu0 0
    %6478 = vmatpush1.bf16.msra.mxu0 %v6059
    %6479 = vmatprep.subr.bf16.mxu0 0
    %6480 = vmatpush1.bf16.msra.mxu0 %v6058
    %6481 = vmatprep.subr.bf16.mxu0 0
    %6482 = vmatpush2.bf16.msra.mxu0 %v6175
    %6483 = vmatprep.subr.bf16.mxu0 0
    %6484 = vmatpush2.bf16.msra.mxu0 %v6174
    %6485 = vmatprep.subr.bf16.mxu0 0
    %6486 = vmatpush2.bf16.msra.mxu0 %v6173
    %6487 = vmatprep.subr.bf16.mxu0 0
    %6488 = vmatpush2.bf16.msra.mxu0 %v6172
    %6489 = vmatprep.subr.bf16.mxu0 0
    %6490 = vmatpush2.bf16.msra.mxu0 %v6171
    %6491 = vmatprep.subr.bf16.mxu0 0
    %6492 = vmatpush2.bf16.msra.mxu0 %v6170
    %6493 = vmatprep.subr.bf16.mxu0 0
    %6494 = vmatpush2.bf16.msra.mxu0 %v6169
    %6495 = vmatprep.subr.bf16.mxu0 0
    %6496 = vmatpush2.bf16.msra.mxu0 %v6168
    %6497 = vmatprep.mubr.bf16.mxu0 %v6307
    %6498 = vmatmul.mubr.bf16.gmra.mxu0 %v6306
    %v6499 = vpop.f32.mrf.mxu0
    %v6500 = vadd.f32 %v6403, %v6499
    %v6501 = vpop.f32.mrf.mxu0
    %v6502 = vpop.f32.mrf.mxu0
    %v6503 = vadd.f32 %v6406, %v6502
    %v6504 = vpop.f32.mrf.mxu0
    %6505 = vmatprep.mubr.bf16.mxu0 %v6311
    %6506 = vmatmul.mubr.bf16.gmra.mxu0 %v6310
    %v6507 = vpop.f32.mrf.mxu0
    %v6508 = vadd.f32 %v6411, %v6507
    %v6509 = vpop.f32.mrf.mxu0
    %v6510 = vpop.f32.mrf.mxu0
    %v6511 = vadd.f32 %v6414, %v6510
    %v6512 = vpop.f32.mrf.mxu0
    %6513 = vmatprep.mubr.bf16.mxu0 %v6315
    %6514 = vmatmul.mubr.bf16.gmra.mxu0 %v6314
    %v6515 = vpop.f32.mrf.mxu0
    %v6516 = vadd.f32 %v6419, %v6515
    %v6517 = vpop.f32.mrf.mxu0
    %v6518 = vpop.f32.mrf.mxu0
    %v6519 = vadd.f32 %v6422, %v6518
    %v6520 = vpop.f32.mrf.mxu0
    %6521 = vmatprep.mubr.bf16.mxu0 %v6319
    %6522 = vmatmul.mubr.bf16.gmra.mxu0 %v6318
    %v6523 = vpop.f32.mrf.mxu0
    %v6524 = vadd.f32 %v6427, %v6523
    %v6525 = vpop.f32.mrf.mxu0
    %v6526 = vpop.f32.mrf.mxu0
    %v6527 = vadd.f32 %v6430, %v6526
    %v6528 = vpop.f32.mrf.mxu0
    %6529 = vmatprep.mubr.bf16.mxu0 %v6323
    %6530 = vmatmul.mubr.bf16.gmra.mxu0 %v6322
    %v6531 = vpop.f32.mrf.mxu0
    %v6532 = vadd.f32 %v6435, %v6531
    %v6533 = vpop.f32.mrf.mxu0
    %v6534 = vpop.f32.mrf.mxu0
    %v6535 = vadd.f32 %v6438, %v6534
    %v6536 = vpop.f32.mrf.mxu0
    %6537 = vmatprep.mubr.bf16.mxu0 %v6327
    %6538 = vmatmul.mubr.bf16.gmra.mxu0 %v6326
    %v6539 = vpop.f32.mrf.mxu0
    %v6540 = vadd.f32 %v6443, %v6539
    %v6541 = vpop.f32.mrf.mxu0
    %v6542 = vpop.f32.mrf.mxu0
    %v6543 = vadd.f32 %v6446, %v6542
    %v6544 = vpop.f32.mrf.mxu0
    %6545 = vmatprep.mubr.bf16.mxu0 %v6331
    %6546 = vmatmul.mubr.bf16.gmra.mxu0 %v6330
    %v6547 = vpop.f32.mrf.mxu0
    %v6548 = vadd.f32 %v6451, %v6547
    %v6549 = vpop.f32.mrf.mxu0
    %v6550 = vpop.f32.mrf.mxu0
    %v6551 = vadd.f32 %v6454, %v6550
    %v6552 = vpop.f32.mrf.mxu0
    %6553 = vmatprep.mubr.bf16.mxu0 %v6335
    %6554 = vmatmul.mubr.bf16.gmra.mxu0 %v6334
    %v6555 = vpop.f32.mrf.mxu0
    %v6556 = vadd.f32 %v6459, %v6555
    %v6557 = vpop.f32.mrf.mxu0
    %v6558 = vpop.f32.mrf.mxu0
    %v6559 = vadd.f32 %v6462, %v6558
    %v6560 = vpop.f32.mrf.mxu0
    %6561 = vdwg.mxu0
    %v6562 = vld [vmem:[%s49] sm:$0x3]
    %v6563 = vld [vmem:[%s53] sm:$0xf]
    %v6564 = vld [vmem:[%s53 + $0x4] sm:$0xf]
    %v6565 = vld [vmem:[%s53 + $0x8] sm:$0xf]
    %v6566 = vld [vmem:[%s53 + $0xc] sm:$0xf]
    %v6567 = vld [vmem:[%s53 + $0x10] sm:$0xf]
    %v6568 = vld [vmem:[%s53 + $0x14] sm:$0xf]
    %v6569 = vld [vmem:[%s53 + $0x18] sm:$0xf]
    %v6570 = vld [vmem:[%s53 + $0x1c] sm:$0xf]
    %vm6571 = vcmask 31744
    %v6573 = vsel %vm6571, %v6500, 0
    %v6576 = vsel %vm6571, %v6503, 0
    %v6579 = vsel %vm6571, %v6508, 0
    %v6582 = vsel %vm6571, %v6511, 0
    %v6585 = vsel %vm6571, %v6516, 0
    %v6588 = vsel %vm6571, %v6519, 0
    %v6591 = vsel %vm6571, %v6524, 0
    %v6594 = vsel %vm6571, %v6527, 0
    %v6597 = vsel %vm6571, %v6532, 0
    %v6600 = vsel %vm6571, %v6535, 0
    %v6603 = vsel %vm6571, %v6540, 0
    %v6606 = vsel %vm6571, %v6543, 0
    %v6609 = vsel %vm6571, %v6548, 0
    %v6612 = vsel %vm6571, %v6551, 0
    %v6615 = vsel %vm6571, %v6556, 0
    %v6618 = vsel %vm6571, %v6559, 0
    %vm6620 = vcmask 1041408
    %v6622 = vsel %vm6620, %v6562, 0
    %6624 = vmatprep.subr.bf16.mxu0 0
    %6625 = vmatpush1.bf16.msra.mxu0 0
    %6626 = vmatprep.subr.bf16.mxu0 0
    %6627 = vmatpush1.bf16.msra.mxu0 0
    %6628 = vmatprep.subr.bf16.mxu0 0
    %6629 = vmatpush1.bf16.msra.mxu0 0
    %6630 = vmatprep.subr.bf16.mxu0 0
    %6631 = vmatpush1.bf16.msra.mxu0 0
    %6632 = vmatprep.subr.bf16.mxu0 0
    %6633 = vmatpush1.bf16.msra.mxu0 0
    %6634 = vmatprep.subr.bf16.mxu0 0
    %6635 = vmatpush1.bf16.msra.mxu0 0
    %6636 = vmatprep.subr.bf16.mxu0 0
    %6637 = vmatpush1.bf16.msra.mxu0 0
    %6638 = vmatprep.subr.bf16.mxu0 0
    %6639 = vmatpush1.bf16.msra.mxu0 %v6622
    %6640 = vmatprep.subr.bf16.mxu0 0
    %6641 = vmatpush2.bf16.msra.mxu0 0
    %6642 = vmatprep.subr.bf16.mxu0 0
    %6643 = vmatpush2.bf16.msra.mxu0 0
    %6644 = vmatprep.subr.bf16.mxu0 0
    %6645 = vmatpush2.bf16.msra.mxu0 0
    %6646 = vmatprep.subr.bf16.mxu0 0
    %6647 = vmatpush2.bf16.msra.mxu0 0
    %6648 = vmatprep.subr.bf16.mxu0 0
    %6649 = vmatpush2.bf16.msra.mxu0 0
    %6650 = vmatprep.subr.bf16.mxu0 0
    %6651 = vmatpush2.bf16.msra.mxu0 0
    %6652 = vmatprep.subr.bf16.mxu0 0
    %6653 = vmatpush2.bf16.msra.mxu0 0
    %6654 = vmatprep.subr.bf16.mxu0 0
    %6655 = vmatpush2.bf16.msra.mxu0 0
    %6656 = vmatprep.mubr.f32.mxu0 0.0
    %6657 = vmatmul.mubr.f32.gmra.mxu0 %v6573
    %v6658 = vpop.f32.mrf.mxu0
    %v6659 = vadd.f32 0.0, %v6658
    %v6660 = vpop.f32.mrf.mxu0
    %6661 = vmatprep.mubr.f32.mxu0 0.0
    %6662 = vmatmul.mubr.f32.gmra.mxu0 %v6576
    %v6663 = vpop.f32.mrf.mxu0
    %v6664 = vadd.f32 0.0, %v6663
    %v6665 = vpop.f32.mrf.mxu0
    %6666 = vmatprep.mubr.f32.mxu0 0.0
    %6667 = vmatmul.mubr.f32.gmra.mxu0 %v6579
    %v6668 = vpop.f32.mrf.mxu0
    %v6669 = vadd.f32 0.0, %v6668
    %v6670 = vpop.f32.mrf.mxu0
    %6671 = vmatprep.mubr.f32.mxu0 0.0
    %6672 = vmatmul.mubr.f32.gmra.mxu0 %v6582
    %v6673 = vpop.f32.mrf.mxu0
    %v6674 = vadd.f32 0.0, %v6673
    %v6675 = vpop.f32.mrf.mxu0
    %6676 = vmatprep.mubr.f32.mxu0 0.0
    %6677 = vmatmul.mubr.f32.gmra.mxu0 %v6585
    %v6678 = vpop.f32.mrf.mxu0
    %v6679 = vadd.f32 0.0, %v6678
    %v6680 = vpop.f32.mrf.mxu0
    %6681 = vmatprep.mubr.f32.mxu0 0.0
    %6682 = vmatmul.mubr.f32.gmra.mxu0 %v6588
    %v6683 = vpop.f32.mrf.mxu0
    %v6684 = vadd.f32 0.0, %v6683
    %v6685 = vpop.f32.mrf.mxu0
    %6686 = vmatprep.mubr.f32.mxu0 0.0
    %6687 = vmatmul.mubr.f32.gmra.mxu0 %v6591
    %v6688 = vpop.f32.mrf.mxu0
    %v6689 = vadd.f32 0.0, %v6688
    %v6690 = vpop.f32.mrf.mxu0
    %6691 = vmatprep.mubr.f32.mxu0 0.0
    %6692 = vmatmul.mubr.f32.gmra.mxu0 %v6594
    %v6693 = vpop.f32.mrf.mxu0
    %v6694 = vadd.f32 0.0, %v6693
    %v6695 = vpop.f32.mrf.mxu0
    %6696 = vmatprep.mubr.f32.mxu0 0.0
    %6697 = vmatmul.mubr.f32.gmra.mxu0 %v6597
    %v6698 = vpop.f32.mrf.mxu0
    %v6699 = vadd.f32 0.0, %v6698
    %v6700 = vpop.f32.mrf.mxu0
    %6701 = vmatprep.mubr.f32.mxu0 0.0
    %6702 = vmatmul.mubr.f32.gmra.mxu0 %v6600
    %v6703 = vpop.f32.mrf.mxu0
    %v6704 = vadd.f32 0.0, %v6703
    %v6705 = vpop.f32.mrf.mxu0
    %6706 = vmatprep.mubr.f32.mxu0 0.0
    %6707 = vmatmul.mubr.f32.gmra.mxu0 %v6603
    %v6708 = vpop.f32.mrf.mxu0
    %v6709 = vadd.f32 0.0, %v6708
    %v6710 = vpop.f32.mrf.mxu0
    %6711 = vmatprep.mubr.f32.mxu0 0.0
    %6712 = vmatmul.mubr.f32.gmra.mxu0 %v6606
    %v6713 = vpop.f32.mrf.mxu0
    %v6714 = vadd.f32 0.0, %v6713
    %v6715 = vpop.f32.mrf.mxu0
    %6716 = vmatprep.mubr.f32.mxu0 0.0
    %6717 = vmatmul.mubr.f32.gmra.mxu0 %v6609
    %v6718 = vpop.f32.mrf.mxu0
    %v6719 = vadd.f32 0.0, %v6718
    %v6720 = vpop.f32.mrf.mxu0
    %6721 = vmatprep.mubr.f32.mxu0 0.0
    %6722 = vmatmul.mubr.f32.gmra.mxu0 %v6612
    %v6723 = vpop.f32.mrf.mxu0
    %v6724 = vadd.f32 0.0, %v6723
    %v6725 = vpop.f32.mrf.mxu0
    %6726 = vmatprep.mubr.f32.mxu0 0.0
    %6727 = vmatmul.mubr.f32.gmra.mxu0 %v6615
    %v6728 = vpop.f32.mrf.mxu0
    %v6729 = vadd.f32 0.0, %v6728
    %v6730 = vpop.f32.mrf.mxu0
    %6731 = vmatprep.mubr.f32.mxu0 0.0
    %6732 = vmatmul.mubr.f32.gmra.mxu0 %v6618
    %v6733 = vpop.f32.mrf.mxu0
    %v6734 = vadd.f32 0.0, %v6733
    %v6735 = vpop.f32.mrf.mxu0
    %6736 = vdwg.mxu0
    %v6745 = vunpack.c.l.b16 %v6563
    %v6746 = vunpack.c.l.b16 %v6564
    %v6747 = vunpack.c.l.b16 %v6565
    %v6748 = vunpack.c.l.b16 %v6566
    %v6749 = vunpack.c.l.b16 %v6567
    %v6750 = vunpack.c.l.b16 %v6568
    %v6751 = vunpack.c.l.b16 %v6569
    %v6752 = vunpack.c.l.b16 %v6570
    %v6753 = vpack.c.b16 %v6746, %v6745
    %v6754 = vpack.c.b16 %v6748, %v6747
    %v6755 = vpack.c.b16 %v6750, %v6749
    %v6756 = vpack.c.b16 %v6752, %v6751
    %6761 = vmatprep.subr.mxu0 0.0
    %6762 = vmatpush1.msra.mxu0 %v6734
    %6763 = vmatprep.subr.mxu0 0.0
    %6764 = vmatpush1.msra.mxu0 %v6729
    %6765 = vmatprep.subr.mxu0 0.0
    %6766 = vmatpush1.msra.mxu0 %v6724
    %6767 = vmatprep.subr.mxu0 0.0
    %6768 = vmatpush1.msra.mxu0 %v6719
    %6769 = vmatprep.subr.mxu0 0.0
    %6770 = vmatpush1.msra.mxu0 %v6714
    %6771 = vmatprep.subr.mxu0 0.0
    %6772 = vmatpush1.msra.mxu0 %v6709
    %6773 = vmatprep.subr.mxu0 0.0
    %6774 = vmatpush1.msra.mxu0 %v6704
    %6775 = vmatprep.subr.mxu0 0.0
    %6776 = vmatpush1.msra.mxu0 %v6699
    %6777 = vmatprep.subr.mxu0 0.0
    %6778 = vmatpush1.msra.mxu0 %v6694
    %6779 = vmatprep.subr.mxu0 0.0
    %6780 = vmatpush1.msra.mxu0 %v6689
    %6781 = vmatprep.subr.mxu0 0.0
    %6782 = vmatpush1.msra.mxu0 %v6684
    %6783 = vmatprep.subr.mxu0 0.0
    %6784 = vmatpush1.msra.mxu0 %v6679
    %6785 = vmatprep.subr.mxu0 0.0
    %6786 = vmatpush1.msra.mxu0 %v6674
    %6787 = vmatprep.subr.mxu0 0.0
    %6788 = vmatpush1.msra.mxu0 %v6669
    %6789 = vmatprep.subr.mxu0 0.0
    %6790 = vmatpush1.msra.mxu0 %v6664
    %6791 = vmatprep.subr.mxu0 0.0
    %6792 = vmatpush1.msra.mxu0 %v6659
    %6793 = vmatprep.subr.mxu0 0.0
    %6794 = vmatpush2.msra.mxu0 0.0
    %6795 = vmatprep.subr.mxu0 0.0
    %6796 = vmatpush2.msra.mxu0 0.0
    %6797 = vmatprep.subr.mxu0 0.0
    %6798 = vmatpush2.msra.mxu0 0.0
    %6799 = vmatprep.subr.mxu0 0.0
    %6800 = vmatpush2.msra.mxu0 0.0
    %6801 = vmatprep.subr.mxu0 0.0
    %6802 = vmatpush2.msra.mxu0 0.0
    %6803 = vmatprep.subr.mxu0 0.0
    %6804 = vmatpush2.msra.mxu0 0.0
    %6805 = vmatprep.subr.mxu0 0.0
    %6806 = vmatpush2.msra.mxu0 0.0
    %6807 = vmatprep.subr.mxu0 0.0
    %6808 = vmatpush2.msra.mxu0 0.0
    %6809 = vmatprep.subr.mxu0 0.0
    %6810 = vmatpush2.msra.mxu0 0.0
    %6811 = vmatprep.subr.mxu0 0.0
    %6812 = vmatpush2.msra.mxu0 0.0
    %6813 = vmatprep.subr.mxu0 0.0
    %6814 = vmatpush2.msra.mxu0 0.0
    %6815 = vmatprep.subr.mxu0 0.0
    %6816 = vmatpush2.msra.mxu0 0.0
    %6817 = vmatprep.subr.mxu0 0.0
    %6818 = vmatpush2.msra.mxu0 0.0
    %6819 = vmatprep.subr.mxu0 0.0
    %6820 = vmatpush2.msra.mxu0 0.0
    %6821 = vmatprep.subr.mxu0 0.0
    %6822 = vmatpush2.msra.mxu0 0.0
    %6823 = vmatprep.subr.mxu0 0.0
    %6824 = vmatpush2.msra.mxu0 0.0
    %6825 = vmatprep.mubr.bf16.mxu0 0
    %6826 = vmatmul.mubr.bf16.gmra.mxu0 %v6753
    %v6827 = vpop.f32.mrf.mxu0
    %v6828 = vadd.f32 0.0, %v6827
    %v6829 = vpop.f32.mrf.mxu0
    %v6830 = vpop.f32.mrf.mxu0
    %v6831 = vadd.f32 0.0, %v6830
    %v6832 = vpop.f32.mrf.mxu0
    %6833 = vmatprep.mubr.bf16.mxu0 0
    %6834 = vmatmul.mubr.bf16.gmra.mxu0 %v6754
    %v6835 = vpop.f32.mrf.mxu0
    %v6836 = vadd.f32 0.0, %v6835
    %v6837 = vpop.f32.mrf.mxu0
    %v6838 = vpop.f32.mrf.mxu0
    %v6839 = vadd.f32 0.0, %v6838
    %v6840 = vpop.f32.mrf.mxu0
    %6841 = vmatprep.mubr.bf16.mxu0 0
    %6842 = vmatmul.mubr.bf16.gmra.mxu0 %v6755
    %v6843 = vpop.f32.mrf.mxu0
    %v6844 = vadd.f32 0.0, %v6843
    %v6845 = vpop.f32.mrf.mxu0
    %v6846 = vpop.f32.mrf.mxu0
    %v6847 = vadd.f32 0.0, %v6846
    %v6848 = vpop.f32.mrf.mxu0
    %6849 = vmatprep.mubr.bf16.mxu0 0
    %6850 = vmatmul.mubr.bf16.gmra.mxu0 %v6756
    %v6851 = vpop.f32.mrf.mxu0
    %v6852 = vadd.f32 0.0, %v6851
    %v6853 = vpop.f32.mrf.mxu0
    %v6854 = vpop.f32.mrf.mxu0
    %v6855 = vadd.f32 0.0, %v6854
    %v6856 = vpop.f32.mrf.mxu0
    %6857 = vdwg.mxu0
    %v6858 = vmul.f32 %v6500, %v6500
    %v6859 = vmul.f32 %v6503, %v6503
    %v6860 = vmul.f32 %v6508, %v6508
    %v6861 = vmul.f32 %v6511, %v6511
    %v6862 = vmul.f32 %v6516, %v6516
    %v6863 = vmul.f32 %v6519, %v6519
    %v6864 = vmul.f32 %v6524, %v6524
    %v6865 = vmul.f32 %v6527, %v6527
    %v6866 = vmul.f32 %v6532, %v6532
    %v6867 = vmul.f32 %v6535, %v6535
    %v6868 = vmul.f32 %v6540, %v6540
    %v6869 = vmul.f32 %v6543, %v6543
    %v6870 = vmul.f32 %v6548, %v6548
    %v6871 = vmul.f32 %v6551, %v6551
    %v6872 = vmul.f32 %v6556, %v6556
    %v6873 = vmul.f32 %v6559, %v6559
    %v6875 = vsel %vm6571, %v6858, 0
    %v6878 = vsel %vm6571, %v6859, 0
    %v6881 = vsel %vm6571, %v6860, 0
    %v6884 = vsel %vm6571, %v6861, 0
    %v6887 = vsel %vm6571, %v6862, 0
    %v6890 = vsel %vm6571, %v6863, 0
    %v6893 = vsel %vm6571, %v6864, 0
    %v6896 = vsel %vm6571, %v6865, 0
    %v6899 = vsel %vm6571, %v6866, 0
    %v6902 = vsel %vm6571, %v6867, 0
    %v6905 = vsel %vm6571, %v6868, 0
    %v6908 = vsel %vm6571, %v6869, 0
    %v6911 = vsel %vm6571, %v6870, 0
    %v6914 = vsel %vm6571, %v6871, 0
    %v6917 = vsel %vm6571, %v6872, 0
    %v6920 = vsel %vm6571, %v6873, 0
    %6922 = vmatprep.subr.bf16.mxu0 0
    %6923 = vmatpush1.bf16.msra.mxu0 0
    %6924 = vmatprep.subr.bf16.mxu0 0
    %6925 = vmatpush1.bf16.msra.mxu0 0
    %6926 = vmatprep.subr.bf16.mxu0 0
    %6927 = vmatpush1.bf16.msra.mxu0 0
    %6928 = vmatprep.subr.bf16.mxu0 0
    %6929 = vmatpush1.bf16.msra.mxu0 0
    %6930 = vmatprep.subr.bf16.mxu0 0
    %6931 = vmatpush1.bf16.msra.mxu0 0
    %6932 = vmatprep.subr.bf16.mxu0 0
    %6933 = vmatpush1.bf16.msra.mxu0 0
    %6934 = vmatprep.subr.bf16.mxu0 0
    %6935 = vmatpush1.bf16.msra.mxu0 0
    %6936 = vmatprep.subr.bf16.mxu0 0
    %6937 = vmatpush1.bf16.msra.mxu0 %v6622
    %6938 = vmatprep.subr.bf16.mxu0 0
    %6939 = vmatpush2.bf16.msra.mxu0 0
    %6940 = vmatprep.subr.bf16.mxu0 0
    %6941 = vmatpush2.bf16.msra.mxu0 0
    %6942 = vmatprep.subr.bf16.mxu0 0
    %6943 = vmatpush2.bf16.msra.mxu0 0
    %6944 = vmatprep.subr.bf16.mxu0 0
    %6945 = vmatpush2.bf16.msra.mxu0 0
    %6946 = vmatprep.subr.bf16.mxu0 0
    %6947 = vmatpush2.bf16.msra.mxu0 0
    %6948 = vmatprep.subr.bf16.mxu0 0
    %6949 = vmatpush2.bf16.msra.mxu0 0
    %6950 = vmatprep.subr.bf16.mxu0 0
    %6951 = vmatpush2.bf16.msra.mxu0 0
    %6952 = vmatprep.subr.bf16.mxu0 0
    %6953 = vmatpush2.bf16.msra.mxu0 0
    %6954 = vmatprep.mubr.f32.mxu0 0.0
    %6955 = vmatmul.mubr.f32.gmra.mxu0 %v6875
    %v6956 = vpop.f32.mrf.mxu0
    %v6957 = vadd.f32 0.0, %v6956
    %v6958 = vpop.f32.mrf.mxu0
    %6959 = vmatprep.mubr.f32.mxu0 0.0
    %6960 = vmatmul.mubr.f32.gmra.mxu0 %v6878
    %v6961 = vpop.f32.mrf.mxu0
    %v6962 = vadd.f32 0.0, %v6961
    %v6963 = vpop.f32.mrf.mxu0
    %6964 = vmatprep.mubr.f32.mxu0 0.0
    %6965 = vmatmul.mubr.f32.gmra.mxu0 %v6881
    %v6966 = vpop.f32.mrf.mxu0
    %v6967 = vadd.f32 0.0, %v6966
    %v6968 = vpop.f32.mrf.mxu0
    %6969 = vmatprep.mubr.f32.mxu0 0.0
    %6970 = vmatmul.mubr.f32.gmra.mxu0 %v6884
    %v6971 = vpop.f32.mrf.mxu0
    %v6972 = vadd.f32 0.0, %v6971
    %v6973 = vpop.f32.mrf.mxu0
    %6974 = vmatprep.mubr.f32.mxu0 0.0
    %6975 = vmatmul.mubr.f32.gmra.mxu0 %v6887
    %v6976 = vpop.f32.mrf.mxu0
    %v6977 = vadd.f32 0.0, %v6976
    %v6978 = vpop.f32.mrf.mxu0
    %6979 = vmatprep.mubr.f32.mxu0 0.0
    %6980 = vmatmul.mubr.f32.gmra.mxu0 %v6890
    %v6981 = vpop.f32.mrf.mxu0
    %v6982 = vadd.f32 0.0, %v6981
    %v6983 = vpop.f32.mrf.mxu0
    %6984 = vmatprep.mubr.f32.mxu0 0.0
    %6985 = vmatmul.mubr.f32.gmra.mxu0 %v6893
    %v6986 = vpop.f32.mrf.mxu0
    %v6987 = vadd.f32 0.0, %v6986
    %v6988 = vpop.f32.mrf.mxu0
    %6989 = vmatprep.mubr.f32.mxu0 0.0
    %6990 = vmatmul.mubr.f32.gmra.mxu0 %v6896
    %v6991 = vpop.f32.mrf.mxu0
    %v6992 = vadd.f32 0.0, %v6991
    %v6993 = vpop.f32.mrf.mxu0
    %6994 = vmatprep.mubr.f32.mxu0 0.0
    %6995 = vmatmul.mubr.f32.gmra.mxu0 %v6899
    %v6996 = vpop.f32.mrf.mxu0
    %v6997 = vadd.f32 0.0, %v6996
    %v6998 = vpop.f32.mrf.mxu0
    %6999 = vmatprep.mubr.f32.mxu0 0.0
    %7000 = vmatmul.mubr.f32.gmra.mxu0 %v6902
    %v7001 = vpop.f32.mrf.mxu0
    %v7002 = vadd.f32 0.0, %v7001
    %v7003 = vpop.f32.mrf.mxu0
    %7004 = vmatprep.mubr.f32.mxu0 0.0
    %7005 = vmatmul.mubr.f32.gmra.mxu0 %v6905
    %v7006 = vpop.f32.mrf.mxu0
    %v7007 = vadd.f32 0.0, %v7006
    %v7008 = vpop.f32.mrf.mxu0
    %7009 = vmatprep.mubr.f32.mxu0 0.0
    %7010 = vmatmul.mubr.f32.gmra.mxu0 %v6908
    %v7011 = vpop.f32.mrf.mxu0
    %v7012 = vadd.f32 0.0, %v7011
    %v7013 = vpop.f32.mrf.mxu0
    %7014 = vmatprep.mubr.f32.mxu0 0.0
    %7015 = vmatmul.mubr.f32.gmra.mxu0 %v6911
    %v7016 = vpop.f32.mrf.mxu0
    %v7017 = vadd.f32 0.0, %v7016
    %v7018 = vpop.f32.mrf.mxu0
    %7019 = vmatprep.mubr.f32.mxu0 0.0
    %7020 = vmatmul.mubr.f32.gmra.mxu0 %v6914
    %v7021 = vpop.f32.mrf.mxu0
    %v7022 = vadd.f32 0.0, %v7021
    %v7023 = vpop.f32.mrf.mxu0
    %7024 = vmatprep.mubr.f32.mxu0 0.0
    %7025 = vmatmul.mubr.f32.gmra.mxu0 %v6917
    %v7026 = vpop.f32.mrf.mxu0
    %v7027 = vadd.f32 0.0, %v7026
    %v7028 = vpop.f32.mrf.mxu0
    %7029 = vmatprep.mubr.f32.mxu0 0.0
    %7030 = vmatmul.mubr.f32.gmra.mxu0 %v6920
    %v7031 = vpop.f32.mrf.mxu0
    %v7032 = vadd.f32 0.0, %v7031
    %v7033 = vpop.f32.mrf.mxu0
    %7034 = vdwg.mxu0
    %7035 = vmatprep.subr.mxu0 0.0
    %7036 = vmatpush1.msra.mxu0 %v7032
    %7037 = vmatprep.subr.mxu0 0.0
    %7038 = vmatpush1.msra.mxu0 %v7027
    %7039 = vmatprep.subr.mxu0 0.0
    %7040 = vmatpush1.msra.mxu0 %v7022
    %7041 = vmatprep.subr.mxu0 0.0
    %7042 = vmatpush1.msra.mxu0 %v7017
    %7043 = vmatprep.subr.mxu0 0.0
    %7044 = vmatpush1.msra.mxu0 %v7012
    %7045 = vmatprep.subr.mxu0 0.0
    %7046 = vmatpush1.msra.mxu0 %v7007
    %7047 = vmatprep.subr.mxu0 0.0
    %7048 = vmatpush1.msra.mxu0 %v7002
    %7049 = vmatprep.subr.mxu0 0.0
    %7050 = vmatpush1.msra.mxu0 %v6997
    %7051 = vmatprep.subr.mxu0 0.0
    %7052 = vmatpush1.msra.mxu0 %v6992
    %7053 = vmatprep.subr.mxu0 0.0
    %7054 = vmatpush1.msra.mxu0 %v6987
    %7055 = vmatprep.subr.mxu0 0.0
    %7056 = vmatpush1.msra.mxu0 %v6982
    %7057 = vmatprep.subr.mxu0 0.0
    %7058 = vmatpush1.msra.mxu0 %v6977
    %7059 = vmatprep.subr.mxu0 0.0
    %7060 = vmatpush1.msra.mxu0 %v6972
    %7061 = vmatprep.subr.mxu0 0.0
    %7062 = vmatpush1.msra.mxu0 %v6967
    %7063 = vmatprep.subr.mxu0 0.0
    %7064 = vmatpush1.msra.mxu0 %v6962
    %7065 = vmatprep.subr.mxu0 0.0
    %7066 = vmatpush1.msra.mxu0 %v6957
    %7067 = vmatprep.subr.mxu0 0.0
    %7068 = vmatpush2.msra.mxu0 0.0
    %7069 = vmatprep.subr.mxu0 0.0
    %7070 = vmatpush2.msra.mxu0 0.0
    %7071 = vmatprep.subr.mxu0 0.0
    %7072 = vmatpush2.msra.mxu0 0.0
    %7073 = vmatprep.subr.mxu0 0.0
    %7074 = vmatpush2.msra.mxu0 0.0
    %7075 = vmatprep.subr.mxu0 0.0
    %7076 = vmatpush2.msra.mxu0 0.0
    %7077 = vmatprep.subr.mxu0 0.0
    %7078 = vmatpush2.msra.mxu0 0.0
    %7079 = vmatprep.subr.mxu0 0.0
    %7080 = vmatpush2.msra.mxu0 0.0
    %7081 = vmatprep.subr.mxu0 0.0
    %7082 = vmatpush2.msra.mxu0 0.0
    %7083 = vmatprep.subr.mxu0 0.0
    %7084 = vmatpush2.msra.mxu0 0.0
    %7085 = vmatprep.subr.mxu0 0.0
    %7086 = vmatpush2.msra.mxu0 0.0
    %7087 = vmatprep.subr.mxu0 0.0
    %7088 = vmatpush2.msra.mxu0 0.0
    %7089 = vmatprep.subr.mxu0 0.0
    %7090 = vmatpush2.msra.mxu0 0.0
    %7091 = vmatprep.subr.mxu0 0.0
    %7092 = vmatpush2.msra.mxu0 0.0
    %7093 = vmatprep.subr.mxu0 0.0
    %7094 = vmatpush2.msra.mxu0 0.0
    %7095 = vmatprep.subr.mxu0 0.0
    %7096 = vmatpush2.msra.mxu0 0.0
    %7097 = vmatprep.subr.mxu0 0.0
    %7098 = vmatpush2.msra.mxu0 0.0
    %7099 = vmatprep.mubr.bf16.mxu0 0
    %7100 = vmatmul.mubr.bf16.gmra.mxu0 %v6753
    %v7101 = vpop.f32.mrf.mxu0
    %v7102 = vadd.f32 0.0, %v7101
    %v7103 = vpop.f32.mrf.mxu0
    %v7104 = vpop.f32.mrf.mxu0
    %v7105 = vadd.f32 0.0, %v7104
    %v7106 = vpop.f32.mrf.mxu0
    %7107 = vmatprep.mubr.bf16.mxu0 0
    %7108 = vmatmul.mubr.bf16.gmra.mxu0 %v6754
    %v7109 = vpop.f32.mrf.mxu0
    %v7110 = vadd.f32 0.0, %v7109
    %v7111 = vpop.f32.mrf.mxu0
    %v7112 = vpop.f32.mrf.mxu0
    %v7113 = vadd.f32 0.0, %v7112
    %v7114 = vpop.f32.mrf.mxu0
    %7115 = vmatprep.mubr.bf16.mxu0 0
    %7116 = vmatmul.mubr.bf16.gmra.mxu0 %v6755
    %v7117 = vpop.f32.mrf.mxu0
    %v7118 = vadd.f32 0.0, %v7117
    %v7119 = vpop.f32.mrf.mxu0
    %v7120 = vpop.f32.mrf.mxu0
    %v7121 = vadd.f32 0.0, %v7120
    %v7122 = vpop.f32.mrf.mxu0
    %7123 = vmatprep.mubr.bf16.mxu0 0
    %7124 = vmatmul.mubr.bf16.gmra.mxu0 %v6756
    %v7125 = vpop.f32.mrf.mxu0
    %v7126 = vadd.f32 0.0, %v7125
    %v7127 = vpop.f32.mrf.mxu0
    %v7128 = vpop.f32.mrf.mxu0
    %v7129 = vadd.f32 0.0, %v7128
    %v7130 = vpop.f32.mrf.mxu0
    %7131 = vdwg.mxu0
    %v7132 = vmul.f32 %v6828, 0.25
    %v7133 = vmul.f32 %v6831, 0.25
    %v7134 = vmul.f32 %v6836, 0.25
    %v7135 = vmul.f32 %v6839, 0.25
    %v7136 = vmul.f32 %v6844, 0.25
    %v7137 = vmul.f32 %v6847, 0.25
    %v7138 = vmul.f32 %v6852, 0.25
    %v7139 = vmul.f32 %v6855, 0.25
    %v7140 = vmul.f32 %v7102, 0.25
    %v7141 = vmul.f32 %v7105, 0.25
    %v7142 = vmul.f32 %v7110, 0.25
    %v7143 = vmul.f32 %v7113, 0.25
    %v7144 = vmul.f32 %v7118, 0.25
    %v7145 = vmul.f32 %v7121, 0.25
    %v7146 = vmul.f32 %v7126, 0.25
    %v7147 = vmul.f32 %v7129, 0.25
    %v7148 = vmul.f32 %v7132, %v7132
    %v7149 = vmul.f32 %v7133, %v7133
    %v7150 = vmul.f32 %v7134, %v7134
    %v7151 = vmul.f32 %v7135, %v7135
    %v7152 = vmul.f32 %v7136, %v7136
    %v7153 = vmul.f32 %v7137, %v7137
    %v7154 = vmul.f32 %v7138, %v7138
    %v7155 = vmul.f32 %v7139, %v7139
    %v7156 = vsub.f32 %v7140, %v7148
    %v7157 = vsub.f32 %v7141, %v7149
    %v7158 = vsub.f32 %v7142, %v7150
    %v7159 = vsub.f32 %v7143, %v7151
    %v7160 = vsub.f32 %v7144, %v7152
    %v7161 = vsub.f32 %v7145, %v7153
    %v7162 = vsub.f32 %v7146, %v7154
    %v7163 = vsub.f32 %v7147, %v7155
    %v7164 = vadd.f32 %v7156, 1e-05
    %v7165 = vadd.f32 %v7157, 1e-05
    %v7166 = vadd.f32 %v7158, 1e-05
    %v7167 = vadd.f32 %v7159, 1e-05
    %v7168 = vadd.f32 %v7160, 1e-05
    %v7169 = vadd.f32 %v7161, 1e-05
    %v7170 = vadd.f32 %v7162, 1e-05
    %v7171 = vadd.f32 %v7163, 1e-05
    %v7172 = vrsqrt.pop %v7164
    %v7173 = vrsqrt.pop %v7165
    %v7174 = vrsqrt.pop %v7166
    %v7175 = vrsqrt.pop %v7167
    %v7176 = vrsqrt.pop %v7168
    %v7177 = vrsqrt.pop %v7169
    %v7178 = vrsqrt.pop %v7170
    %v7179 = vrsqrt.pop %v7171
    %v7180 = vld [vmem:[%s45] sm:$0xff]
    %v7181 = vld [vmem:[%s45 + $0x8] sm:$0xff]
    %v7182 = vld [vmem:[%s45 + $0x10] sm:$0xff]
    %v7183 = vld [vmem:[%s45 + $0x18] sm:$0xff]
    %v7184 = vld [vmem:[%s45 + $0x20] sm:$0xff]
    %v7185 = vld [vmem:[%s45 + $0x28] sm:$0xff]
    %v7186 = vld [vmem:[%s45 + $0x30] sm:$0xff]
    %v7187 = vld [vmem:[%s45 + $0x38] sm:$0xff]
    %7189 = vset.pattern.permute.xlu0 0
    %7190 = vperm.xlu0 %7189, %v7180
    %v7191 = vpop.permute.xlu0 %7190
    %7194 = vset.pattern.permute.xlu0 0
    %7195 = vperm.xlu0 %7194, %v7181
    %v7196 = vpop.permute.xlu0 %7195
    %7199 = vset.pattern.permute.xlu0 0
    %7200 = vperm.xlu0 %7199, %v7182
    %v7201 = vpop.permute.xlu0 %7200
    %7204 = vset.pattern.permute.xlu0 0
    %7205 = vperm.xlu0 %7204, %v7183
    %v7206 = vpop.permute.xlu0 %7205
    %7209 = vset.pattern.permute.xlu0 0
    %7210 = vperm.xlu0 %7209, %v7184
    %v7211 = vpop.permute.xlu0 %7210
    %7214 = vset.pattern.permute.xlu0 0
    %7215 = vperm.xlu0 %7214, %v7185
    %v7216 = vpop.permute.xlu0 %7215
    %7219 = vset.pattern.permute.xlu0 0
    %7220 = vperm.xlu0 %7219, %v7186
    %v7221 = vpop.permute.xlu0 %7220
    %7224 = vset.pattern.permute.xlu0 0
    %7225 = vperm.xlu0 %7224, %v7187
    %v7226 = vpop.permute.xlu0 %7225
    %v7228 = vmul.f32 %v7191, %v7172
    %v7229 = vmul.f32 %v7196, %v7173
    %v7230 = vmul.f32 %v7201, %v7174
    %v7231 = vmul.f32 %v7206, %v7175
    %v7232 = vmul.f32 %v7211, %v7176
    %v7233 = vmul.f32 %v7216, %v7177
    %v7234 = vmul.f32 %v7221, %v7178
    %v7235 = vmul.f32 %v7226, %v7179
    %v7236 = vld [vmem:[%s47] sm:$0xff]
    %v7237 = vld [vmem:[%s47 + $0x8] sm:$0xff]
    %v7238 = vld [vmem:[%s47 + $0x10] sm:$0xff]
    %v7239 = vld [vmem:[%s47 + $0x18] sm:$0xff]
    %v7240 = vld [vmem:[%s47 + $0x20] sm:$0xff]
    %v7241 = vld [vmem:[%s47 + $0x28] sm:$0xff]
    %v7242 = vld [vmem:[%s47 + $0x30] sm:$0xff]
    %v7243 = vld [vmem:[%s47 + $0x38] sm:$0xff]
    %v7244 = vmul.f32 %v7228, %v7132
    %v7245 = vmul.f32 %v7229, %v7133
    %v7246 = vmul.f32 %v7230, %v7134
    %v7247 = vmul.f32 %v7231, %v7135
    %v7248 = vmul.f32 %v7232, %v7136
    %v7249 = vmul.f32 %v7233, %v7137
    %v7250 = vmul.f32 %v7234, %v7138
    %v7251 = vmul.f32 %v7235, %v7139
    %7253 = vset.pattern.permute.xlu0 0
    %7254 = vperm.xlu0 %7253, %v7236
    %v7255 = vpop.permute.xlu0 %7254
    %7258 = vset.pattern.permute.xlu0 0
    %7259 = vperm.xlu0 %7258, %v7237
    %v7260 = vpop.permute.xlu0 %7259
    %7263 = vset.pattern.permute.xlu0 0
    %7264 = vperm.xlu0 %7263, %v7238
    %v7265 = vpop.permute.xlu0 %7264
    %7268 = vset.pattern.permute.xlu0 0
    %7269 = vperm.xlu0 %7268, %v7239
    %v7270 = vpop.permute.xlu0 %7269
    %7273 = vset.pattern.permute.xlu0 0
    %7274 = vperm.xlu0 %7273, %v7240
    %v7275 = vpop.permute.xlu0 %7274
    %7278 = vset.pattern.permute.xlu0 0
    %7279 = vperm.xlu0 %7278, %v7241
    %v7280 = vpop.permute.xlu0 %7279
    %7283 = vset.pattern.permute.xlu0 0
    %7284 = vperm.xlu0 %7283, %v7242
    %v7285 = vpop.permute.xlu0 %7284
    %7288 = vset.pattern.permute.xlu0 0
    %7289 = vperm.xlu0 %7288, %v7243
    %v7290 = vpop.permute.xlu0 %7289
    %v7292 = vsub.f32 %v7255, %v7244
    %v7293 = vsub.f32 %v7260, %v7245
    %v7294 = vsub.f32 %v7265, %v7246
    %v7295 = vsub.f32 %v7270, %v7247
    %v7296 = vsub.f32 %v7275, %v7248
    %v7297 = vsub.f32 %v7280, %v7249
    %v7298 = vsub.f32 %v7285, %v7250
    %v7299 = vsub.f32 %v7290, %v7251
    %v7300 = vld [vmem:[%s55] sm:$0xf]
    %v7301 = vld [vmem:[%s55 + $0x4] sm:$0xf]
    %v7302 = vld [vmem:[%s55 + $0x8] sm:$0xf]
    %v7303 = vld [vmem:[%s55 + $0xc] sm:$0xf]
    %v7304 = vld [vmem:[%s55 + $0x10] sm:$0xf]
    %v7305 = vld [vmem:[%s55 + $0x14] sm:$0xf]
    %v7306 = vld [vmem:[%s55 + $0x18] sm:$0xf]
    %v7307 = vld [vmem:[%s55 + $0x1c] sm:$0xf]
    %v7308 = vld [vmem:[%s55 + $0x20] sm:$0xf]
    %v7309 = vld [vmem:[%s55 + $0x24] sm:$0xf]
    %v7310 = vld [vmem:[%s55 + $0x28] sm:$0xf]
    %v7311 = vld [vmem:[%s55 + $0x2c] sm:$0xf]
    %v7312 = vld [vmem:[%s55 + $0x30] sm:$0xf]
    %v7313 = vld [vmem:[%s55 + $0x34] sm:$0xf]
    %v7314 = vld [vmem:[%s55 + $0x38] sm:$0xf]
    %v7315 = vld [vmem:[%s55 + $0x3c] sm:$0xf]
    %v7332 = vunpack.c.l.b16 %v7300
    %v7333 = vunpack.c.l.b16 %v7301
    %v7334 = vunpack.c.l.b16 %v7302
    %v7335 = vunpack.c.l.b16 %v7303
    %v7336 = vunpack.c.l.b16 %v7304
    %v7337 = vunpack.c.l.b16 %v7305
    %v7338 = vunpack.c.l.b16 %v7306
    %v7339 = vunpack.c.l.b16 %v7307
    %v7340 = vunpack.c.l.b16 %v7308
    %v7341 = vunpack.c.l.b16 %v7309
    %v7342 = vunpack.c.l.b16 %v7310
    %v7343 = vunpack.c.l.b16 %v7311
    %v7344 = vunpack.c.l.b16 %v7312
    %v7345 = vunpack.c.l.b16 %v7313
    %v7346 = vunpack.c.l.b16 %v7314
    %v7347 = vunpack.c.l.b16 %v7315
    %v7348 = vpack.c.b16 %v7333, %v7332
    %v7349 = vpack.c.b16 %v7335, %v7334
    %v7350 = vpack.c.b16 %v7337, %v7336
    %v7351 = vpack.c.b16 %v7339, %v7338
    %v7352 = vpack.c.b16 %v7341, %v7340
    %v7353 = vpack.c.b16 %v7343, %v7342
    %v7354 = vpack.c.b16 %v7345, %v7344
    %v7355 = vpack.c.b16 %v7347, %v7346
    %vm7356 = vcmask 523264
    %v7358 = vsel %vm7356, %v7348, 0
    %v7361 = vsel %vm7356, %v7349, 0
    %v7364 = vsel %vm7356, %v7350, 0
    %v7367 = vsel %vm7356, %v7351, 0
    %v7370 = vsel %vm7356, %v7352, 0
    %v7373 = vsel %vm7356, %v7353, 0
    %v7376 = vsel %vm7356, %v7354, 0
    %v7379 = vsel %vm7356, %v7355, 0
    %7381 = vmatprep.subr.mxu0 0.0
    %7382 = vmatpush1.msra.mxu0 0.0
    %7383 = vmatprep.subr.mxu0 0.0
    %7384 = vmatpush1.msra.mxu0 0.0
    %7385 = vmatprep.subr.mxu0 0.0
    %7386 = vmatpush1.msra.mxu0 0.0
    %7387 = vmatprep.subr.mxu0 0.0
    %7388 = vmatpush1.msra.mxu0 0.0
    %7389 = vmatprep.subr.mxu0 0.0
    %7390 = vmatpush1.msra.mxu0 0.0
    %7391 = vmatprep.subr.mxu0 0.0
    %7392 = vmatpush1.msra.mxu0 0.0
    %7393 = vmatprep.subr.mxu0 0.0
    %7394 = vmatpush1.msra.mxu0 0.0
    %7395 = vmatprep.subr.mxu0 0.0
    %7396 = vmatpush1.msra.mxu0 0.0
    %7397 = vmatprep.subr.mxu0 0.0
    %7398 = vmatpush1.msra.mxu0 %v7235
    %7399 = vmatprep.subr.mxu0 0.0
    %7400 = vmatpush1.msra.mxu0 %v7234
    %7401 = vmatprep.subr.mxu0 0.0
    %7402 = vmatpush1.msra.mxu0 %v7233
    %7403 = vmatprep.subr.mxu0 0.0
    %7404 = vmatpush1.msra.mxu0 %v7232
    %7405 = vmatprep.subr.mxu0 0.0
    %7406 = vmatpush1.msra.mxu0 %v7231
    %7407 = vmatprep.subr.mxu0 0.0
    %7408 = vmatpush1.msra.mxu0 %v7230
    %7409 = vmatprep.subr.mxu0 0.0
    %7410 = vmatpush1.msra.mxu0 %v7229
    %7411 = vmatprep.subr.mxu0 0.0
    %7412 = vmatpush1.msra.mxu0 %v7228
    %7413 = vmatprep.subr.mxu0 0.0
    %7414 = vmatpush2.msra.mxu0 0.0
    %7415 = vmatprep.subr.mxu0 0.0
    %7416 = vmatpush2.msra.mxu0 0.0
    %7417 = vmatprep.subr.mxu0 0.0
    %7418 = vmatpush2.msra.mxu0 0.0
    %7419 = vmatprep.subr.mxu0 0.0
    %7420 = vmatpush2.msra.mxu0 0.0
    %7421 = vmatprep.subr.mxu0 0.0
    %7422 = vmatpush2.msra.mxu0 0.0
    %7423 = vmatprep.subr.mxu0 0.0
    %7424 = vmatpush2.msra.mxu0 0.0
    %7425 = vmatprep.subr.mxu0 0.0
    %7426 = vmatpush2.msra.mxu0 0.0
    %7427 = vmatprep.subr.mxu0 0.0
    %7428 = vmatpush2.msra.mxu0 0.0
    %7429 = vmatprep.subr.mxu0 0.0
    %7430 = vmatpush2.msra.mxu0 0.0
    %7431 = vmatprep.subr.mxu0 0.0
    %7432 = vmatpush2.msra.mxu0 0.0
    %7433 = vmatprep.subr.mxu0 0.0
    %7434 = vmatpush2.msra.mxu0 0.0
    %7435 = vmatprep.subr.mxu0 0.0
    %7436 = vmatpush2.msra.mxu0 0.0
    %7437 = vmatprep.subr.mxu0 0.0
    %7438 = vmatpush2.msra.mxu0 0.0
    %7439 = vmatprep.subr.mxu0 0.0
    %7440 = vmatpush2.msra.mxu0 0.0
    %7441 = vmatprep.subr.mxu0 0.0
    %7442 = vmatpush2.msra.mxu0 0.0
    %7443 = vmatprep.subr.mxu0 0.0
    %7444 = vmatpush2.msra.mxu0 0.0
    %7445 = vmatprep.mubr.bf16.mxu0 0
    %7446 = vmatmul.mubr.bf16.gmra.mxu0 %v7358
    %v7447 = vpop.f32.mrf.mxu0
    %v7448 = vadd.f32 0.0, %v7447
    %v7449 = vpop.f32.mrf.mxu0
    %v7450 = vpop.f32.mrf.mxu0
    %v7451 = vadd.f32 0.0, %v7450
    %v7452 = vpop.f32.mrf.mxu0
    %7453 = vmatprep.mubr.bf16.mxu0 0
    %7454 = vmatmul.mubr.bf16.gmra.mxu0 %v7361
    %v7455 = vpop.f32.mrf.mxu0
    %v7456 = vadd.f32 0.0, %v7455
    %v7457 = vpop.f32.mrf.mxu0
    %v7458 = vpop.f32.mrf.mxu0
    %v7459 = vadd.f32 0.0, %v7458
    %v7460 = vpop.f32.mrf.mxu0
    %7461 = vmatprep.mubr.bf16.mxu0 0
    %7462 = vmatmul.mubr.bf16.gmra.mxu0 %v7364
    %v7463 = vpop.f32.mrf.mxu0
    %v7464 = vadd.f32 0.0, %v7463
    %v7465 = vpop.f32.mrf.mxu0
    %v7466 = vpop.f32.mrf.mxu0
    %v7467 = vadd.f32 0.0, %v7466
    %v7468 = vpop.f32.mrf.mxu0
    %7469 = vmatprep.mubr.bf16.mxu0 0
    %7470 = vmatmul.mubr.bf16.gmra.mxu0 %v7367
    %v7471 = vpop.f32.mrf.mxu0
    %v7472 = vadd.f32 0.0, %v7471
    %v7473 = vpop.f32.mrf.mxu0
    %v7474 = vpop.f32.mrf.mxu0
    %v7475 = vadd.f32 0.0, %v7474
    %v7476 = vpop.f32.mrf.mxu0
    %7477 = vmatprep.mubr.bf16.mxu0 0
    %7478 = vmatmul.mubr.bf16.gmra.mxu0 %v7370
    %v7479 = vpop.f32.mrf.mxu0
    %v7480 = vadd.f32 0.0, %v7479
    %v7481 = vpop.f32.mrf.mxu0
    %v7482 = vpop.f32.mrf.mxu0
    %v7483 = vadd.f32 0.0, %v7482
    %v7484 = vpop.f32.mrf.mxu0
    %7485 = vmatprep.mubr.bf16.mxu0 0
    %7486 = vmatmul.mubr.bf16.gmra.mxu0 %v7373
    %v7487 = vpop.f32.mrf.mxu0
    %v7488 = vadd.f32 0.0, %v7487
    %v7489 = vpop.f32.mrf.mxu0
    %v7490 = vpop.f32.mrf.mxu0
    %v7491 = vadd.f32 0.0, %v7490
    %v7492 = vpop.f32.mrf.mxu0
    %7493 = vmatprep.mubr.bf16.mxu0 0
    %7494 = vmatmul.mubr.bf16.gmra.mxu0 %v7376
    %v7495 = vpop.f32.mrf.mxu0
    %v7496 = vadd.f32 0.0, %v7495
    %v7497 = vpop.f32.mrf.mxu0
    %v7498 = vpop.f32.mrf.mxu0
    %v7499 = vadd.f32 0.0, %v7498
    %v7500 = vpop.f32.mrf.mxu0
    %7501 = vmatprep.mubr.bf16.mxu0 0
    %7502 = vmatmul.mubr.bf16.gmra.mxu0 %v7379
    %v7503 = vpop.f32.mrf.mxu0
    %v7504 = vadd.f32 0.0, %v7503
    %v7505 = vpop.f32.mrf.mxu0
    %v7506 = vpop.f32.mrf.mxu0
    %v7507 = vadd.f32 0.0, %v7506
    %v7508 = vpop.f32.mrf.mxu0
    %7509 = vdwg.mxu0
    %v7510 = vld [vmem:[%s51] sm:$0x1]
    %v7512 = vsel %vm2946, %v7448, 0
    %v7515 = vsel %vm2946, %v7451, 0
    %v7518 = vsel %vm2946, %v7456, 0
    %v7521 = vsel %vm2946, %v7459, 0
    %v7524 = vsel %vm2946, %v7464, 0
    %v7527 = vsel %vm2946, %v7467, 0
    %v7530 = vsel %vm2946, %v7472, 0
    %v7533 = vsel %vm2946, %v7475, 0
    %v7536 = vsel %vm2946, %v7480, 0
    %v7539 = vsel %vm2946, %v7483, 0
    %v7542 = vsel %vm2946, %v7488, 0
    %v7545 = vsel %vm2946, %v7491, 0
    %v7548 = vsel %vm2946, %v7496, 0
    %v7551 = vsel %vm2946, %v7499, 0
    %v7554 = vsel %vm2946, %v7504, 0
    %v7557 = vsel %vm2946, %v7507, 0
    %v7560 = vsel %vm2995, %v7510, 0
    %7562 = vmatprep.subr.bf16.mxu0 0
    %7563 = vmatpush1.bf16.msra.mxu0 0
    %7564 = vmatprep.subr.bf16.mxu0 0
    %7565 = vmatpush1.bf16.msra.mxu0 0
    %7566 = vmatprep.subr.bf16.mxu0 0
    %7567 = vmatpush1.bf16.msra.mxu0 0
    %7568 = vmatprep.subr.bf16.mxu0 0
    %7569 = vmatpush1.bf16.msra.mxu0 0
    %7570 = vmatprep.subr.bf16.mxu0 0
    %7571 = vmatpush1.bf16.msra.mxu0 0
    %7572 = vmatprep.subr.bf16.mxu0 0
    %7573 = vmatpush1.bf16.msra.mxu0 0
    %7574 = vmatprep.subr.bf16.mxu0 0
    %7575 = vmatpush1.bf16.msra.mxu0 0
    %7576 = vmatprep.subr.bf16.mxu0 0
    %7577 = vmatpush1.bf16.msra.mxu0 %v7560
    %7578 = vmatprep.subr.bf16.mxu0 0
    %7579 = vmatpush2.bf16.msra.mxu0 0
    %7580 = vmatprep.subr.bf16.mxu0 0
    %7581 = vmatpush2.bf16.msra.mxu0 0
    %7582 = vmatprep.subr.bf16.mxu0 0
    %7583 = vmatpush2.bf16.msra.mxu0 0
    %7584 = vmatprep.subr.bf16.mxu0 0
    %7585 = vmatpush2.bf16.msra.mxu0 0
    %7586 = vmatprep.subr.bf16.mxu0 0
    %7587 = vmatpush2.bf16.msra.mxu0 0
    %7588 = vmatprep.subr.bf16.mxu0 0
    %7589 = vmatpush2.bf16.msra.mxu0 0
    %7590 = vmatprep.subr.bf16.mxu0 0
    %7591 = vmatpush2.bf16.msra.mxu0 0
    %7592 = vmatprep.subr.bf16.mxu0 0
    %7593 = vmatpush2.bf16.msra.mxu0 0
    %7594 = vmatprep.mubr.f32.mxu0 0.0
    %7595 = vmatmul.mubr.f32.gmra.mxu0 %v7512
    %v7596 = vpop.f32.mrf.mxu0
    %v7597 = vadd.f32 0.0, %v7596
    %v7598 = vpop.f32.mrf.mxu0
    %7599 = vmatprep.mubr.f32.mxu0 0.0
    %7600 = vmatmul.mubr.f32.gmra.mxu0 %v7515
    %v7601 = vpop.f32.mrf.mxu0
    %v7602 = vadd.f32 0.0, %v7601
    %v7603 = vpop.f32.mrf.mxu0
    %7604 = vmatprep.mubr.f32.mxu0 0.0
    %7605 = vmatmul.mubr.f32.gmra.mxu0 %v7518
    %v7606 = vpop.f32.mrf.mxu0
    %v7607 = vadd.f32 0.0, %v7606
    %v7608 = vpop.f32.mrf.mxu0
    %7609 = vmatprep.mubr.f32.mxu0 0.0
    %7610 = vmatmul.mubr.f32.gmra.mxu0 %v7521
    %v7611 = vpop.f32.mrf.mxu0
    %v7612 = vadd.f32 0.0, %v7611
    %v7613 = vpop.f32.mrf.mxu0
    %7614 = vmatprep.mubr.f32.mxu0 0.0
    %7615 = vmatmul.mubr.f32.gmra.mxu0 %v7524
    %v7616 = vpop.f32.mrf.mxu0
    %v7617 = vadd.f32 0.0, %v7616
    %v7618 = vpop.f32.mrf.mxu0
    %7619 = vmatprep.mubr.f32.mxu0 0.0
    %7620 = vmatmul.mubr.f32.gmra.mxu0 %v7527
    %v7621 = vpop.f32.mrf.mxu0
    %v7622 = vadd.f32 0.0, %v7621
    %v7623 = vpop.f32.mrf.mxu0
    %7624 = vmatprep.mubr.f32.mxu0 0.0
    %7625 = vmatmul.mubr.f32.gmra.mxu0 %v7530
    %v7626 = vpop.f32.mrf.mxu0
    %v7627 = vadd.f32 0.0, %v7626
    %v7628 = vpop.f32.mrf.mxu0
    %7629 = vmatprep.mubr.f32.mxu0 0.0
    %7630 = vmatmul.mubr.f32.gmra.mxu0 %v7533
    %v7631 = vpop.f32.mrf.mxu0
    %v7632 = vadd.f32 0.0, %v7631
    %v7633 = vpop.f32.mrf.mxu0
    %7634 = vmatprep.mubr.f32.mxu0 0.0
    %7635 = vmatmul.mubr.f32.gmra.mxu0 %v7536
    %v7636 = vpop.f32.mrf.mxu0
    %v7637 = vadd.f32 0.0, %v7636
    %v7638 = vpop.f32.mrf.mxu0
    %7639 = vmatprep.mubr.f32.mxu0 0.0
    %7640 = vmatmul.mubr.f32.gmra.mxu0 %v7539
    %v7641 = vpop.f32.mrf.mxu0
    %v7642 = vadd.f32 0.0, %v7641
    %v7643 = vpop.f32.mrf.mxu0
    %7644 = vmatprep.mubr.f32.mxu0 0.0
    %7645 = vmatmul.mubr.f32.gmra.mxu0 %v7542
    %v7646 = vpop.f32.mrf.mxu0
    %v7647 = vadd.f32 0.0, %v7646
    %v7648 = vpop.f32.mrf.mxu0
    %7649 = vmatprep.mubr.f32.mxu0 0.0
    %7650 = vmatmul.mubr.f32.gmra.mxu0 %v7545
    %v7651 = vpop.f32.mrf.mxu0
    %v7652 = vadd.f32 0.0, %v7651
    %v7653 = vpop.f32.mrf.mxu0
    %7654 = vmatprep.mubr.f32.mxu0 0.0
    %7655 = vmatmul.mubr.f32.gmra.mxu0 %v7548
    %v7656 = vpop.f32.mrf.mxu0
    %v7657 = vadd.f32 0.0, %v7656
    %v7658 = vpop.f32.mrf.mxu0
    %7659 = vmatprep.mubr.f32.mxu0 0.0
    %7660 = vmatmul.mubr.f32.gmra.mxu0 %v7551
    %v7661 = vpop.f32.mrf.mxu0
    %v7662 = vadd.f32 0.0, %v7661
    %v7663 = vpop.f32.mrf.mxu0
    %7664 = vmatprep.mubr.f32.mxu0 0.0
    %7665 = vmatmul.mubr.f32.gmra.mxu0 %v7554
    %v7666 = vpop.f32.mrf.mxu0
    %v7667 = vadd.f32 0.0, %v7666
    %v7668 = vpop.f32.mrf.mxu0
    %7669 = vmatprep.mubr.f32.mxu0 0.0
    %7670 = vmatmul.mubr.f32.gmra.mxu0 %v7557
    %v7671 = vpop.f32.mrf.mxu0
    %v7672 = vadd.f32 0.0, %v7671
    %v7673 = vpop.f32.mrf.mxu0
    %7674 = vdwg.mxu0
    %7675 = vmatprep.subr.mxu0 0.0
    %7676 = vmatpush1.msra.mxu0 0.0
    %7677 = vmatprep.subr.mxu0 0.0
    %7678 = vmatpush1.msra.mxu0 0.0
    %7679 = vmatprep.subr.mxu0 0.0
    %7680 = vmatpush1.msra.mxu0 0.0
    %7681 = vmatprep.subr.mxu0 0.0
    %7682 = vmatpush1.msra.mxu0 0.0
    %7683 = vmatprep.subr.mxu0 0.0
    %7684 = vmatpush1.msra.mxu0 0.0
    %7685 = vmatprep.subr.mxu0 0.0
    %7686 = vmatpush1.msra.mxu0 0.0
    %7687 = vmatprep.subr.mxu0 0.0
    %7688 = vmatpush1.msra.mxu0 0.0
    %7689 = vmatprep.subr.mxu0 0.0
    %7690 = vmatpush1.msra.mxu0 0.0
    %7691 = vmatprep.subr.mxu0 0.0
    %7692 = vmatpush1.msra.mxu0 %v7299
    %7693 = vmatprep.subr.mxu0 0.0
    %7694 = vmatpush1.msra.mxu0 %v7298
    %7695 = vmatprep.subr.mxu0 0.0
    %7696 = vmatpush1.msra.mxu0 %v7297
    %7697 = vmatprep.subr.mxu0 0.0
    %7698 = vmatpush1.msra.mxu0 %v7296
    %7699 = vmatprep.subr.mxu0 0.0
    %7700 = vmatpush1.msra.mxu0 %v7295
    %7701 = vmatprep.subr.mxu0 0.0
    %7702 = vmatpush1.msra.mxu0 %v7294
    %7703 = vmatprep.subr.mxu0 0.0
    %7704 = vmatpush1.msra.mxu0 %v7293
    %7705 = vmatprep.subr.mxu0 0.0
    %7706 = vmatpush1.msra.mxu0 %v7292
    %7707 = vmatprep.subr.mxu0 0.0
    %7708 = vmatpush2.msra.mxu0 0.0
    %7709 = vmatprep.subr.mxu0 0.0
    %7710 = vmatpush2.msra.mxu0 0.0
    %7711 = vmatprep.subr.mxu0 0.0
    %7712 = vmatpush2.msra.mxu0 0.0
    %7713 = vmatprep.subr.mxu0 0.0
    %7714 = vmatpush2.msra.mxu0 0.0
    %7715 = vmatprep.subr.mxu0 0.0
    %7716 = vmatpush2.msra.mxu0 0.0
    %7717 = vmatprep.subr.mxu0 0.0
    %7718 = vmatpush2.msra.mxu0 0.0
    %7719 = vmatprep.subr.mxu0 0.0
    %7720 = vmatpush2.msra.mxu0 0.0
    %7721 = vmatprep.subr.mxu0 0.0
    %7722 = vmatpush2.msra.mxu0 0.0
    %7723 = vmatprep.subr.mxu0 0.0
    %7724 = vmatpush2.msra.mxu0 0.0
    %7725 = vmatprep.subr.mxu0 0.0
    %7726 = vmatpush2.msra.mxu0 0.0
    %7727 = vmatprep.subr.mxu0 0.0
    %7728 = vmatpush2.msra.mxu0 0.0
    %7729 = vmatprep.subr.mxu0 0.0
    %7730 = vmatpush2.msra.mxu0 0.0
    %7731 = vmatprep.subr.mxu0 0.0
    %7732 = vmatpush2.msra.mxu0 0.0
    %7733 = vmatprep.subr.mxu0 0.0
    %7734 = vmatpush2.msra.mxu0 0.0
    %7735 = vmatprep.subr.mxu0 0.0
    %7736 = vmatpush2.msra.mxu0 0.0
    %7737 = vmatprep.subr.mxu0 0.0
    %7738 = vmatpush2.msra.mxu0 0.0
    %7739 = vmatprep.mubr.bf16.mxu0 0
    %7740 = vmatmul.mubr.bf16.gmra.mxu0 %v7358
    %v7741 = vpop.f32.mrf.mxu0
    %v7742 = vadd.f32 0.0, %v7741
    %v7743 = vpop.f32.mrf.mxu0
    %v7744 = vpop.f32.mrf.mxu0
    %v7745 = vadd.f32 0.0, %v7744
    %v7746 = vpop.f32.mrf.mxu0
    %7747 = vmatprep.mubr.bf16.mxu0 0
    %7748 = vmatmul.mubr.bf16.gmra.mxu0 %v7361
    %v7749 = vpop.f32.mrf.mxu0
    %v7750 = vadd.f32 0.0, %v7749
    %v7751 = vpop.f32.mrf.mxu0
    %v7752 = vpop.f32.mrf.mxu0
    %v7753 = vadd.f32 0.0, %v7752
    %v7754 = vpop.f32.mrf.mxu0
    %7755 = vmatprep.mubr.bf16.mxu0 0
    %7756 = vmatmul.mubr.bf16.gmra.mxu0 %v7364
    %v7757 = vpop.f32.mrf.mxu0
    %v7758 = vadd.f32 0.0, %v7757
    %v7759 = vpop.f32.mrf.mxu0
    %v7760 = vpop.f32.mrf.mxu0
    %v7761 = vadd.f32 0.0, %v7760
    %v7762 = vpop.f32.mrf.mxu0
    %7763 = vmatprep.mubr.bf16.mxu0 0
    %7764 = vmatmul.mubr.bf16.gmra.mxu0 %v7367
    %v7765 = vpop.f32.mrf.mxu0
    %v7766 = vadd.f32 0.0, %v7765
    %v7767 = vpop.f32.mrf.mxu0
    %v7768 = vpop.f32.mrf.mxu0
    %v7769 = vadd.f32 0.0, %v7768
    %v7770 = vpop.f32.mrf.mxu0
    %7771 = vmatprep.mubr.bf16.mxu0 0
    %7772 = vmatmul.mubr.bf16.gmra.mxu0 %v7370
    %v7773 = vpop.f32.mrf.mxu0
    %v7774 = vadd.f32 0.0, %v7773
    %v7775 = vpop.f32.mrf.mxu0
    %v7776 = vpop.f32.mrf.mxu0
    %v7777 = vadd.f32 0.0, %v7776
    %v7778 = vpop.f32.mrf.mxu0
    %7779 = vmatprep.mubr.bf16.mxu0 0
    %7780 = vmatmul.mubr.bf16.gmra.mxu0 %v7373
    %v7781 = vpop.f32.mrf.mxu0
    %v7782 = vadd.f32 0.0, %v7781
    %v7783 = vpop.f32.mrf.mxu0
    %v7784 = vpop.f32.mrf.mxu0
    %v7785 = vadd.f32 0.0, %v7784
    %v7786 = vpop.f32.mrf.mxu0
    %7787 = vmatprep.mubr.bf16.mxu0 0
    %7788 = vmatmul.mubr.bf16.gmra.mxu0 %v7376
    %v7789 = vpop.f32.mrf.mxu0
    %v7790 = vadd.f32 0.0, %v7789
    %v7791 = vpop.f32.mrf.mxu0
    %v7792 = vpop.f32.mrf.mxu0
    %v7793 = vadd.f32 0.0, %v7792
    %v7794 = vpop.f32.mrf.mxu0
    %7795 = vmatprep.mubr.bf16.mxu0 0
    %7796 = vmatmul.mubr.bf16.gmra.mxu0 %v7379
    %v7797 = vpop.f32.mrf.mxu0
    %v7798 = vadd.f32 0.0, %v7797
    %v7799 = vpop.f32.mrf.mxu0
    %v7800 = vpop.f32.mrf.mxu0
    %v7801 = vadd.f32 0.0, %v7800
    %v7802 = vpop.f32.mrf.mxu0
    %7803 = vdwg.mxu0
    %v7805 = vsel %vm2946, %v7742, 0
    %v7808 = vsel %vm2946, %v7745, 0
    %v7811 = vsel %vm2946, %v7750, 0
    %v7814 = vsel %vm2946, %v7753, 0
    %v7817 = vsel %vm2946, %v7758, 0
    %v7820 = vsel %vm2946, %v7761, 0
    %v7823 = vsel %vm2946, %v7766, 0
    %v7826 = vsel %vm2946, %v7769, 0
    %v7829 = vsel %vm2946, %v7774, 0
    %v7832 = vsel %vm2946, %v7777, 0
    %v7835 = vsel %vm2946, %v7782, 0
    %v7838 = vsel %vm2946, %v7785, 0
    %v7841 = vsel %vm2946, %v7790, 0
    %v7844 = vsel %vm2946, %v7793, 0
    %v7847 = vsel %vm2946, %v7798, 0
    %v7850 = vsel %vm2946, %v7801, 0
    %7852 = vmatprep.subr.bf16.mxu0 0
    %7853 = vmatpush1.bf16.msra.mxu0 0
    %7854 = vmatprep.subr.bf16.mxu0 0
    %7855 = vmatpush1.bf16.msra.mxu0 0
    %7856 = vmatprep.subr.bf16.mxu0 0
    %7857 = vmatpush1.bf16.msra.mxu0 0
    %7858 = vmatprep.subr.bf16.mxu0 0
    %7859 = vmatpush1.bf16.msra.mxu0 0
    %7860 = vmatprep.subr.bf16.mxu0 0
    %7861 = vmatpush1.bf16.msra.mxu0 0
    %7862 = vmatprep.subr.bf16.mxu0 0
    %7863 = vmatpush1.bf16.msra.mxu0 0
    %7864 = vmatprep.subr.bf16.mxu0 0
    %7865 = vmatpush1.bf16.msra.mxu0 0
    %7866 = vmatprep.subr.bf16.mxu0 0
    %7867 = vmatpush1.bf16.msra.mxu0 %v7560
    %7868 = vmatprep.subr.bf16.mxu0 0
    %7869 = vmatpush2.bf16.msra.mxu0 0
    %7870 = vmatprep.subr.bf16.mxu0 0
    %7871 = vmatpush2.bf16.msra.mxu0 0
    %7872 = vmatprep.subr.bf16.mxu0 0
    %7873 = vmatpush2.bf16.msra.mxu0 0
    %7874 = vmatprep.subr.bf16.mxu0 0
    %7875 = vmatpush2.bf16.msra.mxu0 0
    %7876 = vmatprep.subr.bf16.mxu0 0
    %7877 = vmatpush2.bf16.msra.mxu0 0
    %7878 = vmatprep.subr.bf16.mxu0 0
    %7879 = vmatpush2.bf16.msra.mxu0 0
    %7880 = vmatprep.subr.bf16.mxu0 0
    %7881 = vmatpush2.bf16.msra.mxu0 0
    %7882 = vmatprep.subr.bf16.mxu0 0
    %7883 = vmatpush2.bf16.msra.mxu0 0
    %7884 = vmatprep.mubr.f32.mxu0 0.0
    %7885 = vmatmul.mubr.f32.gmra.mxu0 %v7805
    %v7886 = vpop.f32.mrf.mxu0
    %v7887 = vadd.f32 0.0, %v7886
    %v7888 = vpop.f32.mrf.mxu0
    %7889 = vmatprep.mubr.f32.mxu0 0.0
    %7890 = vmatmul.mubr.f32.gmra.mxu0 %v7808
    %v7891 = vpop.f32.mrf.mxu0
    %v7892 = vadd.f32 0.0, %v7891
    %v7893 = vpop.f32.mrf.mxu0
    %7894 = vmatprep.mubr.f32.mxu0 0.0
    %7895 = vmatmul.mubr.f32.gmra.mxu0 %v7811
    %v7896 = vpop.f32.mrf.mxu0
    %v7897 = vadd.f32 0.0, %v7896
    %v7898 = vpop.f32.mrf.mxu0
    %7899 = vmatprep.mubr.f32.mxu0 0.0
    %7900 = vmatmul.mubr.f32.gmra.mxu0 %v7814
    %v7901 = vpop.f32.mrf.mxu0
    %v7902 = vadd.f32 0.0, %v7901
    %v7903 = vpop.f32.mrf.mxu0
    %7904 = vmatprep.mubr.f32.mxu0 0.0
    %7905 = vmatmul.mubr.f32.gmra.mxu0 %v7817
    %v7906 = vpop.f32.mrf.mxu0
    %v7907 = vadd.f32 0.0, %v7906
    %v7908 = vpop.f32.mrf.mxu0
    %7909 = vmatprep.mubr.f32.mxu0 0.0
    %7910 = vmatmul.mubr.f32.gmra.mxu0 %v7820
    %v7911 = vpop.f32.mrf.mxu0
    %v7912 = vadd.f32 0.0, %v7911
    %v7913 = vpop.f32.mrf.mxu0
    %7914 = vmatprep.mubr.f32.mxu0 0.0
    %7915 = vmatmul.mubr.f32.gmra.mxu0 %v7823
    %v7916 = vpop.f32.mrf.mxu0
    %v7917 = vadd.f32 0.0, %v7916
    %v7918 = vpop.f32.mrf.mxu0
    %7919 = vmatprep.mubr.f32.mxu0 0.0
    %7920 = vmatmul.mubr.f32.gmra.mxu0 %v7826
    %v7921 = vpop.f32.mrf.mxu0
    %v7922 = vadd.f32 0.0, %v7921
    %v7923 = vpop.f32.mrf.mxu0
    %7924 = vmatprep.mubr.f32.mxu0 0.0
    %7925 = vmatmul.mubr.f32.gmra.mxu0 %v7829
    %v7926 = vpop.f32.mrf.mxu0
    %v7927 = vadd.f32 0.0, %v7926
    %v7928 = vpop.f32.mrf.mxu0
    %7929 = vmatprep.mubr.f32.mxu0 0.0
    %7930 = vmatmul.mubr.f32.gmra.mxu0 %v7832
    %v7931 = vpop.f32.mrf.mxu0
    %v7932 = vadd.f32 0.0, %v7931
    %v7933 = vpop.f32.mrf.mxu0
    %7934 = vmatprep.mubr.f32.mxu0 0.0
    %7935 = vmatmul.mubr.f32.gmra.mxu0 %v7835
    %v7936 = vpop.f32.mrf.mxu0
    %v7937 = vadd.f32 0.0, %v7936
    %v7938 = vpop.f32.mrf.mxu0
    %7939 = vmatprep.mubr.f32.mxu0 0.0
    %7940 = vmatmul.mubr.f32.gmra.mxu0 %v7838
    %v7941 = vpop.f32.mrf.mxu0
    %v7942 = vadd.f32 0.0, %v7941
    %v7943 = vpop.f32.mrf.mxu0
    %7944 = vmatprep.mubr.f32.mxu0 0.0
    %7945 = vmatmul.mubr.f32.gmra.mxu0 %v7841
    %v7946 = vpop.f32.mrf.mxu0
    %v7947 = vadd.f32 0.0, %v7946
    %v7948 = vpop.f32.mrf.mxu0
    %7949 = vmatprep.mubr.f32.mxu0 0.0
    %7950 = vmatmul.mubr.f32.gmra.mxu0 %v7844
    %v7951 = vpop.f32.mrf.mxu0
    %v7952 = vadd.f32 0.0, %v7951
    %v7953 = vpop.f32.mrf.mxu0
    %7954 = vmatprep.mubr.f32.mxu0 0.0
    %7955 = vmatmul.mubr.f32.gmra.mxu0 %v7847
    %v7956 = vpop.f32.mrf.mxu0
    %v7957 = vadd.f32 0.0, %v7956
    %v7958 = vpop.f32.mrf.mxu0
    %7959 = vmatprep.mubr.f32.mxu0 0.0
    %7960 = vmatmul.mubr.f32.gmra.mxu0 %v7850
    %v7961 = vpop.f32.mrf.mxu0
    %v7962 = vadd.f32 0.0, %v7961
    %v7963 = vpop.f32.mrf.mxu0
    %7964 = vdwg.mxu0
    %v7965 = vmul.f32 %v7597, %v6500
    %v7966 = vmul.f32 %v7602, %v6503
    %v7967 = vmul.f32 %v7607, %v6508
    %v7968 = vmul.f32 %v7612, %v6511
    %v7969 = vmul.f32 %v7617, %v6516
    %v7970 = vmul.f32 %v7622, %v6519
    %v7971 = vmul.f32 %v7627, %v6524
    %v7972 = vmul.f32 %v7632, %v6527
    %v7973 = vmul.f32 %v7637, %v6532
    %v7974 = vmul.f32 %v7642, %v6535
    %v7975 = vmul.f32 %v7647, %v6540
    %v7976 = vmul.f32 %v7652, %v6543
    %v7977 = vmul.f32 %v7657, %v6548
    %v7978 = vmul.f32 %v7662, %v6551
    %v7979 = vmul.f32 %v7667, %v6556
    %v7980 = vmul.f32 %v7672, %v6559
    %v7981 = vadd.f32 %v7965, %v7887
    %v7982 = vadd.f32 %v7966, %v7892
    %v7983 = vadd.f32 %v7967, %v7897
    %v7984 = vadd.f32 %v7968, %v7902
    %v7985 = vadd.f32 %v7969, %v7907
    %v7986 = vadd.f32 %v7970, %v7912
    %v7987 = vadd.f32 %v7971, %v7917
    %v7988 = vadd.f32 %v7972, %v7922
    %v7989 = vadd.f32 %v7973, %v7927
    %v7990 = vadd.f32 %v7974, %v7932
    %v7991 = vadd.f32 %v7975, %v7937
    %v7992 = vadd.f32 %v7976, %v7942
    %v7993 = vadd.f32 %v7977, %v7947
    %v7994 = vadd.f32 %v7978, %v7952
    %v7995 = vadd.f32 %v7979, %v7957
    %v7996 = vadd.f32 %v7980, %v7962
    %vm7997 = vcmp.ge.f32.partialorder %v7981, 0.0
    %vm7998 = vcmp.ge.f32.partialorder %v7982, 0.0
    %vm7999 = vcmp.ge.f32.partialorder %v7983, 0.0
    %vm8000 = vcmp.ge.f32.partialorder %v7984, 0.0
    %vm8001 = vcmp.ge.f32.partialorder %v7985, 0.0
    %vm8002 = vcmp.ge.f32.partialorder %v7986, 0.0
    %vm8003 = vcmp.ge.f32.partialorder %v7987, 0.0
    %vm8004 = vcmp.ge.f32.partialorder %v7988, 0.0
    %vm8005 = vcmp.ge.f32.partialorder %v7989, 0.0
    %vm8006 = vcmp.ge.f32.partialorder %v7990, 0.0
    %vm8007 = vcmp.ge.f32.partialorder %v7991, 0.0
    %vm8008 = vcmp.ge.f32.partialorder %v7992, 0.0
    %vm8009 = vcmp.ge.f32.partialorder %v7993, 0.0
    %vm8010 = vcmp.ge.f32.partialorder %v7994, 0.0
    %vm8011 = vcmp.ge.f32.partialorder %v7995, 0.0
    %vm8012 = vcmp.ge.f32.partialorder %v7996, 0.0
    %v8013 = vmul.f32 %v7981, 0.2
    %v8014 = vmul.f32 %v7982, 0.2
    %v8015 = vmul.f32 %v7983, 0.2
    %v8016 = vmul.f32 %v7984, 0.2
    %v8017 = vmul.f32 %v7985, 0.2
    %v8018 = vmul.f32 %v7986, 0.2
    %v8019 = vmul.f32 %v7987, 0.2
    %v8020 = vmul.f32 %v7988, 0.2
    %v8021 = vmul.f32 %v7989, 0.2
    %v8022 = vmul.f32 %v7990, 0.2
    %v8023 = vmul.f32 %v7991, 0.2
    %v8024 = vmul.f32 %v7992, 0.2
    %v8025 = vmul.f32 %v7993, 0.2
    %v8026 = vmul.f32 %v7994, 0.2
    %v8027 = vmul.f32 %v7995, 0.2
    %v8028 = vmul.f32 %v7996, 0.2
    %v8029 = vsel %vm7997, %v7981, %v8013
    %v8030 = vsel %vm7998, %v7982, %v8014
    %v8031 = vsel %vm7999, %v7983, %v8015
    %v8032 = vsel %vm8000, %v7984, %v8016
    %v8033 = vsel %vm8001, %v7985, %v8017
    %v8034 = vsel %vm8002, %v7986, %v8018
    %v8035 = vsel %vm8003, %v7987, %v8019
    %v8036 = vsel %vm8004, %v7988, %v8020
    %v8037 = vsel %vm8005, %v7989, %v8021
    %v8038 = vsel %vm8006, %v7990, %v8022
    %v8039 = vsel %vm8007, %v7991, %v8023
    %v8040 = vsel %vm8008, %v7992, %v8024
    %v8041 = vsel %vm8009, %v7993, %v8025
    %v8042 = vsel %vm8010, %v7994, %v8026
    %v8043 = vsel %vm8011, %v7995, %v8027
    %v8044 = vsel %vm8012, %v7996, %v8028
    %v8045 = vpack.c.bf16 %v8030, %v8029
    %v8046 = vpack.c.bf16 %v8032, %v8031
    %v8047 = vpack.c.bf16 %v8034, %v8033
    %v8048 = vpack.c.bf16 %v8036, %v8035
    %v8049 = vpack.c.bf16 %v8038, %v8037
    %v8050 = vpack.c.bf16 %v8040, %v8039
    %v8051 = vpack.c.bf16 %v8042, %v8041
    %v8052 = vpack.c.bf16 %v8044, %v8043
    %v8053 = vld [vmem:[%s59] sm:$0x3]
    %v8055 = vsel %vm6571, %v8045, 0
    %v8058 = vsel %vm6571, %v8046, 0
    %v8061 = vsel %vm6571, %v8047, 0
    %v8064 = vsel %vm6571, %v8048, 0
    %v8067 = vsel %vm6571, %v8049, 0
    %v8070 = vsel %vm6571, %v8050, 0
    %v8073 = vsel %vm6571, %v8051, 0
    %v8076 = vsel %vm6571, %v8052, 0
    %v8079 = vsel %vm6620, %v8053, 0
    %8081 = vmatprep.subr.bf16.mxu0 0
    %8082 = vmatpush1.bf16.msra.mxu0 0
    %8083 = vmatprep.subr.bf16.mxu0 0
    %8084 = vmatpush1.bf16.msra.mxu0 0
    %8085 = vmatprep.subr.bf16.mxu0 0
    %8086 = vmatpush1.bf16.msra.mxu0 0
    %8087 = vmatprep.subr.bf16.mxu0 0
    %8088 = vmatpush1.bf16.msra.mxu0 0
    %8089 = vmatprep.subr.bf16.mxu0 0
    %8090 = vmatpush1.bf16.msra.mxu0 0
    %8091 = vmatprep.subr.bf16.mxu0 0
    %8092 = vmatpush1.bf16.msra.mxu0 0
    %8093 = vmatprep.subr.bf16.mxu0 0
    %8094 = vmatpush1.bf16.msra.mxu0 0
    %8095 = vmatprep.subr.bf16.mxu0 0
    %8096 = vmatpush1.bf16.msra.mxu0 %v8079
    %8097 = vmatprep.subr.bf16.mxu0 0
    %8098 = vmatpush2.bf16.msra.mxu0 0
    %8099 = vmatprep.subr.bf16.mxu0 0
    %8100 = vmatpush2.bf16.msra.mxu0 0
    %8101 = vmatprep.subr.bf16.mxu0 0
    %8102 = vmatpush2.bf16.msra.mxu0 0
    %8103 = vmatprep.subr.bf16.mxu0 0
    %8104 = vmatpush2.bf16.msra.mxu0 0
    %8105 = vmatprep.subr.bf16.mxu0 0
    %8106 = vmatpush2.bf16.msra.mxu0 0
    %8107 = vmatprep.subr.bf16.mxu0 0
    %8108 = vmatpush2.bf16.msra.mxu0 0
    %8109 = vmatprep.subr.bf16.mxu0 0
    %8110 = vmatpush2.bf16.msra.mxu0 0
    %8111 = vmatprep.subr.bf16.mxu0 0
    %8112 = vmatpush2.bf16.msra.mxu0 0
    %8113 = vmatprep.mubr.bf16.mxu0 0
    %8114 = vmatmul.mubr.bf16.gmra.mxu0 %v8055
    %v8115 = vpop.f32.mrf.mxu0
    %v8116 = vadd.f32 0.0, %v8115
    %v8117 = vpop.f32.mrf.mxu0
    %v8118 = vpop.f32.mrf.mxu0
    %v8119 = vadd.f32 0.0, %v8118
    %v8120 = vpop.f32.mrf.mxu0
    %8121 = vmatprep.mubr.bf16.mxu0 0
    %8122 = vmatmul.mubr.bf16.gmra.mxu0 %v8058
    %v8123 = vpop.f32.mrf.mxu0
    %v8124 = vadd.f32 0.0, %v8123
    %v8125 = vpop.f32.mrf.mxu0
    %v8126 = vpop.f32.mrf.mxu0
    %v8127 = vadd.f32 0.0, %v8126
    %v8128 = vpop.f32.mrf.mxu0
    %8129 = vmatprep.mubr.bf16.mxu0 0
    %8130 = vmatmul.mubr.bf16.gmra.mxu0 %v8061
    %v8131 = vpop.f32.mrf.mxu0
    %v8132 = vadd.f32 0.0, %v8131
    %v8133 = vpop.f32.mrf.mxu0
    %v8134 = vpop.f32.mrf.mxu0
    %v8135 = vadd.f32 0.0, %v8134
    %v8136 = vpop.f32.mrf.mxu0
    %8137 = vmatprep.mubr.bf16.mxu0 0
    %8138 = vmatmul.mubr.bf16.gmra.mxu0 %v8064
    %v8139 = vpop.f32.mrf.mxu0
    %v8140 = vadd.f32 0.0, %v8139
    %v8141 = vpop.f32.mrf.mxu0
    %v8142 = vpop.f32.mrf.mxu0
    %v8143 = vadd.f32 0.0, %v8142
    %v8144 = vpop.f32.mrf.mxu0
    %8145 = vmatprep.mubr.bf16.mxu0 0
    %8146 = vmatmul.mubr.bf16.gmra.mxu0 %v8067
    %v8147 = vpop.f32.mrf.mxu0
    %v8148 = vadd.f32 0.0, %v8147
    %v8149 = vpop.f32.mrf.mxu0
    %v8150 = vpop.f32.mrf.mxu0
    %v8151 = vadd.f32 0.0, %v8150
    %v8152 = vpop.f32.mrf.mxu0
    %8153 = vmatprep.mubr.bf16.mxu0 0
    %8154 = vmatmul.mubr.bf16.gmra.mxu0 %v8070
    %v8155 = vpop.f32.mrf.mxu0
    %v8156 = vadd.f32 0.0, %v8155
    %v8157 = vpop.f32.mrf.mxu0
    %v8158 = vpop.f32.mrf.mxu0
    %v8159 = vadd.f32 0.0, %v8158
    %v8160 = vpop.f32.mrf.mxu0
    %8161 = vmatprep.mubr.bf16.mxu0 0
    %8162 = vmatmul.mubr.bf16.gmra.mxu0 %v8073
    %v8163 = vpop.f32.mrf.mxu0
    %v8164 = vadd.f32 0.0, %v8163
    %v8165 = vpop.f32.mrf.mxu0
    %v8166 = vpop.f32.mrf.mxu0
    %v8167 = vadd.f32 0.0, %v8166
    %v8168 = vpop.f32.mrf.mxu0
    %8169 = vmatprep.mubr.bf16.mxu0 0
    %8170 = vmatmul.mubr.bf16.gmra.mxu0 %v8076
    %v8171 = vpop.f32.mrf.mxu0
    %v8172 = vadd.f32 0.0, %v8171
    %v8173 = vpop.f32.mrf.mxu0
    %v8174 = vpop.f32.mrf.mxu0
    %v8175 = vadd.f32 0.0, %v8174
    %v8176 = vpop.f32.mrf.mxu0
    %8177 = vdwg.mxu0
    %v8178 = vpack.c.bf16 %v8119, %v8116
    %v8179 = vpack.c.bf16 %v8127, %v8124
    %v8180 = vpack.c.bf16 %v8135, %v8132
    %v8181 = vpack.c.bf16 %v8143, %v8140
    %v8182 = vpack.c.bf16 %v8151, %v8148
    %v8183 = vpack.c.bf16 %v8159, %v8156
    %v8184 = vpack.c.bf16 %v8167, %v8164
    %v8185 = vpack.c.bf16 %v8175, %v8172
    %s8186 = scalar_lea.vmem %s59, 2
    %v8187 = vld [vmem:[%s8186] sm:$0x3]
    %v8189 = vsel %vm6620, %v8187, 0
    %8191 = vmatprep.subr.bf16.mxu0 0
    %8192 = vmatpush1.bf16.msra.mxu0 0
    %8193 = vmatprep.subr.bf16.mxu0 0
    %8194 = vmatpush1.bf16.msra.mxu0 0
    %8195 = vmatprep.subr.bf16.mxu0 0
    %8196 = vmatpush1.bf16.msra.mxu0 0
    %8197 = vmatprep.subr.bf16.mxu0 0
    %8198 = vmatpush1.bf16.msra.mxu0 0
    %8199 = vmatprep.subr.bf16.mxu0 0
    %8200 = vmatpush1.bf16.msra.mxu0 0
    %8201 = vmatprep.subr.bf16.mxu0 0
    %8202 = vmatpush1.bf16.msra.mxu0 0
    %8203 = vmatprep.subr.bf16.mxu0 0
    %8204 = vmatpush1.bf16.msra.mxu0 0
    %8205 = vmatprep.subr.bf16.mxu0 0
    %8206 = vmatpush1.bf16.msra.mxu0 %v8189
    %8207 = vmatprep.subr.bf16.mxu0 0
    %8208 = vmatpush2.bf16.msra.mxu0 0
    %8209 = vmatprep.subr.bf16.mxu0 0
    %8210 = vmatpush2.bf16.msra.mxu0 0
    %8211 = vmatprep.subr.bf16.mxu0 0
    %8212 = vmatpush2.bf16.msra.mxu0 0
    %8213 = vmatprep.subr.bf16.mxu0 0
    %8214 = vmatpush2.bf16.msra.mxu0 0
    %8215 = vmatprep.subr.bf16.mxu0 0
    %8216 = vmatpush2.bf16.msra.mxu0 0
    %8217 = vmatprep.subr.bf16.mxu0 0
    %8218 = vmatpush2.bf16.msra.mxu0 0
    %8219 = vmatprep.subr.bf16.mxu0 0
    %8220 = vmatpush2.bf16.msra.mxu0 0
    %8221 = vmatprep.subr.bf16.mxu0 0
    %8222 = vmatpush2.bf16.msra.mxu0 0
    %8223 = vmatprep.mubr.bf16.mxu0 0
    %8224 = vmatmul.mubr.bf16.gmra.mxu0 %v8055
    %v8225 = vpop.f32.mrf.mxu0
    %v8226 = vadd.f32 0.0, %v8225
    %v8227 = vpop.f32.mrf.mxu0
    %v8228 = vpop.f32.mrf.mxu0
    %v8229 = vadd.f32 0.0, %v8228
    %v8230 = vpop.f32.mrf.mxu0
    %8231 = vmatprep.mubr.bf16.mxu0 0
    %8232 = vmatmul.mubr.bf16.gmra.mxu0 %v8058
    %v8233 = vpop.f32.mrf.mxu0
    %v8234 = vadd.f32 0.0, %v8233
    %v8235 = vpop.f32.mrf.mxu0
    %v8236 = vpop.f32.mrf.mxu0
    %v8237 = vadd.f32 0.0, %v8236
    %v8238 = vpop.f32.mrf.mxu0
    %8239 = vmatprep.mubr.bf16.mxu0 0
    %8240 = vmatmul.mubr.bf16.gmra.mxu0 %v8061
    %v8241 = vpop.f32.mrf.mxu0
    %v8242 = vadd.f32 0.0, %v8241
    %v8243 = vpop.f32.mrf.mxu0
    %v8244 = vpop.f32.mrf.mxu0
    %v8245 = vadd.f32 0.0, %v8244
    %v8246 = vpop.f32.mrf.mxu0
    %8247 = vmatprep.mubr.bf16.mxu0 0
    %8248 = vmatmul.mubr.bf16.gmra.mxu0 %v8064
    %v8249 = vpop.f32.mrf.mxu0
    %v8250 = vadd.f32 0.0, %v8249
    %v8251 = vpop.f32.mrf.mxu0
    %v8252 = vpop.f32.mrf.mxu0
    %v8253 = vadd.f32 0.0, %v8252
    %v8254 = vpop.f32.mrf.mxu0
    %8255 = vmatprep.mubr.bf16.mxu0 0
    %8256 = vmatmul.mubr.bf16.gmra.mxu0 %v8067
    %v8257 = vpop.f32.mrf.mxu0
    %v8258 = vadd.f32 0.0, %v8257
    %v8259 = vpop.f32.mrf.mxu0
    %v8260 = vpop.f32.mrf.mxu0
    %v8261 = vadd.f32 0.0, %v8260
    %v8262 = vpop.f32.mrf.mxu0
    %8263 = vmatprep.mubr.bf16.mxu0 0
    %8264 = vmatmul.mubr.bf16.gmra.mxu0 %v8070
    %v8265 = vpop.f32.mrf.mxu0
    %v8266 = vadd.f32 0.0, %v8265
    %v8267 = vpop.f32.mrf.mxu0
    %v8268 = vpop.f32.mrf.mxu0
    %v8269 = vadd.f32 0.0, %v8268
    %v8270 = vpop.f32.mrf.mxu0
    %8271 = vmatprep.mubr.bf16.mxu0 0
    %8272 = vmatmul.mubr.bf16.gmra.mxu0 %v8073
    %v8273 = vpop.f32.mrf.mxu0
    %v8274 = vadd.f32 0.0, %v8273
    %v8275 = vpop.f32.mrf.mxu0
    %v8276 = vpop.f32.mrf.mxu0
    %v8277 = vadd.f32 0.0, %v8276
    %v8278 = vpop.f32.mrf.mxu0
    %8279 = vmatprep.mubr.bf16.mxu0 0
    %8280 = vmatmul.mubr.bf16.gmra.mxu0 %v8076
    %v8281 = vpop.f32.mrf.mxu0
    %v8282 = vadd.f32 0.0, %v8281
    %v8283 = vpop.f32.mrf.mxu0
    %v8284 = vpop.f32.mrf.mxu0
    %v8285 = vadd.f32 0.0, %v8284
    %v8286 = vpop.f32.mrf.mxu0
    %8287 = vdwg.mxu0
    %v8288 = vpack.c.bf16 %v8229, %v8226
    %v8289 = vpack.c.bf16 %v8237, %v8234
    %v8290 = vpack.c.bf16 %v8245, %v8242
    %v8291 = vpack.c.bf16 %v8253, %v8250
    %v8292 = vpack.c.bf16 %v8261, %v8258
    %v8293 = vpack.c.bf16 %v8269, %v8266
    %v8294 = vpack.c.bf16 %v8277, %v8274
    %v8295 = vpack.c.bf16 %v8285, %v8282
    %s8296 = scalar_lea.vmem %s59, 4
    %v8297 = vld [vmem:[%s8296] sm:$0x3]
    %v8299 = vsel %vm6620, %v8297, 0
    %8301 = vmatprep.subr.bf16.mxu0 0
    %8302 = vmatpush1.bf16.msra.mxu0 0
    %8303 = vmatprep.subr.bf16.mxu0 0
    %8304 = vmatpush1.bf16.msra.mxu0 0
    %8305 = vmatprep.subr.bf16.mxu0 0
    %8306 = vmatpush1.bf16.msra.mxu0 0
    %8307 = vmatprep.subr.bf16.mxu0 0
    %8308 = vmatpush1.bf16.msra.mxu0 0
    %8309 = vmatprep.subr.bf16.mxu0 0
    %8310 = vmatpush1.bf16.msra.mxu0 0
    %8311 = vmatprep.subr.bf16.mxu0 0
    %8312 = vmatpush1.bf16.msra.mxu0 0
    %8313 = vmatprep.subr.bf16.mxu0 0
    %8314 = vmatpush1.bf16.msra.mxu0 0
    %8315 = vmatprep.subr.bf16.mxu0 0
    %8316 = vmatpush1.bf16.msra.mxu0 %v8299
    %8317 = vmatprep.subr.bf16.mxu0 0
    %8318 = vmatpush2.bf16.msra.mxu0 0
    %8319 = vmatprep.subr.bf16.mxu0 0
    %8320 = vmatpush2.bf16.msra.mxu0 0
    %8321 = vmatprep.subr.bf16.mxu0 0
    %8322 = vmatpush2.bf16.msra.mxu0 0
    %8323 = vmatprep.subr.bf16.mxu0 0
    %8324 = vmatpush2.bf16.msra.mxu0 0
    %8325 = vmatprep.subr.bf16.mxu0 0
    %8326 = vmatpush2.bf16.msra.mxu0 0
    %8327 = vmatprep.subr.bf16.mxu0 0
    %8328 = vmatpush2.bf16.msra.mxu0 0
    %8329 = vmatprep.subr.bf16.mxu0 0
    %8330 = vmatpush2.bf16.msra.mxu0 0
    %8331 = vmatprep.subr.bf16.mxu0 0
    %8332 = vmatpush2.bf16.msra.mxu0 0
    %8333 = vmatprep.mubr.bf16.mxu0 0
    %8334 = vmatmul.mubr.bf16.gmra.mxu0 %v8055
    %v8335 = vpop.f32.mrf.mxu0
    %v8336 = vadd.f32 0.0, %v8335
    %v8337 = vpop.f32.mrf.mxu0
    %v8338 = vpop.f32.mrf.mxu0
    %v8339 = vadd.f32 0.0, %v8338
    %v8340 = vpop.f32.mrf.mxu0
    %8341 = vmatprep.mubr.bf16.mxu0 0
    %8342 = vmatmul.mubr.bf16.gmra.mxu0 %v8058
    %v8343 = vpop.f32.mrf.mxu0
    %v8344 = vadd.f32 0.0, %v8343
    %v8345 = vpop.f32.mrf.mxu0
    %v8346 = vpop.f32.mrf.mxu0
    %v8347 = vadd.f32 0.0, %v8346
    %v8348 = vpop.f32.mrf.mxu0
    %8349 = vmatprep.mubr.bf16.mxu0 0
    %8350 = vmatmul.mubr.bf16.gmra.mxu0 %v8061
    %v8351 = vpop.f32.mrf.mxu0
    %v8352 = vadd.f32 0.0, %v8351
    %v8353 = vpop.f32.mrf.mxu0
    %v8354 = vpop.f32.mrf.mxu0
    %v8355 = vadd.f32 0.0, %v8354
    %v8356 = vpop.f32.mrf.mxu0
    %8357 = vmatprep.mubr.bf16.mxu0 0
    %8358 = vmatmul.mubr.bf16.gmra.mxu0 %v8064
    %v8359 = vpop.f32.mrf.mxu0
    %v8360 = vadd.f32 0.0, %v8359
    %v8361 = vpop.f32.mrf.mxu0
    %v8362 = vpop.f32.mrf.mxu0
    %v8363 = vadd.f32 0.0, %v8362
    %v8364 = vpop.f32.mrf.mxu0
    %8365 = vmatprep.mubr.bf16.mxu0 0
    %8366 = vmatmul.mubr.bf16.gmra.mxu0 %v8067
    %v8367 = vpop.f32.mrf.mxu0
    %v8368 = vadd.f32 0.0, %v8367
    %v8369 = vpop.f32.mrf.mxu0
    %v8370 = vpop.f32.mrf.mxu0
    %v8371 = vadd.f32 0.0, %v8370
    %v8372 = vpop.f32.mrf.mxu0
    %8373 = vmatprep.mubr.bf16.mxu0 0
    %8374 = vmatmul.mubr.bf16.gmra.mxu0 %v8070
    %v8375 = vpop.f32.mrf.mxu0
    %v8376 = vadd.f32 0.0, %v8375
    %v8377 = vpop.f32.mrf.mxu0
    %v8378 = vpop.f32.mrf.mxu0
    %v8379 = vadd.f32 0.0, %v8378
    %v8380 = vpop.f32.mrf.mxu0
    %8381 = vmatprep.mubr.bf16.mxu0 0
    %8382 = vmatmul.mubr.bf16.gmra.mxu0 %v8073
    %v8383 = vpop.f32.mrf.mxu0
    %v8384 = vadd.f32 0.0, %v8383
    %v8385 = vpop.f32.mrf.mxu0
    %v8386 = vpop.f32.mrf.mxu0
    %v8387 = vadd.f32 0.0, %v8386
    %v8388 = vpop.f32.mrf.mxu0
    %8389 = vmatprep.mubr.bf16.mxu0 0
    %8390 = vmatmul.mubr.bf16.gmra.mxu0 %v8076
    %v8391 = vpop.f32.mrf.mxu0
    %v8392 = vadd.f32 0.0, %v8391
    %v8393 = vpop.f32.mrf.mxu0
    %v8394 = vpop.f32.mrf.mxu0
    %v8395 = vadd.f32 0.0, %v8394
    %v8396 = vpop.f32.mrf.mxu0
    %8397 = vdwg.mxu0
    %v8398 = vpack.c.bf16 %v8339, %v8336
    %v8399 = vpack.c.bf16 %v8347, %v8344
    %v8400 = vpack.c.bf16 %v8355, %v8352
    %v8401 = vpack.c.bf16 %v8363, %v8360
    %v8402 = vpack.c.bf16 %v8371, %v8368
    %v8403 = vpack.c.bf16 %v8379, %v8376
    %v8404 = vpack.c.bf16 %v8387, %v8384
    %v8405 = vpack.c.bf16 %v8395, %v8392
    %s8406 = scalar_lea.vmem %s59, 6
    %v8407 = vld [vmem:[%s8406] sm:$0x3]
    %v8409 = vsel %vm6620, %v8407, 0
    %8411 = vmatprep.subr.bf16.mxu0 0
    %8412 = vmatpush1.bf16.msra.mxu0 0
    %8413 = vmatprep.subr.bf16.mxu0 0
    %8414 = vmatpush1.bf16.msra.mxu0 0
    %8415 = vmatprep.subr.bf16.mxu0 0
    %8416 = vmatpush1.bf16.msra.mxu0 0
    %8417 = vmatprep.subr.bf16.mxu0 0
    %8418 = vmatpush1.bf16.msra.mxu0 0
    %8419 = vmatprep.subr.bf16.mxu0 0
    %8420 = vmatpush1.bf16.msra.mxu0 0
    %8421 = vmatprep.subr.bf16.mxu0 0
    %8422 = vmatpush1.bf16.msra.mxu0 0
    %8423 = vmatprep.subr.bf16.mxu0 0
    %8424 = vmatpush1.bf16.msra.mxu0 0
    %8425 = vmatprep.subr.bf16.mxu0 0
    %8426 = vmatpush1.bf16.msra.mxu0 %v8409
    %8427 = vmatprep.subr.bf16.mxu0 0
    %8428 = vmatpush2.bf16.msra.mxu0 0
    %8429 = vmatprep.subr.bf16.mxu0 0
    %8430 = vmatpush2.bf16.msra.mxu0 0
    %8431 = vmatprep.subr.bf16.mxu0 0
    %8432 = vmatpush2.bf16.msra.mxu0 0
    %8433 = vmatprep.subr.bf16.mxu0 0
    %8434 = vmatpush2.bf16.msra.mxu0 0
    %8435 = vmatprep.subr.bf16.mxu0 0
    %8436 = vmatpush2.bf16.msra.mxu0 0
    %8437 = vmatprep.subr.bf16.mxu0 0
    %8438 = vmatpush2.bf16.msra.mxu0 0
    %8439 = vmatprep.subr.bf16.mxu0 0
    %8440 = vmatpush2.bf16.msra.mxu0 0
    %8441 = vmatprep.subr.bf16.mxu0 0
    %8442 = vmatpush2.bf16.msra.mxu0 0
    %8443 = vmatprep.mubr.bf16.mxu0 0
    %8444 = vmatmul.mubr.bf16.gmra.mxu0 %v8055
    %v8445 = vpop.f32.mrf.mxu0
    %v8446 = vadd.f32 0.0, %v8445
    %v8447 = vpop.f32.mrf.mxu0
    %v8448 = vpop.f32.mrf.mxu0
    %v8449 = vadd.f32 0.0, %v8448
    %v8450 = vpop.f32.mrf.mxu0
    %8451 = vmatprep.mubr.bf16.mxu0 0
    %8452 = vmatmul.mubr.bf16.gmra.mxu0 %v8058
    %v8453 = vpop.f32.mrf.mxu0
    %v8454 = vadd.f32 0.0, %v8453
    %v8455 = vpop.f32.mrf.mxu0
    %v8456 = vpop.f32.mrf.mxu0
    %v8457 = vadd.f32 0.0, %v8456
    %v8458 = vpop.f32.mrf.mxu0
    %8459 = vmatprep.mubr.bf16.mxu0 0
    %8460 = vmatmul.mubr.bf16.gmra.mxu0 %v8061
    %v8461 = vpop.f32.mrf.mxu0
    %v8462 = vadd.f32 0.0, %v8461
    %v8463 = vpop.f32.mrf.mxu0
    %v8464 = vpop.f32.mrf.mxu0
    %v8465 = vadd.f32 0.0, %v8464
    %v8466 = vpop.f32.mrf.mxu0
    %8467 = vmatprep.mubr.bf16.mxu0 0
    %8468 = vmatmul.mubr.bf16.gmra.mxu0 %v8064
    %v8469 = vpop.f32.mrf.mxu0
    %v8470 = vadd.f32 0.0, %v8469
    %v8471 = vpop.f32.mrf.mxu0
    %v8472 = vpop.f32.mrf.mxu0
    %v8473 = vadd.f32 0.0, %v8472
    %v8474 = vpop.f32.mrf.mxu0
    %8475 = vmatprep.mubr.bf16.mxu0 0
    %8476 = vmatmul.mubr.bf16.gmra.mxu0 %v8067
    %v8477 = vpop.f32.mrf.mxu0
    %v8478 = vadd.f32 0.0, %v8477
    %v8479 = vpop.f32.mrf.mxu0
    %v8480 = vpop.f32.mrf.mxu0
    %v8481 = vadd.f32 0.0, %v8480
    %v8482 = vpop.f32.mrf.mxu0
    %8483 = vmatprep.mubr.bf16.mxu0 0
    %8484 = vmatmul.mubr.bf16.gmra.mxu0 %v8070
    %v8485 = vpop.f32.mrf.mxu0
    %v8486 = vadd.f32 0.0, %v8485
    %v8487 = vpop.f32.mrf.mxu0
    %v8488 = vpop.f32.mrf.mxu0
    %v8489 = vadd.f32 0.0, %v8488
    %v8490 = vpop.f32.mrf.mxu0
    %8491 = vmatprep.mubr.bf16.mxu0 0
    %8492 = vmatmul.mubr.bf16.gmra.mxu0 %v8073
    %v8493 = vpop.f32.mrf.mxu0
    %v8494 = vadd.f32 0.0, %v8493
    %v8495 = vpop.f32.mrf.mxu0
    %v8496 = vpop.f32.mrf.mxu0
    %v8497 = vadd.f32 0.0, %v8496
    %v8498 = vpop.f32.mrf.mxu0
    %8499 = vmatprep.mubr.bf16.mxu0 0
    %8500 = vmatmul.mubr.bf16.gmra.mxu0 %v8076
    %v8501 = vpop.f32.mrf.mxu0
    %v8502 = vadd.f32 0.0, %v8501
    %v8503 = vpop.f32.mrf.mxu0
    %v8504 = vpop.f32.mrf.mxu0
    %v8505 = vadd.f32 0.0, %v8504
    %v8506 = vpop.f32.mrf.mxu0
    %8507 = vdwg.mxu0
    %v8508 = vpack.c.bf16 %v8449, %v8446
    %v8509 = vpack.c.bf16 %v8457, %v8454
    %v8510 = vpack.c.bf16 %v8465, %v8462
    %v8511 = vpack.c.bf16 %v8473, %v8470
    %v8512 = vpack.c.bf16 %v8481, %v8478
    %v8513 = vpack.c.bf16 %v8489, %v8486
    %v8514 = vpack.c.bf16 %v8497, %v8494
    %v8515 = vpack.c.bf16 %v8505, %v8502
    %v8516 = vld [vmem:[%s57] sm:$0xf]
    %v8517 = vld [vmem:[#allocation2] sm:$0x1]
    %8519 = vset.pattern.permute.xlu0 0
    %8520 = vperm.xlu0 %8519, %v8517
    %v8521 = vpop.permute.xlu0 %8520
    %v8523 = vlaneseq
    %v8524 = vshrl.u32 %v8523, 7
    %v8525 = vsub.s32 0, %v8524
    %v8526 = vrot.slane %v8521, %v8525
    %v8529 = vunpack.c.l.s4 1966171168
    %v8530 = vunpack.c.0.s8 %v8529
    %v8531 = vlaneseq
    %v8532 = vshrl.u32 %v8531, 7
    %v8533 = vsub.s32 %v8530, %v8532
    %v8534 = vrot.slane %v8516, %v8533
    %v8535 = vcombine.high %v8534, %v8534
    %v8537 = vunpack.c.l.s4 1966171168
    %v8538 = vunpack.c.0.s8 %v8537
    %v8539 = vlaneseq
    %v8540 = vshrl.u32 %v8539, 7
    %v8541 = vsub.s32 %v8538, %v8540
    %v8542 = vrot.slane %v8534, %v8541
    %v8544 = vunpack.c.l.s4 1966171168
    %v8545 = vunpack.c.0.s8 %v8544
    %v8546 = vlaneseq
    %v8547 = vshrl.u32 %v8546, 7
    %v8548 = vsub.s32 %v8545, %v8547
    %v8549 = vrot.slane %v8535, %v8548
    %v8550 = vcombine.high %v8542, %v8542
    %v8551 = vcombine.high %v8549, %v8549
    %8556 = vmatprep.subr.bf16.mxu0 0
    %8557 = vmatpush1.bf16.msra.mxu0 %v8185
    %8558 = vmatprep.subr.bf16.mxu0 0
    %8559 = vmatpush1.bf16.msra.mxu0 %v8184
    %8560 = vmatprep.subr.bf16.mxu0 0
    %8561 = vmatpush1.bf16.msra.mxu0 %v8183
    %8562 = vmatprep.subr.bf16.mxu0 0
    %8563 = vmatpush1.bf16.msra.mxu0 %v8182
    %8564 = vmatprep.subr.bf16.mxu0 0
    %8565 = vmatpush1.bf16.msra.mxu0 %v8181
    %8566 = vmatprep.subr.bf16.mxu0 0
    %8567 = vmatpush1.bf16.msra.mxu0 %v8180
    %8568 = vmatprep.subr.bf16.mxu0 0
    %8569 = vmatpush1.bf16.msra.mxu0 %v8179
    %8570 = vmatprep.subr.bf16.mxu0 0
    %8571 = vmatpush1.bf16.msra.mxu0 %v8178
    %8572 = vmatprep.subr.bf16.mxu0 0
    %8573 = vmatpush2.bf16.msra.mxu0 %v8295
    %8574 = vmatprep.subr.bf16.mxu0 0
    %8575 = vmatpush2.bf16.msra.mxu0 %v8294
    %8576 = vmatprep.subr.bf16.mxu0 0
    %8577 = vmatpush2.bf16.msra.mxu0 %v8293
    %8578 = vmatprep.subr.bf16.mxu0 0
    %8579 = vmatpush2.bf16.msra.mxu0 %v8292
    %8580 = vmatprep.subr.bf16.mxu0 0
    %8581 = vmatpush2.bf16.msra.mxu0 %v8291
    %8582 = vmatprep.subr.bf16.mxu0 0
    %8583 = vmatpush2.bf16.msra.mxu0 %v8290
    %8584 = vmatprep.subr.bf16.mxu0 0
    %8585 = vmatpush2.bf16.msra.mxu0 %v8289
    %8586 = vmatprep.subr.bf16.mxu0 0
    %8587 = vmatpush2.bf16.msra.mxu0 %v8288
    %8588 = vmatprep.mubr.bf16.mxu0 %v8549
    %8589 = vmatmul.mubr.bf16.gmra.mxu0 %v8542
    %v8590 = vpop.f32.mrf.mxu0
    %v8591 = vadd.f32 %v8526, %v8590
    %v8592 = vpop.f32.mrf.mxu0
    %v8593 = vpop.f32.mrf.mxu0
    %v8594 = vpop.f32.mrf.mxu0
    %8595 = vdwg.mxu0
    %8596 = vmatprep.subr.bf16.mxu0 0
    %8597 = vmatpush1.bf16.msra.mxu0 %v8405
    %8598 = vmatprep.subr.bf16.mxu0 0
    %8599 = vmatpush1.bf16.msra.mxu0 %v8404
    %8600 = vmatprep.subr.bf16.mxu0 0
    %8601 = vmatpush1.bf16.msra.mxu0 %v8403
    %8602 = vmatprep.subr.bf16.mxu0 0
    %8603 = vmatpush1.bf16.msra.mxu0 %v8402
    %8604 = vmatprep.subr.bf16.mxu0 0
    %8605 = vmatpush1.bf16.msra.mxu0 %v8401
    %8606 = vmatprep.subr.bf16.mxu0 0
    %8607 = vmatpush1.bf16.msra.mxu0 %v8400
    %8608 = vmatprep.subr.bf16.mxu0 0
    %8609 = vmatpush1.bf16.msra.mxu0 %v8399
    %8610 = vmatprep.subr.bf16.mxu0 0
    %8611 = vmatpush1.bf16.msra.mxu0 %v8398
    %8612 = vmatprep.subr.bf16.mxu0 0
    %8613 = vmatpush2.bf16.msra.mxu0 %v8515
    %8614 = vmatprep.subr.bf16.mxu0 0
    %8615 = vmatpush2.bf16.msra.mxu0 %v8514
    %8616 = vmatprep.subr.bf16.mxu0 0
    %8617 = vmatpush2.bf16.msra.mxu0 %v8513
    %8618 = vmatprep.subr.bf16.mxu0 0
    %8619 = vmatpush2.bf16.msra.mxu0 %v8512
    %8620 = vmatprep.subr.bf16.mxu0 0
    %8621 = vmatpush2.bf16.msra.mxu0 %v8511
    %8622 = vmatprep.subr.bf16.mxu0 0
    %8623 = vmatpush2.bf16.msra.mxu0 %v8510
    %8624 = vmatprep.subr.bf16.mxu0 0
    %8625 = vmatpush2.bf16.msra.mxu0 %v8509
    %8626 = vmatprep.subr.bf16.mxu0 0
    %8627 = vmatpush2.bf16.msra.mxu0 %v8508
    %8628 = vmatprep.mubr.bf16.mxu0 %v8551
    %8629 = vmatmul.mubr.bf16.gmra.mxu0 %v8550
    %v8630 = vpop.f32.mrf.mxu0
    %v8631 = vadd.f32 %v8591, %v8630
    %v8632 = vpop.f32.mrf.mxu0
    %v8633 = vpop.f32.mrf.mxu0
    %v8634 = vpop.f32.mrf.mxu0
    %8635 = vdwg.mxu0
    %vm8636 = vcmask 8192
    %8637 = vst.msk [vmem:[#allocation3] sm:$0x1] %vm8636, %v8631
    // Predicated region
    $region126: #{discriminator_forward_pallas.1} parent=1 // pred_check
      _
    $region127: #{discriminator_forward_pallas.1} parent=1 // pred_check_branch
      %8639 = sbr.rel (0) target = $region129
    $region128: #{discriminator_forward_pallas.1} parent=1 // pred_region
      %s8641 = ssub.s32 16, 16
      %8642 = vsyncadd [#allocation4], %s8641
      %s8644 = sshll.u32 [#allocation3], 4
      %s8645 = int_to_ptr.vmem [resolvable:$true] %s8644
      %8647 = dma.vmem_to_hbm [thread:$0]  %s8645, 16, %s63, [#allocation4]
    $region129: #{discriminator_forward_pallas.1} parent=1 // pred_fallthru
      _
    // Predicated region
    $region130: #{discriminator_forward_pallas.1} parent=1 // pred_check
      _
    $region131: #{discriminator_forward_pallas.1} parent=1 // pred_check_branch
      %8649 = sbr.rel (0) target = $region133
    $region132: #{discriminator_forward_pallas.1} parent=1 // pred_region
      %8650 = dma.done [#allocation4], 16
    $region133: #{discriminator_forward_pallas.1} parent=1 // pred_fallthru
      _
    %8651 = vsyncpa [#allocation4], 1

</llo_original>
